<compile_context>
chip_gen: v5e
topology: v5e:2x2
jax: 0.10.0
libtpu: 0.0.40
codegen_flags: <defaults>
</compile_context>

<pallas_src>
import numpy as np
import jax
import jax.numpy as jnp
from jax.experimental import pallas as pl
from jax.experimental.pallas import tpu as pltpu

H = 64                 # rnn_hidden (per direction)
DH = 2 * H             # 128: merged fwd|bwd hidden width
DG = 8 * H             # 512: merged gate width (4 gates x (fwd|bwd))
NUM_CLASSES = 2


# ---------------------------------------------------------------------------
# Fused kernel: conv/pool frontend + 2-layer bi-LSTM + Linear head.
#
# Merged-direction layout (same as v2):
#   h, c            : (B, 2H)  lanes [0:H] = forward, [H:2H] = backward
#   gates           : (B, 8H)  gate g, dir d at lanes [g*2H + d*H : ... + H]
#   W_hh            : (2H, 8H) block-diagonal (h_fwd -> fwd lanes, h_bwd -> bwd)
# ---------------------------------------------------------------------------
def _fused_kernel(x_ref, m1_ref, b1c_ref, m2_ref, b2c_ref,
                  k0_ref, b0_ref, wh0_ref,
                  wa1_ref, wb1_ref, b1l_ref, wh1_ref,
                  wcls_ref, bcls_ref,
                  pred_ref,
                  gxm0_ref, slabf_ref, slabr_ref, gxm1_ref):
    B = x_ref.shape[0]
    T = k0_ref.shape[0]

    # ---- frontend: conv(k3,s2)+pool(3,2) twice, as max over 3 folded matmuls
    # out[:, i] = max_k (inp @ M[k])[:, i] + bias   (bias is outside the max
    # because it is constant across the pooling window).
    def conv_pool(inp, m_ref, bias):
        c0 = jnp.dot(inp, m_ref[0], preferred_element_type=jnp.float32)
        c1 = jnp.dot(inp, m_ref[1], preferred_element_type=jnp.float32)
        c2 = jnp.dot(inp, m_ref[2], preferred_element_type=jnp.float32)
        return jnp.maximum(jnp.maximum(c0, c1), c2) + bias

    p1 = conv_pool(x_ref[...], m1_ref, b1c_ref[0])     # (B, L2)
    feat = conv_pool(p1, m2_ref, b2c_ref[0])           # (B, T)
    # TODO(synk): nn.Dropout(0.2) is applied as inference-mode identity here.

    # ---- layer-0 gate inputs for ALL merged steps, hoisted off the chain ----
    # gxm0[:, s*DG:(s+1)*DG] = feat[:, s]*Wi0_fwd + feat[:, T-1-s]*Wi0_bwd + b0
    # expressed as a matmul against the host-packed one-hot kernel k0 so no
    # single-lane broadcasts are needed.
    for s in range(T):
        gxm0_ref[:, pl.ds(s * DG, DG)] = (
            jnp.dot(feat, k0_ref[:, pl.ds(s * DG, DG)],
                    preferred_element_type=jnp.float32)
            + b0_ref[...])

    def bicell(gx, h, c, wh_ref):
        # One step of BOTH directions: PyTorch LSTM cell, gate order i,f,g,o.
        # Gate slices are 128-lane aligned (2H = 128) -> no cross-lane moves.
        gates = gx + jnp.dot(h, wh_ref[...], preferred_element_type=jnp.float32)
        i = jax.nn.sigmoid(gates[:, 0 * DH:1 * DH])
        f = jax.nn.sigmoid(gates[:, 1 * DH:2 * DH])
        g = jnp.tanh(gates[:, 2 * DH:3 * DH])
        o = jax.nn.sigmoid(gates[:, 3 * DH:4 * DH])
        c_new = f * c + i * g
        h_new = o * jnp.tanh(c_new)
        return h_new, c_new

    # ---- layer 0: merged fwd/bwd recurrence (serial over T) ----
    # At loop step s:  h = [h0_fwd(s) | h0_bwd(T-1-s)].
    # slab_f[block s]     = h            (time-ordered for the fwd lanes)
    # slab_r[block T-1-s] = h            (time-reversed copy)
    h = jnp.zeros((B, DH), jnp.float32)
    c = jnp.zeros((B, DH), jnp.float32)
    for s in range(T):                       # static unroll, T known at trace time
        tb = T - 1 - s
        h, c = bicell(gxm0_ref[:, pl.ds(s * DG, DG)], h, c, wh0_ref)
        slabf_ref[pl.ds(s * B, B), :] = h
        slabr_ref[pl.ds(tb * B, B), :] = h

    # ---- layer-1 gate inputs: two batched matmuls, already direction-merged --
    # gxm1[block s] = slab_f[s] @ W_A + slab_r[s] @ W_B + b1
    #              == where(fwd_lanes, x1[s] @ Wi1, x1[T-1-s] @ Wi1) + b1
    gxm1_ref[...] = (
        jnp.dot(slabf_ref[...], wa1_ref[...], preferred_element_type=jnp.float32)
        + jnp.dot(slabr_ref[...], wb1_ref[...], preferred_element_type=jnp.float32)
        + b1l_ref[...])

    # ---- layer 1: merged fwd/bwd recurrence ----
    h = jnp.zeros((B, DH), jnp.float32)
    c = jnp.zeros((B, DH), jnp.float32)
    for s in range(T):
        h, c = bicell(gxm1_ref[pl.ds(s * B, B), :], h, c, wh1_ref)

    # h == concat(hn[-2], hn[-1]) in [fwd|bwd] lane order.
    pred_ref[...] = (jnp.dot(h, wcls_ref[...], preferred_element_type=jnp.float32)
                     + bcls_ref[...])


def _fused_call(x_bl, params):
    B, _ = x_bl.shape
    T = params[4].shape[0]                   # k0 is (T, T*DG)
    vmem = pl.BlockSpec(memory_space=pltpu.MemorySpace.VMEM)
    smem = pl.BlockSpec(memory_space=pltpu.MemorySpace.SMEM)
    in_specs = [vmem, vmem, smem, vmem, smem] + [vmem] * 9
    return pl.pallas_call(
        _fused_kernel,
        out_shape=jax.ShapeDtypeStruct((B, NUM_CLASSES), jnp.float32),
        in_specs=in_specs,
        out_specs=vmem,
        scratch_shapes=[
            pltpu.VMEM((B, T * DG), jnp.float32),   # gxm0: hoisted layer-0 gate inputs
            pltpu.VMEM((T * B, DH), jnp.float32),   # slab_f: layer-0 h, time-ordered
            pltpu.VMEM((T * B, DH), jnp.float32),   # slab_r: layer-0 h, time-reversed
            pltpu.VMEM((T * B, DG), jnp.float32),   # gxm1: pre-merged layer-1 gate inputs
        ],
    )(x_bl, *params)


@jax.jit
def base_lstm_forward(x, params):
    # x: (B, L, 1) matching the PyTorch (batch, len, 1) input.
    return _fused_call(x[..., 0], params)    # (B, 2) logits


# ---------------------------------------------------------------------------
# Host-side parameter packing.
# ---------------------------------------------------------------------------
def _downsample_lengths(L):
    L1 = (L - 3) // 2 + 1
    L2 = (L1 - 3) // 2 + 1
    L3 = (L2 - 3) // 2 + 1
    L4 = (L3 - 3) // 2 + 1
    return L1, L2, L3, L4


def _conv_pool_matrices(w_taps, n_in, n_out):
    """Fold conv1d(k3,s2) + maxpool(3,2) into 3 selection matmuls.

    out[:, i] = max_k (inp @ M[k])[:, i] + bias, with
    M[k][4*i + 2*k + t, i] = w_taps[t].
    """
    w = np.asarray(w_taps, np.float32)
    m = np.zeros((3, n_in, n_out), np.float32)
    for k in range(3):
        for i in range(n_out):
            for t in range(3):
                m[k, 4 * i + 2 * k + t, i] += w[t]
    return jnp.asarray(m)


def _interleave_gates(wf, wb):
    """(in,4H),(in,4H) -> (in,8H): columns [i_f|i_b|f_f|f_b|g_f|g_b|o_f|o_b]."""
    cols = []
    for g in range(4):
        cols.append(wf[:, g * H:(g + 1) * H])
        cols.append(wb[:, g * H:(g + 1) * H])
    return jnp.concatenate(cols, axis=1)


def pack_params(conv_raw, lstm_raw, seq_len):
    w1, b1c, w2, b2c = conv_raw
    l0f, l0b, l1f, l1b, wcls, bcls = lstm_raw
    _, L2, _, T = _downsample_lengths(seq_len)

    # Frontend: folded conv+pool selection matrices (built once on the host).
    m1 = _conv_pool_matrices(w1, seq_len, L2)
    m2 = _conv_pool_matrices(w2, L2, T)

    wi0f, wh0f, b0f = l0f
    wi0b, wh0b, b0b = l0b
    wi1f, wh1f, b1f = l1f
    wi1b, wh1b, b1b = l1b

    z_h = jnp.zeros((H, 4 * H), jnp.float32)
    z_i0 = jnp.zeros((1, 4 * H), jnp.float32)
    z_i1 = jnp.zeros((2 * H, 4 * H), jnp.float32)

    # ---- layer 0 ----
    wi0f_row = _interleave_gates(wi0f, z_i0)      # (1,8H) fwd lanes, 0 elsewhere
    wi0b_row = _interleave_gates(z_i0, wi0b)      # (1,8H) bwd lanes, 0 elsewhere
    b0 = _interleave_gates(b0f, b0b)              # (1,8H)
    wh0 = jnp.concatenate([_interleave_gates(wh0f, z_h),
                           _interleave_gates(z_h, wh0b)], axis=0)   # (2H,8H) blockdiag

    # One-hot kernel for the hoisted layer-0 projection:
    #   k0[t, s*DG + j] = wi0f_row[j]*(t==s) + wi0b_row[j]*(t==T-1-s)
    k0 = np.zeros((T, T * DG), np.float32)
    rf = np.asarray(wi0f_row)[0]
    rb = np.asarray(wi0b_row)[0]
    for s in range(T):
        k0[s, s * DG:(s + 1) * DG] += rf
        k0[T - 1 - s, s * DG:(s + 1) * DG] += rb
    k0 = jnp.asarray(k0)

    # ---- layer 1 ----
    wf1 = _interleave_gates(wi1f, z_i1)           # (2H,8H) fwd-gate cols only
    wb1 = _interleave_gates(z_i1, wi1b)           # (2H,8H) bwd-gate cols only
    # gxm1[s] = slab_f[s] @ W_A + slab_r[s] @ W_B + b1  gives the merged gate
    # inputs directly (slab_f[s] = [h0_fwd(s)|h0_bwd(T-1-s)], slab_r reversed).
    wa1 = jnp.concatenate([wf1[0:H, :], wb1[H:DH, :]], axis=0)      # (2H,8H)
    wb1m = jnp.concatenate([wb1[0:H, :], wf1[H:DH, :]], axis=0)     # (2H,8H)
    b1l = _interleave_gates(b1f, b1b)             # (1,8H)
    wh1 = jnp.concatenate([_interleave_gates(wh1f, z_h),
                           _interleave_gates(z_h, wh1b)], axis=0)   # (2H,8H)

    return (m1, b1c, m2, b2c, k0, b0, wh0, wa1, wb1m, b1l, wh1, wcls, bcls)


def init_raw_params(key):
    keys = jax.random.split(key, 24)
    it = iter(keys)

    def u(shape, scale):
        return jax.random.uniform(next(it), shape, jnp.float32, -scale, scale)

    cw = 1.0 / (3.0 ** 0.5)
    conv_raw = (u((3,), cw), u((1,), cw), u((3,), cw), u((1,), cw))

    s = 1.0 / (H ** 0.5)

    def lstm_dir(in_dim):
        w_ih = u((in_dim, 4 * H), s)              # transposed vs PyTorch (4H, in)
        w_hh = u((H, 4 * H), s)                   # transposed vs PyTorch (4H, H)
        b = u((1, 4 * H), s) + u((1, 4 * H), s)   # b_ih + b_hh pre-summed
        return w_ih, w_hh, b

    l0f = lstm_dir(1)
    l0b = lstm_dir(1)
    l1f = lstm_dir(2 * H)
    l1b = lstm_dir(2 * H)

    c = 1.0 / ((2 * H) ** 0.5)
    wcls = u((2 * H, NUM_CLASSES), c)
    bcls = u((1, NUM_CLASSES), c)

    return conv_raw, (l0f, l0b, l1f, l1b, wcls, bcls)


if __name__ == "__main__":
    key = jax.random.PRNGKey(0)
    kx, kp = jax.random.split(key)

    B, L = 2, 256                                 # len=256 -> T=15 after conv/pool
    x = jax.random.normal(kx, (B, L, 1), jnp.float32)

    conv_raw, lstm_raw = init_raw_params(kp)
    params = pack_params(conv_raw, lstm_raw, L)

    pred = base_lstm_forward(x, params)
    jax.block_until_ready(pred)
    assert pred.shape == (B, NUM_CLASSES) and pred.dtype == jnp.float32
    print("KERNEL_OK")
</pallas_src>

<mosaic_0001>
module attributes {stable_mosaic.version = 11 : i64} {
  func.func @_fused_kernel(%arg0: memref<2x256xf32, #tpu.memory_space<vmem>>, %arg1: memref<3x256x63xf32, #tpu.memory_space<vmem>>, %arg2: memref<1xf32, #tpu.memory_space<smem>>, %arg3: memref<3x63x15xf32, #tpu.memory_space<vmem>>, %arg4: memref<1xf32, #tpu.memory_space<smem>>, %arg5: memref<15x7680xf32, #tpu.memory_space<vmem>>, %arg6: memref<1x512xf32, #tpu.memory_space<vmem>>, %arg7: memref<128x512xf32, #tpu.memory_space<vmem>>, %arg8: memref<128x512xf32, #tpu.memory_space<vmem>>, %arg9: memref<128x512xf32, #tpu.memory_space<vmem>>, %arg10: memref<1x512xf32, #tpu.memory_space<vmem>>, %arg11: memref<128x512xf32, #tpu.memory_space<vmem>>, %arg12: memref<128x2xf32, #tpu.memory_space<vmem>>, %arg13: memref<1x2xf32, #tpu.memory_space<vmem>>, %arg14: memref<2x2xf32, #tpu.memory_space<vmem>>, %arg15: memref<2x7680xf32, #tpu.memory_space<vmem>>, %arg16: memref<30x128xf32, #tpu.memory_space<vmem>>, %arg17: memref<30x128xf32, #tpu.memory_space<vmem>>, %arg18: memref<30x512xf32, #tpu.memory_space<vmem>>) attributes {dimension_semantics = [], scalar_prefetch = 0 : i64, scratch_operands = 4 : i64, tpu.core_type = #tpu.core_type<tc>} {
    %c0 = arith.constant 0 : index
    %c0_0 = arith.constant 0 : index
    %0 = vector.load %arg0[%c0, %c0_0] : memref<2x256xf32, #tpu.memory_space<vmem>>, vector<2x256xf32>
    %c0_1 = arith.constant 0 : index
    %1 = memref.load %arg2[%c0_1] : memref<1xf32, #tpu.memory_space<smem>>
    %c0_2 = arith.constant 0 : index
    %c0_3 = arith.constant 0 : index
    %c0_4 = arith.constant 0 : index
    %2 = vector.load %arg1[%c0_2, %c0_3, %c0_4] : memref<3x256x63xf32, #tpu.memory_space<vmem>>, vector<1x256x63xf32>
    %3 = vector.shape_cast %2 : vector<1x256x63xf32> to vector<256x63xf32>
    %cst = arith.constant dense<0.000000e+00> : vector<2x63xf32>
    %4 = tpu.matmul %0, %3, %cst {dimension_numbers = #tpu.dot_dimension_numbers<[1], [0], [0], [1], [0, 0, 1, 1], [], []>} : vector<2x256xf32>, vector<256x63xf32>, vector<2x63xf32> -> vector<2x63xf32>
    %c1 = arith.constant 1 : index
    %c0_5 = arith.constant 0 : index
    %c0_6 = arith.constant 0 : index
    %5 = vector.load %arg1[%c1, %c0_5, %c0_6] : memref<3x256x63xf32, #tpu.memory_space<vmem>>, vector<1x256x63xf32>
    %6 = vector.shape_cast %5 : vector<1x256x63xf32> to vector<256x63xf32>
    %cst_7 = arith.constant dense<0.000000e+00> : vector<2x63xf32>
    %7 = tpu.matmul %0, %6, %cst_7 {dimension_numbers = #tpu.dot_dimension_numbers<[1], [0], [0], [1], [0, 0, 1, 1], [], []>} : vector<2x256xf32>, vector<256x63xf32>, vector<2x63xf32> -> vector<2x63xf32>
    %c2 = arith.constant 2 : index
    %c0_8 = arith.constant 0 : index
    %c0_9 = arith.constant 0 : index
    %8 = vector.load %arg1[%c2, %c0_8, %c0_9] : memref<3x256x63xf32, #tpu.memory_space<vmem>>, vector<1x256x63xf32>
    %9 = vector.shape_cast %8 : vector<1x256x63xf32> to vector<256x63xf32>
    %cst_10 = arith.constant dense<0.000000e+00> : vector<2x63xf32>
    %10 = tpu.matmul %0, %9, %cst_10 {dimension_numbers = #tpu.dot_dimension_numbers<[1], [0], [0], [1], [0, 0, 1, 1], [], []>} : vector<2x256xf32>, vector<256x63xf32>, vector<2x63xf32> -> vector<2x63xf32>
    %11 = arith.maximumf %4, %7 : vector<2x63xf32>
    %12 = arith.maximumf %11, %10 : vector<2x63xf32>
    %13 = vector.broadcast %1 : f32 to vector<2x63xf32>
    %14 = arith.addf %12, %13 : vector<2x63xf32>
    %c0_11 = arith.constant 0 : index
    %15 = memref.load %arg4[%c0_11] : memref<1xf32, #tpu.memory_space<smem>>
    %c0_12 = arith.constant 0 : index
    %c0_13 = arith.constant 0 : index
    %c0_14 = arith.constant 0 : index
    %16 = vector.load %arg3[%c0_12, %c0_13, %c0_14] : memref<3x63x15xf32, #tpu.memory_space<vmem>>, vector<1x63x15xf32>
    %17 = vector.shape_cast %16 : vector<1x63x15xf32> to vector<63x15xf32>
    %cst_15 = arith.constant dense<0.000000e+00> : vector<2x15xf32>
    %18 = tpu.matmul %14, %17, %cst_15 {dimension_numbers = #tpu.dot_dimension_numbers<[1], [0], [0], [1], [0, 0, 1, 1], [], []>} : vector<2x63xf32>, vector<63x15xf32>, vector<2x15xf32> -> vector<2x15xf32>
    %c1_16 = arith.constant 1 : index
    %c0_17 = arith.constant 0 : index
    %c0_18 = arith.constant 0 : index
    %19 = vector.load %arg3[%c1_16, %c0_17, %c0_18] : memref<3x63x15xf32, #tpu.memory_space<vmem>>, vector<1x63x15xf32>
    %20 = vector.shape_cast %19 : vector<1x63x15xf32> to vector<63x15xf32>
    %cst_19 = arith.constant dense<0.000000e+00> : vector<2x15xf32>
    %21 = tpu.matmul %14, %20, %cst_19 {dimension_numbers = #tpu.dot_dimension_numbers<[1], [0], [0], [1], [0, 0, 1, 1], [], []>} : vector<2x63xf32>, vector<63x15xf32>, vector<2x15xf32> -> vector<2x15xf32>
    %c2_20 = arith.constant 2 : index
    %c0_21 = arith.constant 0 : index
    %c0_22 = arith.constant 0 : index
    %22 = vector.load %arg3[%c2_20, %c0_21, %c0_22] : memref<3x63x15xf32, #tpu.memory_space<vmem>>, vector<1x63x15xf32>
    %23 = vector.shape_cast %22 : vector<1x63x15xf32> to vector<63x15xf32>
    %cst_23 = arith.constant dense<0.000000e+00> : vector<2x15xf32>
    %24 = tpu.matmul %14, %23, %cst_23 {dimension_numbers = #tpu.dot_dimension_numbers<[1], [0], [0], [1], [0, 0, 1, 1], [], []>} : vector<2x63xf32>, vector<63x15xf32>, vector<2x15xf32> -> vector<2x15xf32>
    %25 = arith.maximumf %18, %21 : vector<2x15xf32>
    %26 = arith.maximumf %25, %24 : vector<2x15xf32>
    %27 = vector.broadcast %15 : f32 to vector<2x15xf32>
    %28 = arith.addf %26, %27 : vector<2x15xf32>
    %c0_24 = arith.constant 0 : index
    %c0_25 = arith.constant 0 : index
    %29 = vector.load %arg5[%c0_24, %c0_25] : memref<15x7680xf32, #tpu.memory_space<vmem>>, vector<15x512xf32>
    %cst_26 = arith.constant dense<0.000000e+00> : vector<2x512xf32>
    %30 = tpu.matmul %28, %29, %cst_26 {dimension_numbers = #tpu.dot_dimension_numbers<[1], [0], [0], [1], [0, 0, 1, 1], [], []>} : vector<2x15xf32>, vector<15x512xf32>, vector<2x512xf32> -> vector<2x512xf32>
    %c0_27 = arith.constant 0 : index
    %c0_28 = arith.constant 0 : index
    %31 = vector.load %arg6[%c0_27, %c0_28] : memref<1x512xf32, #tpu.memory_space<vmem>>, vector<1x512xf32>
    %32 = vector.broadcast %31 : vector<1x512xf32> to vector<2x512xf32>
    %33 = arith.addf %30, %32 : vector<2x512xf32>
    %c0_29 = arith.constant 0 : index
    %c0_30 = arith.constant 0 : index
    %34 = vector.load %arg15[%c0_29, %c0_30] : memref<2x7680xf32, #tpu.memory_space<vmem>>, vector<2x512xf32>
    tpu.vector_store %arg15[%c0_29, %c0_30], %33 {strides = array<i32>} : memref<2x7680xf32, #tpu.memory_space<vmem>>, vector<2x512xf32>,
    %c0_31 = arith.constant 0 : index
    %c512 = arith.constant 512 : index
    %35 = vector.load %arg5[%c0_31, %c512] : memref<15x7680xf32, #tpu.memory_space<vmem>>, vector<15x512xf32>
    %cst_32 = arith.constant dense<0.000000e+00> : vector<2x512xf32>
    %36 = tpu.matmul %28, %35, %cst_32 {dimension_numbers = #tpu.dot_dimension_numbers<[1], [0], [0], [1], [0, 0, 1, 1], [], []>} : vector<2x15xf32>, vector<15x512xf32>, vector<2x512xf32> -> vector<2x512xf32>
    %c0_33 = arith.constant 0 : index
    %c0_34 = arith.constant 0 : index
    %37 = vector.load %arg6[%c0_33, %c0_34] : memref<1x512xf32, #tpu.memory_space<vmem>>, vector<1x512xf32>
    %38 = vector.broadcast %37 : vector<1x512xf32> to vector<2x512xf32>
    %39 = arith.addf %36, %38 : vector<2x512xf32>
    %c0_35 = arith.constant 0 : index
    %c512_36 = arith.constant 512 : index
    %40 = vector.load %arg15[%c0_35, %c512_36] : memref<2x7680xf32, #tpu.memory_space<vmem>>, vector<2x512xf32>
    tpu.vector_store %arg15[%c0_35, %c512_36], %39 {strides = array<i32>} : memref<2x7680xf32, #tpu.memory_space<vmem>>, vector<2x512xf32>,
    %c0_37 = arith.constant 0 : index
    %c1024 = arith.constant 1024 : index
    %41 = vector.load %arg5[%c0_37, %c1024] : memref<15x7680xf32, #tpu.memory_space<vmem>>, vector<15x512xf32>
    %cst_38 = arith.constant dense<0.000000e+00> : vector<2x512xf32>
    %42 = tpu.matmul %28, %41, %cst_38 {dimension_numbers = #tpu.dot_dimension_numbers<[1], [0], [0], [1], [0, 0, 1, 1], [], []>} : vector<2x15xf32>, vector<15x512xf32>, vector<2x512xf32> -> vector<2x512xf32>
    %c0_39 = arith.constant 0 : index
    %c0_40 = arith.constant 0 : index
    %43 = vector.load %arg6[%c0_39, %c0_40] : memref<1x512xf32, #tpu.memory_space<vmem>>, vector<1x512xf32>
    %44 = vector.broadcast %43 : vector<1x512xf32> to vector<2x512xf32>
    %45 = arith.addf %42, %44 : vector<2x512xf32>
    %c0_41 = arith.constant 0 : index
    %c1024_42 = arith.constant 1024 : index
    %46 = vector.load %arg15[%c0_41, %c1024_42] : memref<2x7680xf32, #tpu.memory_space<vmem>>, vector<2x512xf32>
    tpu.vector_store %arg15[%c0_41, %c1024_42], %45 {strides = array<i32>} : memref<2x7680xf32, #tpu.memory_space<vmem>>, vector<2x512xf32>,
    %c0_43 = arith.constant 0 : index
    %c1536 = arith.constant 1536 : index
    %47 = vector.load %arg5[%c0_43, %c1536] : memref<15x7680xf32, #tpu.memory_space<vmem>>, vector<15x512xf32>
    %cst_44 = arith.constant dense<0.000000e+00> : vector<2x512xf32>
    %48 = tpu.matmul %28, %47, %cst_44 {dimension_numbers = #tpu.dot_dimension_numbers<[1], [0], [0], [1], [0, 0, 1, 1], [], []>} : vector<2x15xf32>, vector<15x512xf32>, vector<2x512xf32> -> vector<2x512xf32>
    %c0_45 = arith.constant 0 : index
    %c0_46 = arith.constant 0 : index
    %49 = vector.load %arg6[%c0_45, %c0_46] : memref<1x512xf32, #tpu.memory_space<vmem>>, vector<1x512xf32>
    %50 = vector.broadcast %49 : vector<1x512xf32> to vector<2x512xf32>
    %51 = arith.addf %48, %50 : vector<2x512xf32>
    %c0_47 = arith.constant 0 : index
    %c1536_48 = arith.constant 1536 : index
    %52 = vector.load %arg15[%c0_47, %c1536_48] : memref<2x7680xf32, #tpu.memory_space<vmem>>, vector<2x512xf32>
    tpu.vector_store %arg15[%c0_47, %c1536_48], %51 {strides = array<i32>} : memref<2x7680xf32, #tpu.memory_space<vmem>>, vector<2x512xf32>,
    %c0_49 = arith.constant 0 : index
    %c2048 = arith.constant 2048 : index
    %53 = vector.load %arg5[%c0_49, %c2048] : memref<15x7680xf32, #tpu.memory_space<vmem>>, vector<15x512xf32>
    %cst_50 = arith.constant dense<0.000000e+00> : vector<2x512xf32>
    %54 = tpu.matmul %28, %53, %cst_50 {dimension_numbers = #tpu.dot_dimension_numbers<[1], [0], [0], [1], [0, 0, 1, 1], [], []>} : vector<2x15xf32>, vector<15x512xf32>, vector<2x512xf32> -> vector<2x512xf32>
    %c0_51 = arith.constant 0 : index
    %c0_52 = arith.constant 0 : index
    %55 = vector.load %arg6[%c0_51, %c0_52] : memref<1x512xf32, #tpu.memory_space<vmem>>, vector<1x512xf32>
    %56 = vector.broadcast %55 : vector<1x512xf32> to vector<2x512xf32>
    %57 = arith.addf %54, %56 : vector<2x512xf32>
    %c0_53 = arith.constant 0 : index
    %c2048_54 = arith.constant 2048 : index
    %58 = vector.load %arg15[%c0_53, %c2048_54] : memref<2x7680xf32, #tpu.memory_space<vmem>>, vector<2x512xf32>
    tpu.vector_store %arg15[%c0_53, %c2048_54], %57 {strides = array<i32>} : memref<2x7680xf32, #tpu.memory_space<vmem>>, vector<2x512xf32>,
    %c0_55 = arith.constant 0 : index
    %c2560 = arith.constant 2560 : index
    %59 = vector.load %arg5[%c0_55, %c2560] : memref<15x7680xf32, #tpu.memory_space<vmem>>, vector<15x512xf32>
    %cst_56 = arith.constant dense<0.000000e+00> : vector<2x512xf32>
    %60 = tpu.matmul %28, %59, %cst_56 {dimension_numbers = #tpu.dot_dimension_numbers<[1], [0], [0], [1], [0, 0, 1, 1], [], []>} : vector<2x15xf32>, vector<15x512xf32>, vector<2x512xf32> -> vector<2x512xf32>
    %c0_57 = arith.constant 0 : index
    %c0_58 = arith.constant 0 : index
    %61 = vector.load %arg6[%c0_57, %c0_58] : memref<1x512xf32, #tpu.memory_space<vmem>>, vector<1x512xf32>
    %62 = vector.broadcast %61 : vector<1x512xf32> to vector<2x512xf32>
    %63 = arith.addf %60, %62 : vector<2x512xf32>
    %c0_59 = arith.constant 0 : index
    %c2560_60 = arith.constant 2560 : index
    %64 = vector.load %arg15[%c0_59, %c2560_60] : memref<2x7680xf32, #tpu.memory_space<vmem>>, vector<2x512xf32>
    tpu.vector_store %arg15[%c0_59, %c2560_60], %63 {strides = array<i32>} : memref<2x7680xf32, #tpu.memory_space<vmem>>, vector<2x512xf32>,
    %c0_61 = arith.constant 0 : index
    %c3072 = arith.constant 3072 : index
    %65 = vector.load %arg5[%c0_61, %c3072] : memref<15x7680xf32, #tpu.memory_space<vmem>>, vector<15x512xf32>
    %cst_62 = arith.constant dense<0.000000e+00> : vector<2x512xf32>
    %66 = tpu.matmul %28, %65, %cst_62 {dimension_numbers = #tpu.dot_dimension_numbers<[1], [0], [0], [1], [0, 0, 1, 1], [], []>} : vector<2x15xf32>, vector<15x512xf32>, vector<2x512xf32> -> vector<2x512xf32>
    %c0_63 = arith.constant 0 : index
    %c0_64 = arith.constant 0 : index
    %67 = vector.load %arg6[%c0_63, %c0_64] : memref<1x512xf32, #tpu.memory_space<vmem>>, vector<1x512xf32>
    %68 = vector.broadcast %67 : vector<1x512xf32> to vector<2x512xf32>
    %69 = arith.addf %66, %68 : vector<2x512xf32>
    %c0_65 = arith.constant 0 : index
    %c3072_66 = arith.constant 3072 : index
    %70 = vector.load %arg15[%c0_65, %c3072_66] : memref<2x7680xf32, #tpu.memory_space<vmem>>, vector<2x512xf32>
    tpu.vector_store %arg15[%c0_65, %c3072_66], %69 {strides = array<i32>} : memref<2x7680xf32, #tpu.memory_space<vmem>>, vector<2x512xf32>,
    %c0_67 = arith.constant 0 : index
    %c3584 = arith.constant 3584 : index
    %71 = vector.load %arg5[%c0_67, %c3584] : memref<15x7680xf32, #tpu.memory_space<vmem>>, vector<15x512xf32>
    %cst_68 = arith.constant dense<0.000000e+00> : vector<2x512xf32>
    %72 = tpu.matmul %28, %71, %cst_68 {dimension_numbers = #tpu.dot_dimension_numbers<[1], [0], [0], [1], [0, 0, 1, 1], [], []>} : vector<2x15xf32>, vector<15x512xf32>, vector<2x512xf32> -> vector<2x512xf32>
    %c0_69 = arith.constant 0 : index
    %c0_70 = arith.constant 0 : index
    %73 = vector.load %arg6[%c0_69, %c0_70] : memref<1x512xf32, #tpu.memory_space<vmem>>, vector<1x512xf32>
    %74 = vector.broadcast %73 : vector<1x512xf32> to vector<2x512xf32>
    %75 = arith.addf %72, %74 : vector<2x512xf32>
    %c0_71 = arith.constant 0 : index
    %c3584_72 = arith.constant 3584 : index
    %76 = vector.load %arg15[%c0_71, %c3584_72] : memref<2x7680xf32, #tpu.memory_space<vmem>>, vector<2x512xf32>
    tpu.vector_store %arg15[%c0_71, %c3584_72], %75 {strides = array<i32>} : memref<2x7680xf32, #tpu.memory_space<vmem>>, vector<2x512xf32>,
    %c0_73 = arith.constant 0 : index
    %c4096 = arith.constant 4096 : index
    %77 = vector.load %arg5[%c0_73, %c4096] : memref<15x7680xf32, #tpu.memory_space<vmem>>, vector<15x512xf32>
    %cst_74 = arith.constant dense<0.000000e+00> : vector<2x512xf32>
    %78 = tpu.matmul %28, %77, %cst_74 {dimension_numbers = #tpu.dot_dimension_numbers<[1], [0], [0], [1], [0, 0, 1, 1], [], []>} : vector<2x15xf32>, vector<15x512xf32>, vector<2x512xf32> -> vector<2x512xf32>
    %c0_75 = arith.constant 0 : index
    %c0_76 = arith.constant 0 : index
    %79 = vector.load %arg6[%c0_75, %c0_76] : memref<1x512xf32, #tpu.memory_space<vmem>>, vector<1x512xf32>
    %80 = vector.broadcast %79 : vector<1x512xf32> to vector<2x512xf32>
    %81 = arith.addf %78, %80 : vector<2x512xf32>
    %c0_77 = arith.constant 0 : index
    %c4096_78 = arith.constant 4096 : index
    %82 = vector.load %arg15[%c0_77, %c4096_78] : memref<2x7680xf32, #tpu.memory_space<vmem>>, vector<2x512xf32>
    tpu.vector_store %arg15[%c0_77, %c4096_78], %81 {strides = array<i32>} : memref<2x7680xf32, #tpu.memory_space<vmem>>, vector<2x512xf32>,
    %c0_79 = arith.constant 0 : index
    %c4608 = arith.constant 4608 : index
    %83 = vector.load %arg5[%c0_79, %c4608] : memref<15x7680xf32, #tpu.memory_space<vmem>>, vector<15x512xf32>
    %cst_80 = arith.constant dense<0.000000e+00> : vector<2x512xf32>
    %84 = tpu.matmul %28, %83, %cst_80 {dimension_numbers = #tpu.dot_dimension_numbers<[1], [0], [0], [1], [0, 0, 1, 1], [], []>} : vector<2x15xf32>, vector<15x512xf32>, vector<2x512xf32> -> vector<2x512xf32>
    %c0_81 = arith.constant 0 : index
    %c0_82 = arith.constant 0 : index
    %85 = vector.load %arg6[%c0_81, %c0_82] : memref<1x512xf32, #tpu.memory_space<vmem>>, vector<1x512xf32>
    %86 = vector.broadcast %85 : vector<1x512xf32> to vector<2x512xf32>
    %87 = arith.addf %84, %86 : vector<2x512xf32>
    %c0_83 = arith.constant 0 : index
    %c4608_84 = arith.constant 4608 : index
    %88 = vector.load %arg15[%c0_83, %c4608_84] : memref<2x7680xf32, #tpu.memory_space<vmem>>, vector<2x512xf32>
    tpu.vector_store %arg15[%c0_83, %c4608_84], %87 {strides = array<i32>} : memref<2x7680xf32, #tpu.memory_space<vmem>>, vector<2x512xf32>,
    %c0_85 = arith.constant 0 : index
    %c5120 = arith.constant 5120 : index
    %89 = vector.load %arg5[%c0_85, %c5120] : memref<15x7680xf32, #tpu.memory_space<vmem>>, vector<15x512xf32>
    %cst_86 = arith.constant dense<0.000000e+00> : vector<2x512xf32>
    %90 = tpu.matmul %28, %89, %cst_86 {dimension_numbers = #tpu.dot_dimension_numbers<[1], [0], [0], [1], [0, 0, 1, 1], [], []>} : vector<2x15xf32>, vector<15x512xf32>, vector<2x512xf32> -> vector<2x512xf32>
    %c0_87 = arith.constant 0 : index
    %c0_88 = arith.constant 0 : index
    %91 = vector.load %arg6[%c0_87, %c0_88] : memref<1x512xf32, #tpu.memory_space<vmem>>, vector<1x512xf32>
    %92 = vector.broadcast %91 : vector<1x512xf32> to vector<2x512xf32>
    %93 = arith.addf %90, %92 : vector<2x512xf32>
    %c0_89 = arith.constant 0 : index
    %c5120_90 = arith.constant 5120 : index
    %94 = vector.load %arg15[%c0_89, %c5120_90] : memref<2x7680xf32, #tpu.memory_space<vmem>>, vector<2x512xf32>
    tpu.vector_store %arg15[%c0_89, %c5120_90], %93 {strides = array<i32>} : memref<2x7680xf32, #tpu.memory_space<vmem>>, vector<2x512xf32>,
    %c0_91 = arith.constant 0 : index
    %c5632 = arith.constant 5632 : index
    %95 = vector.load %arg5[%c0_91, %c5632] : memref<15x7680xf32, #tpu.memory_space<vmem>>, vector<15x512xf32>
    %cst_92 = arith.constant dense<0.000000e+00> : vector<2x512xf32>
    %96 = tpu.matmul %28, %95, %cst_92 {dimension_numbers = #tpu.dot_dimension_numbers<[1], [0], [0], [1], [0, 0, 1, 1], [], []>} : vector<2x15xf32>, vector<15x512xf32>, vector<2x512xf32> -> vector<2x512xf32>
    %c0_93 = arith.constant 0 : index
    %c0_94 = arith.constant 0 : index
    %97 = vector.load %arg6[%c0_93, %c0_94] : memref<1x512xf32, #tpu.memory_space<vmem>>, vector<1x512xf32>
    %98 = vector.broadcast %97 : vector<1x512xf32> to vector<2x512xf32>
    %99 = arith.addf %96, %98 : vector<2x512xf32>
    %c0_95 = arith.constant 0 : index
    %c5632_96 = arith.constant 5632 : index
    %100 = vector.load %arg15[%c0_95, %c5632_96] : memref<2x7680xf32, #tpu.memory_space<vmem>>, vector<2x512xf32>
    tpu.vector_store %arg15[%c0_95, %c5632_96], %99 {strides = array<i32>} : memref<2x7680xf32, #tpu.memory_space<vmem>>, vector<2x512xf32>,
    %c0_97 = arith.constant 0 : index
    %c6144 = arith.constant 6144 : index
    %101 = vector.load %arg5[%c0_97, %c6144] : memref<15x7680xf32, #tpu.memory_space<vmem>>, vector<15x512xf32>
    %cst_98 = arith.constant dense<0.000000e+00> : vector<2x512xf32>
    %102 = tpu.matmul %28, %101, %cst_98 {dimension_numbers = #tpu.dot_dimension_numbers<[1], [0], [0], [1], [0, 0, 1, 1], [], []>} : vector<2x15xf32>, vector<15x512xf32>, vector<2x512xf32> -> vector<2x512xf32>
    %c0_99 = arith.constant 0 : index
    %c0_100 = arith.constant 0 : index
    %103 = vector.load %arg6[%c0_99, %c0_100] : memref<1x512xf32, #tpu.memory_space<vmem>>, vector<1x512xf32>
    %104 = vector.broadcast %103 : vector<1x512xf32> to vector<2x512xf32>
    %105 = arith.addf %102, %104 : vector<2x512xf32>
    %c0_101 = arith.constant 0 : index
    %c6144_102 = arith.constant 6144 : index
    %106 = vector.load %arg15[%c0_101, %c6144_102] : memref<2x7680xf32, #tpu.memory_space<vmem>>, vector<2x512xf32>
    tpu.vector_store %arg15[%c0_101, %c6144_102], %105 {strides = array<i32>} : memref<2x7680xf32, #tpu.memory_space<vmem>>, vector<2x512xf32>,
    %c0_103 = arith.constant 0 : index
    %c6656 = arith.constant 6656 : index
    %107 = vector.load %arg5[%c0_103, %c6656] : memref<15x7680xf32, #tpu.memory_space<vmem>>, vector<15x512xf32>
    %cst_104 = arith.constant dense<0.000000e+00> : vector<2x512xf32>
    %108 = tpu.matmul %28, %107, %cst_104 {dimension_numbers = #tpu.dot_dimension_numbers<[1], [0], [0], [1], [0, 0, 1, 1], [], []>} : vector<2x15xf32>, vector<15x512xf32>, vector<2x512xf32> -> vector<2x512xf32>
    %c0_105 = arith.constant 0 : index
    %c0_106 = arith.constant 0 : index
    %109 = vector.load %arg6[%c0_105, %c0_106] : memref<1x512xf32, #tpu.memory_space<vmem>>, vector<1x512xf32>
    %110 = vector.broadcast %109 : vector<1x512xf32> to vector<2x512xf32>
    %111 = arith.addf %108, %110 : vector<2x512xf32>
    %c0_107 = arith.constant 0 : index
    %c6656_108 = arith.constant 6656 : index
    %112 = vector.load %arg15[%c0_107, %c6656_108] : memref<2x7680xf32, #tpu.memory_space<vmem>>, vector<2x512xf32>
    tpu.vector_store %arg15[%c0_107, %c6656_108], %111 {strides = array<i32>} : memref<2x7680xf32, #tpu.memory_space<vmem>>, vector<2x512xf32>,
    %c0_109 = arith.constant 0 : index
    %c7168 = arith.constant 7168 : index
    %113 = vector.load %arg5[%c0_109, %c7168] : memref<15x7680xf32, #tpu.memory_space<vmem>>, vector<15x512xf32>
    %cst_110 = arith.constant dense<0.000000e+00> : vector<2x512xf32>
    %114 = tpu.matmul %28, %113, %cst_110 {dimension_numbers = #tpu.dot_dimension_numbers<[1], [0], [0], [1], [0, 0, 1, 1], [], []>} : vector<2x15xf32>, vector<15x512xf32>, vector<2x512xf32> -> vector<2x512xf32>
    %c0_111 = arith.constant 0 : index
    %c0_112 = arith.constant 0 : index
    %115 = vector.load %arg6[%c0_111, %c0_112] : memref<1x512xf32, #tpu.memory_space<vmem>>, vector<1x512xf32>
    %116 = vector.broadcast %115 : vector<1x512xf32> to vector<2x512xf32>
    %117 = arith.addf %114, %116 : vector<2x512xf32>
    %c0_113 = arith.constant 0 : index
    %c7168_114 = arith.constant 7168 : index
    %118 = vector.load %arg15[%c0_113, %c7168_114] : memref<2x7680xf32, #tpu.memory_space<vmem>>, vector<2x512xf32>
    tpu.vector_store %arg15[%c0_113, %c7168_114], %117 {strides = array<i32>} : memref<2x7680xf32, #tpu.memory_space<vmem>>, vector<2x512xf32>,
    %cst_115 = arith.constant 0.000000e+00 : f32
    %119 = vector.broadcast %cst_115 : f32 to vector<2x128xf32>
    %cst_116 = arith.constant 0.000000e+00 : f32
    %120 = vector.broadcast %cst_116 : f32 to vector<2x128xf32>
    %c0_117 = arith.constant 0 : index
    %c0_118 = arith.constant 0 : index
    %121 = vector.load %arg15[%c0_117, %c0_118] : memref<2x7680xf32, #tpu.memory_space<vmem>>, vector<2x512xf32>
    %c0_119 = arith.constant 0 : index
    %c0_120 = arith.constant 0 : index
    %122 = vector.load %arg7[%c0_119, %c0_120] : memref<128x512xf32, #tpu.memory_space<vmem>>, vector<128x512xf32>
    %cst_121 = arith.constant dense<0.000000e+00> : vector<2x512xf32>
    %123 = tpu.matmul %119, %122, %cst_121 {dimension_numbers = #tpu.dot_dimension_numbers<[1], [0], [0], [1], [0, 0, 1, 1], [], []>} : vector<2x128xf32>, vector<128x512xf32>, vector<2x512xf32> -> vector<2x512xf32>
    %124 = arith.addf %121, %123 : vector<2x512xf32>
    %125 = vector.extract_strided_slice %124 {offsets = [0, 0], sizes = [2, 128], strides = [1, 1]} : vector<2x512xf32> to vector<2x128xf32>
    %126 = arith.negf %125 : vector<2x128xf32>
    %127 = math.exp %126 : vector<2x128xf32>
    %cst_122 = arith.constant 1.000000e+00 : f32
    %128 = vector.broadcast %cst_122 : f32 to vector<2x128xf32>
    %129 = arith.addf %128, %127 : vector<2x128xf32>
    %130 = arith.divf %128, %129 : vector<2x128xf32>
    %131 = vector.extract_strided_slice %124 {offsets = [0, 128], sizes = [2, 128], strides = [1, 1]} : vector<2x512xf32> to vector<2x128xf32>
    %132 = arith.negf %131 : vector<2x128xf32>
    %133 = math.exp %132 : vector<2x128xf32>
    %cst_123 = arith.constant 1.000000e+00 : f32
    %134 = vector.broadcast %cst_123 : f32 to vector<2x128xf32>
    %135 = arith.addf %134, %133 : vector<2x128xf32>
    %136 = arith.divf %134, %135 : vector<2x128xf32>
    %137 = vector.extract_strided_slice %124 {offsets = [0, 256], sizes = [2, 128], strides = [1, 1]} : vector<2x512xf32> to vector<2x128xf32>
    %138 = math.tanh %137 : vector<2x128xf32>
    %139 = vector.extract_strided_slice %124 {offsets = [0, 384], sizes = [2, 128], strides = [1, 1]} : vector<2x512xf32> to vector<2x128xf32>
    %140 = arith.negf %139 : vector<2x128xf32>
    %141 = math.exp %140 : vector<2x128xf32>
    %cst_124 = arith.constant 1.000000e+00 : f32
    %142 = vector.broadcast %cst_124 : f32 to vector<2x128xf32>
    %143 = arith.addf %142, %141 : vector<2x128xf32>
    %144 = arith.divf %142, %143 : vector<2x128xf32>
    %145 = arith.mulf %136, %120 : vector<2x128xf32>
    %146 = arith.mulf %130, %138 : vector<2x128xf32>
    %147 = arith.addf %145, %146 : vector<2x128xf32>
    %148 = math.tanh %147 : vector<2x128xf32>
    %149 = arith.mulf %144, %148 : vector<2x128xf32>
    %c0_125 = arith.constant 0 : index
    %c0_126 = arith.constant 0 : index
    %150 = vector.load %arg16[%c0_125, %c0_126] : memref<30x128xf32, #tpu.memory_space<vmem>>, vector<2x128xf32>
    tpu.vector_store %arg16[%c0_125, %c0_126], %149 {strides = array<i32>} : memref<30x128xf32, #tpu.memory_space<vmem>>, vector<2x128xf32>,
    %c28 = arith.constant 28 : index
    %c0_127 = arith.constant 0 : index
    %151 = vector.load %arg17[%c28, %c0_127] : memref<30x128xf32, #tpu.memory_space<vmem>>, vector<2x128xf32>
    tpu.vector_store %arg17[%c28, %c0_127], %149 {strides = array<i32>} : memref<30x128xf32, #tpu.memory_space<vmem>>, vector<2x128xf32>,
    %c0_128 = arith.constant 0 : index
    %c512_129 = arith.constant 512 : index
    %152 = vector.load %arg15[%c0_128, %c512_129] : memref<2x7680xf32, #tpu.memory_space<vmem>>, vector<2x512xf32>
    %c0_130 = arith.constant 0 : index
    %c0_131 = arith.constant 0 : index
    %153 = vector.load %arg7[%c0_130, %c0_131] : memref<128x512xf32, #tpu.memory_space<vmem>>, vector<128x512xf32>
    %cst_132 = arith.constant dense<0.000000e+00> : vector<2x512xf32>
    %154 = tpu.matmul %149, %153, %cst_132 {dimension_numbers = #tpu.dot_dimension_numbers<[1], [0], [0], [1], [0, 0, 1, 1], [], []>} : vector<2x128xf32>, vector<128x512xf32>, vector<2x512xf32> -> vector<2x512xf32>
    %155 = arith.addf %152, %154 : vector<2x512xf32>
    %156 = vector.extract_strided_slice %155 {offsets = [0, 0], sizes = [2, 128], strides = [1, 1]} : vector<2x512xf32> to vector<2x128xf32>
    %157 = arith.negf %156 : vector<2x128xf32>
    %158 = math.exp %157 : vector<2x128xf32>
    %cst_133 = arith.constant 1.000000e+00 : f32
    %159 = vector.broadcast %cst_133 : f32 to vector<2x128xf32>
    %160 = arith.addf %159, %158 : vector<2x128xf32>
    %161 = arith.divf %159, %160 : vector<2x128xf32>
    %162 = vector.extract_strided_slice %155 {offsets = [0, 128], sizes = [2, 128], strides = [1, 1]} : vector<2x512xf32> to vector<2x128xf32>
    %163 = arith.negf %162 : vector<2x128xf32>
    %164 = math.exp %163 : vector<2x128xf32>
    %cst_134 = arith.constant 1.000000e+00 : f32
    %165 = vector.broadcast %cst_134 : f32 to vector<2x128xf32>
    %166 = arith.addf %165, %164 : vector<2x128xf32>
    %167 = arith.divf %165, %166 : vector<2x128xf32>
    %168 = vector.extract_strided_slice %155 {offsets = [0, 256], sizes = [2, 128], strides = [1, 1]} : vector<2x512xf32> to vector<2x128xf32>
    %169 = math.tanh %168 : vector<2x128xf32>
    %170 = vector.extract_strided_slice %155 {offsets = [0, 384], sizes = [2, 128], strides = [1, 1]} : vector<2x512xf32> to vector<2x128xf32>
    %171 = arith.negf %170 : vector<2x128xf32>
    %172 = math.exp %171 : vector<2x128xf32>
    %cst_135 = arith.constant 1.000000e+00 : f32
    %173 = vector.broadcast %cst_135 : f32 to vector<2x128xf32>
    %174 = arith.addf %173, %172 : vector<2x128xf32>
    %175 = arith.divf %173, %174 : vector<2x128xf32>
    %176 = arith.mulf %167, %147 : vector<2x128xf32>
    %177 = arith.mulf %161, %169 : vector<2x128xf32>
    %178 = arith.addf %176, %177 : vector<2x128xf32>
    %179 = math.tanh %178 : vector<2x128xf32>
    %180 = arith.mulf %175, %179 : vector<2x128xf32>
    %c2_136 = arith.constant 2 : index
    %c0_137 = arith.constant 0 : index
    %181 = vector.load %arg16[%c2_136, %c0_137] : memref<30x128xf32, #tpu.memory_space<vmem>>, vector<2x128xf32>
    tpu.vector_store %arg16[%c2_136, %c0_137], %180 {strides = array<i32>} : memref<30x128xf32, #tpu.memory_space<vmem>>, vector<2x128xf32>,
    %c26 = arith.constant 26 : index
    %c0_138 = arith.constant 0 : index
    %182 = vector.load %arg17[%c26, %c0_138] : memref<30x128xf32, #tpu.memory_space<vmem>>, vector<2x128xf32>
    tpu.vector_store %arg17[%c26, %c0_138], %180 {strides = array<i32>} : memref<30x128xf32, #tpu.memory_space<vmem>>, vector<2x128xf32>,
    %c0_139 = arith.constant 0 : index
    %c1024_140 = arith.constant 1024 : index
    %183 = vector.load %arg15[%c0_139, %c1024_140] : memref<2x7680xf32, #tpu.memory_space<vmem>>, vector<2x512xf32>
    %c0_141 = arith.constant 0 : index
    %c0_142 = arith.constant 0 : index
    %184 = vector.load %arg7[%c0_141, %c0_142] : memref<128x512xf32, #tpu.memory_space<vmem>>, vector<128x512xf32>
    %cst_143 = arith.constant dense<0.000000e+00> : vector<2x512xf32>
    %185 = tpu.matmul %180, %184, %cst_143 {dimension_numbers = #tpu.dot_dimension_numbers<[1], [0], [0], [1], [0, 0, 1, 1], [], []>} : vector<2x128xf32>, vector<128x512xf32>, vector<2x512xf32> -> vector<2x512xf32>
    %186 = arith.addf %183, %185 : vector<2x512xf32>
    %187 = vector.extract_strided_slice %186 {offsets = [0, 0], sizes = [2, 128], strides = [1, 1]} : vector<2x512xf32> to vector<2x128xf32>
    %188 = arith.negf %187 : vector<2x128xf32>
    %189 = math.exp %188 : vector<2x128xf32>
    %cst_144 = arith.constant 1.000000e+00 : f32
    %190 = vector.broadcast %cst_144 : f32 to vector<2x128xf32>
    %191 = arith.addf %190, %189 : vector<2x128xf32>
    %192 = arith.divf %190, %191 : vector<2x128xf32>
    %193 = vector.extract_strided_slice %186 {offsets = [0, 128], sizes = [2, 128], strides = [1, 1]} : vector<2x512xf32> to vector<2x128xf32>
    %194 = arith.negf %193 : vector<2x128xf32>
    %195 = math.exp %194 : vector<2x128xf32>
    %cst_145 = arith.constant 1.000000e+00 : f32
    %196 = vector.broadcast %cst_145 : f32 to vector<2x128xf32>
    %197 = arith.addf %196, %195 : vector<2x128xf32>
    %198 = arith.divf %196, %197 : vector<2x128xf32>
    %199 = vector.extract_strided_slice %186 {offsets = [0, 256], sizes = [2, 128], strides = [1, 1]} : vector<2x512xf32> to vector<2x128xf32>
    %200 = math.tanh %199 : vector<2x128xf32>
    %201 = vector.extract_strided_slice %186 {offsets = [0, 384], sizes = [2, 128], strides = [1, 1]} : vector<2x512xf32> to vector<2x128xf32>
    %202 = arith.negf %201 : vector<2x128xf32>
    %203 = math.exp %202 : vector<2x128xf32>
    %cst_146 = arith.constant 1.000000e+00 : f32
    %204 = vector.broadcast %cst_146 : f32 to vector<2x128xf32>
    %205 = arith.addf %204, %203 : vector<2x128xf32>
    %206 = arith.divf %204, %205 : vector<2x128xf32>
    %207 = arith.mulf %198, %178 : vector<2x128xf32>
    %208 = arith.mulf %192, %200 : vector<2x128xf32>
    %209 = arith.addf %207, %208 : vector<2x128xf32>
    %210 = math.tanh %209 : vector<2x128xf32>
    %211 = arith.mulf %206, %210 : vector<2x128xf32>
    %c4 = arith.constant 4 : index
    %c0_147 = arith.constant 0 : index
    %212 = vector.load %arg16[%c4, %c0_147] : memref<30x128xf32, #tpu.memory_space<vmem>>, vector<2x128xf32>
    tpu.vector_store %arg16[%c4, %c0_147], %211 {strides = array<i32>} : memref<30x128xf32, #tpu.memory_space<vmem>>, vector<2x128xf32>,
    %c24 = arith.constant 24 : index
    %c0_148 = arith.constant 0 : index
    %213 = vector.load %arg17[%c24, %c0_148] : memref<30x128xf32, #tpu.memory_space<vmem>>, vector<2x128xf32>
    tpu.vector_store %arg17[%c24, %c0_148], %211 {strides = array<i32>} : memref<30x128xf32, #tpu.memory_space<vmem>>, vector<2x128xf32>,
    %c0_149 = arith.constant 0 : index
    %c1536_150 = arith.constant 1536 : index
    %214 = vector.load %arg15[%c0_149, %c1536_150] : memref<2x7680xf32, #tpu.memory_space<vmem>>, vector<2x512xf32>
    %c0_151 = arith.constant 0 : index
    %c0_152 = arith.constant 0 : index
    %215 = vector.load %arg7[%c0_151, %c0_152] : memref<128x512xf32, #tpu.memory_space<vmem>>, vector<128x512xf32>
    %cst_153 = arith.constant dense<0.000000e+00> : vector<2x512xf32>
    %216 = tpu.matmul %211, %215, %cst_153 {dimension_numbers = #tpu.dot_dimension_numbers<[1], [0], [0], [1], [0, 0, 1, 1], [], []>} : vector<2x128xf32>, vector<128x512xf32>, vector<2x512xf32> -> vector<2x512xf32>
    %217 = arith.addf %214, %216 : vector<2x512xf32>
    %218 = vector.extract_strided_slice %217 {offsets = [0, 0], sizes = [2, 128], strides = [1, 1]} : vector<2x512xf32> to vector<2x128xf32>
    %219 = arith.negf %218 : vector<2x128xf32>
    %220 = math.exp %219 : vector<2x128xf32>
    %cst_154 = arith.constant 1.000000e+00 : f32
    %221 = vector.broadcast %cst_154 : f32 to vector<2x128xf32>
    %222 = arith.addf %221, %220 : vector<2x128xf32>
    %223 = arith.divf %221, %222 : vector<2x128xf32>
    %224 = vector.extract_strided_slice %217 {offsets = [0, 128], sizes = [2, 128], strides = [1, 1]} : vector<2x512xf32> to vector<2x128xf32>
    %225 = arith.negf %224 : vector<2x128xf32>
    %226 = math.exp %225 : vector<2x128xf32>
    %cst_155 = arith.constant 1.000000e+00 : f32
    %227 = vector.broadcast %cst_155 : f32 to vector<2x128xf32>
    %228 = arith.addf %227, %226 : vector<2x128xf32>
    %229 = arith.divf %227, %228 : vector<2x128xf32>
    %230 = vector.extract_strided_slice %217 {offsets = [0, 256], sizes = [2, 128], strides = [1, 1]} : vector<2x512xf32> to vector<2x128xf32>
    %231 = math.tanh %230 : vector<2x128xf32>
    %232 = vector.extract_strided_slice %217 {offsets = [0, 384], sizes = [2, 128], strides = [1, 1]} : vector<2x512xf32> to vector<2x128xf32>
    %233 = arith.negf %232 : vector<2x128xf32>
    %234 = math.exp %233 : vector<2x128xf32>
    %cst_156 = arith.constant 1.000000e+00 : f32
    %235 = vector.broadcast %cst_156 : f32 to vector<2x128xf32>
    %236 = arith.addf %235, %234 : vector<2x128xf32>
    %237 = arith.divf %235, %236 : vector<2x128xf32>
    %238 = arith.mulf %229, %209 : vector<2x128xf32>
    %239 = arith.mulf %223, %231 : vector<2x128xf32>
    %240 = arith.addf %238, %239 : vector<2x128xf32>
    %241 = math.tanh %240 : vector<2x128xf32>
    %242 = arith.mulf %237, %241 : vector<2x128xf32>
    %c6 = arith.constant 6 : index
    %c0_157 = arith.constant 0 : index
    %243 = vector.load %arg16[%c6, %c0_157] : memref<30x128xf32, #tpu.memory_space<vmem>>, vector<2x128xf32>
    tpu.vector_store %arg16[%c6, %c0_157], %242 {strides = array<i32>} : memref<30x128xf32, #tpu.memory_space<vmem>>, vector<2x128xf32>,
    %c22 = arith.constant 22 : index
    %c0_158 = arith.constant 0 : index
    %244 = vector.load %arg17[%c22, %c0_158] : memref<30x128xf32, #tpu.memory_space<vmem>>, vector<2x128xf32>
    tpu.vector_store %arg17[%c22, %c0_158], %242 {strides = array<i32>} : memref<30x128xf32, #tpu.memory_space<vmem>>, vector<2x128xf32>,
    %c0_159 = arith.constant 0 : index
    %c2048_160 = arith.constant 2048 : index
    %245 = vector.load %arg15[%c0_159, %c2048_160] : memref<2x7680xf32, #tpu.memory_space<vmem>>, vector<2x512xf32>
    %c0_161 = arith.constant 0 : index
    %c0_162 = arith.constant 0 : index
    %246 = vector.load %arg7[%c0_161, %c0_162] : memref<128x512xf32, #tpu.memory_space<vmem>>, vector<128x512xf32>
    %cst_163 = arith.constant dense<0.000000e+00> : vector<2x512xf32>
    %247 = tpu.matmul %242, %246, %cst_163 {dimension_numbers = #tpu.dot_dimension_numbers<[1], [0], [0], [1], [0, 0, 1, 1], [], []>} : vector<2x128xf32>, vector<128x512xf32>, vector<2x512xf32> -> vector<2x512xf32>
    %248 = arith.addf %245, %247 : vector<2x512xf32>
    %249 = vector.extract_strided_slice %248 {offsets = [0, 0], sizes = [2, 128], strides = [1, 1]} : vector<2x512xf32> to vector<2x128xf32>
    %250 = arith.negf %249 : vector<2x128xf32>
    %251 = math.exp %250 : vector<2x128xf32>
    %cst_164 = arith.constant 1.000000e+00 : f32
    %252 = vector.broadcast %cst_164 : f32 to vector<2x128xf32>
    %253 = arith.addf %252, %251 : vector<2x128xf32>
    %254 = arith.divf %252, %253 : vector<2x128xf32>
    %255 = vector.extract_strided_slice %248 {offsets = [0, 128], sizes = [2, 128], strides = [1, 1]} : vector<2x512xf32> to vector<2x128xf32>
    %256 = arith.negf %255 : vector<2x128xf32>
    %257 = math.exp %256 : vector<2x128xf32>
    %cst_165 = arith.constant 1.000000e+00 : f32
    %258 = vector.broadcast %cst_165 : f32 to vector<2x128xf32>
    %259 = arith.addf %258, %257 : vector<2x128xf32>
    %260 = arith.divf %258, %259 : vector<2x128xf32>
    %261 = vector.extract_strided_slice %248 {offsets = [0, 256], sizes = [2, 128], strides = [1, 1]} : vector<2x512xf32> to vector<2x128xf32>
    %262 = math.tanh %261 : vector<2x128xf32>
    %263 = vector.extract_strided_slice %248 {offsets = [0, 384], sizes = [2, 128], strides = [1, 1]} : vector<2x512xf32> to vector<2x128xf32>
    %264 = arith.negf %263 : vector<2x128xf32>
    %265 = math.exp %264 : vector<2x128xf32>
    %cst_166 = arith.constant 1.000000e+00 : f32
    %266 = vector.broadcast %cst_166 : f32 to vector<2x128xf32>
    %267 = arith.addf %266, %265 : vector<2x128xf32>
    %268 = arith.divf %266, %267 : vector<2x128xf32>
    %269 = arith.mulf %260, %240 : vector<2x128xf32>
    %270 = arith.mulf %254, %262 : vector<2x128xf32>
    %271 = arith.addf %269, %270 : vector<2x128xf32>
    %272 = math.tanh %271 : vector<2x128xf32>
    %273 = arith.mulf %268, %272 : vector<2x128xf32>
    %c8 = arith.constant 8 : index
    %c0_167 = arith.constant 0 : index
    %274 = vector.load %arg16[%c8, %c0_167] : memref<30x128xf32, #tpu.memory_space<vmem>>, vector<2x128xf32>
    tpu.vector_store %arg16[%c8, %c0_167], %273 {strides = array<i32>} : memref<30x128xf32, #tpu.memory_space<vmem>>, vector<2x128xf32>,
    %c20 = arith.constant 20 : index
    %c0_168 = arith.constant 0 : index
    %275 = vector.load %arg17[%c20, %c0_168] : memref<30x128xf32, #tpu.memory_space<vmem>>, vector<2x128xf32>
    tpu.vector_store %arg17[%c20, %c0_168], %273 {strides = array<i32>} : memref<30x128xf32, #tpu.memory_space<vmem>>, vector<2x128xf32>,
    %c0_169 = arith.constant 0 : index
    %c2560_170 = arith.constant 2560 : index
    %276 = vector.load %arg15[%c0_169, %c2560_170] : memref<2x7680xf32, #tpu.memory_space<vmem>>, vector<2x512xf32>
    %c0_171 = arith.constant 0 : index
    %c0_172 = arith.constant 0 : index
    %277 = vector.load %arg7[%c0_171, %c0_172] : memref<128x512xf32, #tpu.memory_space<vmem>>, vector<128x512xf32>
    %cst_173 = arith.constant dense<0.000000e+00> : vector<2x512xf32>
    %278 = tpu.matmul %273, %277, %cst_173 {dimension_numbers = #tpu.dot_dimension_numbers<[1], [0], [0], [1], [0, 0, 1, 1], [], []>} : vector<2x128xf32>, vector<128x512xf32>, vector<2x512xf32> -> vector<2x512xf32>
    %279 = arith.addf %276, %278 : vector<2x512xf32>
    %280 = vector.extract_strided_slice %279 {offsets = [0, 0], sizes = [2, 128], strides = [1, 1]} : vector<2x512xf32> to vector<2x128xf32>
    %281 = arith.negf %280 : vector<2x128xf32>
    %282 = math.exp %281 : vector<2x128xf32>
    %cst_174 = arith.constant 1.000000e+00 : f32
    %283 = vector.broadcast %cst_174 : f32 to vector<2x128xf32>
    %284 = arith.addf %283, %282 : vector<2x128xf32>
    %285 = arith.divf %283, %284 : vector<2x128xf32>
    %286 = vector.extract_strided_slice %279 {offsets = [0, 128], sizes = [2, 128], strides = [1, 1]} : vector<2x512xf32> to vector<2x128xf32>
    %287 = arith.negf %286 : vector<2x128xf32>
    %288 = math.exp %287 : vector<2x128xf32>
    %cst_175 = arith.constant 1.000000e+00 : f32
    %289 = vector.broadcast %cst_175 : f32 to vector<2x128xf32>
    %290 = arith.addf %289, %288 : vector<2x128xf32>
    %291 = arith.divf %289, %290 : vector<2x128xf32>
    %292 = vector.extract_strided_slice %279 {offsets = [0, 256], sizes = [2, 128], strides = [1, 1]} : vector<2x512xf32> to vector<2x128xf32>
    %293 = math.tanh %292 : vector<2x128xf32>
    %294 = vector.extract_strided_slice %279 {offsets = [0, 384], sizes = [2, 128], strides = [1, 1]} : vector<2x512xf32> to vector<2x128xf32>
    %295 = arith.negf %294 : vector<2x128xf32>
    %296 = math.exp %295 : vector<2x128xf32>
    %cst_176 = arith.constant 1.000000e+00 : f32
    %297 = vector.broadcast %cst_176 : f32 to vector<2x128xf32>
    %298 = arith.addf %297, %296 : vector<2x128xf32>
    %299 = arith.divf %297, %298 : vector<2x128xf32>
    %300 = arith.mulf %291, %271 : vector<2x128xf32>
    %301 = arith.mulf %285, %293 : vector<2x128xf32>
    %302 = arith.addf %300, %301 : vector<2x128xf32>
    %303 = math.tanh %302 : vector<2x128xf32>
    %304 = arith.mulf %299, %303 : vector<2x128xf32>
    %c10 = arith.constant 10 : index
    %c0_177 = arith.constant 0 : index
    %305 = vector.load %arg16[%c10, %c0_177] : memref<30x128xf32, #tpu.memory_space<vmem>>, vector<2x128xf32>
    tpu.vector_store %arg16[%c10, %c0_177], %304 {strides = array<i32>} : memref<30x128xf32, #tpu.memory_space<vmem>>, vector<2x128xf32>,
    %c18 = arith.constant 18 : index
    %c0_178 = arith.constant 0 : index
    %306 = vector.load %arg17[%c18, %c0_178] : memref<30x128xf32, #tpu.memory_space<vmem>>, vector<2x128xf32>
    tpu.vector_store %arg17[%c18, %c0_178], %304 {strides = array<i32>} : memref<30x128xf32, #tpu.memory_space<vmem>>, vector<2x128xf32>,
    %c0_179 = arith.constant 0 : index
    %c3072_180 = arith.constant 3072 : index
    %307 = vector.load %arg15[%c0_179, %c3072_180] : memref<2x7680xf32, #tpu.memory_space<vmem>>, vector<2x512xf32>
    %c0_181 = arith.constant 0 : index
    %c0_182 = arith.constant 0 : index
    %308 = vector.load %arg7[%c0_181, %c0_182] : memref<128x512xf32, #tpu.memory_space<vmem>>, vector<128x512xf32>
    %cst_183 = arith.constant dense<0.000000e+00> : vector<2x512xf32>
    %309 = tpu.matmul %304, %308, %cst_183 {dimension_numbers = #tpu.dot_dimension_numbers<[1], [0], [0], [1], [0, 0, 1, 1], [], []>} : vector<2x128xf32>, vector<128x512xf32>, vector<2x512xf32> -> vector<2x512xf32>
    %310 = arith.addf %307, %309 : vector<2x512xf32>
    %311 = vector.extract_strided_slice %310 {offsets = [0, 0], sizes = [2, 128], strides = [1, 1]} : vector<2x512xf32> to vector<2x128xf32>
    %312 = arith.negf %311 : vector<2x128xf32>
    %313 = math.exp %312 : vector<2x128xf32>
    %cst_184 = arith.constant 1.000000e+00 : f32
    %314 = vector.broadcast %cst_184 : f32 to vector<2x128xf32>
    %315 = arith.addf %314, %313 : vector<2x128xf32>
    %316 = arith.divf %314, %315 : vector<2x128xf32>
    %317 = vector.extract_strided_slice %310 {offsets = [0, 128], sizes = [2, 128], strides = [1, 1]} : vector<2x512xf32> to vector<2x128xf32>
    %318 = arith.negf %317 : vector<2x128xf32>
    %319 = math.exp %318 : vector<2x128xf32>
    %cst_185 = arith.constant 1.000000e+00 : f32
    %320 = vector.broadcast %cst_185 : f32 to vector<2x128xf32>
    %321 = arith.addf %320, %319 : vector<2x128xf32>
    %322 = arith.divf %320, %321 : vector<2x128xf32>
    %323 = vector.extract_strided_slice %310 {offsets = [0, 256], sizes = [2, 128], strides = [1, 1]} : vector<2x512xf32> to vector<2x128xf32>
    %324 = math.tanh %323 : vector<2x128xf32>
    %325 = vector.extract_strided_slice %310 {offsets = [0, 384], sizes = [2, 128], strides = [1, 1]} : vector<2x512xf32> to vector<2x128xf32>
    %326 = arith.negf %325 : vector<2x128xf32>
    %327 = math.exp %326 : vector<2x128xf32>
    %cst_186 = arith.constant 1.000000e+00 : f32
    %328 = vector.broadcast %cst_186 : f32 to vector<2x128xf32>
    %329 = arith.addf %328, %327 : vector<2x128xf32>
    %330 = arith.divf %328, %329 : vector<2x128xf32>
    %331 = arith.mulf %322, %302 : vector<2x128xf32>
    %332 = arith.mulf %316, %324 : vector<2x128xf32>
    %333 = arith.addf %331, %332 : vector<2x128xf32>
    %334 = math.tanh %333 : vector<2x128xf32>
    %335 = arith.mulf %330, %334 : vector<2x128xf32>
    %c12 = arith.constant 12 : index
    %c0_187 = arith.constant 0 : index
    %336 = vector.load %arg16[%c12, %c0_187] : memref<30x128xf32, #tpu.memory_space<vmem>>, vector<2x128xf32>
    tpu.vector_store %arg16[%c12, %c0_187], %335 {strides = array<i32>} : memref<30x128xf32, #tpu.memory_space<vmem>>, vector<2x128xf32>,
    %c16 = arith.constant 16 : index
    %c0_188 = arith.constant 0 : index
    %337 = vector.load %arg17[%c16, %c0_188] : memref<30x128xf32, #tpu.memory_space<vmem>>, vector<2x128xf32>
    tpu.vector_store %arg17[%c16, %c0_188], %335 {strides = array<i32>} : memref<30x128xf32, #tpu.memory_space<vmem>>, vector<2x128xf32>,
    %c0_189 = arith.constant 0 : index
    %c3584_190 = arith.constant 3584 : index
    %338 = vector.load %arg15[%c0_189, %c3584_190] : memref<2x7680xf32, #tpu.memory_space<vmem>>, vector<2x512xf32>
    %c0_191 = arith.constant 0 : index
    %c0_192 = arith.constant 0 : index
    %339 = vector.load %arg7[%c0_191, %c0_192] : memref<128x512xf32, #tpu.memory_space<vmem>>, vector<128x512xf32>
    %cst_193 = arith.constant dense<0.000000e+00> : vector<2x512xf32>
    %340 = tpu.matmul %335, %339, %cst_193 {dimension_numbers = #tpu.dot_dimension_numbers<[1], [0], [0], [1], [0, 0, 1, 1], [], []>} : vector<2x128xf32>, vector<128x512xf32>, vector<2x512xf32> -> vector<2x512xf32>
    %341 = arith.addf %338, %340 : vector<2x512xf32>
    %342 = vector.extract_strided_slice %341 {offsets = [0, 0], sizes = [2, 128], strides = [1, 1]} : vector<2x512xf32> to vector<2x128xf32>
    %343 = arith.negf %342 : vector<2x128xf32>
    %344 = math.exp %343 : vector<2x128xf32>
    %cst_194 = arith.constant 1.000000e+00 : f32
    %345 = vector.broadcast %cst_194 : f32 to vector<2x128xf32>
    %346 = arith.addf %345, %344 : vector<2x128xf32>
    %347 = arith.divf %345, %346 : vector<2x128xf32>
    %348 = vector.extract_strided_slice %341 {offsets = [0, 128], sizes = [2, 128], strides = [1, 1]} : vector<2x512xf32> to vector<2x128xf32>
    %349 = arith.negf %348 : vector<2x128xf32>
    %350 = math.exp %349 : vector<2x128xf32>
    %cst_195 = arith.constant 1.000000e+00 : f32
    %351 = vector.broadcast %cst_195 : f32 to vector<2x128xf32>
    %352 = arith.addf %351, %350 : vector<2x128xf32>
    %353 = arith.divf %351, %352 : vector<2x128xf32>
    %354 = vector.extract_strided_slice %341 {offsets = [0, 256], sizes = [2, 128], strides = [1, 1]} : vector<2x512xf32> to vector<2x128xf32>
    %355 = math.tanh %354 : vector<2x128xf32>
    %356 = vector.extract_strided_slice %341 {offsets = [0, 384], sizes = [2, 128], strides = [1, 1]} : vector<2x512xf32> to vector<2x128xf32>
    %357 = arith.negf %356 : vector<2x128xf32>
    %358 = math.exp %357 : vector<2x128xf32>
    %cst_196 = arith.constant 1.000000e+00 : f32
    %359 = vector.broadcast %cst_196 : f32 to vector<2x128xf32>
    %360 = arith.addf %359, %358 : vector<2x128xf32>
    %361 = arith.divf %359, %360 : vector<2x128xf32>
    %362 = arith.mulf %353, %333 : vector<2x128xf32>
    %363 = arith.mulf %347, %355 : vector<2x128xf32>
    %364 = arith.addf %362, %363 : vector<2x128xf32>
    %365 = math.tanh %364 : vector<2x128xf32>
    %366 = arith.mulf %361, %365 : vector<2x128xf32>
    %c14 = arith.constant 14 : index
    %c0_197 = arith.constant 0 : index
    %367 = vector.load %arg16[%c14, %c0_197] : memref<30x128xf32, #tpu.memory_space<vmem>>, vector<2x128xf32>
    tpu.vector_store %arg16[%c14, %c0_197], %366 {strides = array<i32>} : memref<30x128xf32, #tpu.memory_space<vmem>>, vector<2x128xf32>,
    %c14_198 = arith.constant 14 : index
    %c0_199 = arith.constant 0 : index
    %368 = vector.load %arg17[%c14_198, %c0_199] : memref<30x128xf32, #tpu.memory_space<vmem>>, vector<2x128xf32>
    tpu.vector_store %arg17[%c14_198, %c0_199], %366 {strides = array<i32>} : memref<30x128xf32, #tpu.memory_space<vmem>>, vector<2x128xf32>,
    %c0_200 = arith.constant 0 : index
    %c4096_201 = arith.constant 4096 : index
    %369 = vector.load %arg15[%c0_200, %c4096_201] : memref<2x7680xf32, #tpu.memory_space<vmem>>, vector<2x512xf32>
    %c0_202 = arith.constant 0 : index
    %c0_203 = arith.constant 0 : index
    %370 = vector.load %arg7[%c0_202, %c0_203] : memref<128x512xf32, #tpu.memory_space<vmem>>, vector<128x512xf32>
    %cst_204 = arith.constant dense<0.000000e+00> : vector<2x512xf32>
    %371 = tpu.matmul %366, %370, %cst_204 {dimension_numbers = #tpu.dot_dimension_numbers<[1], [0], [0], [1], [0, 0, 1, 1], [], []>} : vector<2x128xf32>, vector<128x512xf32>, vector<2x512xf32> -> vector<2x512xf32>
    %372 = arith.addf %369, %371 : vector<2x512xf32>
    %373 = vector.extract_strided_slice %372 {offsets = [0, 0], sizes = [2, 128], strides = [1, 1]} : vector<2x512xf32> to vector<2x128xf32>
    %374 = arith.negf %373 : vector<2x128xf32>
    %375 = math.exp %374 : vector<2x128xf32>
    %cst_205 = arith.constant 1.000000e+00 : f32
    %376 = vector.broadcast %cst_205 : f32 to vector<2x128xf32>
    %377 = arith.addf %376, %375 : vector<2x128xf32>
    %378 = arith.divf %376, %377 : vector<2x128xf32>
    %379 = vector.extract_strided_slice %372 {offsets = [0, 128], sizes = [2, 128], strides = [1, 1]} : vector<2x512xf32> to vector<2x128xf32>
    %380 = arith.negf %379 : vector<2x128xf32>
    %381 = math.exp %380 : vector<2x128xf32>
    %cst_206 = arith.constant 1.000000e+00 : f32
    %382 = vector.broadcast %cst_206 : f32 to vector<2x128xf32>
    %383 = arith.addf %382, %381 : vector<2x128xf32>
    %384 = arith.divf %382, %383 : vector<2x128xf32>
    %385 = vector.extract_strided_slice %372 {offsets = [0, 256], sizes = [2, 128], strides = [1, 1]} : vector<2x512xf32> to vector<2x128xf32>
    %386 = math.tanh %385 : vector<2x128xf32>
    %387 = vector.extract_strided_slice %372 {offsets = [0, 384], sizes = [2, 128], strides = [1, 1]} : vector<2x512xf32> to vector<2x128xf32>
    %388 = arith.negf %387 : vector<2x128xf32>
    %389 = math.exp %388 : vector<2x128xf32>
    %cst_207 = arith.constant 1.000000e+00 : f32
    %390 = vector.broadcast %cst_207 : f32 to vector<2x128xf32>
    %391 = arith.addf %390, %389 : vector<2x128xf32>
    %392 = arith.divf %390, %391 : vector<2x128xf32>
    %393 = arith.mulf %384, %364 : vector<2x128xf32>
    %394 = arith.mulf %378, %386 : vector<2x128xf32>
    %395 = arith.addf %393, %394 : vector<2x128xf32>
    %396 = math.tanh %395 : vector<2x128xf32>
    %397 = arith.mulf %392, %396 : vector<2x128xf32>
    %c16_208 = arith.constant 16 : index
    %c0_209 = arith.constant 0 : index
    %398 = vector.load %arg16[%c16_208, %c0_209] : memref<30x128xf32, #tpu.memory_space<vmem>>, vector<2x128xf32>
    tpu.vector_store %arg16[%c16_208, %c0_209], %397 {strides = array<i32>} : memref<30x128xf32, #tpu.memory_space<vmem>>, vector<2x128xf32>,
    %c12_210 = arith.constant 12 : index
    %c0_211 = arith.constant 0 : index
    %399 = vector.load %arg17[%c12_210, %c0_211] : memref<30x128xf32, #tpu.memory_space<vmem>>, vector<2x128xf32>
    tpu.vector_store %arg17[%c12_210, %c0_211], %397 {strides = array<i32>} : memref<30x128xf32, #tpu.memory_space<vmem>>, vector<2x128xf32>,
    %c0_212 = arith.constant 0 : index
    %c4608_213 = arith.constant 4608 : index
    %400 = vector.load %arg15[%c0_212, %c4608_213] : memref<2x7680xf32, #tpu.memory_space<vmem>>, vector<2x512xf32>
    %c0_214 = arith.constant 0 : index
    %c0_215 = arith.constant 0 : index
    %401 = vector.load %arg7[%c0_214, %c0_215] : memref<128x512xf32, #tpu.memory_space<vmem>>, vector<128x512xf32>
    %cst_216 = arith.constant dense<0.000000e+00> : vector<2x512xf32>
    %402 = tpu.matmul %397, %401, %cst_216 {dimension_numbers = #tpu.dot_dimension_numbers<[1], [0], [0], [1], [0, 0, 1, 1], [], []>} : vector<2x128xf32>, vector<128x512xf32>, vector<2x512xf32> -> vector<2x512xf32>
    %403 = arith.addf %400, %402 : vector<2x512xf32>
    %404 = vector.extract_strided_slice %403 {offsets = [0, 0], sizes = [2, 128], strides = [1, 1]} : vector<2x512xf32> to vector<2x128xf32>
    %405 = arith.negf %404 : vector<2x128xf32>
    %406 = math.exp %405 : vector<2x128xf32>
    %cst_217 = arith.constant 1.000000e+00 : f32
    %407 = vector.broadcast %cst_217 : f32 to vector<2x128xf32>
    %408 = arith.addf %407, %406 : vector<2x128xf32>
    %409 = arith.divf %407, %408 : vector<2x128xf32>
    %410 = vector.extract_strided_slice %403 {offsets = [0, 128], sizes = [2, 128], strides = [1, 1]} : vector<2x512xf32> to vector<2x128xf32>
    %411 = arith.negf %410 : vector<2x128xf32>
    %412 = math.exp %411 : vector<2x128xf32>
    %cst_218 = arith.constant 1.000000e+00 : f32
    %413 = vector.broadcast %cst_218 : f32 to vector<2x128xf32>
    %414 = arith.addf %413, %412 : vector<2x128xf32>
    %415 = arith.divf %413, %414 : vector<2x128xf32>
    %416 = vector.extract_strided_slice %403 {offsets = [0, 256], sizes = [2, 128], strides = [1, 1]} : vector<2x512xf32> to vector<2x128xf32>
    %417 = math.tanh %416 : vector<2x128xf32>
    %418 = vector.extract_strided_slice %403 {offsets = [0, 384], sizes = [2, 128], strides = [1, 1]} : vector<2x512xf32> to vector<2x128xf32>
    %419 = arith.negf %418 : vector<2x128xf32>
    %420 = math.exp %419 : vector<2x128xf32>
    %cst_219 = arith.constant 1.000000e+00 : f32
    %421 = vector.broadcast %cst_219 : f32 to vector<2x128xf32>
    %422 = arith.addf %421, %420 : vector<2x128xf32>
    %423 = arith.divf %421, %422 : vector<2x128xf32>
    %424 = arith.mulf %415, %395 : vector<2x128xf32>
    %425 = arith.mulf %409, %417 : vector<2x128xf32>
    %426 = arith.addf %424, %425 : vector<2x128xf32>
    %427 = math.tanh %426 : vector<2x128xf32>
    %428 = arith.mulf %423, %427 : vector<2x128xf32>
    %c18_220 = arith.constant 18 : index
    %c0_221 = arith.constant 0 : index
    %429 = vector.load %arg16[%c18_220, %c0_221] : memref<30x128xf32, #tpu.memory_space<vmem>>, vector<2x128xf32>
    tpu.vector_store %arg16[%c18_220, %c0_221], %428 {strides = array<i32>} : memref<30x128xf32, #tpu.memory_space<vmem>>, vector<2x128xf32>,
    %c10_222 = arith.constant 10 : index
    %c0_223 = arith.constant 0 : index
    %430 = vector.load %arg17[%c10_222, %c0_223] : memref<30x128xf32, #tpu.memory_space<vmem>>, vector<2x128xf32>
    tpu.vector_store %arg17[%c10_222, %c0_223], %428 {strides = array<i32>} : memref<30x128xf32, #tpu.memory_space<vmem>>, vector<2x128xf32>,
    %c0_224 = arith.constant 0 : index
    %c5120_225 = arith.constant 5120 : index
    %431 = vector.load %arg15[%c0_224, %c5120_225] : memref<2x7680xf32, #tpu.memory_space<vmem>>, vector<2x512xf32>
    %c0_226 = arith.constant 0 : index
    %c0_227 = arith.constant 0 : index
    %432 = vector.load %arg7[%c0_226, %c0_227] : memref<128x512xf32, #tpu.memory_space<vmem>>, vector<128x512xf32>
    %cst_228 = arith.constant dense<0.000000e+00> : vector<2x512xf32>
    %433 = tpu.matmul %428, %432, %cst_228 {dimension_numbers = #tpu.dot_dimension_numbers<[1], [0], [0], [1], [0, 0, 1, 1], [], []>} : vector<2x128xf32>, vector<128x512xf32>, vector<2x512xf32> -> vector<2x512xf32>
    %434 = arith.addf %431, %433 : vector<2x512xf32>
    %435 = vector.extract_strided_slice %434 {offsets = [0, 0], sizes = [2, 128], strides = [1, 1]} : vector<2x512xf32> to vector<2x128xf32>
    %436 = arith.negf %435 : vector<2x128xf32>
    %437 = math.exp %436 : vector<2x128xf32>
    %cst_229 = arith.constant 1.000000e+00 : f32
    %438 = vector.broadcast %cst_229 : f32 to vector<2x128xf32>
    %439 = arith.addf %438, %437 : vector<2x128xf32>
    %440 = arith.divf %438, %439 : vector<2x128xf32>
    %441 = vector.extract_strided_slice %434 {offsets = [0, 128], sizes = [2, 128], strides = [1, 1]} : vector<2x512xf32> to vector<2x128xf32>
    %442 = arith.negf %441 : vector<2x128xf32>
    %443 = math.exp %442 : vector<2x128xf32>
    %cst_230 = arith.constant 1.000000e+00 : f32
    %444 = vector.broadcast %cst_230 : f32 to vector<2x128xf32>
    %445 = arith.addf %444, %443 : vector<2x128xf32>
    %446 = arith.divf %444, %445 : vector<2x128xf32>
    %447 = vector.extract_strided_slice %434 {offsets = [0, 256], sizes = [2, 128], strides = [1, 1]} : vector<2x512xf32> to vector<2x128xf32>
    %448 = math.tanh %447 : vector<2x128xf32>
    %449 = vector.extract_strided_slice %434 {offsets = [0, 384], sizes = [2, 128], strides = [1, 1]} : vector<2x512xf32> to vector<2x128xf32>
    %450 = arith.negf %449 : vector<2x128xf32>
    %451 = math.exp %450 : vector<2x128xf32>
    %cst_231 = arith.constant 1.000000e+00 : f32
    %452 = vector.broadcast %cst_231 : f32 to vector<2x128xf32>
    %453 = arith.addf %452, %451 : vector<2x128xf32>
    %454 = arith.divf %452, %453 : vector<2x128xf32>
    %455 = arith.mulf %446, %426 : vector<2x128xf32>
    %456 = arith.mulf %440, %448 : vector<2x128xf32>
    %457 = arith.addf %455, %456 : vector<2x128xf32>
    %458 = math.tanh %457 : vector<2x128xf32>
    %459 = arith.mulf %454, %458 : vector<2x128xf32>
    %c20_232 = arith.constant 20 : index
    %c0_233 = arith.constant 0 : index
    %460 = vector.load %arg16[%c20_232, %c0_233] : memref<30x128xf32, #tpu.memory_space<vmem>>, vector<2x128xf32>
    tpu.vector_store %arg16[%c20_232, %c0_233], %459 {strides = array<i32>} : memref<30x128xf32, #tpu.memory_space<vmem>>, vector<2x128xf32>,
    %c8_234 = arith.constant 8 : index
    %c0_235 = arith.constant 0 : index
    %461 = vector.load %arg17[%c8_234, %c0_235] : memref<30x128xf32, #tpu.memory_space<vmem>>, vector<2x128xf32>
    tpu.vector_store %arg17[%c8_234, %c0_235], %459 {strides = array<i32>} : memref<30x128xf32, #tpu.memory_space<vmem>>, vector<2x128xf32>,
    %c0_236 = arith.constant 0 : index
    %c5632_237 = arith.constant 5632 : index
    %462 = vector.load %arg15[%c0_236, %c5632_237] : memref<2x7680xf32, #tpu.memory_space<vmem>>, vector<2x512xf32>
    %c0_238 = arith.constant 0 : index
    %c0_239 = arith.constant 0 : index
    %463 = vector.load %arg7[%c0_238, %c0_239] : memref<128x512xf32, #tpu.memory_space<vmem>>, vector<128x512xf32>
    %cst_240 = arith.constant dense<0.000000e+00> : vector<2x512xf32>
    %464 = tpu.matmul %459, %463, %cst_240 {dimension_numbers = #tpu.dot_dimension_numbers<[1], [0], [0], [1], [0, 0, 1, 1], [], []>} : vector<2x128xf32>, vector<128x512xf32>, vector<2x512xf32> -> vector<2x512xf32>
    %465 = arith.addf %462, %464 : vector<2x512xf32>
    %466 = vector.extract_strided_slice %465 {offsets = [0, 0], sizes = [2, 128], strides = [1, 1]} : vector<2x512xf32> to vector<2x128xf32>
    %467 = arith.negf %466 : vector<2x128xf32>
    %468 = math.exp %467 : vector<2x128xf32>
    %cst_241 = arith.constant 1.000000e+00 : f32
    %469 = vector.broadcast %cst_241 : f32 to vector<2x128xf32>
    %470 = arith.addf %469, %468 : vector<2x128xf32>
    %471 = arith.divf %469, %470 : vector<2x128xf32>
    %472 = vector.extract_strided_slice %465 {offsets = [0, 128], sizes = [2, 128], strides = [1, 1]} : vector<2x512xf32> to vector<2x128xf32>
    %473 = arith.negf %472 : vector<2x128xf32>
    %474 = math.exp %473 : vector<2x128xf32>
    %cst_242 = arith.constant 1.000000e+00 : f32
    %475 = vector.broadcast %cst_242 : f32 to vector<2x128xf32>
    %476 = arith.addf %475, %474 : vector<2x128xf32>
    %477 = arith.divf %475, %476 : vector<2x128xf32>
    %478 = vector.extract_strided_slice %465 {offsets = [0, 256], sizes = [2, 128], strides = [1, 1]} : vector<2x512xf32> to vector<2x128xf32>
    %479 = math.tanh %478 : vector<2x128xf32>
    %480 = vector.extract_strided_slice %465 {offsets = [0, 384], sizes = [2, 128], strides = [1, 1]} : vector<2x512xf32> to vector<2x128xf32>
    %481 = arith.negf %480 : vector<2x128xf32>
    %482 = math.exp %481 : vector<2x128xf32>
    %cst_243 = arith.constant 1.000000e+00 : f32
    %483 = vector.broadcast %cst_243 : f32 to vector<2x128xf32>
    %484 = arith.addf %483, %482 : vector<2x128xf32>
    %485 = arith.divf %483, %484 : vector<2x128xf32>
    %486 = arith.mulf %477, %457 : vector<2x128xf32>
    %487 = arith.mulf %471, %479 : vector<2x128xf32>
    %488 = arith.addf %486, %487 : vector<2x128xf32>
    %489 = math.tanh %488 : vector<2x128xf32>
    %490 = arith.mulf %485, %489 : vector<2x128xf32>
    %c22_244 = arith.constant 22 : index
    %c0_245 = arith.constant 0 : index
    %491 = vector.load %arg16[%c22_244, %c0_245] : memref<30x128xf32, #tpu.memory_space<vmem>>, vector<2x128xf32>
    tpu.vector_store %arg16[%c22_244, %c0_245], %490 {strides = array<i32>} : memref<30x128xf32, #tpu.memory_space<vmem>>, vector<2x128xf32>,
    %c6_246 = arith.constant 6 : index
    %c0_247 = arith.constant 0 : index
    %492 = vector.load %arg17[%c6_246, %c0_247] : memref<30x128xf32, #tpu.memory_space<vmem>>, vector<2x128xf32>
    tpu.vector_store %arg17[%c6_246, %c0_247], %490 {strides = array<i32>} : memref<30x128xf32, #tpu.memory_space<vmem>>, vector<2x128xf32>,
    %c0_248 = arith.constant 0 : index
    %c6144_249 = arith.constant 6144 : index
    %493 = vector.load %arg15[%c0_248, %c6144_249] : memref<2x7680xf32, #tpu.memory_space<vmem>>, vector<2x512xf32>
    %c0_250 = arith.constant 0 : index
    %c0_251 = arith.constant 0 : index
    %494 = vector.load %arg7[%c0_250, %c0_251] : memref<128x512xf32, #tpu.memory_space<vmem>>, vector<128x512xf32>
    %cst_252 = arith.constant dense<0.000000e+00> : vector<2x512xf32>
    %495 = tpu.matmul %490, %494, %cst_252 {dimension_numbers = #tpu.dot_dimension_numbers<[1], [0], [0], [1], [0, 0, 1, 1], [], []>} : vector<2x128xf32>, vector<128x512xf32>, vector<2x512xf32> -> vector<2x512xf32>
    %496 = arith.addf %493, %495 : vector<2x512xf32>
    %497 = vector.extract_strided_slice %496 {offsets = [0, 0], sizes = [2, 128], strides = [1, 1]} : vector<2x512xf32> to vector<2x128xf32>
    %498 = arith.negf %497 : vector<2x128xf32>
    %499 = math.exp %498 : vector<2x128xf32>
    %cst_253 = arith.constant 1.000000e+00 : f32
    %500 = vector.broadcast %cst_253 : f32 to vector<2x128xf32>
    %501 = arith.addf %500, %499 : vector<2x128xf32>
    %502 = arith.divf %500, %501 : vector<2x128xf32>
    %503 = vector.extract_strided_slice %496 {offsets = [0, 128], sizes = [2, 128], strides = [1, 1]} : vector<2x512xf32> to vector<2x128xf32>
    %504 = arith.negf %503 : vector<2x128xf32>
    %505 = math.exp %504 : vector<2x128xf32>
    %cst_254 = arith.constant 1.000000e+00 : f32
    %506 = vector.broadcast %cst_254 : f32 to vector<2x128xf32>
    %507 = arith.addf %506, %505 : vector<2x128xf32>
    %508 = arith.divf %506, %507 : vector<2x128xf32>
    %509 = vector.extract_strided_slice %496 {offsets = [0, 256], sizes = [2, 128], strides = [1, 1]} : vector<2x512xf32> to vector<2x128xf32>
    %510 = math.tanh %509 : vector<2x128xf32>
    %511 = vector.extract_strided_slice %496 {offsets = [0, 384], sizes = [2, 128], strides = [1, 1]} : vector<2x512xf32> to vector<2x128xf32>
    %512 = arith.negf %511 : vector<2x128xf32>
    %513 = math.exp %512 : vector<2x128xf32>
    %cst_255 = arith.constant 1.000000e+00 : f32
    %514 = vector.broadcast %cst_255 : f32 to vector<2x128xf32>
    %515 = arith.addf %514, %513 : vector<2x128xf32>
    %516 = arith.divf %514, %515 : vector<2x128xf32>
    %517 = arith.mulf %508, %488 : vector<2x128xf32>
    %518 = arith.mulf %502, %510 : vector<2x128xf32>
    %519 = arith.addf %517, %518 : vector<2x128xf32>
    %520 = math.tanh %519 : vector<2x128xf32>
    %521 = arith.mulf %516, %520 : vector<2x128xf32>
    %c24_256 = arith.constant 24 : index
    %c0_257 = arith.constant 0 : index
    %522 = vector.load %arg16[%c24_256, %c0_257] : memref<30x128xf32, #tpu.memory_space<vmem>>, vector<2x128xf32>
    tpu.vector_store %arg16[%c24_256, %c0_257], %521 {strides = array<i32>} : memref<30x128xf32, #tpu.memory_space<vmem>>, vector<2x128xf32>,
    %c4_258 = arith.constant 4 : index
    %c0_259 = arith.constant 0 : index
    %523 = vector.load %arg17[%c4_258, %c0_259] : memref<30x128xf32, #tpu.memory_space<vmem>>, vector<2x128xf32>
    tpu.vector_store %arg17[%c4_258, %c0_259], %521 {strides = array<i32>} : memref<30x128xf32, #tpu.memory_space<vmem>>, vector<2x128xf32>,
    %c0_260 = arith.constant 0 : index
    %c6656_261 = arith.constant 6656 : index
    %524 = vector.load %arg15[%c0_260, %c6656_261] : memref<2x7680xf32, #tpu.memory_space<vmem>>, vector<2x512xf32>
    %c0_262 = arith.constant 0 : index
    %c0_263 = arith.constant 0 : index
    %525 = vector.load %arg7[%c0_262, %c0_263] : memref<128x512xf32, #tpu.memory_space<vmem>>, vector<128x512xf32>
    %cst_264 = arith.constant dense<0.000000e+00> : vector<2x512xf32>
    %526 = tpu.matmul %521, %525, %cst_264 {dimension_numbers = #tpu.dot_dimension_numbers<[1], [0], [0], [1], [0, 0, 1, 1], [], []>} : vector<2x128xf32>, vector<128x512xf32>, vector<2x512xf32> -> vector<2x512xf32>
    %527 = arith.addf %524, %526 : vector<2x512xf32>
    %528 = vector.extract_strided_slice %527 {offsets = [0, 0], sizes = [2, 128], strides = [1, 1]} : vector<2x512xf32> to vector<2x128xf32>
    %529 = arith.negf %528 : vector<2x128xf32>
    %530 = math.exp %529 : vector<2x128xf32>
    %cst_265 = arith.constant 1.000000e+00 : f32
    %531 = vector.broadcast %cst_265 : f32 to vector<2x128xf32>
    %532 = arith.addf %531, %530 : vector<2x128xf32>
    %533 = arith.divf %531, %532 : vector<2x128xf32>
    %534 = vector.extract_strided_slice %527 {offsets = [0, 128], sizes = [2, 128], strides = [1, 1]} : vector<2x512xf32> to vector<2x128xf32>
    %535 = arith.negf %534 : vector<2x128xf32>
    %536 = math.exp %535 : vector<2x128xf32>
    %cst_266 = arith.constant 1.000000e+00 : f32
    %537 = vector.broadcast %cst_266 : f32 to vector<2x128xf32>
    %538 = arith.addf %537, %536 : vector<2x128xf32>
    %539 = arith.divf %537, %538 : vector<2x128xf32>
    %540 = vector.extract_strided_slice %527 {offsets = [0, 256], sizes = [2, 128], strides = [1, 1]} : vector<2x512xf32> to vector<2x128xf32>
    %541 = math.tanh %540 : vector<2x128xf32>
    %542 = vector.extract_strided_slice %527 {offsets = [0, 384], sizes = [2, 128], strides = [1, 1]} : vector<2x512xf32> to vector<2x128xf32>
    %543 = arith.negf %542 : vector<2x128xf32>
    %544 = math.exp %543 : vector<2x128xf32>
    %cst_267 = arith.constant 1.000000e+00 : f32
    %545 = vector.broadcast %cst_267 : f32 to vector<2x128xf32>
    %546 = arith.addf %545, %544 : vector<2x128xf32>
    %547 = arith.divf %545, %546 : vector<2x128xf32>
    %548 = arith.mulf %539, %519 : vector<2x128xf32>
    %549 = arith.mulf %533, %541 : vector<2x128xf32>
    %550 = arith.addf %548, %549 : vector<2x128xf32>
    %551 = math.tanh %550 : vector<2x128xf32>
    %552 = arith.mulf %547, %551 : vector<2x128xf32>
    %c26_268 = arith.constant 26 : index
    %c0_269 = arith.constant 0 : index
    %553 = vector.load %arg16[%c26_268, %c0_269] : memref<30x128xf32, #tpu.memory_space<vmem>>, vector<2x128xf32>
    tpu.vector_store %arg16[%c26_268, %c0_269], %552 {strides = array<i32>} : memref<30x128xf32, #tpu.memory_space<vmem>>, vector<2x128xf32>,
    %c2_270 = arith.constant 2 : index
    %c0_271 = arith.constant 0 : index
    %554 = vector.load %arg17[%c2_270, %c0_271] : memref<30x128xf32, #tpu.memory_space<vmem>>, vector<2x128xf32>
    tpu.vector_store %arg17[%c2_270, %c0_271], %552 {strides = array<i32>} : memref<30x128xf32, #tpu.memory_space<vmem>>, vector<2x128xf32>,
    %c0_272 = arith.constant 0 : index
    %c7168_273 = arith.constant 7168 : index
    %555 = vector.load %arg15[%c0_272, %c7168_273] : memref<2x7680xf32, #tpu.memory_space<vmem>>, vector<2x512xf32>
    %c0_274 = arith.constant 0 : index
    %c0_275 = arith.constant 0 : index
    %556 = vector.load %arg7[%c0_274, %c0_275] : memref<128x512xf32, #tpu.memory_space<vmem>>, vector<128x512xf32>
    %cst_276 = arith.constant dense<0.000000e+00> : vector<2x512xf32>
    %557 = tpu.matmul %552, %556, %cst_276 {dimension_numbers = #tpu.dot_dimension_numbers<[1], [0], [0], [1], [0, 0, 1, 1], [], []>} : vector<2x128xf32>, vector<128x512xf32>, vector<2x512xf32> -> vector<2x512xf32>
    %558 = arith.addf %555, %557 : vector<2x512xf32>
    %559 = vector.extract_strided_slice %558 {offsets = [0, 0], sizes = [2, 128], strides = [1, 1]} : vector<2x512xf32> to vector<2x128xf32>
    %560 = arith.negf %559 : vector<2x128xf32>
    %561 = math.exp %560 : vector<2x128xf32>
    %cst_277 = arith.constant 1.000000e+00 : f32
    %562 = vector.broadcast %cst_277 : f32 to vector<2x128xf32>
    %563 = arith.addf %562, %561 : vector<2x128xf32>
    %564 = arith.divf %562, %563 : vector<2x128xf32>
    %565 = vector.extract_strided_slice %558 {offsets = [0, 128], sizes = [2, 128], strides = [1, 1]} : vector<2x512xf32> to vector<2x128xf32>
    %566 = arith.negf %565 : vector<2x128xf32>
    %567 = math.exp %566 : vector<2x128xf32>
    %cst_278 = arith.constant 1.000000e+00 : f32
    %568 = vector.broadcast %cst_278 : f32 to vector<2x128xf32>
    %569 = arith.addf %568, %567 : vector<2x128xf32>
    %570 = arith.divf %568, %569 : vector<2x128xf32>
    %571 = vector.extract_strided_slice %558 {offsets = [0, 256], sizes = [2, 128], strides = [1, 1]} : vector<2x512xf32> to vector<2x128xf32>
    %572 = math.tanh %571 : vector<2x128xf32>
    %573 = vector.extract_strided_slice %558 {offsets = [0, 384], sizes = [2, 128], strides = [1, 1]} : vector<2x512xf32> to vector<2x128xf32>
    %574 = arith.negf %573 : vector<2x128xf32>
    %575 = math.exp %574 : vector<2x128xf32>
    %cst_279 = arith.constant 1.000000e+00 : f32
    %576 = vector.broadcast %cst_279 : f32 to vector<2x128xf32>
    %577 = arith.addf %576, %575 : vector<2x128xf32>
    %578 = arith.divf %576, %577 : vector<2x128xf32>
    %579 = arith.mulf %570, %550 : vector<2x128xf32>
    %580 = arith.mulf %564, %572 : vector<2x128xf32>
    %581 = arith.addf %579, %580 : vector<2x128xf32>
    %582 = math.tanh %581 : vector<2x128xf32>
    %583 = arith.mulf %578, %582 : vector<2x128xf32>
    %c28_280 = arith.constant 28 : index
    %c0_281 = arith.constant 0 : index
    %584 = vector.load %arg16[%c28_280, %c0_281] : memref<30x128xf32, #tpu.memory_space<vmem>>, vector<2x128xf32>
    tpu.vector_store %arg16[%c28_280, %c0_281], %583 {strides = array<i32>} : memref<30x128xf32, #tpu.memory_space<vmem>>, vector<2x128xf32>,
    %c0_282 = arith.constant 0 : index
    %c0_283 = arith.constant 0 : index
    %585 = vector.load %arg17[%c0_282, %c0_283] : memref<30x128xf32, #tpu.memory_space<vmem>>, vector<2x128xf32>
    tpu.vector_store %arg17[%c0_282, %c0_283], %583 {strides = array<i32>} : memref<30x128xf32, #tpu.memory_space<vmem>>, vector<2x128xf32>,
    %c0_284 = arith.constant 0 : index
    %c0_285 = arith.constant 0 : index
    %586 = vector.load %arg16[%c0_284, %c0_285] : memref<30x128xf32, #tpu.memory_space<vmem>>, vector<30x128xf32>
    %c0_286 = arith.constant 0 : index
    %c0_287 = arith.constant 0 : index
    %587 = vector.load %arg8[%c0_286, %c0_287] : memref<128x512xf32, #tpu.memory_space<vmem>>, vector<128x512xf32>
    %cst_288 = arith.constant dense<0.000000e+00> : vector<30x512xf32>
    %588 = tpu.matmul %586, %587, %cst_288 {dimension_numbers = #tpu.dot_dimension_numbers<[1], [0], [0], [1], [0, 0, 1, 1], [], []>} : vector<30x128xf32>, vector<128x512xf32>, vector<30x512xf32> -> vector<30x512xf32>
    %c0_289 = arith.constant 0 : index
    %c0_290 = arith.constant 0 : index
    %589 = vector.load %arg17[%c0_289, %c0_290] : memref<30x128xf32, #tpu.memory_space<vmem>>, vector<30x128xf32>
    %c0_291 = arith.constant 0 : index
    %c0_292 = arith.constant 0 : index
    %590 = vector.load %arg9[%c0_291, %c0_292] : memref<128x512xf32, #tpu.memory_space<vmem>>, vector<128x512xf32>
    %cst_293 = arith.constant dense<0.000000e+00> : vector<30x512xf32>
    %591 = tpu.matmul %589, %590, %cst_293 {dimension_numbers = #tpu.dot_dimension_numbers<[1], [0], [0], [1], [0, 0, 1, 1], [], []>} : vector<30x128xf32>, vector<128x512xf32>, vector<30x512xf32> -> vector<30x512xf32>
    %592 = arith.addf %588, %591 : vector<30x512xf32>
    %c0_294 = arith.constant 0 : index
    %c0_295 = arith.constant 0 : index
    %593 = vector.load %arg10[%c0_294, %c0_295] : memref<1x512xf32, #tpu.memory_space<vmem>>, vector<1x512xf32>
    %594 = vector.broadcast %593 : vector<1x512xf32> to vector<30x512xf32>
    %595 = arith.addf %592, %594 : vector<30x512xf32>
    %c0_296 = arith.constant 0 : index
    %c0_297 = arith.constant 0 : index
    %596 = vector.load %arg18[%c0_296, %c0_297] : memref<30x512xf32, #tpu.memory_space<vmem>>, vector<30x512xf32>
    tpu.vector_store %arg18[%c0_296, %c0_297], %595 {strides = array<i32>} : memref<30x512xf32, #tpu.memory_space<vmem>>, vector<30x512xf32>,
    %cst_298 = arith.constant 0.000000e+00 : f32
    %597 = vector.broadcast %cst_298 : f32 to vector<2x128xf32>
    %cst_299 = arith.constant 0.000000e+00 : f32
    %598 = vector.broadcast %cst_299 : f32 to vector<2x128xf32>
    %c0_300 = arith.constant 0 : index
    %c0_301 = arith.constant 0 : index
    %599 = vector.load %arg18[%c0_300, %c0_301] : memref<30x512xf32, #tpu.memory_space<vmem>>, vector<2x512xf32>
    %c0_302 = arith.constant 0 : index
    %c0_303 = arith.constant 0 : index
    %600 = vector.load %arg11[%c0_302, %c0_303] : memref<128x512xf32, #tpu.memory_space<vmem>>, vector<128x512xf32>
    %cst_304 = arith.constant dense<0.000000e+00> : vector<2x512xf32>
    %601 = tpu.matmul %597, %600, %cst_304 {dimension_numbers = #tpu.dot_dimension_numbers<[1], [0], [0], [1], [0, 0, 1, 1], [], []>} : vector<2x128xf32>, vector<128x512xf32>, vector<2x512xf32> -> vector<2x512xf32>
    %602 = arith.addf %599, %601 : vector<2x512xf32>
    %603 = vector.extract_strided_slice %602 {offsets = [0, 0], sizes = [2, 128], strides = [1, 1]} : vector<2x512xf32> to vector<2x128xf32>
    %604 = arith.negf %603 : vector<2x128xf32>
    %605 = math.exp %604 : vector<2x128xf32>
    %cst_305 = arith.constant 1.000000e+00 : f32
    %606 = vector.broadcast %cst_305 : f32 to vector<2x128xf32>
    %607 = arith.addf %606, %605 : vector<2x128xf32>
    %608 = arith.divf %606, %607 : vector<2x128xf32>
    %609 = vector.extract_strided_slice %602 {offsets = [0, 128], sizes = [2, 128], strides = [1, 1]} : vector<2x512xf32> to vector<2x128xf32>
    %610 = arith.negf %609 : vector<2x128xf32>
    %611 = math.exp %610 : vector<2x128xf32>
    %cst_306 = arith.constant 1.000000e+00 : f32
    %612 = vector.broadcast %cst_306 : f32 to vector<2x128xf32>
    %613 = arith.addf %612, %611 : vector<2x128xf32>
    %614 = arith.divf %612, %613 : vector<2x128xf32>
    %615 = vector.extract_strided_slice %602 {offsets = [0, 256], sizes = [2, 128], strides = [1, 1]} : vector<2x512xf32> to vector<2x128xf32>
    %616 = math.tanh %615 : vector<2x128xf32>
    %617 = vector.extract_strided_slice %602 {offsets = [0, 384], sizes = [2, 128], strides = [1, 1]} : vector<2x512xf32> to vector<2x128xf32>
    %618 = arith.negf %617 : vector<2x128xf32>
    %619 = math.exp %618 : vector<2x128xf32>
    %cst_307 = arith.constant 1.000000e+00 : f32
    %620 = vector.broadcast %cst_307 : f32 to vector<2x128xf32>
    %621 = arith.addf %620, %619 : vector<2x128xf32>
    %622 = arith.divf %620, %621 : vector<2x128xf32>
    %623 = arith.mulf %614, %598 : vector<2x128xf32>
    %624 = arith.mulf %608, %616 : vector<2x128xf32>
    %625 = arith.addf %623, %624 : vector<2x128xf32>
    %626 = math.tanh %625 : vector<2x128xf32>
    %627 = arith.mulf %622, %626 : vector<2x128xf32>
    %c2_308 = arith.constant 2 : index
    %c0_309 = arith.constant 0 : index
    %628 = vector.load %arg18[%c2_308, %c0_309] : memref<30x512xf32, #tpu.memory_space<vmem>>, vector<2x512xf32>
    %c0_310 = arith.constant 0 : index
    %c0_311 = arith.constant 0 : index
    %629 = vector.load %arg11[%c0_310, %c0_311] : memref<128x512xf32, #tpu.memory_space<vmem>>, vector<128x512xf32>
    %cst_312 = arith.constant dense<0.000000e+00> : vector<2x512xf32>
    %630 = tpu.matmul %627, %629, %cst_312 {dimension_numbers = #tpu.dot_dimension_numbers<[1], [0], [0], [1], [0, 0, 1, 1], [], []>} : vector<2x128xf32>, vector<128x512xf32>, vector<2x512xf32> -> vector<2x512xf32>
    %631 = arith.addf %628, %630 : vector<2x512xf32>
    %632 = vector.extract_strided_slice %631 {offsets = [0, 0], sizes = [2, 128], strides = [1, 1]} : vector<2x512xf32> to vector<2x128xf32>
    %633 = arith.negf %632 : vector<2x128xf32>
    %634 = math.exp %633 : vector<2x128xf32>
    %cst_313 = arith.constant 1.000000e+00 : f32
    %635 = vector.broadcast %cst_313 : f32 to vector<2x128xf32>
    %636 = arith.addf %635, %634 : vector<2x128xf32>
    %637 = arith.divf %635, %636 : vector<2x128xf32>
    %638 = vector.extract_strided_slice %631 {offsets = [0, 128], sizes = [2, 128], strides = [1, 1]} : vector<2x512xf32> to vector<2x128xf32>
    %639 = arith.negf %638 : vector<2x128xf32>
    %640 = math.exp %639 : vector<2x128xf32>
    %cst_314 = arith.constant 1.000000e+00 : f32
    %641 = vector.broadcast %cst_314 : f32 to vector<2x128xf32>
    %642 = arith.addf %641, %640 : vector<2x128xf32>
    %643 = arith.divf %641, %642 : vector<2x128xf32>
    %644 = vector.extract_strided_slice %631 {offsets = [0, 256], sizes = [2, 128], strides = [1, 1]} : vector<2x512xf32> to vector<2x128xf32>
    %645 = math.tanh %644 : vector<2x128xf32>
    %646 = vector.extract_strided_slice %631 {offsets = [0, 384], sizes = [2, 128], strides = [1, 1]} : vector<2x512xf32> to vector<2x128xf32>
    %647 = arith.negf %646 : vector<2x128xf32>
    %648 = math.exp %647 : vector<2x128xf32>
    %cst_315 = arith.constant 1.000000e+00 : f32
    %649 = vector.broadcast %cst_315 : f32 to vector<2x128xf32>
    %650 = arith.addf %649, %648 : vector<2x128xf32>
    %651 = arith.divf %649, %650 : vector<2x128xf32>
    %652 = arith.mulf %643, %625 : vector<2x128xf32>
    %653 = arith.mulf %637, %645 : vector<2x128xf32>
    %654 = arith.addf %652, %653 : vector<2x128xf32>
    %655 = math.tanh %654 : vector<2x128xf32>
    %656 = arith.mulf %651, %655 : vector<2x128xf32>
    %c4_316 = arith.constant 4 : index
    %c0_317 = arith.constant 0 : index
    %657 = vector.load %arg18[%c4_316, %c0_317] : memref<30x512xf32, #tpu.memory_space<vmem>>, vector<2x512xf32>
    %c0_318 = arith.constant 0 : index
    %c0_319 = arith.constant 0 : index
    %658 = vector.load %arg11[%c0_318, %c0_319] : memref<128x512xf32, #tpu.memory_space<vmem>>, vector<128x512xf32>
    %cst_320 = arith.constant dense<0.000000e+00> : vector<2x512xf32>
    %659 = tpu.matmul %656, %658, %cst_320 {dimension_numbers = #tpu.dot_dimension_numbers<[1], [0], [0], [1], [0, 0, 1, 1], [], []>} : vector<2x128xf32>, vector<128x512xf32>, vector<2x512xf32> -> vector<2x512xf32>
    %660 = arith.addf %657, %659 : vector<2x512xf32>
    %661 = vector.extract_strided_slice %660 {offsets = [0, 0], sizes = [2, 128], strides = [1, 1]} : vector<2x512xf32> to vector<2x128xf32>
    %662 = arith.negf %661 : vector<2x128xf32>
    %663 = math.exp %662 : vector<2x128xf32>
    %cst_321 = arith.constant 1.000000e+00 : f32
    %664 = vector.broadcast %cst_321 : f32 to vector<2x128xf32>
    %665 = arith.addf %664, %663 : vector<2x128xf32>
    %666 = arith.divf %664, %665 : vector<2x128xf32>
    %667 = vector.extract_strided_slice %660 {offsets = [0, 128], sizes = [2, 128], strides = [1, 1]} : vector<2x512xf32> to vector<2x128xf32>
    %668 = arith.negf %667 : vector<2x128xf32>
    %669 = math.exp %668 : vector<2x128xf32>
    %cst_322 = arith.constant 1.000000e+00 : f32
    %670 = vector.broadcast %cst_322 : f32 to vector<2x128xf32>
    %671 = arith.addf %670, %669 : vector<2x128xf32>
    %672 = arith.divf %670, %671 : vector<2x128xf32>
    %673 = vector.extract_strided_slice %660 {offsets = [0, 256], sizes = [2, 128], strides = [1, 1]} : vector<2x512xf32> to vector<2x128xf32>
    %674 = math.tanh %673 : vector<2x128xf32>
    %675 = vector.extract_strided_slice %660 {offsets = [0, 384], sizes = [2, 128], strides = [1, 1]} : vector<2x512xf32> to vector<2x128xf32>
    %676 = arith.negf %675 : vector<2x128xf32>
    %677 = math.exp %676 : vector<2x128xf32>
    %cst_323 = arith.constant 1.000000e+00 : f32
    %678 = vector.broadcast %cst_323 : f32 to vector<2x128xf32>
    %679 = arith.addf %678, %677 : vector<2x128xf32>
    %680 = arith.divf %678, %679 : vector<2x128xf32>
    %681 = arith.mulf %672, %654 : vector<2x128xf32>
    %682 = arith.mulf %666, %674 : vector<2x128xf32>
    %683 = arith.addf %681, %682 : vector<2x128xf32>
    %684 = math.tanh %683 : vector<2x128xf32>
    %685 = arith.mulf %680, %684 : vector<2x128xf32>
    %c6_324 = arith.constant 6 : index
    %c0_325 = arith.constant 0 : index
    %686 = vector.load %arg18[%c6_324, %c0_325] : memref<30x512xf32, #tpu.memory_space<vmem>>, vector<2x512xf32>
    %c0_326 = arith.constant 0 : index
    %c0_327 = arith.constant 0 : index
    %687 = vector.load %arg11[%c0_326, %c0_327] : memref<128x512xf32, #tpu.memory_space<vmem>>, vector<128x512xf32>
    %cst_328 = arith.constant dense<0.000000e+00> : vector<2x512xf32>
    %688 = tpu.matmul %685, %687, %cst_328 {dimension_numbers = #tpu.dot_dimension_numbers<[1], [0], [0], [1], [0, 0, 1, 1], [], []>} : vector<2x128xf32>, vector<128x512xf32>, vector<2x512xf32> -> vector<2x512xf32>
    %689 = arith.addf %686, %688 : vector<2x512xf32>
    %690 = vector.extract_strided_slice %689 {offsets = [0, 0], sizes = [2, 128], strides = [1, 1]} : vector<2x512xf32> to vector<2x128xf32>
    %691 = arith.negf %690 : vector<2x128xf32>
    %692 = math.exp %691 : vector<2x128xf32>
    %cst_329 = arith.constant 1.000000e+00 : f32
    %693 = vector.broadcast %cst_329 : f32 to vector<2x128xf32>
    %694 = arith.addf %693, %692 : vector<2x128xf32>
    %695 = arith.divf %693, %694 : vector<2x128xf32>
    %696 = vector.extract_strided_slice %689 {offsets = [0, 128], sizes = [2, 128], strides = [1, 1]} : vector<2x512xf32> to vector<2x128xf32>
    %697 = arith.negf %696 : vector<2x128xf32>
    %698 = math.exp %697 : vector<2x128xf32>
    %cst_330 = arith.constant 1.000000e+00 : f32
    %699 = vector.broadcast %cst_330 : f32 to vector<2x128xf32>
    %700 = arith.addf %699, %698 : vector<2x128xf32>
    %701 = arith.divf %699, %700 : vector<2x128xf32>
    %702 = vector.extract_strided_slice %689 {offsets = [0, 256], sizes = [2, 128], strides = [1, 1]} : vector<2x512xf32> to vector<2x128xf32>
    %703 = math.tanh %702 : vector<2x128xf32>
    %704 = vector.extract_strided_slice %689 {offsets = [0, 384], sizes = [2, 128], strides = [1, 1]} : vector<2x512xf32> to vector<2x128xf32>
    %705 = arith.negf %704 : vector<2x128xf32>
    %706 = math.exp %705 : vector<2x128xf32>
    %cst_331 = arith.constant 1.000000e+00 : f32
    %707 = vector.broadcast %cst_331 : f32 to vector<2x128xf32>
    %708 = arith.addf %707, %706 : vector<2x128xf32>
    %709 = arith.divf %707, %708 : vector<2x128xf32>
    %710 = arith.mulf %701, %683 : vector<2x128xf32>
    %711 = arith.mulf %695, %703 : vector<2x128xf32>
    %712 = arith.addf %710, %711 : vector<2x128xf32>
    %713 = math.tanh %712 : vector<2x128xf32>
    %714 = arith.mulf %709, %713 : vector<2x128xf32>
    %c8_332 = arith.constant 8 : index
    %c0_333 = arith.constant 0 : index
    %715 = vector.load %arg18[%c8_332, %c0_333] : memref<30x512xf32, #tpu.memory_space<vmem>>, vector<2x512xf32>
    %c0_334 = arith.constant 0 : index
    %c0_335 = arith.constant 0 : index
    %716 = vector.load %arg11[%c0_334, %c0_335] : memref<128x512xf32, #tpu.memory_space<vmem>>, vector<128x512xf32>
    %cst_336 = arith.constant dense<0.000000e+00> : vector<2x512xf32>
    %717 = tpu.matmul %714, %716, %cst_336 {dimension_numbers = #tpu.dot_dimension_numbers<[1], [0], [0], [1], [0, 0, 1, 1], [], []>} : vector<2x128xf32>, vector<128x512xf32>, vector<2x512xf32> -> vector<2x512xf32>
    %718 = arith.addf %715, %717 : vector<2x512xf32>
    %719 = vector.extract_strided_slice %718 {offsets = [0, 0], sizes = [2, 128], strides = [1, 1]} : vector<2x512xf32> to vector<2x128xf32>
    %720 = arith.negf %719 : vector<2x128xf32>
    %721 = math.exp %720 : vector<2x128xf32>
    %cst_337 = arith.constant 1.000000e+00 : f32
    %722 = vector.broadcast %cst_337 : f32 to vector<2x128xf32>
    %723 = arith.addf %722, %721 : vector<2x128xf32>
    %724 = arith.divf %722, %723 : vector<2x128xf32>
    %725 = vector.extract_strided_slice %718 {offsets = [0, 128], sizes = [2, 128], strides = [1, 1]} : vector<2x512xf32> to vector<2x128xf32>
    %726 = arith.negf %725 : vector<2x128xf32>
    %727 = math.exp %726 : vector<2x128xf32>
    %cst_338 = arith.constant 1.000000e+00 : f32
    %728 = vector.broadcast %cst_338 : f32 to vector<2x128xf32>
    %729 = arith.addf %728, %727 : vector<2x128xf32>
    %730 = arith.divf %728, %729 : vector<2x128xf32>
    %731 = vector.extract_strided_slice %718 {offsets = [0, 256], sizes = [2, 128], strides = [1, 1]} : vector<2x512xf32> to vector<2x128xf32>
    %732 = math.tanh %731 : vector<2x128xf32>
    %733 = vector.extract_strided_slice %718 {offsets = [0, 384], sizes = [2, 128], strides = [1, 1]} : vector<2x512xf32> to vector<2x128xf32>
    %734 = arith.negf %733 : vector<2x128xf32>
    %735 = math.exp %734 : vector<2x128xf32>
    %cst_339 = arith.constant 1.000000e+00 : f32
    %736 = vector.broadcast %cst_339 : f32 to vector<2x128xf32>
    %737 = arith.addf %736, %735 : vector<2x128xf32>
    %738 = arith.divf %736, %737 : vector<2x128xf32>
    %739 = arith.mulf %730, %712 : vector<2x128xf32>
    %740 = arith.mulf %724, %732 : vector<2x128xf32>
    %741 = arith.addf %739, %740 : vector<2x128xf32>
    %742 = math.tanh %741 : vector<2x128xf32>
    %743 = arith.mulf %738, %742 : vector<2x128xf32>
    %c10_340 = arith.constant 10 : index
    %c0_341 = arith.constant 0 : index
    %744 = vector.load %arg18[%c10_340, %c0_341] : memref<30x512xf32, #tpu.memory_space<vmem>>, vector<2x512xf32>
    %c0_342 = arith.constant 0 : index
    %c0_343 = arith.constant 0 : index
    %745 = vector.load %arg11[%c0_342, %c0_343] : memref<128x512xf32, #tpu.memory_space<vmem>>, vector<128x512xf32>
    %cst_344 = arith.constant dense<0.000000e+00> : vector<2x512xf32>
    %746 = tpu.matmul %743, %745, %cst_344 {dimension_numbers = #tpu.dot_dimension_numbers<[1], [0], [0], [1], [0, 0, 1, 1], [], []>} : vector<2x128xf32>, vector<128x512xf32>, vector<2x512xf32> -> vector<2x512xf32>
    %747 = arith.addf %744, %746 : vector<2x512xf32>
    %748 = vector.extract_strided_slice %747 {offsets = [0, 0], sizes = [2, 128], strides = [1, 1]} : vector<2x512xf32> to vector<2x128xf32>
    %749 = arith.negf %748 : vector<2x128xf32>
    %750 = math.exp %749 : vector<2x128xf32>
    %cst_345 = arith.constant 1.000000e+00 : f32
    %751 = vector.broadcast %cst_345 : f32 to vector<2x128xf32>
    %752 = arith.addf %751, %750 : vector<2x128xf32>
    %753 = arith.divf %751, %752 : vector<2x128xf32>
    %754 = vector.extract_strided_slice %747 {offsets = [0, 128], sizes = [2, 128], strides = [1, 1]} : vector<2x512xf32> to vector<2x128xf32>
    %755 = arith.negf %754 : vector<2x128xf32>
    %756 = math.exp %755 : vector<2x128xf32>
    %cst_346 = arith.constant 1.000000e+00 : f32
    %757 = vector.broadcast %cst_346 : f32 to vector<2x128xf32>
    %758 = arith.addf %757, %756 : vector<2x128xf32>
    %759 = arith.divf %757, %758 : vector<2x128xf32>
    %760 = vector.extract_strided_slice %747 {offsets = [0, 256], sizes = [2, 128], strides = [1, 1]} : vector<2x512xf32> to vector<2x128xf32>
    %761 = math.tanh %760 : vector<2x128xf32>
    %762 = vector.extract_strided_slice %747 {offsets = [0, 384], sizes = [2, 128], strides = [1, 1]} : vector<2x512xf32> to vector<2x128xf32>
    %763 = arith.negf %762 : vector<2x128xf32>
    %764 = math.exp %763 : vector<2x128xf32>
    %cst_347 = arith.constant 1.000000e+00 : f32
    %765 = vector.broadcast %cst_347 : f32 to vector<2x128xf32>
    %766 = arith.addf %765, %764 : vector<2x128xf32>
    %767 = arith.divf %765, %766 : vector<2x128xf32>
    %768 = arith.mulf %759, %741 : vector<2x128xf32>
    %769 = arith.mulf %753, %761 : vector<2x128xf32>
    %770 = arith.addf %768, %769 : vector<2x128xf32>
    %771 = math.tanh %770 : vector<2x128xf32>
    %772 = arith.mulf %767, %771 : vector<2x128xf32>
    %c12_348 = arith.constant 12 : index
    %c0_349 = arith.constant 0 : index
    %773 = vector.load %arg18[%c12_348, %c0_349] : memref<30x512xf32, #tpu.memory_space<vmem>>, vector<2x512xf32>
    %c0_350 = arith.constant 0 : index
    %c0_351 = arith.constant 0 : index
    %774 = vector.load %arg11[%c0_350, %c0_351] : memref<128x512xf32, #tpu.memory_space<vmem>>, vector<128x512xf32>
    %cst_352 = arith.constant dense<0.000000e+00> : vector<2x512xf32>
    %775 = tpu.matmul %772, %774, %cst_352 {dimension_numbers = #tpu.dot_dimension_numbers<[1], [0], [0], [1], [0, 0, 1, 1], [], []>} : vector<2x128xf32>, vector<128x512xf32>, vector<2x512xf32> -> vector<2x512xf32>
    %776 = arith.addf %773, %775 : vector<2x512xf32>
    %777 = vector.extract_strided_slice %776 {offsets = [0, 0], sizes = [2, 128], strides = [1, 1]} : vector<2x512xf32> to vector<2x128xf32>
    %778 = arith.negf %777 : vector<2x128xf32>
    %779 = math.exp %778 : vector<2x128xf32>
    %cst_353 = arith.constant 1.000000e+00 : f32
    %780 = vector.broadcast %cst_353 : f32 to vector<2x128xf32>
    %781 = arith.addf %780, %779 : vector<2x128xf32>
    %782 = arith.divf %780, %781 : vector<2x128xf32>
    %783 = vector.extract_strided_slice %776 {offsets = [0, 128], sizes = [2, 128], strides = [1, 1]} : vector<2x512xf32> to vector<2x128xf32>
    %784 = arith.negf %783 : vector<2x128xf32>
    %785 = math.exp %784 : vector<2x128xf32>
    %cst_354 = arith.constant 1.000000e+00 : f32
    %786 = vector.broadcast %cst_354 : f32 to vector<2x128xf32>
    %787 = arith.addf %786, %785 : vector<2x128xf32>
    %788 = arith.divf %786, %787 : vector<2x128xf32>
    %789 = vector.extract_strided_slice %776 {offsets = [0, 256], sizes = [2, 128], strides = [1, 1]} : vector<2x512xf32> to vector<2x128xf32>
    %790 = math.tanh %789 : vector<2x128xf32>
    %791 = vector.extract_strided_slice %776 {offsets = [0, 384], sizes = [2, 128], strides = [1, 1]} : vector<2x512xf32> to vector<2x128xf32>
    %792 = arith.negf %791 : vector<2x128xf32>
    %793 = math.exp %792 : vector<2x128xf32>
    %cst_355 = arith.constant 1.000000e+00 : f32
    %794 = vector.broadcast %cst_355 : f32 to vector<2x128xf32>
    %795 = arith.addf %794, %793 : vector<2x128xf32>
    %796 = arith.divf %794, %795 : vector<2x128xf32>
    %797 = arith.mulf %788, %770 : vector<2x128xf32>
    %798 = arith.mulf %782, %790 : vector<2x128xf32>
    %799 = arith.addf %797, %798 : vector<2x128xf32>
    %800 = math.tanh %799 : vector<2x128xf32>
    %801 = arith.mulf %796, %800 : vector<2x128xf32>
    %c14_356 = arith.constant 14 : index
    %c0_357 = arith.constant 0 : index
    %802 = vector.load %arg18[%c14_356, %c0_357] : memref<30x512xf32, #tpu.memory_space<vmem>>, vector<2x512xf32>
    %c0_358 = arith.constant 0 : index
    %c0_359 = arith.constant 0 : index
    %803 = vector.load %arg11[%c0_358, %c0_359] : memref<128x512xf32, #tpu.memory_space<vmem>>, vector<128x512xf32>
    %cst_360 = arith.constant dense<0.000000e+00> : vector<2x512xf32>
    %804 = tpu.matmul %801, %803, %cst_360 {dimension_numbers = #tpu.dot_dimension_numbers<[1], [0], [0], [1], [0, 0, 1, 1], [], []>} : vector<2x128xf32>, vector<128x512xf32>, vector<2x512xf32> -> vector<2x512xf32>
    %805 = arith.addf %802, %804 : vector<2x512xf32>
    %806 = vector.extract_strided_slice %805 {offsets = [0, 0], sizes = [2, 128], strides = [1, 1]} : vector<2x512xf32> to vector<2x128xf32>
    %807 = arith.negf %806 : vector<2x128xf32>
    %808 = math.exp %807 : vector<2x128xf32>
    %cst_361 = arith.constant 1.000000e+00 : f32
    %809 = vector.broadcast %cst_361 : f32 to vector<2x128xf32>
    %810 = arith.addf %809, %808 : vector<2x128xf32>
    %811 = arith.divf %809, %810 : vector<2x128xf32>
    %812 = vector.extract_strided_slice %805 {offsets = [0, 128], sizes = [2, 128], strides = [1, 1]} : vector<2x512xf32> to vector<2x128xf32>
    %813 = arith.negf %812 : vector<2x128xf32>
    %814 = math.exp %813 : vector<2x128xf32>
    %cst_362 = arith.constant 1.000000e+00 : f32
    %815 = vector.broadcast %cst_362 : f32 to vector<2x128xf32>
    %816 = arith.addf %815, %814 : vector<2x128xf32>
    %817 = arith.divf %815, %816 : vector<2x128xf32>
    %818 = vector.extract_strided_slice %805 {offsets = [0, 256], sizes = [2, 128], strides = [1, 1]} : vector<2x512xf32> to vector<2x128xf32>
    %819 = math.tanh %818 : vector<2x128xf32>
    %820 = vector.extract_strided_slice %805 {offsets = [0, 384], sizes = [2, 128], strides = [1, 1]} : vector<2x512xf32> to vector<2x128xf32>
    %821 = arith.negf %820 : vector<2x128xf32>
    %822 = math.exp %821 : vector<2x128xf32>
    %cst_363 = arith.constant 1.000000e+00 : f32
    %823 = vector.broadcast %cst_363 : f32 to vector<2x128xf32>
    %824 = arith.addf %823, %822 : vector<2x128xf32>
    %825 = arith.divf %823, %824 : vector<2x128xf32>
    %826 = arith.mulf %817, %799 : vector<2x128xf32>
    %827 = arith.mulf %811, %819 : vector<2x128xf32>
    %828 = arith.addf %826, %827 : vector<2x128xf32>
    %829 = math.tanh %828 : vector<2x128xf32>
    %830 = arith.mulf %825, %829 : vector<2x128xf32>
    %c16_364 = arith.constant 16 : index
    %c0_365 = arith.constant 0 : index
    %831 = vector.load %arg18[%c16_364, %c0_365] : memref<30x512xf32, #tpu.memory_space<vmem>>, vector<2x512xf32>
    %c0_366 = arith.constant 0 : index
    %c0_367 = arith.constant 0 : index
    %832 = vector.load %arg11[%c0_366, %c0_367] : memref<128x512xf32, #tpu.memory_space<vmem>>, vector<128x512xf32>
    %cst_368 = arith.constant dense<0.000000e+00> : vector<2x512xf32>
    %833 = tpu.matmul %830, %832, %cst_368 {dimension_numbers = #tpu.dot_dimension_numbers<[1], [0], [0], [1], [0, 0, 1, 1], [], []>} : vector<2x128xf32>, vector<128x512xf32>, vector<2x512xf32> -> vector<2x512xf32>
    %834 = arith.addf %831, %833 : vector<2x512xf32>
    %835 = vector.extract_strided_slice %834 {offsets = [0, 0], sizes = [2, 128], strides = [1, 1]} : vector<2x512xf32> to vector<2x128xf32>
    %836 = arith.negf %835 : vector<2x128xf32>
    %837 = math.exp %836 : vector<2x128xf32>
    %cst_369 = arith.constant 1.000000e+00 : f32
    %838 = vector.broadcast %cst_369 : f32 to vector<2x128xf32>
    %839 = arith.addf %838, %837 : vector<2x128xf32>
    %840 = arith.divf %838, %839 : vector<2x128xf32>
    %841 = vector.extract_strided_slice %834 {offsets = [0, 128], sizes = [2, 128], strides = [1, 1]} : vector<2x512xf32> to vector<2x128xf32>
    %842 = arith.negf %841 : vector<2x128xf32>
    %843 = math.exp %842 : vector<2x128xf32>
    %cst_370 = arith.constant 1.000000e+00 : f32
    %844 = vector.broadcast %cst_370 : f32 to vector<2x128xf32>
    %845 = arith.addf %844, %843 : vector<2x128xf32>
    %846 = arith.divf %844, %845 : vector<2x128xf32>
    %847 = vector.extract_strided_slice %834 {offsets = [0, 256], sizes = [2, 128], strides = [1, 1]} : vector<2x512xf32> to vector<2x128xf32>
    %848 = math.tanh %847 : vector<2x128xf32>
    %849 = vector.extract_strided_slice %834 {offsets = [0, 384], sizes = [2, 128], strides = [1, 1]} : vector<2x512xf32> to vector<2x128xf32>
    %850 = arith.negf %849 : vector<2x128xf32>
    %851 = math.exp %850 : vector<2x128xf32>
    %cst_371 = arith.constant 1.000000e+00 : f32
    %852 = vector.broadcast %cst_371 : f32 to vector<2x128xf32>
    %853 = arith.addf %852, %851 : vector<2x128xf32>
    %854 = arith.divf %852, %853 : vector<2x128xf32>
    %855 = arith.mulf %846, %828 : vector<2x128xf32>
    %856 = arith.mulf %840, %848 : vector<2x128xf32>
    %857 = arith.addf %855, %856 : vector<2x128xf32>
    %858 = math.tanh %857 : vector<2x128xf32>
    %859 = arith.mulf %854, %858 : vector<2x128xf32>
    %c18_372 = arith.constant 18 : index
    %c0_373 = arith.constant 0 : index
    %860 = vector.load %arg18[%c18_372, %c0_373] : memref<30x512xf32, #tpu.memory_space<vmem>>, vector<2x512xf32>
    %c0_374 = arith.constant 0 : index
    %c0_375 = arith.constant 0 : index
    %861 = vector.load %arg11[%c0_374, %c0_375] : memref<128x512xf32, #tpu.memory_space<vmem>>, vector<128x512xf32>
    %cst_376 = arith.constant dense<0.000000e+00> : vector<2x512xf32>
    %862 = tpu.matmul %859, %861, %cst_376 {dimension_numbers = #tpu.dot_dimension_numbers<[1], [0], [0], [1], [0, 0, 1, 1], [], []>} : vector<2x128xf32>, vector<128x512xf32>, vector<2x512xf32> -> vector<2x512xf32>
    %863 = arith.addf %860, %862 : vector<2x512xf32>
    %864 = vector.extract_strided_slice %863 {offsets = [0, 0], sizes = [2, 128], strides = [1, 1]} : vector<2x512xf32> to vector<2x128xf32>
    %865 = arith.negf %864 : vector<2x128xf32>
    %866 = math.exp %865 : vector<2x128xf32>
    %cst_377 = arith.constant 1.000000e+00 : f32
    %867 = vector.broadcast %cst_377 : f32 to vector<2x128xf32>
    %868 = arith.addf %867, %866 : vector<2x128xf32>
    %869 = arith.divf %867, %868 : vector<2x128xf32>
    %870 = vector.extract_strided_slice %863 {offsets = [0, 128], sizes = [2, 128], strides = [1, 1]} : vector<2x512xf32> to vector<2x128xf32>
    %871 = arith.negf %870 : vector<2x128xf32>
    %872 = math.exp %871 : vector<2x128xf32>
    %cst_378 = arith.constant 1.000000e+00 : f32
    %873 = vector.broadcast %cst_378 : f32 to vector<2x128xf32>
    %874 = arith.addf %873, %872 : vector<2x128xf32>
    %875 = arith.divf %873, %874 : vector<2x128xf32>
    %876 = vector.extract_strided_slice %863 {offsets = [0, 256], sizes = [2, 128], strides = [1, 1]} : vector<2x512xf32> to vector<2x128xf32>
    %877 = math.tanh %876 : vector<2x128xf32>
    %878 = vector.extract_strided_slice %863 {offsets = [0, 384], sizes = [2, 128], strides = [1, 1]} : vector<2x512xf32> to vector<2x128xf32>
    %879 = arith.negf %878 : vector<2x128xf32>
    %880 = math.exp %879 : vector<2x128xf32>
    %cst_379 = arith.constant 1.000000e+00 : f32
    %881 = vector.broadcast %cst_379 : f32 to vector<2x128xf32>
    %882 = arith.addf %881, %880 : vector<2x128xf32>
    %883 = arith.divf %881, %882 : vector<2x128xf32>
    %884 = arith.mulf %875, %857 : vector<2x128xf32>
    %885 = arith.mulf %869, %877 : vector<2x128xf32>
    %886 = arith.addf %884, %885 : vector<2x128xf32>
    %887 = math.tanh %886 : vector<2x128xf32>
    %888 = arith.mulf %883, %887 : vector<2x128xf32>
    %c20_380 = arith.constant 20 : index
    %c0_381 = arith.constant 0 : index
    %889 = vector.load %arg18[%c20_380, %c0_381] : memref<30x512xf32, #tpu.memory_space<vmem>>, vector<2x512xf32>
    %c0_382 = arith.constant 0 : index
    %c0_383 = arith.constant 0 : index
    %890 = vector.load %arg11[%c0_382, %c0_383] : memref<128x512xf32, #tpu.memory_space<vmem>>, vector<128x512xf32>
    %cst_384 = arith.constant dense<0.000000e+00> : vector<2x512xf32>
    %891 = tpu.matmul %888, %890, %cst_384 {dimension_numbers = #tpu.dot_dimension_numbers<[1], [0], [0], [1], [0, 0, 1, 1], [], []>} : vector<2x128xf32>, vector<128x512xf32>, vector<2x512xf32> -> vector<2x512xf32>
    %892 = arith.addf %889, %891 : vector<2x512xf32>
    %893 = vector.extract_strided_slice %892 {offsets = [0, 0], sizes = [2, 128], strides = [1, 1]} : vector<2x512xf32> to vector<2x128xf32>
    %894 = arith.negf %893 : vector<2x128xf32>
    %895 = math.exp %894 : vector<2x128xf32>
    %cst_385 = arith.constant 1.000000e+00 : f32
    %896 = vector.broadcast %cst_385 : f32 to vector<2x128xf32>
    %897 = arith.addf %896, %895 : vector<2x128xf32>
    %898 = arith.divf %896, %897 : vector<2x128xf32>
    %899 = vector.extract_strided_slice %892 {offsets = [0, 128], sizes = [2, 128], strides = [1, 1]} : vector<2x512xf32> to vector<2x128xf32>
    %900 = arith.negf %899 : vector<2x128xf32>
    %901 = math.exp %900 : vector<2x128xf32>
    %cst_386 = arith.constant 1.000000e+00 : f32
    %902 = vector.broadcast %cst_386 : f32 to vector<2x128xf32>
    %903 = arith.addf %902, %901 : vector<2x128xf32>
    %904 = arith.divf %902, %903 : vector<2x128xf32>
    %905 = vector.extract_strided_slice %892 {offsets = [0, 256], sizes = [2, 128], strides = [1, 1]} : vector<2x512xf32> to vector<2x128xf32>
    %906 = math.tanh %905 : vector<2x128xf32>
    %907 = vector.extract_strided_slice %892 {offsets = [0, 384], sizes = [2, 128], strides = [1, 1]} : vector<2x512xf32> to vector<2x128xf32>
    %908 = arith.negf %907 : vector<2x128xf32>
    %909 = math.exp %908 : vector<2x128xf32>
    %cst_387 = arith.constant 1.000000e+00 : f32
    %910 = vector.broadcast %cst_387 : f32 to vector<2x128xf32>
    %911 = arith.addf %910, %909 : vector<2x128xf32>
    %912 = arith.divf %910, %911 : vector<2x128xf32>
    %913 = arith.mulf %904, %886 : vector<2x128xf32>
    %914 = arith.mulf %898, %906 : vector<2x128xf32>
    %915 = arith.addf %913, %914 : vector<2x128xf32>
    %916 = math.tanh %915 : vector<2x128xf32>
    %917 = arith.mulf %912, %916 : vector<2x128xf32>
    %c22_388 = arith.constant 22 : index
    %c0_389 = arith.constant 0 : index
    %918 = vector.load %arg18[%c22_388, %c0_389] : memref<30x512xf32, #tpu.memory_space<vmem>>, vector<2x512xf32>
    %c0_390 = arith.constant 0 : index
    %c0_391 = arith.constant 0 : index
    %919 = vector.load %arg11[%c0_390, %c0_391] : memref<128x512xf32, #tpu.memory_space<vmem>>, vector<128x512xf32>
    %cst_392 = arith.constant dense<0.000000e+00> : vector<2x512xf32>
    %920 = tpu.matmul %917, %919, %cst_392 {dimension_numbers = #tpu.dot_dimension_numbers<[1], [0], [0], [1], [0, 0, 1, 1], [], []>} : vector<2x128xf32>, vector<128x512xf32>, vector<2x512xf32> -> vector<2x512xf32>
    %921 = arith.addf %918, %920 : vector<2x512xf32>
    %922 = vector.extract_strided_slice %921 {offsets = [0, 0], sizes = [2, 128], strides = [1, 1]} : vector<2x512xf32> to vector<2x128xf32>
    %923 = arith.negf %922 : vector<2x128xf32>
    %924 = math.exp %923 : vector<2x128xf32>
    %cst_393 = arith.constant 1.000000e+00 : f32
    %925 = vector.broadcast %cst_393 : f32 to vector<2x128xf32>
    %926 = arith.addf %925, %924 : vector<2x128xf32>
    %927 = arith.divf %925, %926 : vector<2x128xf32>
    %928 = vector.extract_strided_slice %921 {offsets = [0, 128], sizes = [2, 128], strides = [1, 1]} : vector<2x512xf32> to vector<2x128xf32>
    %929 = arith.negf %928 : vector<2x128xf32>
    %930 = math.exp %929 : vector<2x128xf32>
    %cst_394 = arith.constant 1.000000e+00 : f32
    %931 = vector.broadcast %cst_394 : f32 to vector<2x128xf32>
    %932 = arith.addf %931, %930 : vector<2x128xf32>
    %933 = arith.divf %931, %932 : vector<2x128xf32>
    %934 = vector.extract_strided_slice %921 {offsets = [0, 256], sizes = [2, 128], strides = [1, 1]} : vector<2x512xf32> to vector<2x128xf32>
    %935 = math.tanh %934 : vector<2x128xf32>
    %936 = vector.extract_strided_slice %921 {offsets = [0, 384], sizes = [2, 128], strides = [1, 1]} : vector<2x512xf32> to vector<2x128xf32>
    %937 = arith.negf %936 : vector<2x128xf32>
    %938 = math.exp %937 : vector<2x128xf32>
    %cst_395 = arith.constant 1.000000e+00 : f32
    %939 = vector.broadcast %cst_395 : f32 to vector<2x128xf32>
    %940 = arith.addf %939, %938 : vector<2x128xf32>
    %941 = arith.divf %939, %940 : vector<2x128xf32>
    %942 = arith.mulf %933, %915 : vector<2x128xf32>
    %943 = arith.mulf %927, %935 : vector<2x128xf32>
    %944 = arith.addf %942, %943 : vector<2x128xf32>
    %945 = math.tanh %944 : vector<2x128xf32>
    %946 = arith.mulf %941, %945 : vector<2x128xf32>
    %c24_396 = arith.constant 24 : index
    %c0_397 = arith.constant 0 : index
    %947 = vector.load %arg18[%c24_396, %c0_397] : memref<30x512xf32, #tpu.memory_space<vmem>>, vector<2x512xf32>
    %c0_398 = arith.constant 0 : index
    %c0_399 = arith.constant 0 : index
    %948 = vector.load %arg11[%c0_398, %c0_399] : memref<128x512xf32, #tpu.memory_space<vmem>>, vector<128x512xf32>
    %cst_400 = arith.constant dense<0.000000e+00> : vector<2x512xf32>
    %949 = tpu.matmul %946, %948, %cst_400 {dimension_numbers = #tpu.dot_dimension_numbers<[1], [0], [0], [1], [0, 0, 1, 1], [], []>} : vector<2x128xf32>, vector<128x512xf32>, vector<2x512xf32> -> vector<2x512xf32>
    %950 = arith.addf %947, %949 : vector<2x512xf32>
    %951 = vector.extract_strided_slice %950 {offsets = [0, 0], sizes = [2, 128], strides = [1, 1]} : vector<2x512xf32> to vector<2x128xf32>
    %952 = arith.negf %951 : vector<2x128xf32>
    %953 = math.exp %952 : vector<2x128xf32>
    %cst_401 = arith.constant 1.000000e+00 : f32
    %954 = vector.broadcast %cst_401 : f32 to vector<2x128xf32>
    %955 = arith.addf %954, %953 : vector<2x128xf32>
    %956 = arith.divf %954, %955 : vector<2x128xf32>
    %957 = vector.extract_strided_slice %950 {offsets = [0, 128], sizes = [2, 128], strides = [1, 1]} : vector<2x512xf32> to vector<2x128xf32>
    %958 = arith.negf %957 : vector<2x128xf32>
    %959 = math.exp %958 : vector<2x128xf32>
    %cst_402 = arith.constant 1.000000e+00 : f32
    %960 = vector.broadcast %cst_402 : f32 to vector<2x128xf32>
    %961 = arith.addf %960, %959 : vector<2x128xf32>
    %962 = arith.divf %960, %961 : vector<2x128xf32>
    %963 = vector.extract_strided_slice %950 {offsets = [0, 256], sizes = [2, 128], strides = [1, 1]} : vector<2x512xf32> to vector<2x128xf32>
    %964 = math.tanh %963 : vector<2x128xf32>
    %965 = vector.extract_strided_slice %950 {offsets = [0, 384], sizes = [2, 128], strides = [1, 1]} : vector<2x512xf32> to vector<2x128xf32>
    %966 = arith.negf %965 : vector<2x128xf32>
    %967 = math.exp %966 : vector<2x128xf32>
    %cst_403 = arith.constant 1.000000e+00 : f32
    %968 = vector.broadcast %cst_403 : f32 to vector<2x128xf32>
    %969 = arith.addf %968, %967 : vector<2x128xf32>
    %970 = arith.divf %968, %969 : vector<2x128xf32>
    %971 = arith.mulf %962, %944 : vector<2x128xf32>
    %972 = arith.mulf %956, %964 : vector<2x128xf32>
    %973 = arith.addf %971, %972 : vector<2x128xf32>
    %974 = math.tanh %973 : vector<2x128xf32>
    %975 = arith.mulf %970, %974 : vector<2x128xf32>
    %c26_404 = arith.constant 26 : index
    %c0_405 = arith.constant 0 : index
    %976 = vector.load %arg18[%c26_404, %c0_405] : memref<30x512xf32, #tpu.memory_space<vmem>>, vector<2x512xf32>
    %c0_406 = arith.constant 0 : index
    %c0_407 = arith.constant 0 : index
    %977 = vector.load %arg11[%c0_406, %c0_407] : memref<128x512xf32, #tpu.memory_space<vmem>>, vector<128x512xf32>
    %cst_408 = arith.constant dense<0.000000e+00> : vector<2x512xf32>
    %978 = tpu.matmul %975, %977, %cst_408 {dimension_numbers = #tpu.dot_dimension_numbers<[1], [0], [0], [1], [0, 0, 1, 1], [], []>} : vector<2x128xf32>, vector<128x512xf32>, vector<2x512xf32> -> vector<2x512xf32>
    %979 = arith.addf %976, %978 : vector<2x512xf32>
    %980 = vector.extract_strided_slice %979 {offsets = [0, 0], sizes = [2, 128], strides = [1, 1]} : vector<2x512xf32> to vector<2x128xf32>
    %981 = arith.negf %980 : vector<2x128xf32>
    %982 = math.exp %981 : vector<2x128xf32>
    %cst_409 = arith.constant 1.000000e+00 : f32
    %983 = vector.broadcast %cst_409 : f32 to vector<2x128xf32>
    %984 = arith.addf %983, %982 : vector<2x128xf32>
    %985 = arith.divf %983, %984 : vector<2x128xf32>
    %986 = vector.extract_strided_slice %979 {offsets = [0, 128], sizes = [2, 128], strides = [1, 1]} : vector<2x512xf32> to vector<2x128xf32>
    %987 = arith.negf %986 : vector<2x128xf32>
    %988 = math.exp %987 : vector<2x128xf32>
    %cst_410 = arith.constant 1.000000e+00 : f32
    %989 = vector.broadcast %cst_410 : f32 to vector<2x128xf32>
    %990 = arith.addf %989, %988 : vector<2x128xf32>
    %991 = arith.divf %989, %990 : vector<2x128xf32>
    %992 = vector.extract_strided_slice %979 {offsets = [0, 256], sizes = [2, 128], strides = [1, 1]} : vector<2x512xf32> to vector<2x128xf32>
    %993 = math.tanh %992 : vector<2x128xf32>
    %994 = vector.extract_strided_slice %979 {offsets = [0, 384], sizes = [2, 128], strides = [1, 1]} : vector<2x512xf32> to vector<2x128xf32>
    %995 = arith.negf %994 : vector<2x128xf32>
    %996 = math.exp %995 : vector<2x128xf32>
    %cst_411 = arith.constant 1.000000e+00 : f32
    %997 = vector.broadcast %cst_411 : f32 to vector<2x128xf32>
    %998 = arith.addf %997, %996 : vector<2x128xf32>
    %999 = arith.divf %997, %998 : vector<2x128xf32>
    %1000 = arith.mulf %991, %973 : vector<2x128xf32>
    %1001 = arith.mulf %985, %993 : vector<2x128xf32>
    %1002 = arith.addf %1000, %1001 : vector<2x128xf32>
    %1003 = math.tanh %1002 : vector<2x128xf32>
    %1004 = arith.mulf %999, %1003 : vector<2x128xf32>
    %c28_412 = arith.constant 28 : index
    %c0_413 = arith.constant 0 : index
    %1005 = vector.load %arg18[%c28_412, %c0_413] : memref<30x512xf32, #tpu.memory_space<vmem>>, vector<2x512xf32>
    %c0_414 = arith.constant 0 : index
    %c0_415 = arith.constant 0 : index
    %1006 = vector.load %arg11[%c0_414, %c0_415] : memref<128x512xf32, #tpu.memory_space<vmem>>, vector<128x512xf32>
    %cst_416 = arith.constant dense<0.000000e+00> : vector<2x512xf32>
    %1007 = tpu.matmul %1004, %1006, %cst_416 {dimension_numbers = #tpu.dot_dimension_numbers<[1], [0], [0], [1], [0, 0, 1, 1], [], []>} : vector<2x128xf32>, vector<128x512xf32>, vector<2x512xf32> -> vector<2x512xf32>
    %1008 = arith.addf %1005, %1007 : vector<2x512xf32>
    %1009 = vector.extract_strided_slice %1008 {offsets = [0, 0], sizes = [2, 128], strides = [1, 1]} : vector<2x512xf32> to vector<2x128xf32>
    %1010 = arith.negf %1009 : vector<2x128xf32>
    %1011 = math.exp %1010 : vector<2x128xf32>
    %cst_417 = arith.constant 1.000000e+00 : f32
    %1012 = vector.broadcast %cst_417 : f32 to vector<2x128xf32>
    %1013 = arith.addf %1012, %1011 : vector<2x128xf32>
    %1014 = arith.divf %1012, %1013 : vector<2x128xf32>
    %1015 = vector.extract_strided_slice %1008 {offsets = [0, 128], sizes = [2, 128], strides = [1, 1]} : vector<2x512xf32> to vector<2x128xf32>
    %1016 = arith.negf %1015 : vector<2x128xf32>
    %1017 = math.exp %1016 : vector<2x128xf32>
    %cst_418 = arith.constant 1.000000e+00 : f32
    %1018 = vector.broadcast %cst_418 : f32 to vector<2x128xf32>
    %1019 = arith.addf %1018, %1017 : vector<2x128xf32>
    %1020 = arith.divf %1018, %1019 : vector<2x128xf32>
    %1021 = vector.extract_strided_slice %1008 {offsets = [0, 256], sizes = [2, 128], strides = [1, 1]} : vector<2x512xf32> to vector<2x128xf32>
    %1022 = math.tanh %1021 : vector<2x128xf32>
    %1023 = vector.extract_strided_slice %1008 {offsets = [0, 384], sizes = [2, 128], strides = [1, 1]} : vector<2x512xf32> to vector<2x128xf32>
    %1024 = arith.negf %1023 : vector<2x128xf32>
    %1025 = math.exp %1024 : vector<2x128xf32>
    %cst_419 = arith.constant 1.000000e+00 : f32
    %1026 = vector.broadcast %cst_419 : f32 to vector<2x128xf32>
    %1027 = arith.addf %1026, %1025 : vector<2x128xf32>
    %1028 = arith.divf %1026, %1027 : vector<2x128xf32>
    %1029 = arith.mulf %1020, %1002 : vector<2x128xf32>
    %1030 = arith.mulf %1014, %1022 : vector<2x128xf32>
    %1031 = arith.addf %1029, %1030 : vector<2x128xf32>
    %1032 = math.tanh %1031 : vector<2x128xf32>
    %1033 = arith.mulf %1028, %1032 : vector<2x128xf32>
    %c0_420 = arith.constant 0 : index
    %c0_421 = arith.constant 0 : index
    %1034 = vector.load %arg12[%c0_420, %c0_421] : memref<128x2xf32, #tpu.memory_space<vmem>>, vector<128x2xf32>
    %cst_422 = arith.constant dense<0.000000e+00> : vector<2x2xf32>
    %1035 = tpu.matmul %1033, %1034, %cst_422 {dimension_numbers = #tpu.dot_dimension_numbers<[1], [0], [0], [1], [0, 0, 1, 1], [], []>} : vector<2x128xf32>, vector<128x2xf32>, vector<2x2xf32> -> vector<2x2xf32>
    %c0_423 = arith.constant 0 : index
    %c0_424 = arith.constant 0 : index
    %1036 = vector.load %arg13[%c0_423, %c0_424] : memref<1x2xf32, #tpu.memory_space<vmem>>, vector<1x2xf32>
    %1037 = vector.broadcast %1036 : vector<1x2xf32> to vector<2x2xf32>
    %1038 = arith.addf %1035, %1037 : vector<2x2xf32>
    %c0_425 = arith.constant 0 : index
    %c0_426 = arith.constant 0 : index
    %1039 = vector.load %arg14[%c0_425, %c0_426] : memref<2x2xf32, #tpu.memory_space<vmem>>, vector<2x2xf32>
    tpu.vector_store %arg14[%c0_425, %c0_426], %1038 {strides = array<i32>} : memref<2x2xf32, #tpu.memory_space<vmem>>, vector<2x2xf32>,
    return
  }
}

</mosaic_0001>

<llo_original>
// kernel: base_lstm_forward.1
$region0: #{base_lstm_forward.1}
  #allocation0 [shape = 'u32[]', space=smem, size = 0x4, offset = 0x4, fixed_abs, tag = 'smem constant byte address 0x4 - core index']
  #allocation1 [shape = 'u32[72,128]{1,0:T(1,128)}', space=vmem, size = 0x9000, scoped, tag = 'internal scratch']
  #allocation2 [shape = 'f32[2,7680]{1,0:T(2,128)}', space=vmem, size = 0xf000, scoped, tag = 'scratch operand']
  #allocation3 [shape = 'f32[30,128]{1,0:T(8,128)}', space=vmem, size = 0x4000, scoped, tag = 'scratch operand']
  #allocation4 [shape = 'f32[30,128]{1,0:T(8,128)}', space=vmem, size = 0x4000, scoped, tag = 'scratch operand']
  #allocation5 [shape = 'f32[30,512]{1,0:T(8,128)}', space=vmem, size = 0x10000, scoped, tag = 'scratch operand']
  #allocation6 [shape = 'f32[1]{0:T(128)S(6)}', space=smem, size = 0x200, scoped, tag = 'scoped memory for base_lstm_forward.1']
  #allocation7 [shape = 'f32[1]{0:T(128)S(6)}', space=smem, size = 0x200, scoped, tag = 'scoped memory for base_lstm_forward.1']
  %s0 = inlined_call_operand.vmem [shape: f32[2,256], index: 0, kind: input, shape index: {}]
  %s1 = inlined_call_operand.vmem [shape: f32[3,256,63], index: 1, kind: input, shape index: {}]
  %s2 = inlined_call_operand.<no memory space> [shape: f32[1], index: 2, kind: input, shape index: {}]
  %s3 = inlined_call_operand.vmem [shape: f32[3,63,15], index: 3, kind: input, shape index: {}]
  %s4 = inlined_call_operand.<no memory space> [shape: f32[1], index: 4, kind: input, shape index: {}]
  %s5 = inlined_call_operand.vmem [shape: f32[15,7680], index: 5, kind: input, shape index: {}]
  %s6 = inlined_call_operand.hbm [shape: f32[1,512], index: 6, kind: input, shape index: {}]
  %s7 = inlined_call_operand.vmem [shape: f32[128,512], index: 7, kind: input, shape index: {}]
  %s8 = inlined_call_operand.hbm [shape: f32[128,512], index: 8, kind: input, shape index: {}]
  %s9 = inlined_call_operand.hbm [shape: f32[128,512], index: 9, kind: input, shape index: {}]
  %s10 = inlined_call_operand.hbm [shape: f32[1,512], index: 10, kind: input, shape index: {}]
  %s11 = inlined_call_operand.hbm [shape: f32[128,512], index: 11, kind: input, shape index: {}]
  %s12 = inlined_call_operand.vmem [shape: f32[128,2], index: 12, kind: input, shape index: {}]
  %s13 = inlined_call_operand.vmem [shape: f32[1,2], index: 13, kind: input, shape index: {}]
  %s14 = inlined_call_operand.hbm [shape: f32[2,2], index: 14, kind: output, shape index: {}]
  %s15 = sld [smem:[#allocation0]]
  $region86: #{base_lstm_forward.1} parent=0
    _
  %s17 = ssub.s32 1, %s15
  %s18 = scalar_select 0, %s17, %s15
  %19 = sst [smem:[#allocation6]] %s2
  %20 = sst [smem:[#allocation7]] %s4
  $region1: #{base_lstm_forward.1} parent=0
    #allocation8 [shape = 'u8[2048]{0}', space=vmem, size = 0x800, scoped, tag = 'input window, operand 6, single buffered']
    #allocation9 [shape = 's32[1]{0}', space=sflag, size = 0x4, scoped, tag = 'scoped memory for base_lstm_forward.1']
    #allocation10 [shape = 's32[1]{0}', space=sflag, size = 0x4, scoped, tag = 'scoped memory for base_lstm_forward.1']
    #allocation11 [shape = 'u8[262144]{0}', space=vmem, size = 0x40000, scoped, tag = 'input window, operand 8, single buffered']
    #allocation12 [shape = 's32[1]{0}', space=sflag, size = 0x4, scoped, tag = 'scoped memory for base_lstm_forward.1']
    #allocation13 [shape = 'u8[262144]{0}', space=vmem, size = 0x40000, scoped, tag = 'input window, operand 9, single buffered']
    #allocation14 [shape = 'u8[2048]{0}', space=vmem, size = 0x800, scoped, tag = 'input window, operand 10, single buffered']
    #allocation15 [shape = 's32[1]{0}', space=sflag, size = 0x4, scoped, tag = 'scoped memory for base_lstm_forward.1']
    #allocation16 [shape = 'u8[262144]{0}', space=vmem, size = 0x40000, scoped, tag = 'input window, operand 11, single buffered']
    #allocation17 [shape = 'u8[1024]{0}', space=vmem, size = 0x400, scoped, tag = 'output window, operand 0, single buffered']
    %21 = vsyncpa [#allocation9], 0
    %22 = vsyncpa [#allocation12], 0
    %23 = vsyncpa [#allocation15], 0
    %24 = vsyncpa [#allocation10], 0
    // Predicated region
    $region2: #{base_lstm_forward.1} parent=1 // pred_check
      _
    $region3: #{base_lstm_forward.1} parent=1 // pred_check_branch
      %26 = sbr.rel (0) target = $region5
    $region4: #{base_lstm_forward.1} parent=1 // pred_region
      _
    $region5: #{base_lstm_forward.1} parent=1 // pred_fallthru
      _
    // Predicated region
    $region6: #{base_lstm_forward.1} parent=1 // pred_check
      _
    $region7: #{base_lstm_forward.1} parent=1 // pred_check_branch
      %28 = sbr.rel (0) target = $region9
    $region8: #{base_lstm_forward.1} parent=1 // pred_region
      _
    $region9: #{base_lstm_forward.1} parent=1 // pred_fallthru
      _
    // Predicated region
    $region10: #{base_lstm_forward.1} parent=1 // pred_check
      _
    $region11: #{base_lstm_forward.1} parent=1 // pred_check_branch
      %30 = sbr.rel (0) target = $region13
    $region12: #{base_lstm_forward.1} parent=1 // pred_region
      _
    $region13: #{base_lstm_forward.1} parent=1 // pred_fallthru
      _
    // Predicated region
    $region14: #{base_lstm_forward.1} parent=1 // pred_check
      _
    $region15: #{base_lstm_forward.1} parent=1 // pred_check_branch
      %32 = sbr.rel (0) target = $region17
    $region16: #{base_lstm_forward.1} parent=1 // pred_region
      _
    $region17: #{base_lstm_forward.1} parent=1 // pred_fallthru
      _
    // Predicated region
    $region18: #{base_lstm_forward.1} parent=1 // pred_check
      _
    $region19: #{base_lstm_forward.1} parent=1 // pred_check_branch
      %34 = sbr.rel (0) target = $region21
    $region20: #{base_lstm_forward.1} parent=1 // pred_region
      _
    $region21: #{base_lstm_forward.1} parent=1 // pred_fallthru
      _
    // Predicated region
    $region22: #{base_lstm_forward.1} parent=1 // pred_check
      _
    $region23: #{base_lstm_forward.1} parent=1 // pred_check_branch
      %36 = sbr.rel (0) target = $region25
    $region24: #{base_lstm_forward.1} parent=1 // pred_region
      _
    $region25: #{base_lstm_forward.1} parent=1 // pred_fallthru
      _
    // Predicated region
    $region26: #{base_lstm_forward.1} parent=1 // pred_check
      _
    $region27: #{base_lstm_forward.1} parent=1 // pred_check_branch
      %38 = sbr.rel (0) target = $region29
    $region28: #{base_lstm_forward.1} parent=1 // pred_region
      %40 = vsyncadd [#allocation9], 0
      %s42 = sshll.u32 %s6, 4
      %s43 = int_to_ptr.hbm [resolvable:$true] %s42
      %s44 = sshll.u32 [#allocation8], 4
      %s45 = int_to_ptr.vmem [resolvable:$true] %s44
      %47 = dma.hbm_to_vmem [thread:$0]  %s43, 64, %s45, [#allocation9]
    $region29: #{base_lstm_forward.1} parent=1 // pred_fallthru
      _
    // Predicated region
    $region30: #{base_lstm_forward.1} parent=1 // pred_check
      _
    $region31: #{base_lstm_forward.1} parent=1 // pred_check_branch
      %49 = sbr.rel (0) target = $region33
    $region32: #{base_lstm_forward.1} parent=1 // pred_region
      _
    $region33: #{base_lstm_forward.1} parent=1 // pred_fallthru
      _
    // Predicated region
    $region34: #{base_lstm_forward.1} parent=1 // pred_check
      _
    $region35: #{base_lstm_forward.1} parent=1 // pred_check_branch
      %51 = sbr.rel (0) target = $region37
    $region36: #{base_lstm_forward.1} parent=1 // pred_region
      %53 = vsyncadd [#allocation12], 0
      %s54 = sshll.u32 %s8, 4
      %s55 = int_to_ptr.hbm [resolvable:$true] %s54
      %s56 = sshll.u32 [#allocation11], 4
      %s57 = int_to_ptr.vmem [resolvable:$true] %s56
      %62 = dma.hbm_to_vmem [thread:$0]  %s55, 8192, %s57, [#allocation12], 512, 512, 32
    $region37: #{base_lstm_forward.1} parent=1 // pred_fallthru
      _
    // Predicated region
    $region38: #{base_lstm_forward.1} parent=1 // pred_check
      _
    $region39: #{base_lstm_forward.1} parent=1 // pred_check_branch
      %64 = sbr.rel (0) target = $region41
    $region40: #{base_lstm_forward.1} parent=1 // pred_region
      %66 = vsyncadd [#allocation12], 0
      %s67 = sshll.u32 %s9, 4
      %s68 = int_to_ptr.hbm [resolvable:$true] %s67
      %s69 = sshll.u32 [#allocation13], 4
      %s70 = int_to_ptr.vmem [resolvable:$true] %s69
      %75 = dma.hbm_to_vmem [thread:$0]  %s68, 8192, %s70, [#allocation12], 512, 512, 32
    $region41: #{base_lstm_forward.1} parent=1 // pred_fallthru
      _
    // Predicated region
    $region42: #{base_lstm_forward.1} parent=1 // pred_check
      _
    $region43: #{base_lstm_forward.1} parent=1 // pred_check_branch
      %77 = sbr.rel (0) target = $region45
    $region44: #{base_lstm_forward.1} parent=1 // pred_region
      %79 = vsyncadd [#allocation15], 0
      %s81 = sshll.u32 %s10, 4
      %s82 = int_to_ptr.hbm [resolvable:$true] %s81
      %s83 = sshll.u32 [#allocation14], 4
      %s84 = int_to_ptr.vmem [resolvable:$true] %s83
      %86 = dma.hbm_to_vmem [thread:$0]  %s82, 64, %s84, [#allocation15]
    $region45: #{base_lstm_forward.1} parent=1 // pred_fallthru
      _
    // Predicated region
    $region46: #{base_lstm_forward.1} parent=1 // pred_check
      _
    $region47: #{base_lstm_forward.1} parent=1 // pred_check_branch
      %88 = sbr.rel (0) target = $region49
    $region48: #{base_lstm_forward.1} parent=1 // pred_region
      %90 = vsyncadd [#allocation15], 0
      %s91 = sshll.u32 %s11, 4
      %s92 = int_to_ptr.hbm [resolvable:$true] %s91
      %s93 = sshll.u32 [#allocation16], 4
      %s94 = int_to_ptr.vmem [resolvable:$true] %s93
      %99 = dma.hbm_to_vmem [thread:$0]  %s92, 8192, %s94, [#allocation15], 512, 512, 32
    $region49: #{base_lstm_forward.1} parent=1 // pred_fallthru
      _
    // Predicated region
    $region50: #{base_lstm_forward.1} parent=1 // pred_check
      _
    $region51: #{base_lstm_forward.1} parent=1 // pred_check_branch
      %101 = sbr.rel (0) target = $region53
    $region52: #{base_lstm_forward.1} parent=1 // pred_region
      _
    $region53: #{base_lstm_forward.1} parent=1 // pred_fallthru
      _
    // Predicated region
    $region54: #{base_lstm_forward.1} parent=1 // pred_check
      _
    $region55: #{base_lstm_forward.1} parent=1 // pred_check_branch
      %103 = sbr.rel (0) target = $region57
    $region56: #{base_lstm_forward.1} parent=1 // pred_region
      _
    $region57: #{base_lstm_forward.1} parent=1 // pred_fallthru
      _
    // Predicated region
    $region58: #{base_lstm_forward.1} parent=1 // pred_check
      _
    $region59: #{base_lstm_forward.1} parent=1 // pred_check_branch
      %105 = sbr.rel (0) target = $region61
    $region60: #{base_lstm_forward.1} parent=1 // pred_region
      %107 = dma.done [#allocation9], 64
    $region61: #{base_lstm_forward.1} parent=1 // pred_fallthru
      _
    // Predicated region
    $region62: #{base_lstm_forward.1} parent=1 // pred_check
      _
    $region63: #{base_lstm_forward.1} parent=1 // pred_check_branch
      %109 = sbr.rel (0) target = $region65
    $region64: #{base_lstm_forward.1} parent=1 // pred_region
      %111 = dma.done [#allocation12], 8192
    $region65: #{base_lstm_forward.1} parent=1 // pred_fallthru
      _
    // Predicated region
    $region66: #{base_lstm_forward.1} parent=1 // pred_check
      _
    $region67: #{base_lstm_forward.1} parent=1 // pred_check_branch
      %113 = sbr.rel (0) target = $region69
    $region68: #{base_lstm_forward.1} parent=1 // pred_region
      %115 = dma.done [#allocation12], 8192
    $region69: #{base_lstm_forward.1} parent=1 // pred_fallthru
      _
    // Predicated region
    $region70: #{base_lstm_forward.1} parent=1 // pred_check
      _
    $region71: #{base_lstm_forward.1} parent=1 // pred_check_branch
      %117 = sbr.rel (0) target = $region73
    $region72: #{base_lstm_forward.1} parent=1 // pred_region
      %119 = dma.done [#allocation15], 64
    $region73: #{base_lstm_forward.1} parent=1 // pred_fallthru
      _
    // Predicated region
    $region74: #{base_lstm_forward.1} parent=1 // pred_check
      _
    $region75: #{base_lstm_forward.1} parent=1 // pred_check_branch
      %121 = sbr.rel (0) target = $region77
    $region76: #{base_lstm_forward.1} parent=1 // pred_region
      %123 = dma.done [#allocation15], 8192
    $region77: #{base_lstm_forward.1} parent=1 // pred_fallthru
      _
    %v124 = vld [vmem:[%s0] sm:$0xf]
    %s125 = sld [smem:[#allocation6]]
    %v126 = vld [vmem:[%s1] sm:$0xff]
    %v127 = vld [vmem:[%s1 + $0x8] sm:$0xff]
    %v128 = vld [vmem:[%s1 + $0x10] sm:$0xff]
    %v129 = vld [vmem:[%s1 + $0x18] sm:$0xff]
    %v130 = vld [vmem:[%s1 + $0x20] sm:$0xff]
    %v131 = vld [vmem:[%s1 + $0x28] sm:$0xff]
    %v132 = vld [vmem:[%s1 + $0x30] sm:$0xff]
    %v133 = vld [vmem:[%s1 + $0x38] sm:$0xff]
    %v134 = vld [vmem:[%s1 + $0x40] sm:$0xff]
    %v135 = vld [vmem:[%s1 + $0x48] sm:$0xff]
    %v136 = vld [vmem:[%s1 + $0x50] sm:$0xff]
    %v137 = vld [vmem:[%s1 + $0x58] sm:$0xff]
    %v138 = vld [vmem:[%s1 + $0x60] sm:$0xff]
    %v139 = vld [vmem:[%s1 + $0x68] sm:$0xff]
    %v140 = vld [vmem:[%s1 + $0x70] sm:$0xff]
    %v141 = vld [vmem:[%s1 + $0x78] sm:$0xff]
    %v142 = vld [vmem:[%s1 + $0x80] sm:$0xff]
    %v143 = vld [vmem:[%s1 + $0x88] sm:$0xff]
    %v144 = vld [vmem:[%s1 + $0x90] sm:$0xff]
    %v145 = vld [vmem:[%s1 + $0x98] sm:$0xff]
    %v146 = vld [vmem:[%s1 + $0xa0] sm:$0xff]
    %v147 = vld [vmem:[%s1 + $0xa8] sm:$0xff]
    %v148 = vld [vmem:[%s1 + $0xb0] sm:$0xff]
    %v149 = vld [vmem:[%s1 + $0xb8] sm:$0xff]
    %v150 = vld [vmem:[%s1 + $0xc0] sm:$0xff]
    %v151 = vld [vmem:[%s1 + $0xc8] sm:$0xff]
    %v152 = vld [vmem:[%s1 + $0xd0] sm:$0xff]
    %v153 = vld [vmem:[%s1 + $0xd8] sm:$0xff]
    %v154 = vld [vmem:[%s1 + $0xe0] sm:$0xff]
    %v155 = vld [vmem:[%s1 + $0xe8] sm:$0xff]
    %v156 = vld [vmem:[%s1 + $0xf0] sm:$0xff]
    %v157 = vld [vmem:[%s1 + $0xf8] sm:$0xff]
    %159 = vst [vmem:[#allocation1] ss:$4 sm:$0xff] %v124
    %v160 = vld.sshfl [vmem:[#allocation1] sm:$0xff pattern:$0x73625140]
    %v161 = vld.sshfl [vmem:[#allocation1 + $0x8] sm:$0xff pattern:$0x73625140]
    %164 = vmatpush.msra.mxu0 %v141
    %165 = vmatpush.msra.mxu0 %v140
    %166 = vmatpush.msra.mxu0 %v139
    %167 = vmatpush.msra.mxu0 %v138
    %168 = vmatpush.msra.mxu0 %v137
    %169 = vmatpush.msra.mxu0 %v136
    %170 = vmatpush.msra.mxu0 %v135
    %171 = vmatpush.msra.mxu0 %v134
    %172 = vmatpush.msra.mxu0 %v133
    %173 = vmatpush.msra.mxu0 %v132
    %174 = vmatpush.msra.mxu0 %v131
    %175 = vmatpush.msra.mxu0 %v130
    %176 = vmatpush.msra.mxu0 %v129
    %177 = vmatpush.msra.mxu0 %v128
    %178 = vmatpush.msra.mxu0 %v127
    %179 = vmatpush.msra.mxu0 %v126
    %180 = vmatmul.f32.gmra.mxu0 %v160
    %v181 = vpop.f32.mrf.mxu0
    %v182 = vadd.f32 0.0, %v181
    %183 = vdwg.mxu0
    %184 = vmatpush.msra.mxu0 %v157
    %185 = vmatpush.msra.mxu0 %v156
    %186 = vmatpush.msra.mxu0 %v155
    %187 = vmatpush.msra.mxu0 %v154
    %188 = vmatpush.msra.mxu0 %v153
    %189 = vmatpush.msra.mxu0 %v152
    %190 = vmatpush.msra.mxu0 %v151
    %191 = vmatpush.msra.mxu0 %v150
    %192 = vmatpush.msra.mxu0 %v149
    %193 = vmatpush.msra.mxu0 %v148
    %194 = vmatpush.msra.mxu0 %v147
    %195 = vmatpush.msra.mxu0 %v146
    %196 = vmatpush.msra.mxu0 %v145
    %197 = vmatpush.msra.mxu0 %v144
    %198 = vmatpush.msra.mxu0 %v143
    %199 = vmatpush.msra.mxu0 %v142
    %200 = vmatmul.f32.gmra.mxu0 %v161
    %v201 = vpop.f32.mrf.mxu0
    %v202 = vadd.f32 %v182, %v201
    %203 = vdwg.mxu0
    %s204 = scalar_lea.vmem %s1, 256
    %v205 = vld [vmem:[%s204] sm:$0xff]
    %v206 = vld [vmem:[%s204 + $0x8] sm:$0xff]
    %v207 = vld [vmem:[%s204 + $0x10] sm:$0xff]
    %v208 = vld [vmem:[%s204 + $0x18] sm:$0xff]
    %v209 = vld [vmem:[%s204 + $0x20] sm:$0xff]
    %v210 = vld [vmem:[%s204 + $0x28] sm:$0xff]
    %v211 = vld [vmem:[%s204 + $0x30] sm:$0xff]
    %v212 = vld [vmem:[%s204 + $0x38] sm:$0xff]
    %v213 = vld [vmem:[%s204 + $0x40] sm:$0xff]
    %v214 = vld [vmem:[%s204 + $0x48] sm:$0xff]
    %v215 = vld [vmem:[%s204 + $0x50] sm:$0xff]
    %v216 = vld [vmem:[%s204 + $0x58] sm:$0xff]
    %v217 = vld [vmem:[%s204 + $0x60] sm:$0xff]
    %v218 = vld [vmem:[%s204 + $0x68] sm:$0xff]
    %v219 = vld [vmem:[%s204 + $0x70] sm:$0xff]
    %v220 = vld [vmem:[%s204 + $0x78] sm:$0xff]
    %v221 = vld [vmem:[%s204 + $0x80] sm:$0xff]
    %v222 = vld [vmem:[%s204 + $0x88] sm:$0xff]
    %v223 = vld [vmem:[%s204 + $0x90] sm:$0xff]
    %v224 = vld [vmem:[%s204 + $0x98] sm:$0xff]
    %v225 = vld [vmem:[%s204 + $0xa0] sm:$0xff]
    %v226 = vld [vmem:[%s204 + $0xa8] sm:$0xff]
    %v227 = vld [vmem:[%s204 + $0xb0] sm:$0xff]
    %v228 = vld [vmem:[%s204 + $0xb8] sm:$0xff]
    %v229 = vld [vmem:[%s204 + $0xc0] sm:$0xff]
    %v230 = vld [vmem:[%s204 + $0xc8] sm:$0xff]
    %v231 = vld [vmem:[%s204 + $0xd0] sm:$0xff]
    %v232 = vld [vmem:[%s204 + $0xd8] sm:$0xff]
    %v233 = vld [vmem:[%s204 + $0xe0] sm:$0xff]
    %v234 = vld [vmem:[%s204 + $0xe8] sm:$0xff]
    %v235 = vld [vmem:[%s204 + $0xf0] sm:$0xff]
    %v236 = vld [vmem:[%s204 + $0xf8] sm:$0xff]
    %237 = vst [vmem:[#allocation1] ss:$4 sm:$0xff] %v124
    %v238 = vld.sshfl [vmem:[#allocation1] sm:$0xff pattern:$0x73625140]
    %v239 = vld.sshfl [vmem:[#allocation1 + $0x8] sm:$0xff pattern:$0x73625140]
    %242 = vmatpush.msra.mxu0 %v220
    %243 = vmatpush.msra.mxu0 %v219
    %244 = vmatpush.msra.mxu0 %v218
    %245 = vmatpush.msra.mxu0 %v217
    %246 = vmatpush.msra.mxu0 %v216
    %247 = vmatpush.msra.mxu0 %v215
    %248 = vmatpush.msra.mxu0 %v214
    %249 = vmatpush.msra.mxu0 %v213
    %250 = vmatpush.msra.mxu0 %v212
    %251 = vmatpush.msra.mxu0 %v211
    %252 = vmatpush.msra.mxu0 %v210
    %253 = vmatpush.msra.mxu0 %v209
    %254 = vmatpush.msra.mxu0 %v208
    %255 = vmatpush.msra.mxu0 %v207
    %256 = vmatpush.msra.mxu0 %v206
    %257 = vmatpush.msra.mxu0 %v205
    %258 = vmatmul.f32.gmra.mxu0 %v238
    %v259 = vpop.f32.mrf.mxu0
    %v260 = vadd.f32 0.0, %v259
    %261 = vdwg.mxu0
    %262 = vmatpush.msra.mxu0 %v236
    %263 = vmatpush.msra.mxu0 %v235
    %264 = vmatpush.msra.mxu0 %v234
    %265 = vmatpush.msra.mxu0 %v233
    %266 = vmatpush.msra.mxu0 %v232
    %267 = vmatpush.msra.mxu0 %v231
    %268 = vmatpush.msra.mxu0 %v230
    %269 = vmatpush.msra.mxu0 %v229
    %270 = vmatpush.msra.mxu0 %v228
    %271 = vmatpush.msra.mxu0 %v227
    %272 = vmatpush.msra.mxu0 %v226
    %273 = vmatpush.msra.mxu0 %v225
    %274 = vmatpush.msra.mxu0 %v224
    %275 = vmatpush.msra.mxu0 %v223
    %276 = vmatpush.msra.mxu0 %v222
    %277 = vmatpush.msra.mxu0 %v221
    %278 = vmatmul.f32.gmra.mxu0 %v239
    %v279 = vpop.f32.mrf.mxu0
    %v280 = vadd.f32 %v260, %v279
    %281 = vdwg.mxu0
    %s282 = scalar_lea.vmem %s1, 512
    %v283 = vld [vmem:[%s282] sm:$0xff]
    %v284 = vld [vmem:[%s282 + $0x8] sm:$0xff]
    %v285 = vld [vmem:[%s282 + $0x10] sm:$0xff]
    %v286 = vld [vmem:[%s282 + $0x18] sm:$0xff]
    %v287 = vld [vmem:[%s282 + $0x20] sm:$0xff]
    %v288 = vld [vmem:[%s282 + $0x28] sm:$0xff]
    %v289 = vld [vmem:[%s282 + $0x30] sm:$0xff]
    %v290 = vld [vmem:[%s282 + $0x38] sm:$0xff]
    %v291 = vld [vmem:[%s282 + $0x40] sm:$0xff]
    %v292 = vld [vmem:[%s282 + $0x48] sm:$0xff]
    %v293 = vld [vmem:[%s282 + $0x50] sm:$0xff]
    %v294 = vld [vmem:[%s282 + $0x58] sm:$0xff]
    %v295 = vld [vmem:[%s282 + $0x60] sm:$0xff]
    %v296 = vld [vmem:[%s282 + $0x68] sm:$0xff]
    %v297 = vld [vmem:[%s282 + $0x70] sm:$0xff]
    %v298 = vld [vmem:[%s282 + $0x78] sm:$0xff]
    %v299 = vld [vmem:[%s282 + $0x80] sm:$0xff]
    %v300 = vld [vmem:[%s282 + $0x88] sm:$0xff]
    %v301 = vld [vmem:[%s282 + $0x90] sm:$0xff]
    %v302 = vld [vmem:[%s282 + $0x98] sm:$0xff]
    %v303 = vld [vmem:[%s282 + $0xa0] sm:$0xff]
    %v304 = vld [vmem:[%s282 + $0xa8] sm:$0xff]
    %v305 = vld [vmem:[%s282 + $0xb0] sm:$0xff]
    %v306 = vld [vmem:[%s282 + $0xb8] sm:$0xff]
    %v307 = vld [vmem:[%s282 + $0xc0] sm:$0xff]
    %v308 = vld [vmem:[%s282 + $0xc8] sm:$0xff]
    %v309 = vld [vmem:[%s282 + $0xd0] sm:$0xff]
    %v310 = vld [vmem:[%s282 + $0xd8] sm:$0xff]
    %v311 = vld [vmem:[%s282 + $0xe0] sm:$0xff]
    %v312 = vld [vmem:[%s282 + $0xe8] sm:$0xff]
    %v313 = vld [vmem:[%s282 + $0xf0] sm:$0xff]
    %v314 = vld [vmem:[%s282 + $0xf8] sm:$0xff]
    %315 = vst [vmem:[#allocation1] ss:$4 sm:$0xff] %v124
    %v316 = vld.sshfl [vmem:[#allocation1] sm:$0xff pattern:$0x73625140]
    %v317 = vld.sshfl [vmem:[#allocation1 + $0x8] sm:$0xff pattern:$0x73625140]
    %320 = vmatpush.msra.mxu0 %v298
    %321 = vmatpush.msra.mxu0 %v297
    %322 = vmatpush.msra.mxu0 %v296
    %323 = vmatpush.msra.mxu0 %v295
    %324 = vmatpush.msra.mxu0 %v294
    %325 = vmatpush.msra.mxu0 %v293
    %326 = vmatpush.msra.mxu0 %v292
    %327 = vmatpush.msra.mxu0 %v291
    %328 = vmatpush.msra.mxu0 %v290
    %329 = vmatpush.msra.mxu0 %v289
    %330 = vmatpush.msra.mxu0 %v288
    %331 = vmatpush.msra.mxu0 %v287
    %332 = vmatpush.msra.mxu0 %v286
    %333 = vmatpush.msra.mxu0 %v285
    %334 = vmatpush.msra.mxu0 %v284
    %335 = vmatpush.msra.mxu0 %v283
    %336 = vmatmul.f32.gmra.mxu0 %v316
    %v337 = vpop.f32.mrf.mxu0
    %v338 = vadd.f32 0.0, %v337
    %339 = vdwg.mxu0
    %340 = vmatpush.msra.mxu0 %v314
    %341 = vmatpush.msra.mxu0 %v313
    %342 = vmatpush.msra.mxu0 %v312
    %343 = vmatpush.msra.mxu0 %v311
    %344 = vmatpush.msra.mxu0 %v310
    %345 = vmatpush.msra.mxu0 %v309
    %346 = vmatpush.msra.mxu0 %v308
    %347 = vmatpush.msra.mxu0 %v307
    %348 = vmatpush.msra.mxu0 %v306
    %349 = vmatpush.msra.mxu0 %v305
    %350 = vmatpush.msra.mxu0 %v304
    %351 = vmatpush.msra.mxu0 %v303
    %352 = vmatpush.msra.mxu0 %v302
    %353 = vmatpush.msra.mxu0 %v301
    %354 = vmatpush.msra.mxu0 %v300
    %355 = vmatpush.msra.mxu0 %v299
    %356 = vmatmul.f32.gmra.mxu0 %v317
    %v357 = vpop.f32.mrf.mxu0
    %v358 = vadd.f32 %v338, %v357
    %359 = vdwg.mxu0
    %v360 = vmax.f32 %v202, %v280
    %v361 = vmax.f32 %v360, %v358
    %v362 = vstv %s125
    %v363 = vadd.f32 %v361, %v362
    %s364 = sld [smem:[#allocation7]]
    %v365 = vld [vmem:[%s3] sm:$0xff]
    %v366 = vld [vmem:[%s3 + $0x8] sm:$0xff]
    %v367 = vld [vmem:[%s3 + $0x10] sm:$0xff]
    %v368 = vld [vmem:[%s3 + $0x18] sm:$0xff]
    %v369 = vld [vmem:[%s3 + $0x20] sm:$0xff]
    %v370 = vld [vmem:[%s3 + $0x28] sm:$0xff]
    %v371 = vld [vmem:[%s3 + $0x30] sm:$0xff]
    %v372 = vld [vmem:[%s3 + $0x38] sm:$0x7f]
    %vm373 = vcmask 515072
    %v375 = vsel %vm373, %v363, 0
    %vm377 = vcmask 1046528
    %v379 = vsel %vm377, %v372, 0
    %381 = vmatpush.msra.mxu0 0.0
    %382 = vmatpush.msra.mxu0 0.0
    %383 = vmatpush.msra.mxu0 0.0
    %384 = vmatpush.msra.mxu0 0.0
    %385 = vmatpush.msra.mxu0 0.0
    %386 = vmatpush.msra.mxu0 0.0
    %387 = vmatpush.msra.mxu0 0.0
    %388 = vmatpush.msra.mxu0 0.0
    %389 = vmatpush.msra.mxu0 %v379
    %390 = vmatpush.msra.mxu0 %v371
    %391 = vmatpush.msra.mxu0 %v370
    %392 = vmatpush.msra.mxu0 %v369
    %393 = vmatpush.msra.mxu0 %v368
    %394 = vmatpush.msra.mxu0 %v367
    %395 = vmatpush.msra.mxu0 %v366
    %396 = vmatpush.msra.mxu0 %v365
    %397 = vmatmul.f32.gmra.mxu0 %v375
    %v398 = vpop.f32.mrf.mxu0
    %v399 = vadd.f32 0.0, %v398
    %400 = vdwg.mxu0
    %s401 = scalar_lea.vmem %s3, 64
    %v402 = vld [vmem:[%s401] sm:$0xff]
    %v403 = vld [vmem:[%s401 + $0x8] sm:$0xff]
    %v404 = vld [vmem:[%s401 + $0x10] sm:$0xff]
    %v405 = vld [vmem:[%s401 + $0x18] sm:$0xff]
    %v406 = vld [vmem:[%s401 + $0x20] sm:$0xff]
    %v407 = vld [vmem:[%s401 + $0x28] sm:$0xff]
    %v408 = vld [vmem:[%s401 + $0x30] sm:$0xff]
    %v409 = vld [vmem:[%s401 + $0x38] sm:$0x7f]
    %v411 = vsel %vm377, %v409, 0
    %413 = vmatpush.msra.mxu0 0.0
    %414 = vmatpush.msra.mxu0 0.0
    %415 = vmatpush.msra.mxu0 0.0
    %416 = vmatpush.msra.mxu0 0.0
    %417 = vmatpush.msra.mxu0 0.0
    %418 = vmatpush.msra.mxu0 0.0
    %419 = vmatpush.msra.mxu0 0.0
    %420 = vmatpush.msra.mxu0 0.0
    %421 = vmatpush.msra.mxu0 %v411
    %422 = vmatpush.msra.mxu0 %v408
    %423 = vmatpush.msra.mxu0 %v407
    %424 = vmatpush.msra.mxu0 %v406
    %425 = vmatpush.msra.mxu0 %v405
    %426 = vmatpush.msra.mxu0 %v404
    %427 = vmatpush.msra.mxu0 %v403
    %428 = vmatpush.msra.mxu0 %v402
    %429 = vmatmul.f32.gmra.mxu0 %v375
    %v430 = vpop.f32.mrf.mxu0
    %v431 = vadd.f32 0.0, %v430
    %432 = vdwg.mxu0
    %s433 = scalar_lea.vmem %s3, 128
    %v434 = vld [vmem:[%s433] sm:$0xff]
    %v435 = vld [vmem:[%s433 + $0x8] sm:$0xff]
    %v436 = vld [vmem:[%s433 + $0x10] sm:$0xff]
    %v437 = vld [vmem:[%s433 + $0x18] sm:$0xff]
    %v438 = vld [vmem:[%s433 + $0x20] sm:$0xff]
    %v439 = vld [vmem:[%s433 + $0x28] sm:$0xff]
    %v440 = vld [vmem:[%s433 + $0x30] sm:$0xff]
    %v441 = vld [vmem:[%s433 + $0x38] sm:$0x7f]
    %v443 = vsel %vm377, %v441, 0
    %445 = vmatpush.msra.mxu0 0.0
    %446 = vmatpush.msra.mxu0 0.0
    %447 = vmatpush.msra.mxu0 0.0
    %448 = vmatpush.msra.mxu0 0.0
    %449 = vmatpush.msra.mxu0 0.0
    %450 = vmatpush.msra.mxu0 0.0
    %451 = vmatpush.msra.mxu0 0.0
    %452 = vmatpush.msra.mxu0 0.0
    %453 = vmatpush.msra.mxu0 %v443
    %454 = vmatpush.msra.mxu0 %v440
    %455 = vmatpush.msra.mxu0 %v439
    %456 = vmatpush.msra.mxu0 %v438
    %457 = vmatpush.msra.mxu0 %v437
    %458 = vmatpush.msra.mxu0 %v436
    %459 = vmatpush.msra.mxu0 %v435
    %460 = vmatpush.msra.mxu0 %v434
    %461 = vmatmul.f32.gmra.mxu0 %v375
    %v462 = vpop.f32.mrf.mxu0
    %v463 = vadd.f32 0.0, %v462
    %464 = vdwg.mxu0
    %v465 = vmax.f32 %v399, %v431
    %v466 = vmax.f32 %v465, %v463
    %v467 = vstv %s364
    %v468 = vadd.f32 %v466, %v467
    %v469 = vld [vmem:[%s5] sm:$0xff]
    %v470 = vld [vmem:[%s5 + $0x8] sm:$0xff]
    %v471 = vld [vmem:[%s5 + $0x10] sm:$0xff]
    %v472 = vld [vmem:[%s5 + $0x18] sm:$0xff]
    %v473 = vld [vmem:[%s5 + $0x1e0] sm:$0x7f]
    %v474 = vld [vmem:[%s5 + $0x1e8] sm:$0x7f]
    %v475 = vld [vmem:[%s5 + $0x1f0] sm:$0x7f]
    %v476 = vld [vmem:[%s5 + $0x1f8] sm:$0x7f]
    %v477 = vld [vmem:[#allocation8] sm:$0xf]
    %v479 = vperm.slane %v477, 0
    %v480 = vperm.slane %v477, 1
    %v481 = vperm.slane %v477, 2
    %v482 = vperm.slane %v477, 3
    %vm487 = vcmask 121856
    %v489 = vsel %vm487, %v468, 0
    %v492 = vsel %vm377, %v473, 0
    %v495 = vsel %vm377, %v474, 0
    %v498 = vsel %vm377, %v475, 0
    %v501 = vsel %vm377, %v476, 0
    %503 = vmatpush.msra.mxu0 0.0
    %504 = vmatpush.msra.mxu0 0.0
    %505 = vmatpush.msra.mxu0 0.0
    %506 = vmatpush.msra.mxu0 0.0
    %507 = vmatpush.msra.mxu0 0.0
    %508 = vmatpush.msra.mxu0 0.0
    %509 = vmatpush.msra.mxu0 0.0
    %510 = vmatpush.msra.mxu0 0.0
    %511 = vmatpush.msra.mxu0 0.0
    %512 = vmatpush.msra.mxu0 0.0
    %513 = vmatpush.msra.mxu0 0.0
    %514 = vmatpush.msra.mxu0 0.0
    %515 = vmatpush.msra.mxu0 0.0
    %516 = vmatpush.msra.mxu0 0.0
    %517 = vmatpush.msra.mxu0 %v492
    %518 = vmatpush.msra.mxu0 %v469
    %519 = vmatmul.f32.gmra.mxu0 %v489
    %v520 = vpop.f32.mrf.mxu0
    %v521 = vadd.f32 %v479, %v520
    %522 = vdwg.mxu0
    %523 = vmatpush.msra.mxu0 0.0
    %524 = vmatpush.msra.mxu0 0.0
    %525 = vmatpush.msra.mxu0 0.0
    %526 = vmatpush.msra.mxu0 0.0
    %527 = vmatpush.msra.mxu0 0.0
    %528 = vmatpush.msra.mxu0 0.0
    %529 = vmatpush.msra.mxu0 0.0
    %530 = vmatpush.msra.mxu0 0.0
    %531 = vmatpush.msra.mxu0 0.0
    %532 = vmatpush.msra.mxu0 0.0
    %533 = vmatpush.msra.mxu0 0.0
    %534 = vmatpush.msra.mxu0 0.0
    %535 = vmatpush.msra.mxu0 0.0
    %536 = vmatpush.msra.mxu0 0.0
    %537 = vmatpush.msra.mxu0 %v495
    %538 = vmatpush.msra.mxu0 %v470
    %539 = vmatmul.f32.gmra.mxu0 %v489
    %v540 = vpop.f32.mrf.mxu0
    %v541 = vadd.f32 %v480, %v540
    %542 = vdwg.mxu0
    %543 = vmatpush.msra.mxu0 0.0
    %544 = vmatpush.msra.mxu0 0.0
    %545 = vmatpush.msra.mxu0 0.0
    %546 = vmatpush.msra.mxu0 0.0
    %547 = vmatpush.msra.mxu0 0.0
    %548 = vmatpush.msra.mxu0 0.0
    %549 = vmatpush.msra.mxu0 0.0
    %550 = vmatpush.msra.mxu0 0.0
    %551 = vmatpush.msra.mxu0 0.0
    %552 = vmatpush.msra.mxu0 0.0
    %553 = vmatpush.msra.mxu0 0.0
    %554 = vmatpush.msra.mxu0 0.0
    %555 = vmatpush.msra.mxu0 0.0
    %556 = vmatpush.msra.mxu0 0.0
    %557 = vmatpush.msra.mxu0 %v498
    %558 = vmatpush.msra.mxu0 %v471
    %559 = vmatmul.f32.gmra.mxu0 %v489
    %v560 = vpop.f32.mrf.mxu0
    %v561 = vadd.f32 %v481, %v560
    %562 = vdwg.mxu0
    %563 = vmatpush.msra.mxu0 0.0
    %564 = vmatpush.msra.mxu0 0.0
    %565 = vmatpush.msra.mxu0 0.0
    %566 = vmatpush.msra.mxu0 0.0
    %567 = vmatpush.msra.mxu0 0.0
    %568 = vmatpush.msra.mxu0 0.0
    %569 = vmatpush.msra.mxu0 0.0
    %570 = vmatpush.msra.mxu0 0.0
    %571 = vmatpush.msra.mxu0 0.0
    %572 = vmatpush.msra.mxu0 0.0
    %573 = vmatpush.msra.mxu0 0.0
    %574 = vmatpush.msra.mxu0 0.0
    %575 = vmatpush.msra.mxu0 0.0
    %576 = vmatpush.msra.mxu0 0.0
    %577 = vmatpush.msra.mxu0 %v501
    %578 = vmatpush.msra.mxu0 %v472
    %579 = vmatmul.f32.gmra.mxu0 %v489
    %v580 = vpop.f32.mrf.mxu0
    %v581 = vadd.f32 %v482, %v580
    %582 = vdwg.mxu0
    %v587 = vrot.slane %v541, 6
    %v588 = vrot.slane %v561, 4
    %v589 = vrot.slane %v581, 2
    %vm590 = vcmask 1041408
    %v591 = vsel %vm590, %v521, %v587
    %vm592 = vcmask 1045508
    %v593 = vsel %vm592, %v588, %v589
    %vm594 = vcmask 1043456
    %v595 = vsel %vm594, %v591, %v593
    %597 = vst [vmem:[#allocation2] sm:$0xff] %v595
    %v598 = vld [vmem:[%s5 + $0x20] sm:$0xff]
    %v599 = vld [vmem:[%s5 + $0x28] sm:$0xff]
    %v600 = vld [vmem:[%s5 + $0x30] sm:$0xff]
    %v601 = vld [vmem:[%s5 + $0x38] sm:$0xff]
    %v602 = vld [vmem:[%s5 + $0x200] sm:$0x7f]
    %v603 = vld [vmem:[%s5 + $0x208] sm:$0x7f]
    %v604 = vld [vmem:[%s5 + $0x210] sm:$0x7f]
    %v605 = vld [vmem:[%s5 + $0x218] sm:$0x7f]
    %v606 = vld [vmem:[#allocation8] sm:$0xf]
    %v608 = vperm.slane %v606, 0
    %v609 = vperm.slane %v606, 1
    %v610 = vperm.slane %v606, 2
    %v611 = vperm.slane %v606, 3
    %v617 = vsel %vm377, %v602, 0
    %v620 = vsel %vm377, %v603, 0
    %v623 = vsel %vm377, %v604, 0
    %v626 = vsel %vm377, %v605, 0
    %628 = vmatpush.msra.mxu0 0.0
    %629 = vmatpush.msra.mxu0 0.0
    %630 = vmatpush.msra.mxu0 0.0
    %631 = vmatpush.msra.mxu0 0.0
    %632 = vmatpush.msra.mxu0 0.0
    %633 = vmatpush.msra.mxu0 0.0
    %634 = vmatpush.msra.mxu0 0.0
    %635 = vmatpush.msra.mxu0 0.0
    %636 = vmatpush.msra.mxu0 0.0
    %637 = vmatpush.msra.mxu0 0.0
    %638 = vmatpush.msra.mxu0 0.0
    %639 = vmatpush.msra.mxu0 0.0
    %640 = vmatpush.msra.mxu0 0.0
    %641 = vmatpush.msra.mxu0 0.0
    %642 = vmatpush.msra.mxu0 %v617
    %643 = vmatpush.msra.mxu0 %v598
    %644 = vmatmul.f32.gmra.mxu0 %v489
    %v645 = vpop.f32.mrf.mxu0
    %v646 = vadd.f32 %v608, %v645
    %647 = vdwg.mxu0
    %648 = vmatpush.msra.mxu0 0.0
    %649 = vmatpush.msra.mxu0 0.0
    %650 = vmatpush.msra.mxu0 0.0
    %651 = vmatpush.msra.mxu0 0.0
    %652 = vmatpush.msra.mxu0 0.0
    %653 = vmatpush.msra.mxu0 0.0
    %654 = vmatpush.msra.mxu0 0.0
    %655 = vmatpush.msra.mxu0 0.0
    %656 = vmatpush.msra.mxu0 0.0
    %657 = vmatpush.msra.mxu0 0.0
    %658 = vmatpush.msra.mxu0 0.0
    %659 = vmatpush.msra.mxu0 0.0
    %660 = vmatpush.msra.mxu0 0.0
    %661 = vmatpush.msra.mxu0 0.0
    %662 = vmatpush.msra.mxu0 %v620
    %663 = vmatpush.msra.mxu0 %v599
    %664 = vmatmul.f32.gmra.mxu0 %v489
    %v665 = vpop.f32.mrf.mxu0
    %v666 = vadd.f32 %v609, %v665
    %667 = vdwg.mxu0
    %668 = vmatpush.msra.mxu0 0.0
    %669 = vmatpush.msra.mxu0 0.0
    %670 = vmatpush.msra.mxu0 0.0
    %671 = vmatpush.msra.mxu0 0.0
    %672 = vmatpush.msra.mxu0 0.0
    %673 = vmatpush.msra.mxu0 0.0
    %674 = vmatpush.msra.mxu0 0.0
    %675 = vmatpush.msra.mxu0 0.0
    %676 = vmatpush.msra.mxu0 0.0
    %677 = vmatpush.msra.mxu0 0.0
    %678 = vmatpush.msra.mxu0 0.0
    %679 = vmatpush.msra.mxu0 0.0
    %680 = vmatpush.msra.mxu0 0.0
    %681 = vmatpush.msra.mxu0 0.0
    %682 = vmatpush.msra.mxu0 %v623
    %683 = vmatpush.msra.mxu0 %v600
    %684 = vmatmul.f32.gmra.mxu0 %v489
    %v685 = vpop.f32.mrf.mxu0
    %v686 = vadd.f32 %v610, %v685
    %687 = vdwg.mxu0
    %688 = vmatpush.msra.mxu0 0.0
    %689 = vmatpush.msra.mxu0 0.0
    %690 = vmatpush.msra.mxu0 0.0
    %691 = vmatpush.msra.mxu0 0.0
    %692 = vmatpush.msra.mxu0 0.0
    %693 = vmatpush.msra.mxu0 0.0
    %694 = vmatpush.msra.mxu0 0.0
    %695 = vmatpush.msra.mxu0 0.0
    %696 = vmatpush.msra.mxu0 0.0
    %697 = vmatpush.msra.mxu0 0.0
    %698 = vmatpush.msra.mxu0 0.0
    %699 = vmatpush.msra.mxu0 0.0
    %700 = vmatpush.msra.mxu0 0.0
    %701 = vmatpush.msra.mxu0 0.0
    %702 = vmatpush.msra.mxu0 %v626
    %703 = vmatpush.msra.mxu0 %v601
    %704 = vmatmul.f32.gmra.mxu0 %v489
    %v705 = vpop.f32.mrf.mxu0
    %v706 = vadd.f32 %v611, %v705
    %707 = vdwg.mxu0
    %v712 = vrot.slane %v666, 6
    %v713 = vrot.slane %v686, 4
    %v714 = vrot.slane %v706, 2
    %v715 = vsel %vm590, %v646, %v712
    %v716 = vsel %vm592, %v713, %v714
    %v717 = vsel %vm594, %v715, %v716
    %719 = vst [vmem:[#allocation2 + $0x8] sm:$0xff] %v717
    %v720 = vld [vmem:[%s5 + $0x40] sm:$0xff]
    %v721 = vld [vmem:[%s5 + $0x48] sm:$0xff]
    %v722 = vld [vmem:[%s5 + $0x50] sm:$0xff]
    %v723 = vld [vmem:[%s5 + $0x58] sm:$0xff]
    %v724 = vld [vmem:[%s5 + $0x220] sm:$0x7f]
    %v725 = vld [vmem:[%s5 + $0x228] sm:$0x7f]
    %v726 = vld [vmem:[%s5 + $0x230] sm:$0x7f]
    %v727 = vld [vmem:[%s5 + $0x238] sm:$0x7f]
    %v728 = vld [vmem:[#allocation8] sm:$0xf]
    %v730 = vperm.slane %v728, 0
    %v731 = vperm.slane %v728, 1
    %v732 = vperm.slane %v728, 2
    %v733 = vperm.slane %v728, 3
    %v739 = vsel %vm377, %v724, 0
    %v742 = vsel %vm377, %v725, 0
    %v745 = vsel %vm377, %v726, 0
    %v748 = vsel %vm377, %v727, 0
    %750 = vmatpush.msra.mxu0 0.0
    %751 = vmatpush.msra.mxu0 0.0
    %752 = vmatpush.msra.mxu0 0.0
    %753 = vmatpush.msra.mxu0 0.0
    %754 = vmatpush.msra.mxu0 0.0
    %755 = vmatpush.msra.mxu0 0.0
    %756 = vmatpush.msra.mxu0 0.0
    %757 = vmatpush.msra.mxu0 0.0
    %758 = vmatpush.msra.mxu0 0.0
    %759 = vmatpush.msra.mxu0 0.0
    %760 = vmatpush.msra.mxu0 0.0
    %761 = vmatpush.msra.mxu0 0.0
    %762 = vmatpush.msra.mxu0 0.0
    %763 = vmatpush.msra.mxu0 0.0
    %764 = vmatpush.msra.mxu0 %v739
    %765 = vmatpush.msra.mxu0 %v720
    %766 = vmatmul.f32.gmra.mxu0 %v489
    %v767 = vpop.f32.mrf.mxu0
    %v768 = vadd.f32 %v730, %v767
    %769 = vdwg.mxu0
    %770 = vmatpush.msra.mxu0 0.0
    %771 = vmatpush.msra.mxu0 0.0
    %772 = vmatpush.msra.mxu0 0.0
    %773 = vmatpush.msra.mxu0 0.0
    %774 = vmatpush.msra.mxu0 0.0
    %775 = vmatpush.msra.mxu0 0.0
    %776 = vmatpush.msra.mxu0 0.0
    %777 = vmatpush.msra.mxu0 0.0
    %778 = vmatpush.msra.mxu0 0.0
    %779 = vmatpush.msra.mxu0 0.0
    %780 = vmatpush.msra.mxu0 0.0
    %781 = vmatpush.msra.mxu0 0.0
    %782 = vmatpush.msra.mxu0 0.0
    %783 = vmatpush.msra.mxu0 0.0
    %784 = vmatpush.msra.mxu0 %v742
    %785 = vmatpush.msra.mxu0 %v721
    %786 = vmatmul.f32.gmra.mxu0 %v489
    %v787 = vpop.f32.mrf.mxu0
    %v788 = vadd.f32 %v731, %v787
    %789 = vdwg.mxu0
    %790 = vmatpush.msra.mxu0 0.0
    %791 = vmatpush.msra.mxu0 0.0
    %792 = vmatpush.msra.mxu0 0.0
    %793 = vmatpush.msra.mxu0 0.0
    %794 = vmatpush.msra.mxu0 0.0
    %795 = vmatpush.msra.mxu0 0.0
    %796 = vmatpush.msra.mxu0 0.0
    %797 = vmatpush.msra.mxu0 0.0
    %798 = vmatpush.msra.mxu0 0.0
    %799 = vmatpush.msra.mxu0 0.0
    %800 = vmatpush.msra.mxu0 0.0
    %801 = vmatpush.msra.mxu0 0.0
    %802 = vmatpush.msra.mxu0 0.0
    %803 = vmatpush.msra.mxu0 0.0
    %804 = vmatpush.msra.mxu0 %v745
    %805 = vmatpush.msra.mxu0 %v722
    %806 = vmatmul.f32.gmra.mxu0 %v489
    %v807 = vpop.f32.mrf.mxu0
    %v808 = vadd.f32 %v732, %v807
    %809 = vdwg.mxu0
    %810 = vmatpush.msra.mxu0 0.0
    %811 = vmatpush.msra.mxu0 0.0
    %812 = vmatpush.msra.mxu0 0.0
    %813 = vmatpush.msra.mxu0 0.0
    %814 = vmatpush.msra.mxu0 0.0
    %815 = vmatpush.msra.mxu0 0.0
    %816 = vmatpush.msra.mxu0 0.0
    %817 = vmatpush.msra.mxu0 0.0
    %818 = vmatpush.msra.mxu0 0.0
    %819 = vmatpush.msra.mxu0 0.0
    %820 = vmatpush.msra.mxu0 0.0
    %821 = vmatpush.msra.mxu0 0.0
    %822 = vmatpush.msra.mxu0 0.0
    %823 = vmatpush.msra.mxu0 0.0
    %824 = vmatpush.msra.mxu0 %v748
    %825 = vmatpush.msra.mxu0 %v723
    %826 = vmatmul.f32.gmra.mxu0 %v489
    %v827 = vpop.f32.mrf.mxu0
    %v828 = vadd.f32 %v733, %v827
    %829 = vdwg.mxu0
    %v834 = vrot.slane %v788, 6
    %v835 = vrot.slane %v808, 4
    %v836 = vrot.slane %v828, 2
    %v837 = vsel %vm590, %v768, %v834
    %v838 = vsel %vm592, %v835, %v836
    %v839 = vsel %vm594, %v837, %v838
    %841 = vst [vmem:[#allocation2 + $0x10] sm:$0xff] %v839
    %v842 = vld [vmem:[%s5 + $0x60] sm:$0xff]
    %v843 = vld [vmem:[%s5 + $0x68] sm:$0xff]
    %v844 = vld [vmem:[%s5 + $0x70] sm:$0xff]
    %v845 = vld [vmem:[%s5 + $0x78] sm:$0xff]
    %v846 = vld [vmem:[%s5 + $0x240] sm:$0x7f]
    %v847 = vld [vmem:[%s5 + $0x248] sm:$0x7f]
    %v848 = vld [vmem:[%s5 + $0x250] sm:$0x7f]
    %v849 = vld [vmem:[%s5 + $0x258] sm:$0x7f]
    %v850 = vld [vmem:[#allocation8] sm:$0xf]
    %v852 = vperm.slane %v850, 0
    %v853 = vperm.slane %v850, 1
    %v854 = vperm.slane %v850, 2
    %v855 = vperm.slane %v850, 3
    %v861 = vsel %vm377, %v846, 0
    %v864 = vsel %vm377, %v847, 0
    %v867 = vsel %vm377, %v848, 0
    %v870 = vsel %vm377, %v849, 0
    %872 = vmatpush.msra.mxu0 0.0
    %873 = vmatpush.msra.mxu0 0.0
    %874 = vmatpush.msra.mxu0 0.0
    %875 = vmatpush.msra.mxu0 0.0
    %876 = vmatpush.msra.mxu0 0.0
    %877 = vmatpush.msra.mxu0 0.0
    %878 = vmatpush.msra.mxu0 0.0
    %879 = vmatpush.msra.mxu0 0.0
    %880 = vmatpush.msra.mxu0 0.0
    %881 = vmatpush.msra.mxu0 0.0
    %882 = vmatpush.msra.mxu0 0.0
    %883 = vmatpush.msra.mxu0 0.0
    %884 = vmatpush.msra.mxu0 0.0
    %885 = vmatpush.msra.mxu0 0.0
    %886 = vmatpush.msra.mxu0 %v861
    %887 = vmatpush.msra.mxu0 %v842
    %888 = vmatmul.f32.gmra.mxu0 %v489
    %v889 = vpop.f32.mrf.mxu0
    %v890 = vadd.f32 %v852, %v889
    %891 = vdwg.mxu0
    %892 = vmatpush.msra.mxu0 0.0
    %893 = vmatpush.msra.mxu0 0.0
    %894 = vmatpush.msra.mxu0 0.0
    %895 = vmatpush.msra.mxu0 0.0
    %896 = vmatpush.msra.mxu0 0.0
    %897 = vmatpush.msra.mxu0 0.0
    %898 = vmatpush.msra.mxu0 0.0
    %899 = vmatpush.msra.mxu0 0.0
    %900 = vmatpush.msra.mxu0 0.0
    %901 = vmatpush.msra.mxu0 0.0
    %902 = vmatpush.msra.mxu0 0.0
    %903 = vmatpush.msra.mxu0 0.0
    %904 = vmatpush.msra.mxu0 0.0
    %905 = vmatpush.msra.mxu0 0.0
    %906 = vmatpush.msra.mxu0 %v864
    %907 = vmatpush.msra.mxu0 %v843
    %908 = vmatmul.f32.gmra.mxu0 %v489
    %v909 = vpop.f32.mrf.mxu0
    %v910 = vadd.f32 %v853, %v909
    %911 = vdwg.mxu0
    %912 = vmatpush.msra.mxu0 0.0
    %913 = vmatpush.msra.mxu0 0.0
    %914 = vmatpush.msra.mxu0 0.0
    %915 = vmatpush.msra.mxu0 0.0
    %916 = vmatpush.msra.mxu0 0.0
    %917 = vmatpush.msra.mxu0 0.0
    %918 = vmatpush.msra.mxu0 0.0
    %919 = vmatpush.msra.mxu0 0.0
    %920 = vmatpush.msra.mxu0 0.0
    %921 = vmatpush.msra.mxu0 0.0
    %922 = vmatpush.msra.mxu0 0.0
    %923 = vmatpush.msra.mxu0 0.0
    %924 = vmatpush.msra.mxu0 0.0
    %925 = vmatpush.msra.mxu0 0.0
    %926 = vmatpush.msra.mxu0 %v867
    %927 = vmatpush.msra.mxu0 %v844
    %928 = vmatmul.f32.gmra.mxu0 %v489
    %v929 = vpop.f32.mrf.mxu0
    %v930 = vadd.f32 %v854, %v929
    %931 = vdwg.mxu0
    %932 = vmatpush.msra.mxu0 0.0
    %933 = vmatpush.msra.mxu0 0.0
    %934 = vmatpush.msra.mxu0 0.0
    %935 = vmatpush.msra.mxu0 0.0
    %936 = vmatpush.msra.mxu0 0.0
    %937 = vmatpush.msra.mxu0 0.0
    %938 = vmatpush.msra.mxu0 0.0
    %939 = vmatpush.msra.mxu0 0.0
    %940 = vmatpush.msra.mxu0 0.0
    %941 = vmatpush.msra.mxu0 0.0
    %942 = vmatpush.msra.mxu0 0.0
    %943 = vmatpush.msra.mxu0 0.0
    %944 = vmatpush.msra.mxu0 0.0
    %945 = vmatpush.msra.mxu0 0.0
    %946 = vmatpush.msra.mxu0 %v870
    %947 = vmatpush.msra.mxu0 %v845
    %948 = vmatmul.f32.gmra.mxu0 %v489
    %v949 = vpop.f32.mrf.mxu0
    %v950 = vadd.f32 %v855, %v949
    %951 = vdwg.mxu0
    %v956 = vrot.slane %v910, 6
    %v957 = vrot.slane %v930, 4
    %v958 = vrot.slane %v950, 2
    %v959 = vsel %vm590, %v890, %v956
    %v960 = vsel %vm592, %v957, %v958
    %v961 = vsel %vm594, %v959, %v960
    %963 = vst [vmem:[#allocation2 + $0x18] sm:$0xff] %v961
    %v964 = vld [vmem:[%s5 + $0x80] sm:$0xff]
    %v965 = vld [vmem:[%s5 + $0x88] sm:$0xff]
    %v966 = vld [vmem:[%s5 + $0x90] sm:$0xff]
    %v967 = vld [vmem:[%s5 + $0x98] sm:$0xff]
    %v968 = vld [vmem:[%s5 + $0x260] sm:$0x7f]
    %v969 = vld [vmem:[%s5 + $0x268] sm:$0x7f]
    %v970 = vld [vmem:[%s5 + $0x270] sm:$0x7f]
    %v971 = vld [vmem:[%s5 + $0x278] sm:$0x7f]
    %v972 = vld [vmem:[#allocation8] sm:$0xf]
    %v974 = vperm.slane %v972, 0
    %v975 = vperm.slane %v972, 1
    %v976 = vperm.slane %v972, 2
    %v977 = vperm.slane %v972, 3
    %v983 = vsel %vm377, %v968, 0
    %v986 = vsel %vm377, %v969, 0
    %v989 = vsel %vm377, %v970, 0
    %v992 = vsel %vm377, %v971, 0
    %994 = vmatpush.msra.mxu0 0.0
    %995 = vmatpush.msra.mxu0 0.0
    %996 = vmatpush.msra.mxu0 0.0
    %997 = vmatpush.msra.mxu0 0.0
    %998 = vmatpush.msra.mxu0 0.0
    %999 = vmatpush.msra.mxu0 0.0
    %1000 = vmatpush.msra.mxu0 0.0
    %1001 = vmatpush.msra.mxu0 0.0
    %1002 = vmatpush.msra.mxu0 0.0
    %1003 = vmatpush.msra.mxu0 0.0
    %1004 = vmatpush.msra.mxu0 0.0
    %1005 = vmatpush.msra.mxu0 0.0
    %1006 = vmatpush.msra.mxu0 0.0
    %1007 = vmatpush.msra.mxu0 0.0
    %1008 = vmatpush.msra.mxu0 %v983
    %1009 = vmatpush.msra.mxu0 %v964
    %1010 = vmatmul.f32.gmra.mxu0 %v489
    %v1011 = vpop.f32.mrf.mxu0
    %v1012 = vadd.f32 %v974, %v1011
    %1013 = vdwg.mxu0
    %1014 = vmatpush.msra.mxu0 0.0
    %1015 = vmatpush.msra.mxu0 0.0
    %1016 = vmatpush.msra.mxu0 0.0
    %1017 = vmatpush.msra.mxu0 0.0
    %1018 = vmatpush.msra.mxu0 0.0
    %1019 = vmatpush.msra.mxu0 0.0
    %1020 = vmatpush.msra.mxu0 0.0
    %1021 = vmatpush.msra.mxu0 0.0
    %1022 = vmatpush.msra.mxu0 0.0
    %1023 = vmatpush.msra.mxu0 0.0
    %1024 = vmatpush.msra.mxu0 0.0
    %1025 = vmatpush.msra.mxu0 0.0
    %1026 = vmatpush.msra.mxu0 0.0
    %1027 = vmatpush.msra.mxu0 0.0
    %1028 = vmatpush.msra.mxu0 %v986
    %1029 = vmatpush.msra.mxu0 %v965
    %1030 = vmatmul.f32.gmra.mxu0 %v489
    %v1031 = vpop.f32.mrf.mxu0
    %v1032 = vadd.f32 %v975, %v1031
    %1033 = vdwg.mxu0
    %1034 = vmatpush.msra.mxu0 0.0
    %1035 = vmatpush.msra.mxu0 0.0
    %1036 = vmatpush.msra.mxu0 0.0
    %1037 = vmatpush.msra.mxu0 0.0
    %1038 = vmatpush.msra.mxu0 0.0
    %1039 = vmatpush.msra.mxu0 0.0
    %1040 = vmatpush.msra.mxu0 0.0
    %1041 = vmatpush.msra.mxu0 0.0
    %1042 = vmatpush.msra.mxu0 0.0
    %1043 = vmatpush.msra.mxu0 0.0
    %1044 = vmatpush.msra.mxu0 0.0
    %1045 = vmatpush.msra.mxu0 0.0
    %1046 = vmatpush.msra.mxu0 0.0
    %1047 = vmatpush.msra.mxu0 0.0
    %1048 = vmatpush.msra.mxu0 %v989
    %1049 = vmatpush.msra.mxu0 %v966
    %1050 = vmatmul.f32.gmra.mxu0 %v489
    %v1051 = vpop.f32.mrf.mxu0
    %v1052 = vadd.f32 %v976, %v1051
    %1053 = vdwg.mxu0
    %1054 = vmatpush.msra.mxu0 0.0
    %1055 = vmatpush.msra.mxu0 0.0
    %1056 = vmatpush.msra.mxu0 0.0
    %1057 = vmatpush.msra.mxu0 0.0
    %1058 = vmatpush.msra.mxu0 0.0
    %1059 = vmatpush.msra.mxu0 0.0
    %1060 = vmatpush.msra.mxu0 0.0
    %1061 = vmatpush.msra.mxu0 0.0
    %1062 = vmatpush.msra.mxu0 0.0
    %1063 = vmatpush.msra.mxu0 0.0
    %1064 = vmatpush.msra.mxu0 0.0
    %1065 = vmatpush.msra.mxu0 0.0
    %1066 = vmatpush.msra.mxu0 0.0
    %1067 = vmatpush.msra.mxu0 0.0
    %1068 = vmatpush.msra.mxu0 %v992
    %1069 = vmatpush.msra.mxu0 %v967
    %1070 = vmatmul.f32.gmra.mxu0 %v489
    %v1071 = vpop.f32.mrf.mxu0
    %v1072 = vadd.f32 %v977, %v1071
    %1073 = vdwg.mxu0
    %v1078 = vrot.slane %v1032, 6
    %v1079 = vrot.slane %v1052, 4
    %v1080 = vrot.slane %v1072, 2
    %v1081 = vsel %vm590, %v1012, %v1078
    %v1082 = vsel %vm592, %v1079, %v1080
    %v1083 = vsel %vm594, %v1081, %v1082
    %1085 = vst [vmem:[#allocation2 + $0x20] sm:$0xff] %v1083
    %v1086 = vld [vmem:[%s5 + $0xa0] sm:$0xff]
    %v1087 = vld [vmem:[%s5 + $0xa8] sm:$0xff]
    %v1088 = vld [vmem:[%s5 + $0xb0] sm:$0xff]
    %v1089 = vld [vmem:[%s5 + $0xb8] sm:$0xff]
    %v1090 = vld [vmem:[%s5 + $0x280] sm:$0x7f]
    %v1091 = vld [vmem:[%s5 + $0x288] sm:$0x7f]
    %v1092 = vld [vmem:[%s5 + $0x290] sm:$0x7f]
    %v1093 = vld [vmem:[%s5 + $0x298] sm:$0x7f]
    %v1094 = vld [vmem:[#allocation8] sm:$0xf]
    %v1096 = vperm.slane %v1094, 0
    %v1097 = vperm.slane %v1094, 1
    %v1098 = vperm.slane %v1094, 2
    %v1099 = vperm.slane %v1094, 3
    %v1105 = vsel %vm377, %v1090, 0
    %v1108 = vsel %vm377, %v1091, 0
    %v1111 = vsel %vm377, %v1092, 0
    %v1114 = vsel %vm377, %v1093, 0
    %1116 = vmatpush.msra.mxu0 0.0
    %1117 = vmatpush.msra.mxu0 0.0
    %1118 = vmatpush.msra.mxu0 0.0
    %1119 = vmatpush.msra.mxu0 0.0
    %1120 = vmatpush.msra.mxu0 0.0
    %1121 = vmatpush.msra.mxu0 0.0
    %1122 = vmatpush.msra.mxu0 0.0
    %1123 = vmatpush.msra.mxu0 0.0
    %1124 = vmatpush.msra.mxu0 0.0
    %1125 = vmatpush.msra.mxu0 0.0
    %1126 = vmatpush.msra.mxu0 0.0
    %1127 = vmatpush.msra.mxu0 0.0
    %1128 = vmatpush.msra.mxu0 0.0
    %1129 = vmatpush.msra.mxu0 0.0
    %1130 = vmatpush.msra.mxu0 %v1105
    %1131 = vmatpush.msra.mxu0 %v1086
    %1132 = vmatmul.f32.gmra.mxu0 %v489
    %v1133 = vpop.f32.mrf.mxu0
    %v1134 = vadd.f32 %v1096, %v1133
    %1135 = vdwg.mxu0
    %1136 = vmatpush.msra.mxu0 0.0
    %1137 = vmatpush.msra.mxu0 0.0
    %1138 = vmatpush.msra.mxu0 0.0
    %1139 = vmatpush.msra.mxu0 0.0
    %1140 = vmatpush.msra.mxu0 0.0
    %1141 = vmatpush.msra.mxu0 0.0
    %1142 = vmatpush.msra.mxu0 0.0
    %1143 = vmatpush.msra.mxu0 0.0
    %1144 = vmatpush.msra.mxu0 0.0
    %1145 = vmatpush.msra.mxu0 0.0
    %1146 = vmatpush.msra.mxu0 0.0
    %1147 = vmatpush.msra.mxu0 0.0
    %1148 = vmatpush.msra.mxu0 0.0
    %1149 = vmatpush.msra.mxu0 0.0
    %1150 = vmatpush.msra.mxu0 %v1108
    %1151 = vmatpush.msra.mxu0 %v1087
    %1152 = vmatmul.f32.gmra.mxu0 %v489
    %v1153 = vpop.f32.mrf.mxu0
    %v1154 = vadd.f32 %v1097, %v1153
    %1155 = vdwg.mxu0
    %1156 = vmatpush.msra.mxu0 0.0
    %1157 = vmatpush.msra.mxu0 0.0
    %1158 = vmatpush.msra.mxu0 0.0
    %1159 = vmatpush.msra.mxu0 0.0
    %1160 = vmatpush.msra.mxu0 0.0
    %1161 = vmatpush.msra.mxu0 0.0
    %1162 = vmatpush.msra.mxu0 0.0
    %1163 = vmatpush.msra.mxu0 0.0
    %1164 = vmatpush.msra.mxu0 0.0
    %1165 = vmatpush.msra.mxu0 0.0
    %1166 = vmatpush.msra.mxu0 0.0
    %1167 = vmatpush.msra.mxu0 0.0
    %1168 = vmatpush.msra.mxu0 0.0
    %1169 = vmatpush.msra.mxu0 0.0
    %1170 = vmatpush.msra.mxu0 %v1111
    %1171 = vmatpush.msra.mxu0 %v1088
    %1172 = vmatmul.f32.gmra.mxu0 %v489
    %v1173 = vpop.f32.mrf.mxu0
    %v1174 = vadd.f32 %v1098, %v1173
    %1175 = vdwg.mxu0
    %1176 = vmatpush.msra.mxu0 0.0
    %1177 = vmatpush.msra.mxu0 0.0
    %1178 = vmatpush.msra.mxu0 0.0
    %1179 = vmatpush.msra.mxu0 0.0
    %1180 = vmatpush.msra.mxu0 0.0
    %1181 = vmatpush.msra.mxu0 0.0
    %1182 = vmatpush.msra.mxu0 0.0
    %1183 = vmatpush.msra.mxu0 0.0
    %1184 = vmatpush.msra.mxu0 0.0
    %1185 = vmatpush.msra.mxu0 0.0
    %1186 = vmatpush.msra.mxu0 0.0
    %1187 = vmatpush.msra.mxu0 0.0
    %1188 = vmatpush.msra.mxu0 0.0
    %1189 = vmatpush.msra.mxu0 0.0
    %1190 = vmatpush.msra.mxu0 %v1114
    %1191 = vmatpush.msra.mxu0 %v1089
    %1192 = vmatmul.f32.gmra.mxu0 %v489
    %v1193 = vpop.f32.mrf.mxu0
    %v1194 = vadd.f32 %v1099, %v1193
    %1195 = vdwg.mxu0
    %v1200 = vrot.slane %v1154, 6
    %v1201 = vrot.slane %v1174, 4
    %v1202 = vrot.slane %v1194, 2
    %v1203 = vsel %vm590, %v1134, %v1200
    %v1204 = vsel %vm592, %v1201, %v1202
    %v1205 = vsel %vm594, %v1203, %v1204
    %1207 = vst [vmem:[#allocation2 + $0x28] sm:$0xff] %v1205
    %v1208 = vld [vmem:[%s5 + $0xc0] sm:$0xff]
    %v1209 = vld [vmem:[%s5 + $0xc8] sm:$0xff]
    %v1210 = vld [vmem:[%s5 + $0xd0] sm:$0xff]
    %v1211 = vld [vmem:[%s5 + $0xd8] sm:$0xff]
    %v1212 = vld [vmem:[%s5 + $0x2a0] sm:$0x7f]
    %v1213 = vld [vmem:[%s5 + $0x2a8] sm:$0x7f]
    %v1214 = vld [vmem:[%s5 + $0x2b0] sm:$0x7f]
    %v1215 = vld [vmem:[%s5 + $0x2b8] sm:$0x7f]
    %v1216 = vld [vmem:[#allocation8] sm:$0xf]
    %v1218 = vperm.slane %v1216, 0
    %v1219 = vperm.slane %v1216, 1
    %v1220 = vperm.slane %v1216, 2
    %v1221 = vperm.slane %v1216, 3
    %v1227 = vsel %vm377, %v1212, 0
    %v1230 = vsel %vm377, %v1213, 0
    %v1233 = vsel %vm377, %v1214, 0
    %v1236 = vsel %vm377, %v1215, 0
    %1238 = vmatpush.msra.mxu0 0.0
    %1239 = vmatpush.msra.mxu0 0.0
    %1240 = vmatpush.msra.mxu0 0.0
    %1241 = vmatpush.msra.mxu0 0.0
    %1242 = vmatpush.msra.mxu0 0.0
    %1243 = vmatpush.msra.mxu0 0.0
    %1244 = vmatpush.msra.mxu0 0.0
    %1245 = vmatpush.msra.mxu0 0.0
    %1246 = vmatpush.msra.mxu0 0.0
    %1247 = vmatpush.msra.mxu0 0.0
    %1248 = vmatpush.msra.mxu0 0.0
    %1249 = vmatpush.msra.mxu0 0.0
    %1250 = vmatpush.msra.mxu0 0.0
    %1251 = vmatpush.msra.mxu0 0.0
    %1252 = vmatpush.msra.mxu0 %v1227
    %1253 = vmatpush.msra.mxu0 %v1208
    %1254 = vmatmul.f32.gmra.mxu0 %v489
    %v1255 = vpop.f32.mrf.mxu0
    %v1256 = vadd.f32 %v1218, %v1255
    %1257 = vdwg.mxu0
    %1258 = vmatpush.msra.mxu0 0.0
    %1259 = vmatpush.msra.mxu0 0.0
    %1260 = vmatpush.msra.mxu0 0.0
    %1261 = vmatpush.msra.mxu0 0.0
    %1262 = vmatpush.msra.mxu0 0.0
    %1263 = vmatpush.msra.mxu0 0.0
    %1264 = vmatpush.msra.mxu0 0.0
    %1265 = vmatpush.msra.mxu0 0.0
    %1266 = vmatpush.msra.mxu0 0.0
    %1267 = vmatpush.msra.mxu0 0.0
    %1268 = vmatpush.msra.mxu0 0.0
    %1269 = vmatpush.msra.mxu0 0.0
    %1270 = vmatpush.msra.mxu0 0.0
    %1271 = vmatpush.msra.mxu0 0.0
    %1272 = vmatpush.msra.mxu0 %v1230
    %1273 = vmatpush.msra.mxu0 %v1209
    %1274 = vmatmul.f32.gmra.mxu0 %v489
    %v1275 = vpop.f32.mrf.mxu0
    %v1276 = vadd.f32 %v1219, %v1275
    %1277 = vdwg.mxu0
    %1278 = vmatpush.msra.mxu0 0.0
    %1279 = vmatpush.msra.mxu0 0.0
    %1280 = vmatpush.msra.mxu0 0.0
    %1281 = vmatpush.msra.mxu0 0.0
    %1282 = vmatpush.msra.mxu0 0.0
    %1283 = vmatpush.msra.mxu0 0.0
    %1284 = vmatpush.msra.mxu0 0.0
    %1285 = vmatpush.msra.mxu0 0.0
    %1286 = vmatpush.msra.mxu0 0.0
    %1287 = vmatpush.msra.mxu0 0.0
    %1288 = vmatpush.msra.mxu0 0.0
    %1289 = vmatpush.msra.mxu0 0.0
    %1290 = vmatpush.msra.mxu0 0.0
    %1291 = vmatpush.msra.mxu0 0.0
    %1292 = vmatpush.msra.mxu0 %v1233
    %1293 = vmatpush.msra.mxu0 %v1210
    %1294 = vmatmul.f32.gmra.mxu0 %v489
    %v1295 = vpop.f32.mrf.mxu0
    %v1296 = vadd.f32 %v1220, %v1295
    %1297 = vdwg.mxu0
    %1298 = vmatpush.msra.mxu0 0.0
    %1299 = vmatpush.msra.mxu0 0.0
    %1300 = vmatpush.msra.mxu0 0.0
    %1301 = vmatpush.msra.mxu0 0.0
    %1302 = vmatpush.msra.mxu0 0.0
    %1303 = vmatpush.msra.mxu0 0.0
    %1304 = vmatpush.msra.mxu0 0.0
    %1305 = vmatpush.msra.mxu0 0.0
    %1306 = vmatpush.msra.mxu0 0.0
    %1307 = vmatpush.msra.mxu0 0.0
    %1308 = vmatpush.msra.mxu0 0.0
    %1309 = vmatpush.msra.mxu0 0.0
    %1310 = vmatpush.msra.mxu0 0.0
    %1311 = vmatpush.msra.mxu0 0.0
    %1312 = vmatpush.msra.mxu0 %v1236
    %1313 = vmatpush.msra.mxu0 %v1211
    %1314 = vmatmul.f32.gmra.mxu0 %v489
    %v1315 = vpop.f32.mrf.mxu0
    %v1316 = vadd.f32 %v1221, %v1315
    %1317 = vdwg.mxu0
    %v1322 = vrot.slane %v1276, 6
    %v1323 = vrot.slane %v1296, 4
    %v1324 = vrot.slane %v1316, 2
    %v1325 = vsel %vm590, %v1256, %v1322
    %v1326 = vsel %vm592, %v1323, %v1324
    %v1327 = vsel %vm594, %v1325, %v1326
    %1329 = vst [vmem:[#allocation2 + $0x30] sm:$0xff] %v1327
    %v1330 = vld [vmem:[%s5 + $0xe0] sm:$0xff]
    %v1331 = vld [vmem:[%s5 + $0xe8] sm:$0xff]
    %v1332 = vld [vmem:[%s5 + $0xf0] sm:$0xff]
    %v1333 = vld [vmem:[%s5 + $0xf8] sm:$0xff]
    %v1334 = vld [vmem:[%s5 + $0x2c0] sm:$0x7f]
    %v1335 = vld [vmem:[%s5 + $0x2c8] sm:$0x7f]
    %v1336 = vld [vmem:[%s5 + $0x2d0] sm:$0x7f]
    %v1337 = vld [vmem:[%s5 + $0x2d8] sm:$0x7f]
    %v1338 = vld [vmem:[#allocation8] sm:$0xf]
    %v1340 = vperm.slane %v1338, 0
    %v1341 = vperm.slane %v1338, 1
    %v1342 = vperm.slane %v1338, 2
    %v1343 = vperm.slane %v1338, 3
    %v1349 = vsel %vm377, %v1334, 0
    %v1352 = vsel %vm377, %v1335, 0
    %v1355 = vsel %vm377, %v1336, 0
    %v1358 = vsel %vm377, %v1337, 0
    %1360 = vmatpush.msra.mxu0 0.0
    %1361 = vmatpush.msra.mxu0 0.0
    %1362 = vmatpush.msra.mxu0 0.0
    %1363 = vmatpush.msra.mxu0 0.0
    %1364 = vmatpush.msra.mxu0 0.0
    %1365 = vmatpush.msra.mxu0 0.0
    %1366 = vmatpush.msra.mxu0 0.0
    %1367 = vmatpush.msra.mxu0 0.0
    %1368 = vmatpush.msra.mxu0 0.0
    %1369 = vmatpush.msra.mxu0 0.0
    %1370 = vmatpush.msra.mxu0 0.0
    %1371 = vmatpush.msra.mxu0 0.0
    %1372 = vmatpush.msra.mxu0 0.0
    %1373 = vmatpush.msra.mxu0 0.0
    %1374 = vmatpush.msra.mxu0 %v1349
    %1375 = vmatpush.msra.mxu0 %v1330
    %1376 = vmatmul.f32.gmra.mxu0 %v489
    %v1377 = vpop.f32.mrf.mxu0
    %v1378 = vadd.f32 %v1340, %v1377
    %1379 = vdwg.mxu0
    %1380 = vmatpush.msra.mxu0 0.0
    %1381 = vmatpush.msra.mxu0 0.0
    %1382 = vmatpush.msra.mxu0 0.0
    %1383 = vmatpush.msra.mxu0 0.0
    %1384 = vmatpush.msra.mxu0 0.0
    %1385 = vmatpush.msra.mxu0 0.0
    %1386 = vmatpush.msra.mxu0 0.0
    %1387 = vmatpush.msra.mxu0 0.0
    %1388 = vmatpush.msra.mxu0 0.0
    %1389 = vmatpush.msra.mxu0 0.0
    %1390 = vmatpush.msra.mxu0 0.0
    %1391 = vmatpush.msra.mxu0 0.0
    %1392 = vmatpush.msra.mxu0 0.0
    %1393 = vmatpush.msra.mxu0 0.0
    %1394 = vmatpush.msra.mxu0 %v1352
    %1395 = vmatpush.msra.mxu0 %v1331
    %1396 = vmatmul.f32.gmra.mxu0 %v489
    %v1397 = vpop.f32.mrf.mxu0
    %v1398 = vadd.f32 %v1341, %v1397
    %1399 = vdwg.mxu0
    %1400 = vmatpush.msra.mxu0 0.0
    %1401 = vmatpush.msra.mxu0 0.0
    %1402 = vmatpush.msra.mxu0 0.0
    %1403 = vmatpush.msra.mxu0 0.0
    %1404 = vmatpush.msra.mxu0 0.0
    %1405 = vmatpush.msra.mxu0 0.0
    %1406 = vmatpush.msra.mxu0 0.0
    %1407 = vmatpush.msra.mxu0 0.0
    %1408 = vmatpush.msra.mxu0 0.0
    %1409 = vmatpush.msra.mxu0 0.0
    %1410 = vmatpush.msra.mxu0 0.0
    %1411 = vmatpush.msra.mxu0 0.0
    %1412 = vmatpush.msra.mxu0 0.0
    %1413 = vmatpush.msra.mxu0 0.0
    %1414 = vmatpush.msra.mxu0 %v1355
    %1415 = vmatpush.msra.mxu0 %v1332
    %1416 = vmatmul.f32.gmra.mxu0 %v489
    %v1417 = vpop.f32.mrf.mxu0
    %v1418 = vadd.f32 %v1342, %v1417
    %1419 = vdwg.mxu0
    %1420 = vmatpush.msra.mxu0 0.0
    %1421 = vmatpush.msra.mxu0 0.0
    %1422 = vmatpush.msra.mxu0 0.0
    %1423 = vmatpush.msra.mxu0 0.0
    %1424 = vmatpush.msra.mxu0 0.0
    %1425 = vmatpush.msra.mxu0 0.0
    %1426 = vmatpush.msra.mxu0 0.0
    %1427 = vmatpush.msra.mxu0 0.0
    %1428 = vmatpush.msra.mxu0 0.0
    %1429 = vmatpush.msra.mxu0 0.0
    %1430 = vmatpush.msra.mxu0 0.0
    %1431 = vmatpush.msra.mxu0 0.0
    %1432 = vmatpush.msra.mxu0 0.0
    %1433 = vmatpush.msra.mxu0 0.0
    %1434 = vmatpush.msra.mxu0 %v1358
    %1435 = vmatpush.msra.mxu0 %v1333
    %1436 = vmatmul.f32.gmra.mxu0 %v489
    %v1437 = vpop.f32.mrf.mxu0
    %v1438 = vadd.f32 %v1343, %v1437
    %1439 = vdwg.mxu0
    %v1444 = vrot.slane %v1398, 6
    %v1445 = vrot.slane %v1418, 4
    %v1446 = vrot.slane %v1438, 2
    %v1447 = vsel %vm590, %v1378, %v1444
    %v1448 = vsel %vm592, %v1445, %v1446
    %v1449 = vsel %vm594, %v1447, %v1448
    %1451 = vst [vmem:[#allocation2 + $0x38] sm:$0xff] %v1449
    %v1452 = vld [vmem:[%s5 + $0x100] sm:$0xff]
    %v1453 = vld [vmem:[%s5 + $0x108] sm:$0xff]
    %v1454 = vld [vmem:[%s5 + $0x110] sm:$0xff]
    %v1455 = vld [vmem:[%s5 + $0x118] sm:$0xff]
    %v1456 = vld [vmem:[%s5 + $0x2e0] sm:$0x7f]
    %v1457 = vld [vmem:[%s5 + $0x2e8] sm:$0x7f]
    %v1458 = vld [vmem:[%s5 + $0x2f0] sm:$0x7f]
    %v1459 = vld [vmem:[%s5 + $0x2f8] sm:$0x7f]
    %v1460 = vld [vmem:[#allocation8] sm:$0xf]
    %v1462 = vperm.slane %v1460, 0
    %v1463 = vperm.slane %v1460, 1
    %v1464 = vperm.slane %v1460, 2
    %v1465 = vperm.slane %v1460, 3
    %v1471 = vsel %vm377, %v1456, 0
    %v1474 = vsel %vm377, %v1457, 0
    %v1477 = vsel %vm377, %v1458, 0
    %v1480 = vsel %vm377, %v1459, 0
    %1482 = vmatpush.msra.mxu0 0.0
    %1483 = vmatpush.msra.mxu0 0.0
    %1484 = vmatpush.msra.mxu0 0.0
    %1485 = vmatpush.msra.mxu0 0.0
    %1486 = vmatpush.msra.mxu0 0.0
    %1487 = vmatpush.msra.mxu0 0.0
    %1488 = vmatpush.msra.mxu0 0.0
    %1489 = vmatpush.msra.mxu0 0.0
    %1490 = vmatpush.msra.mxu0 0.0
    %1491 = vmatpush.msra.mxu0 0.0
    %1492 = vmatpush.msra.mxu0 0.0
    %1493 = vmatpush.msra.mxu0 0.0
    %1494 = vmatpush.msra.mxu0 0.0
    %1495 = vmatpush.msra.mxu0 0.0
    %1496 = vmatpush.msra.mxu0 %v1471
    %1497 = vmatpush.msra.mxu0 %v1452
    %1498 = vmatmul.f32.gmra.mxu0 %v489
    %v1499 = vpop.f32.mrf.mxu0
    %v1500 = vadd.f32 %v1462, %v1499
    %1501 = vdwg.mxu0
    %1502 = vmatpush.msra.mxu0 0.0
    %1503 = vmatpush.msra.mxu0 0.0
    %1504 = vmatpush.msra.mxu0 0.0
    %1505 = vmatpush.msra.mxu0 0.0
    %1506 = vmatpush.msra.mxu0 0.0
    %1507 = vmatpush.msra.mxu0 0.0
    %1508 = vmatpush.msra.mxu0 0.0
    %1509 = vmatpush.msra.mxu0 0.0
    %1510 = vmatpush.msra.mxu0 0.0
    %1511 = vmatpush.msra.mxu0 0.0
    %1512 = vmatpush.msra.mxu0 0.0
    %1513 = vmatpush.msra.mxu0 0.0
    %1514 = vmatpush.msra.mxu0 0.0
    %1515 = vmatpush.msra.mxu0 0.0
    %1516 = vmatpush.msra.mxu0 %v1474
    %1517 = vmatpush.msra.mxu0 %v1453
    %1518 = vmatmul.f32.gmra.mxu0 %v489
    %v1519 = vpop.f32.mrf.mxu0
    %v1520 = vadd.f32 %v1463, %v1519
    %1521 = vdwg.mxu0
    %1522 = vmatpush.msra.mxu0 0.0
    %1523 = vmatpush.msra.mxu0 0.0
    %1524 = vmatpush.msra.mxu0 0.0
    %1525 = vmatpush.msra.mxu0 0.0
    %1526 = vmatpush.msra.mxu0 0.0
    %1527 = vmatpush.msra.mxu0 0.0
    %1528 = vmatpush.msra.mxu0 0.0
    %1529 = vmatpush.msra.mxu0 0.0
    %1530 = vmatpush.msra.mxu0 0.0
    %1531 = vmatpush.msra.mxu0 0.0
    %1532 = vmatpush.msra.mxu0 0.0
    %1533 = vmatpush.msra.mxu0 0.0
    %1534 = vmatpush.msra.mxu0 0.0
    %1535 = vmatpush.msra.mxu0 0.0
    %1536 = vmatpush.msra.mxu0 %v1477
    %1537 = vmatpush.msra.mxu0 %v1454
    %1538 = vmatmul.f32.gmra.mxu0 %v489
    %v1539 = vpop.f32.mrf.mxu0
    %v1540 = vadd.f32 %v1464, %v1539
    %1541 = vdwg.mxu0
    %1542 = vmatpush.msra.mxu0 0.0
    %1543 = vmatpush.msra.mxu0 0.0
    %1544 = vmatpush.msra.mxu0 0.0
    %1545 = vmatpush.msra.mxu0 0.0
    %1546 = vmatpush.msra.mxu0 0.0
    %1547 = vmatpush.msra.mxu0 0.0
    %1548 = vmatpush.msra.mxu0 0.0
    %1549 = vmatpush.msra.mxu0 0.0
    %1550 = vmatpush.msra.mxu0 0.0
    %1551 = vmatpush.msra.mxu0 0.0
    %1552 = vmatpush.msra.mxu0 0.0
    %1553 = vmatpush.msra.mxu0 0.0
    %1554 = vmatpush.msra.mxu0 0.0
    %1555 = vmatpush.msra.mxu0 0.0
    %1556 = vmatpush.msra.mxu0 %v1480
    %1557 = vmatpush.msra.mxu0 %v1455
    %1558 = vmatmul.f32.gmra.mxu0 %v489
    %v1559 = vpop.f32.mrf.mxu0
    %v1560 = vadd.f32 %v1465, %v1559
    %1561 = vdwg.mxu0
    %v1566 = vrot.slane %v1520, 6
    %v1567 = vrot.slane %v1540, 4
    %v1568 = vrot.slane %v1560, 2
    %v1569 = vsel %vm590, %v1500, %v1566
    %v1570 = vsel %vm592, %v1567, %v1568
    %v1571 = vsel %vm594, %v1569, %v1570
    %1573 = vst [vmem:[#allocation2 + $0x40] sm:$0xff] %v1571
    %v1574 = vld [vmem:[%s5 + $0x120] sm:$0xff]
    %v1575 = vld [vmem:[%s5 + $0x128] sm:$0xff]
    %v1576 = vld [vmem:[%s5 + $0x130] sm:$0xff]
    %v1577 = vld [vmem:[%s5 + $0x138] sm:$0xff]
    %v1578 = vld [vmem:[%s5 + $0x300] sm:$0x7f]
    %v1579 = vld [vmem:[%s5 + $0x308] sm:$0x7f]
    %v1580 = vld [vmem:[%s5 + $0x310] sm:$0x7f]
    %v1581 = vld [vmem:[%s5 + $0x318] sm:$0x7f]
    %v1582 = vld [vmem:[#allocation8] sm:$0xf]
    %v1584 = vperm.slane %v1582, 0
    %v1585 = vperm.slane %v1582, 1
    %v1586 = vperm.slane %v1582, 2
    %v1587 = vperm.slane %v1582, 3
    %v1593 = vsel %vm377, %v1578, 0
    %v1596 = vsel %vm377, %v1579, 0
    %v1599 = vsel %vm377, %v1580, 0
    %v1602 = vsel %vm377, %v1581, 0
    %1604 = vmatpush.msra.mxu0 0.0
    %1605 = vmatpush.msra.mxu0 0.0
    %1606 = vmatpush.msra.mxu0 0.0
    %1607 = vmatpush.msra.mxu0 0.0
    %1608 = vmatpush.msra.mxu0 0.0
    %1609 = vmatpush.msra.mxu0 0.0
    %1610 = vmatpush.msra.mxu0 0.0
    %1611 = vmatpush.msra.mxu0 0.0
    %1612 = vmatpush.msra.mxu0 0.0
    %1613 = vmatpush.msra.mxu0 0.0
    %1614 = vmatpush.msra.mxu0 0.0
    %1615 = vmatpush.msra.mxu0 0.0
    %1616 = vmatpush.msra.mxu0 0.0
    %1617 = vmatpush.msra.mxu0 0.0
    %1618 = vmatpush.msra.mxu0 %v1593
    %1619 = vmatpush.msra.mxu0 %v1574
    %1620 = vmatmul.f32.gmra.mxu0 %v489
    %v1621 = vpop.f32.mrf.mxu0
    %v1622 = vadd.f32 %v1584, %v1621
    %1623 = vdwg.mxu0
    %1624 = vmatpush.msra.mxu0 0.0
    %1625 = vmatpush.msra.mxu0 0.0
    %1626 = vmatpush.msra.mxu0 0.0
    %1627 = vmatpush.msra.mxu0 0.0
    %1628 = vmatpush.msra.mxu0 0.0
    %1629 = vmatpush.msra.mxu0 0.0
    %1630 = vmatpush.msra.mxu0 0.0
    %1631 = vmatpush.msra.mxu0 0.0
    %1632 = vmatpush.msra.mxu0 0.0
    %1633 = vmatpush.msra.mxu0 0.0
    %1634 = vmatpush.msra.mxu0 0.0
    %1635 = vmatpush.msra.mxu0 0.0
    %1636 = vmatpush.msra.mxu0 0.0
    %1637 = vmatpush.msra.mxu0 0.0
    %1638 = vmatpush.msra.mxu0 %v1596
    %1639 = vmatpush.msra.mxu0 %v1575
    %1640 = vmatmul.f32.gmra.mxu0 %v489
    %v1641 = vpop.f32.mrf.mxu0
    %v1642 = vadd.f32 %v1585, %v1641
    %1643 = vdwg.mxu0
    %1644 = vmatpush.msra.mxu0 0.0
    %1645 = vmatpush.msra.mxu0 0.0
    %1646 = vmatpush.msra.mxu0 0.0
    %1647 = vmatpush.msra.mxu0 0.0
    %1648 = vmatpush.msra.mxu0 0.0
    %1649 = vmatpush.msra.mxu0 0.0
    %1650 = vmatpush.msra.mxu0 0.0
    %1651 = vmatpush.msra.mxu0 0.0
    %1652 = vmatpush.msra.mxu0 0.0
    %1653 = vmatpush.msra.mxu0 0.0
    %1654 = vmatpush.msra.mxu0 0.0
    %1655 = vmatpush.msra.mxu0 0.0
    %1656 = vmatpush.msra.mxu0 0.0
    %1657 = vmatpush.msra.mxu0 0.0
    %1658 = vmatpush.msra.mxu0 %v1599
    %1659 = vmatpush.msra.mxu0 %v1576
    %1660 = vmatmul.f32.gmra.mxu0 %v489
    %v1661 = vpop.f32.mrf.mxu0
    %v1662 = vadd.f32 %v1586, %v1661
    %1663 = vdwg.mxu0
    %1664 = vmatpush.msra.mxu0 0.0
    %1665 = vmatpush.msra.mxu0 0.0
    %1666 = vmatpush.msra.mxu0 0.0
    %1667 = vmatpush.msra.mxu0 0.0
    %1668 = vmatpush.msra.mxu0 0.0
    %1669 = vmatpush.msra.mxu0 0.0
    %1670 = vmatpush.msra.mxu0 0.0
    %1671 = vmatpush.msra.mxu0 0.0
    %1672 = vmatpush.msra.mxu0 0.0
    %1673 = vmatpush.msra.mxu0 0.0
    %1674 = vmatpush.msra.mxu0 0.0
    %1675 = vmatpush.msra.mxu0 0.0
    %1676 = vmatpush.msra.mxu0 0.0
    %1677 = vmatpush.msra.mxu0 0.0
    %1678 = vmatpush.msra.mxu0 %v1602
    %1679 = vmatpush.msra.mxu0 %v1577
    %1680 = vmatmul.f32.gmra.mxu0 %v489
    %v1681 = vpop.f32.mrf.mxu0
    %v1682 = vadd.f32 %v1587, %v1681
    %1683 = vdwg.mxu0
    %v1688 = vrot.slane %v1642, 6
    %v1689 = vrot.slane %v1662, 4
    %v1690 = vrot.slane %v1682, 2
    %v1691 = vsel %vm590, %v1622, %v1688
    %v1692 = vsel %vm592, %v1689, %v1690
    %v1693 = vsel %vm594, %v1691, %v1692
    %1695 = vst [vmem:[#allocation2 + $0x48] sm:$0xff] %v1693
    %v1696 = vld [vmem:[%s5 + $0x140] sm:$0xff]
    %v1697 = vld [vmem:[%s5 + $0x148] sm:$0xff]
    %v1698 = vld [vmem:[%s5 + $0x150] sm:$0xff]
    %v1699 = vld [vmem:[%s5 + $0x158] sm:$0xff]
    %v1700 = vld [vmem:[%s5 + $0x320] sm:$0x7f]
    %v1701 = vld [vmem:[%s5 + $0x328] sm:$0x7f]
    %v1702 = vld [vmem:[%s5 + $0x330] sm:$0x7f]
    %v1703 = vld [vmem:[%s5 + $0x338] sm:$0x7f]
    %v1704 = vld [vmem:[#allocation8] sm:$0xf]
    %v1706 = vperm.slane %v1704, 0
    %v1707 = vperm.slane %v1704, 1
    %v1708 = vperm.slane %v1704, 2
    %v1709 = vperm.slane %v1704, 3
    %v1715 = vsel %vm377, %v1700, 0
    %v1718 = vsel %vm377, %v1701, 0
    %v1721 = vsel %vm377, %v1702, 0
    %v1724 = vsel %vm377, %v1703, 0
    %1726 = vmatpush.msra.mxu0 0.0
    %1727 = vmatpush.msra.mxu0 0.0
    %1728 = vmatpush.msra.mxu0 0.0
    %1729 = vmatpush.msra.mxu0 0.0
    %1730 = vmatpush.msra.mxu0 0.0
    %1731 = vmatpush.msra.mxu0 0.0
    %1732 = vmatpush.msra.mxu0 0.0
    %1733 = vmatpush.msra.mxu0 0.0
    %1734 = vmatpush.msra.mxu0 0.0
    %1735 = vmatpush.msra.mxu0 0.0
    %1736 = vmatpush.msra.mxu0 0.0
    %1737 = vmatpush.msra.mxu0 0.0
    %1738 = vmatpush.msra.mxu0 0.0
    %1739 = vmatpush.msra.mxu0 0.0
    %1740 = vmatpush.msra.mxu0 %v1715
    %1741 = vmatpush.msra.mxu0 %v1696
    %1742 = vmatmul.f32.gmra.mxu0 %v489
    %v1743 = vpop.f32.mrf.mxu0
    %v1744 = vadd.f32 %v1706, %v1743
    %1745 = vdwg.mxu0
    %1746 = vmatpush.msra.mxu0 0.0
    %1747 = vmatpush.msra.mxu0 0.0
    %1748 = vmatpush.msra.mxu0 0.0
    %1749 = vmatpush.msra.mxu0 0.0
    %1750 = vmatpush.msra.mxu0 0.0
    %1751 = vmatpush.msra.mxu0 0.0
    %1752 = vmatpush.msra.mxu0 0.0
    %1753 = vmatpush.msra.mxu0 0.0
    %1754 = vmatpush.msra.mxu0 0.0
    %1755 = vmatpush.msra.mxu0 0.0
    %1756 = vmatpush.msra.mxu0 0.0
    %1757 = vmatpush.msra.mxu0 0.0
    %1758 = vmatpush.msra.mxu0 0.0
    %1759 = vmatpush.msra.mxu0 0.0
    %1760 = vmatpush.msra.mxu0 %v1718
    %1761 = vmatpush.msra.mxu0 %v1697
    %1762 = vmatmul.f32.gmra.mxu0 %v489
    %v1763 = vpop.f32.mrf.mxu0
    %v1764 = vadd.f32 %v1707, %v1763
    %1765 = vdwg.mxu0
    %1766 = vmatpush.msra.mxu0 0.0
    %1767 = vmatpush.msra.mxu0 0.0
    %1768 = vmatpush.msra.mxu0 0.0
    %1769 = vmatpush.msra.mxu0 0.0
    %1770 = vmatpush.msra.mxu0 0.0
    %1771 = vmatpush.msra.mxu0 0.0
    %1772 = vmatpush.msra.mxu0 0.0
    %1773 = vmatpush.msra.mxu0 0.0
    %1774 = vmatpush.msra.mxu0 0.0
    %1775 = vmatpush.msra.mxu0 0.0
    %1776 = vmatpush.msra.mxu0 0.0
    %1777 = vmatpush.msra.mxu0 0.0
    %1778 = vmatpush.msra.mxu0 0.0
    %1779 = vmatpush.msra.mxu0 0.0
    %1780 = vmatpush.msra.mxu0 %v1721
    %1781 = vmatpush.msra.mxu0 %v1698
    %1782 = vmatmul.f32.gmra.mxu0 %v489
    %v1783 = vpop.f32.mrf.mxu0
    %v1784 = vadd.f32 %v1708, %v1783
    %1785 = vdwg.mxu0
    %1786 = vmatpush.msra.mxu0 0.0
    %1787 = vmatpush.msra.mxu0 0.0
    %1788 = vmatpush.msra.mxu0 0.0
    %1789 = vmatpush.msra.mxu0 0.0
    %1790 = vmatpush.msra.mxu0 0.0
    %1791 = vmatpush.msra.mxu0 0.0
    %1792 = vmatpush.msra.mxu0 0.0
    %1793 = vmatpush.msra.mxu0 0.0
    %1794 = vmatpush.msra.mxu0 0.0
    %1795 = vmatpush.msra.mxu0 0.0
    %1796 = vmatpush.msra.mxu0 0.0
    %1797 = vmatpush.msra.mxu0 0.0
    %1798 = vmatpush.msra.mxu0 0.0
    %1799 = vmatpush.msra.mxu0 0.0
    %1800 = vmatpush.msra.mxu0 %v1724
    %1801 = vmatpush.msra.mxu0 %v1699
    %1802 = vmatmul.f32.gmra.mxu0 %v489
    %v1803 = vpop.f32.mrf.mxu0
    %v1804 = vadd.f32 %v1709, %v1803
    %1805 = vdwg.mxu0
    %v1810 = vrot.slane %v1764, 6
    %v1811 = vrot.slane %v1784, 4
    %v1812 = vrot.slane %v1804, 2
    %v1813 = vsel %vm590, %v1744, %v1810
    %v1814 = vsel %vm592, %v1811, %v1812
    %v1815 = vsel %vm594, %v1813, %v1814
    %1817 = vst [vmem:[#allocation2 + $0x50] sm:$0xff] %v1815
    %v1818 = vld [vmem:[%s5 + $0x160] sm:$0xff]
    %v1819 = vld [vmem:[%s5 + $0x168] sm:$0xff]
    %v1820 = vld [vmem:[%s5 + $0x170] sm:$0xff]
    %v1821 = vld [vmem:[%s5 + $0x178] sm:$0xff]
    %v1822 = vld [vmem:[%s5 + $0x340] sm:$0x7f]
    %v1823 = vld [vmem:[%s5 + $0x348] sm:$0x7f]
    %v1824 = vld [vmem:[%s5 + $0x350] sm:$0x7f]
    %v1825 = vld [vmem:[%s5 + $0x358] sm:$0x7f]
    %v1826 = vld [vmem:[#allocation8] sm:$0xf]
    %v1828 = vperm.slane %v1826, 0
    %v1829 = vperm.slane %v1826, 1
    %v1830 = vperm.slane %v1826, 2
    %v1831 = vperm.slane %v1826, 3
    %v1837 = vsel %vm377, %v1822, 0
    %v1840 = vsel %vm377, %v1823, 0
    %v1843 = vsel %vm377, %v1824, 0
    %v1846 = vsel %vm377, %v1825, 0
    %1848 = vmatpush.msra.mxu0 0.0
    %1849 = vmatpush.msra.mxu0 0.0
    %1850 = vmatpush.msra.mxu0 0.0
    %1851 = vmatpush.msra.mxu0 0.0
    %1852 = vmatpush.msra.mxu0 0.0
    %1853 = vmatpush.msra.mxu0 0.0
    %1854 = vmatpush.msra.mxu0 0.0
    %1855 = vmatpush.msra.mxu0 0.0
    %1856 = vmatpush.msra.mxu0 0.0
    %1857 = vmatpush.msra.mxu0 0.0
    %1858 = vmatpush.msra.mxu0 0.0
    %1859 = vmatpush.msra.mxu0 0.0
    %1860 = vmatpush.msra.mxu0 0.0
    %1861 = vmatpush.msra.mxu0 0.0
    %1862 = vmatpush.msra.mxu0 %v1837
    %1863 = vmatpush.msra.mxu0 %v1818
    %1864 = vmatmul.f32.gmra.mxu0 %v489
    %v1865 = vpop.f32.mrf.mxu0
    %v1866 = vadd.f32 %v1828, %v1865
    %1867 = vdwg.mxu0
    %1868 = vmatpush.msra.mxu0 0.0
    %1869 = vmatpush.msra.mxu0 0.0
    %1870 = vmatpush.msra.mxu0 0.0
    %1871 = vmatpush.msra.mxu0 0.0
    %1872 = vmatpush.msra.mxu0 0.0
    %1873 = vmatpush.msra.mxu0 0.0
    %1874 = vmatpush.msra.mxu0 0.0
    %1875 = vmatpush.msra.mxu0 0.0
    %1876 = vmatpush.msra.mxu0 0.0
    %1877 = vmatpush.msra.mxu0 0.0
    %1878 = vmatpush.msra.mxu0 0.0
    %1879 = vmatpush.msra.mxu0 0.0
    %1880 = vmatpush.msra.mxu0 0.0
    %1881 = vmatpush.msra.mxu0 0.0
    %1882 = vmatpush.msra.mxu0 %v1840
    %1883 = vmatpush.msra.mxu0 %v1819
    %1884 = vmatmul.f32.gmra.mxu0 %v489
    %v1885 = vpop.f32.mrf.mxu0
    %v1886 = vadd.f32 %v1829, %v1885
    %1887 = vdwg.mxu0
    %1888 = vmatpush.msra.mxu0 0.0
    %1889 = vmatpush.msra.mxu0 0.0
    %1890 = vmatpush.msra.mxu0 0.0
    %1891 = vmatpush.msra.mxu0 0.0
    %1892 = vmatpush.msra.mxu0 0.0
    %1893 = vmatpush.msra.mxu0 0.0
    %1894 = vmatpush.msra.mxu0 0.0
    %1895 = vmatpush.msra.mxu0 0.0
    %1896 = vmatpush.msra.mxu0 0.0
    %1897 = vmatpush.msra.mxu0 0.0
    %1898 = vmatpush.msra.mxu0 0.0
    %1899 = vmatpush.msra.mxu0 0.0
    %1900 = vmatpush.msra.mxu0 0.0
    %1901 = vmatpush.msra.mxu0 0.0
    %1902 = vmatpush.msra.mxu0 %v1843
    %1903 = vmatpush.msra.mxu0 %v1820
    %1904 = vmatmul.f32.gmra.mxu0 %v489
    %v1905 = vpop.f32.mrf.mxu0
    %v1906 = vadd.f32 %v1830, %v1905
    %1907 = vdwg.mxu0
    %1908 = vmatpush.msra.mxu0 0.0
    %1909 = vmatpush.msra.mxu0 0.0
    %1910 = vmatpush.msra.mxu0 0.0
    %1911 = vmatpush.msra.mxu0 0.0
    %1912 = vmatpush.msra.mxu0 0.0
    %1913 = vmatpush.msra.mxu0 0.0
    %1914 = vmatpush.msra.mxu0 0.0
    %1915 = vmatpush.msra.mxu0 0.0
    %1916 = vmatpush.msra.mxu0 0.0
    %1917 = vmatpush.msra.mxu0 0.0
    %1918 = vmatpush.msra.mxu0 0.0
    %1919 = vmatpush.msra.mxu0 0.0
    %1920 = vmatpush.msra.mxu0 0.0
    %1921 = vmatpush.msra.mxu0 0.0
    %1922 = vmatpush.msra.mxu0 %v1846
    %1923 = vmatpush.msra.mxu0 %v1821
    %1924 = vmatmul.f32.gmra.mxu0 %v489
    %v1925 = vpop.f32.mrf.mxu0
    %v1926 = vadd.f32 %v1831, %v1925
    %1927 = vdwg.mxu0
    %v1932 = vrot.slane %v1886, 6
    %v1933 = vrot.slane %v1906, 4
    %v1934 = vrot.slane %v1926, 2
    %v1935 = vsel %vm590, %v1866, %v1932
    %v1936 = vsel %vm592, %v1933, %v1934
    %v1937 = vsel %vm594, %v1935, %v1936
    %1939 = vst [vmem:[#allocation2 + $0x58] sm:$0xff] %v1937
    %v1940 = vld [vmem:[%s5 + $0x180] sm:$0xff]
    %v1941 = vld [vmem:[%s5 + $0x188] sm:$0xff]
    %v1942 = vld [vmem:[%s5 + $0x190] sm:$0xff]
    %v1943 = vld [vmem:[%s5 + $0x198] sm:$0xff]
    %v1944 = vld [vmem:[%s5 + $0x360] sm:$0x7f]
    %v1945 = vld [vmem:[%s5 + $0x368] sm:$0x7f]
    %v1946 = vld [vmem:[%s5 + $0x370] sm:$0x7f]
    %v1947 = vld [vmem:[%s5 + $0x378] sm:$0x7f]
    %v1948 = vld [vmem:[#allocation8] sm:$0xf]
    %v1950 = vperm.slane %v1948, 0
    %v1951 = vperm.slane %v1948, 1
    %v1952 = vperm.slane %v1948, 2
    %v1953 = vperm.slane %v1948, 3
    %v1959 = vsel %vm377, %v1944, 0
    %v1962 = vsel %vm377, %v1945, 0
    %v1965 = vsel %vm377, %v1946, 0
    %v1968 = vsel %vm377, %v1947, 0
    %1970 = vmatpush.msra.mxu0 0.0
    %1971 = vmatpush.msra.mxu0 0.0
    %1972 = vmatpush.msra.mxu0 0.0
    %1973 = vmatpush.msra.mxu0 0.0
    %1974 = vmatpush.msra.mxu0 0.0
    %1975 = vmatpush.msra.mxu0 0.0
    %1976 = vmatpush.msra.mxu0 0.0
    %1977 = vmatpush.msra.mxu0 0.0
    %1978 = vmatpush.msra.mxu0 0.0
    %1979 = vmatpush.msra.mxu0 0.0
    %1980 = vmatpush.msra.mxu0 0.0
    %1981 = vmatpush.msra.mxu0 0.0
    %1982 = vmatpush.msra.mxu0 0.0
    %1983 = vmatpush.msra.mxu0 0.0
    %1984 = vmatpush.msra.mxu0 %v1959
    %1985 = vmatpush.msra.mxu0 %v1940
    %1986 = vmatmul.f32.gmra.mxu0 %v489
    %v1987 = vpop.f32.mrf.mxu0
    %v1988 = vadd.f32 %v1950, %v1987
    %1989 = vdwg.mxu0
    %1990 = vmatpush.msra.mxu0 0.0
    %1991 = vmatpush.msra.mxu0 0.0
    %1992 = vmatpush.msra.mxu0 0.0
    %1993 = vmatpush.msra.mxu0 0.0
    %1994 = vmatpush.msra.mxu0 0.0
    %1995 = vmatpush.msra.mxu0 0.0
    %1996 = vmatpush.msra.mxu0 0.0
    %1997 = vmatpush.msra.mxu0 0.0
    %1998 = vmatpush.msra.mxu0 0.0
    %1999 = vmatpush.msra.mxu0 0.0
    %2000 = vmatpush.msra.mxu0 0.0
    %2001 = vmatpush.msra.mxu0 0.0
    %2002 = vmatpush.msra.mxu0 0.0
    %2003 = vmatpush.msra.mxu0 0.0
    %2004 = vmatpush.msra.mxu0 %v1962
    %2005 = vmatpush.msra.mxu0 %v1941
    %2006 = vmatmul.f32.gmra.mxu0 %v489
    %v2007 = vpop.f32.mrf.mxu0
    %v2008 = vadd.f32 %v1951, %v2007
    %2009 = vdwg.mxu0
    %2010 = vmatpush.msra.mxu0 0.0
    %2011 = vmatpush.msra.mxu0 0.0
    %2012 = vmatpush.msra.mxu0 0.0
    %2013 = vmatpush.msra.mxu0 0.0
    %2014 = vmatpush.msra.mxu0 0.0
    %2015 = vmatpush.msra.mxu0 0.0
    %2016 = vmatpush.msra.mxu0 0.0
    %2017 = vmatpush.msra.mxu0 0.0
    %2018 = vmatpush.msra.mxu0 0.0
    %2019 = vmatpush.msra.mxu0 0.0
    %2020 = vmatpush.msra.mxu0 0.0
    %2021 = vmatpush.msra.mxu0 0.0
    %2022 = vmatpush.msra.mxu0 0.0
    %2023 = vmatpush.msra.mxu0 0.0
    %2024 = vmatpush.msra.mxu0 %v1965
    %2025 = vmatpush.msra.mxu0 %v1942
    %2026 = vmatmul.f32.gmra.mxu0 %v489
    %v2027 = vpop.f32.mrf.mxu0
    %v2028 = vadd.f32 %v1952, %v2027
    %2029 = vdwg.mxu0
    %2030 = vmatpush.msra.mxu0 0.0
    %2031 = vmatpush.msra.mxu0 0.0
    %2032 = vmatpush.msra.mxu0 0.0
    %2033 = vmatpush.msra.mxu0 0.0
    %2034 = vmatpush.msra.mxu0 0.0
    %2035 = vmatpush.msra.mxu0 0.0
    %2036 = vmatpush.msra.mxu0 0.0
    %2037 = vmatpush.msra.mxu0 0.0
    %2038 = vmatpush.msra.mxu0 0.0
    %2039 = vmatpush.msra.mxu0 0.0
    %2040 = vmatpush.msra.mxu0 0.0
    %2041 = vmatpush.msra.mxu0 0.0
    %2042 = vmatpush.msra.mxu0 0.0
    %2043 = vmatpush.msra.mxu0 0.0
    %2044 = vmatpush.msra.mxu0 %v1968
    %2045 = vmatpush.msra.mxu0 %v1943
    %2046 = vmatmul.f32.gmra.mxu0 %v489
    %v2047 = vpop.f32.mrf.mxu0
    %v2048 = vadd.f32 %v1953, %v2047
    %2049 = vdwg.mxu0
    %v2054 = vrot.slane %v2008, 6
    %v2055 = vrot.slane %v2028, 4
    %v2056 = vrot.slane %v2048, 2
    %v2057 = vsel %vm590, %v1988, %v2054
    %v2058 = vsel %vm592, %v2055, %v2056
    %v2059 = vsel %vm594, %v2057, %v2058
    %2061 = vst [vmem:[#allocation2 + $0x60] sm:$0xff] %v2059
    %v2062 = vld [vmem:[%s5 + $0x1a0] sm:$0xff]
    %v2063 = vld [vmem:[%s5 + $0x1a8] sm:$0xff]
    %v2064 = vld [vmem:[%s5 + $0x1b0] sm:$0xff]
    %v2065 = vld [vmem:[%s5 + $0x1b8] sm:$0xff]
    %v2066 = vld [vmem:[%s5 + $0x380] sm:$0x7f]
    %v2067 = vld [vmem:[%s5 + $0x388] sm:$0x7f]
    %v2068 = vld [vmem:[%s5 + $0x390] sm:$0x7f]
    %v2069 = vld [vmem:[%s5 + $0x398] sm:$0x7f]
    %v2070 = vld [vmem:[#allocation8] sm:$0xf]
    %v2072 = vperm.slane %v2070, 0
    %v2073 = vperm.slane %v2070, 1
    %v2074 = vperm.slane %v2070, 2
    %v2075 = vperm.slane %v2070, 3
    %v2081 = vsel %vm377, %v2066, 0
    %v2084 = vsel %vm377, %v2067, 0
    %v2087 = vsel %vm377, %v2068, 0
    %v2090 = vsel %vm377, %v2069, 0
    %2092 = vmatpush.msra.mxu0 0.0
    %2093 = vmatpush.msra.mxu0 0.0
    %2094 = vmatpush.msra.mxu0 0.0
    %2095 = vmatpush.msra.mxu0 0.0
    %2096 = vmatpush.msra.mxu0 0.0
    %2097 = vmatpush.msra.mxu0 0.0
    %2098 = vmatpush.msra.mxu0 0.0
    %2099 = vmatpush.msra.mxu0 0.0
    %2100 = vmatpush.msra.mxu0 0.0
    %2101 = vmatpush.msra.mxu0 0.0
    %2102 = vmatpush.msra.mxu0 0.0
    %2103 = vmatpush.msra.mxu0 0.0
    %2104 = vmatpush.msra.mxu0 0.0
    %2105 = vmatpush.msra.mxu0 0.0
    %2106 = vmatpush.msra.mxu0 %v2081
    %2107 = vmatpush.msra.mxu0 %v2062
    %2108 = vmatmul.f32.gmra.mxu0 %v489
    %v2109 = vpop.f32.mrf.mxu0
    %v2110 = vadd.f32 %v2072, %v2109
    %2111 = vdwg.mxu0
    %2112 = vmatpush.msra.mxu0 0.0
    %2113 = vmatpush.msra.mxu0 0.0
    %2114 = vmatpush.msra.mxu0 0.0
    %2115 = vmatpush.msra.mxu0 0.0
    %2116 = vmatpush.msra.mxu0 0.0
    %2117 = vmatpush.msra.mxu0 0.0
    %2118 = vmatpush.msra.mxu0 0.0
    %2119 = vmatpush.msra.mxu0 0.0
    %2120 = vmatpush.msra.mxu0 0.0
    %2121 = vmatpush.msra.mxu0 0.0
    %2122 = vmatpush.msra.mxu0 0.0
    %2123 = vmatpush.msra.mxu0 0.0
    %2124 = vmatpush.msra.mxu0 0.0
    %2125 = vmatpush.msra.mxu0 0.0
    %2126 = vmatpush.msra.mxu0 %v2084
    %2127 = vmatpush.msra.mxu0 %v2063
    %2128 = vmatmul.f32.gmra.mxu0 %v489
    %v2129 = vpop.f32.mrf.mxu0
    %v2130 = vadd.f32 %v2073, %v2129
    %2131 = vdwg.mxu0
    %2132 = vmatpush.msra.mxu0 0.0
    %2133 = vmatpush.msra.mxu0 0.0
    %2134 = vmatpush.msra.mxu0 0.0
    %2135 = vmatpush.msra.mxu0 0.0
    %2136 = vmatpush.msra.mxu0 0.0
    %2137 = vmatpush.msra.mxu0 0.0
    %2138 = vmatpush.msra.mxu0 0.0
    %2139 = vmatpush.msra.mxu0 0.0
    %2140 = vmatpush.msra.mxu0 0.0
    %2141 = vmatpush.msra.mxu0 0.0
    %2142 = vmatpush.msra.mxu0 0.0
    %2143 = vmatpush.msra.mxu0 0.0
    %2144 = vmatpush.msra.mxu0 0.0
    %2145 = vmatpush.msra.mxu0 0.0
    %2146 = vmatpush.msra.mxu0 %v2087
    %2147 = vmatpush.msra.mxu0 %v2064
    %2148 = vmatmul.f32.gmra.mxu0 %v489
    %v2149 = vpop.f32.mrf.mxu0
    %v2150 = vadd.f32 %v2074, %v2149
    %2151 = vdwg.mxu0
    %2152 = vmatpush.msra.mxu0 0.0
    %2153 = vmatpush.msra.mxu0 0.0
    %2154 = vmatpush.msra.mxu0 0.0
    %2155 = vmatpush.msra.mxu0 0.0
    %2156 = vmatpush.msra.mxu0 0.0
    %2157 = vmatpush.msra.mxu0 0.0
    %2158 = vmatpush.msra.mxu0 0.0
    %2159 = vmatpush.msra.mxu0 0.0
    %2160 = vmatpush.msra.mxu0 0.0
    %2161 = vmatpush.msra.mxu0 0.0
    %2162 = vmatpush.msra.mxu0 0.0
    %2163 = vmatpush.msra.mxu0 0.0
    %2164 = vmatpush.msra.mxu0 0.0
    %2165 = vmatpush.msra.mxu0 0.0
    %2166 = vmatpush.msra.mxu0 %v2090
    %2167 = vmatpush.msra.mxu0 %v2065
    %2168 = vmatmul.f32.gmra.mxu0 %v489
    %v2169 = vpop.f32.mrf.mxu0
    %v2170 = vadd.f32 %v2075, %v2169
    %2171 = vdwg.mxu0
    %v2176 = vrot.slane %v2130, 6
    %v2177 = vrot.slane %v2150, 4
    %v2178 = vrot.slane %v2170, 2
    %v2179 = vsel %vm590, %v2110, %v2176
    %v2180 = vsel %vm592, %v2177, %v2178
    %v2181 = vsel %vm594, %v2179, %v2180
    %2183 = vst [vmem:[#allocation2 + $0x68] sm:$0xff] %v2181
    %v2184 = vld [vmem:[%s5 + $0x1c0] sm:$0xff]
    %v2185 = vld [vmem:[%s5 + $0x1c8] sm:$0xff]
    %v2186 = vld [vmem:[%s5 + $0x1d0] sm:$0xff]
    %v2187 = vld [vmem:[%s5 + $0x1d8] sm:$0xff]
    %v2188 = vld [vmem:[%s5 + $0x3a0] sm:$0x7f]
    %v2189 = vld [vmem:[%s5 + $0x3a8] sm:$0x7f]
    %v2190 = vld [vmem:[%s5 + $0x3b0] sm:$0x7f]
    %v2191 = vld [vmem:[%s5 + $0x3b8] sm:$0x7f]
    %v2192 = vld [vmem:[#allocation8] sm:$0xf]
    %v2194 = vperm.slane %v2192, 0
    %v2195 = vperm.slane %v2192, 1
    %v2196 = vperm.slane %v2192, 2
    %v2197 = vperm.slane %v2192, 3
    %v2203 = vsel %vm377, %v2188, 0
    %v2206 = vsel %vm377, %v2189, 0
    %v2209 = vsel %vm377, %v2190, 0
    %v2212 = vsel %vm377, %v2191, 0
    %2214 = vmatpush.msra.mxu0 0.0
    %2215 = vmatpush.msra.mxu0 0.0
    %2216 = vmatpush.msra.mxu0 0.0
    %2217 = vmatpush.msra.mxu0 0.0
    %2218 = vmatpush.msra.mxu0 0.0
    %2219 = vmatpush.msra.mxu0 0.0
    %2220 = vmatpush.msra.mxu0 0.0
    %2221 = vmatpush.msra.mxu0 0.0
    %2222 = vmatpush.msra.mxu0 0.0
    %2223 = vmatpush.msra.mxu0 0.0
    %2224 = vmatpush.msra.mxu0 0.0
    %2225 = vmatpush.msra.mxu0 0.0
    %2226 = vmatpush.msra.mxu0 0.0
    %2227 = vmatpush.msra.mxu0 0.0
    %2228 = vmatpush.msra.mxu0 %v2203
    %2229 = vmatpush.msra.mxu0 %v2184
    %2230 = vmatmul.f32.gmra.mxu0 %v489
    %v2231 = vpop.f32.mrf.mxu0
    %v2232 = vadd.f32 %v2194, %v2231
    %2233 = vdwg.mxu0
    %2234 = vmatpush.msra.mxu0 0.0
    %2235 = vmatpush.msra.mxu0 0.0
    %2236 = vmatpush.msra.mxu0 0.0
    %2237 = vmatpush.msra.mxu0 0.0
    %2238 = vmatpush.msra.mxu0 0.0
    %2239 = vmatpush.msra.mxu0 0.0
    %2240 = vmatpush.msra.mxu0 0.0
    %2241 = vmatpush.msra.mxu0 0.0
    %2242 = vmatpush.msra.mxu0 0.0
    %2243 = vmatpush.msra.mxu0 0.0
    %2244 = vmatpush.msra.mxu0 0.0
    %2245 = vmatpush.msra.mxu0 0.0
    %2246 = vmatpush.msra.mxu0 0.0
    %2247 = vmatpush.msra.mxu0 0.0
    %2248 = vmatpush.msra.mxu0 %v2206
    %2249 = vmatpush.msra.mxu0 %v2185
    %2250 = vmatmul.f32.gmra.mxu0 %v489
    %v2251 = vpop.f32.mrf.mxu0
    %v2252 = vadd.f32 %v2195, %v2251
    %2253 = vdwg.mxu0
    %2254 = vmatpush.msra.mxu0 0.0
    %2255 = vmatpush.msra.mxu0 0.0
    %2256 = vmatpush.msra.mxu0 0.0
    %2257 = vmatpush.msra.mxu0 0.0
    %2258 = vmatpush.msra.mxu0 0.0
    %2259 = vmatpush.msra.mxu0 0.0
    %2260 = vmatpush.msra.mxu0 0.0
    %2261 = vmatpush.msra.mxu0 0.0
    %2262 = vmatpush.msra.mxu0 0.0
    %2263 = vmatpush.msra.mxu0 0.0
    %2264 = vmatpush.msra.mxu0 0.0
    %2265 = vmatpush.msra.mxu0 0.0
    %2266 = vmatpush.msra.mxu0 0.0
    %2267 = vmatpush.msra.mxu0 0.0
    %2268 = vmatpush.msra.mxu0 %v2209
    %2269 = vmatpush.msra.mxu0 %v2186
    %2270 = vmatmul.f32.gmra.mxu0 %v489
    %v2271 = vpop.f32.mrf.mxu0
    %v2272 = vadd.f32 %v2196, %v2271
    %2273 = vdwg.mxu0
    %2274 = vmatpush.msra.mxu0 0.0
    %2275 = vmatpush.msra.mxu0 0.0
    %2276 = vmatpush.msra.mxu0 0.0
    %2277 = vmatpush.msra.mxu0 0.0
    %2278 = vmatpush.msra.mxu0 0.0
    %2279 = vmatpush.msra.mxu0 0.0
    %2280 = vmatpush.msra.mxu0 0.0
    %2281 = vmatpush.msra.mxu0 0.0
    %2282 = vmatpush.msra.mxu0 0.0
    %2283 = vmatpush.msra.mxu0 0.0
    %2284 = vmatpush.msra.mxu0 0.0
    %2285 = vmatpush.msra.mxu0 0.0
    %2286 = vmatpush.msra.mxu0 0.0
    %2287 = vmatpush.msra.mxu0 0.0
    %2288 = vmatpush.msra.mxu0 %v2212
    %2289 = vmatpush.msra.mxu0 %v2187
    %2290 = vmatmul.f32.gmra.mxu0 %v489
    %v2291 = vpop.f32.mrf.mxu0
    %v2292 = vadd.f32 %v2197, %v2291
    %2293 = vdwg.mxu0
    %v2298 = vrot.slane %v2252, 6
    %v2299 = vrot.slane %v2272, 4
    %v2300 = vrot.slane %v2292, 2
    %v2301 = vsel %vm590, %v2232, %v2298
    %v2302 = vsel %vm592, %v2299, %v2300
    %v2303 = vsel %vm594, %v2301, %v2302
    %2305 = vst [vmem:[#allocation2 + $0x70] sm:$0xff] %v2303
    %v2306 = vld [vmem:[#allocation2] sm:$0xff]
    %v2307 = vld [vmem:[%s7] sm:$0xff]
    %v2308 = vld [vmem:[%s7 + $0x8] sm:$0xff]
    %v2309 = vld [vmem:[%s7 + $0x10] sm:$0xff]
    %v2310 = vld [vmem:[%s7 + $0x18] sm:$0xff]
    %v2311 = vld [vmem:[%s7 + $0x20] sm:$0xff]
    %v2312 = vld [vmem:[%s7 + $0x28] sm:$0xff]
    %v2313 = vld [vmem:[%s7 + $0x30] sm:$0xff]
    %v2314 = vld [vmem:[%s7 + $0x38] sm:$0xff]
    %v2315 = vld [vmem:[%s7 + $0x40] sm:$0xff]
    %v2316 = vld [vmem:[%s7 + $0x48] sm:$0xff]
    %v2317 = vld [vmem:[%s7 + $0x50] sm:$0xff]
    %v2318 = vld [vmem:[%s7 + $0x58] sm:$0xff]
    %v2319 = vld [vmem:[%s7 + $0x60] sm:$0xff]
    %v2320 = vld [vmem:[%s7 + $0x68] sm:$0xff]
    %v2321 = vld [vmem:[%s7 + $0x70] sm:$0xff]
    %v2322 = vld [vmem:[%s7 + $0x78] sm:$0xff]
    %v2323 = vld [vmem:[%s7 + $0x80] sm:$0xff]
    %v2324 = vld [vmem:[%s7 + $0x88] sm:$0xff]
    %v2325 = vld [vmem:[%s7 + $0x90] sm:$0xff]
    %v2326 = vld [vmem:[%s7 + $0x98] sm:$0xff]
    %v2327 = vld [vmem:[%s7 + $0xa0] sm:$0xff]
    %v2328 = vld [vmem:[%s7 + $0xa8] sm:$0xff]
    %v2329 = vld [vmem:[%s7 + $0xb0] sm:$0xff]
    %v2330 = vld [vmem:[%s7 + $0xb8] sm:$0xff]
    %v2331 = vld [vmem:[%s7 + $0xc0] sm:$0xff]
    %v2332 = vld [vmem:[%s7 + $0xc8] sm:$0xff]
    %v2333 = vld [vmem:[%s7 + $0xd0] sm:$0xff]
    %v2334 = vld [vmem:[%s7 + $0xd8] sm:$0xff]
    %v2335 = vld [vmem:[%s7 + $0xe0] sm:$0xff]
    %v2336 = vld [vmem:[%s7 + $0xe8] sm:$0xff]
    %v2337 = vld [vmem:[%s7 + $0xf0] sm:$0xff]
    %v2338 = vld [vmem:[%s7 + $0xf8] sm:$0xff]
    %v2339 = vld [vmem:[%s7 + $0x100] sm:$0xff]
    %v2340 = vld [vmem:[%s7 + $0x108] sm:$0xff]
    %v2341 = vld [vmem:[%s7 + $0x110] sm:$0xff]
    %v2342 = vld [vmem:[%s7 + $0x118] sm:$0xff]
    %v2343 = vld [vmem:[%s7 + $0x120] sm:$0xff]
    %v2344 = vld [vmem:[%s7 + $0x128] sm:$0xff]
    %v2345 = vld [vmem:[%s7 + $0x130] sm:$0xff]
    %v2346 = vld [vmem:[%s7 + $0x138] sm:$0xff]
    %v2347 = vld [vmem:[%s7 + $0x140] sm:$0xff]
    %v2348 = vld [vmem:[%s7 + $0x148] sm:$0xff]
    %v2349 = vld [vmem:[%s7 + $0x150] sm:$0xff]
    %v2350 = vld [vmem:[%s7 + $0x158] sm:$0xff]
    %v2351 = vld [vmem:[%s7 + $0x160] sm:$0xff]
    %v2352 = vld [vmem:[%s7 + $0x168] sm:$0xff]
    %v2353 = vld [vmem:[%s7 + $0x170] sm:$0xff]
    %v2354 = vld [vmem:[%s7 + $0x178] sm:$0xff]
    %v2355 = vld [vmem:[%s7 + $0x180] sm:$0xff]
    %v2356 = vld [vmem:[%s7 + $0x188] sm:$0xff]
    %v2357 = vld [vmem:[%s7 + $0x190] sm:$0xff]
    %v2358 = vld [vmem:[%s7 + $0x198] sm:$0xff]
    %v2359 = vld [vmem:[%s7 + $0x1a0] sm:$0xff]
    %v2360 = vld [vmem:[%s7 + $0x1a8] sm:$0xff]
    %v2361 = vld [vmem:[%s7 + $0x1b0] sm:$0xff]
    %v2362 = vld [vmem:[%s7 + $0x1b8] sm:$0xff]
    %v2363 = vld [vmem:[%s7 + $0x1c0] sm:$0xff]
    %v2364 = vld [vmem:[%s7 + $0x1c8] sm:$0xff]
    %v2365 = vld [vmem:[%s7 + $0x1d0] sm:$0xff]
    %v2366 = vld [vmem:[%s7 + $0x1d8] sm:$0xff]
    %v2367 = vld [vmem:[%s7 + $0x1e0] sm:$0xff]
    %v2368 = vld [vmem:[%s7 + $0x1e8] sm:$0xff]
    %v2369 = vld [vmem:[%s7 + $0x1f0] sm:$0xff]
    %v2370 = vld [vmem:[%s7 + $0x1f8] sm:$0xff]
    %2371 = vmatpush.msra.mxu0 %v2367
    %2372 = vmatpush.msra.mxu0 %v2363
    %2373 = vmatpush.msra.mxu0 %v2359
    %2374 = vmatpush.msra.mxu0 %v2355
    %2375 = vmatpush.msra.mxu0 %v2351
    %2376 = vmatpush.msra.mxu0 %v2347
    %2377 = vmatpush.msra.mxu0 %v2343
    %2378 = vmatpush.msra.mxu0 %v2339
    %2379 = vmatpush.msra.mxu0 %v2335
    %2380 = vmatpush.msra.mxu0 %v2331
    %2381 = vmatpush.msra.mxu0 %v2327
    %2382 = vmatpush.msra.mxu0 %v2323
    %2383 = vmatpush.msra.mxu0 %v2319
    %2384 = vmatpush.msra.mxu0 %v2315
    %2385 = vmatpush.msra.mxu0 %v2311
    %2386 = vmatpush.msra.mxu0 %v2307
    %2387 = vmatmul.f32.gmra.mxu0 0.0
    %v2388 = vpop.f32.mrf.mxu0
    %v2389 = vadd.f32 0.0, %v2388
    %2390 = vdwg.mxu0
    %2391 = vmatpush.msra.mxu0 %v2368
    %2392 = vmatpush.msra.mxu0 %v2364
    %2393 = vmatpush.msra.mxu0 %v2360
    %2394 = vmatpush.msra.mxu0 %v2356
    %2395 = vmatpush.msra.mxu0 %v2352
    %2396 = vmatpush.msra.mxu0 %v2348
    %2397 = vmatpush.msra.mxu0 %v2344
    %2398 = vmatpush.msra.mxu0 %v2340
    %2399 = vmatpush.msra.mxu0 %v2336
    %2400 = vmatpush.msra.mxu0 %v2332
    %2401 = vmatpush.msra.mxu0 %v2328
    %2402 = vmatpush.msra.mxu0 %v2324
    %2403 = vmatpush.msra.mxu0 %v2320
    %2404 = vmatpush.msra.mxu0 %v2316
    %2405 = vmatpush.msra.mxu0 %v2312
    %2406 = vmatpush.msra.mxu0 %v2308
    %2407 = vmatmul.f32.gmra.mxu0 0.0
    %v2408 = vpop.f32.mrf.mxu0
    %v2409 = vadd.f32 0.0, %v2408
    %2410 = vdwg.mxu0
    %2411 = vmatpush.msra.mxu0 %v2369
    %2412 = vmatpush.msra.mxu0 %v2365
    %2413 = vmatpush.msra.mxu0 %v2361
    %2414 = vmatpush.msra.mxu0 %v2357
    %2415 = vmatpush.msra.mxu0 %v2353
    %2416 = vmatpush.msra.mxu0 %v2349
    %2417 = vmatpush.msra.mxu0 %v2345
    %2418 = vmatpush.msra.mxu0 %v2341
    %2419 = vmatpush.msra.mxu0 %v2337
    %2420 = vmatpush.msra.mxu0 %v2333
    %2421 = vmatpush.msra.mxu0 %v2329
    %2422 = vmatpush.msra.mxu0 %v2325
    %2423 = vmatpush.msra.mxu0 %v2321
    %2424 = vmatpush.msra.mxu0 %v2317
    %2425 = vmatpush.msra.mxu0 %v2313
    %2426 = vmatpush.msra.mxu0 %v2309
    %2427 = vmatmul.f32.gmra.mxu0 0.0
    %v2428 = vpop.f32.mrf.mxu0
    %v2429 = vadd.f32 0.0, %v2428
    %2430 = vdwg.mxu0
    %2431 = vmatpush.msra.mxu0 %v2370
    %2432 = vmatpush.msra.mxu0 %v2366
    %2433 = vmatpush.msra.mxu0 %v2362
    %2434 = vmatpush.msra.mxu0 %v2358
    %2435 = vmatpush.msra.mxu0 %v2354
    %2436 = vmatpush.msra.mxu0 %v2350
    %2437 = vmatpush.msra.mxu0 %v2346
    %2438 = vmatpush.msra.mxu0 %v2342
    %2439 = vmatpush.msra.mxu0 %v2338
    %2440 = vmatpush.msra.mxu0 %v2334
    %2441 = vmatpush.msra.mxu0 %v2330
    %2442 = vmatpush.msra.mxu0 %v2326
    %2443 = vmatpush.msra.mxu0 %v2322
    %2444 = vmatpush.msra.mxu0 %v2318
    %2445 = vmatpush.msra.mxu0 %v2314
    %2446 = vmatpush.msra.mxu0 %v2310
    %2447 = vmatmul.f32.gmra.mxu0 0.0
    %v2448 = vpop.f32.mrf.mxu0
    %v2449 = vadd.f32 0.0, %v2448
    %2450 = vdwg.mxu0
    %v2455 = vrot.slane %v2409, 6
    %v2456 = vrot.slane %v2429, 4
    %v2457 = vrot.slane %v2449, 2
    %v2458 = vsel %vm590, %v2389, %v2455
    %v2459 = vsel %vm592, %v2456, %v2457
    %v2460 = vsel %vm594, %v2458, %v2459
    %v2462 = vadd.f32 %v2306, %v2460
    %v2463 = vxor.u32 %v2462, 2147483648
    %v2464 = vmul.f32 %v2463, 1.442695
    %v2465 = vpow.pop %v2464
    %v2466 = vadd.f32 %v2465, 1.0
    %v2467 = vrcp.pop %v2466
    %v2468 = vmul.f32 %v2466, %v2467
    %v2469 = vsub.f32 1.0, %v2468
    %v2470 = vmul.f32 %v2467, %v2469
    %v2471 = vadd.f32 %v2467, %v2470
    %vm2472 = vweird.f32 %v2466
    %vm2473 = vweird.f32 %v2467
    %vm2474 = vmor %vm2472, %vm2473
    %v2475 = vsel %vm2474, %v2467, %v2471
    %v2476 = vand.u32 2147483647, %v2466
    %vm2477 = vcmp.eq.f32.partialorder %v2476, 8.507059e+37
    %v2478 = vand.u32 %v2466, 2147483648
    %v2479 = vor.u32 1.1754944e-38, %v2478
    %v2480 = vsel %vm2477, %v2479, %v2475
    %v2481 = vmul.f32 1.0, %v2480
    %v2483 = vrot.slane %v2462, 2
    %v2485 = vxor.u32 %v2483, 2147483648
    %v2486 = vmul.f32 %v2485, 1.442695
    %v2487 = vpow.pop %v2486
    %v2488 = vadd.f32 %v2487, 1.0
    %v2489 = vrcp.pop %v2488
    %v2490 = vmul.f32 %v2488, %v2489
    %v2491 = vsub.f32 1.0, %v2490
    %v2492 = vmul.f32 %v2489, %v2491
    %v2493 = vadd.f32 %v2489, %v2492
    %vm2494 = vweird.f32 %v2488
    %vm2495 = vweird.f32 %v2489
    %vm2496 = vmor %vm2494, %vm2495
    %v2497 = vsel %vm2496, %v2489, %v2493
    %v2498 = vand.u32 2147483647, %v2488
    %vm2499 = vcmp.eq.f32.partialorder %v2498, 8.507059e+37
    %v2500 = vand.u32 %v2488, 2147483648
    %v2501 = vor.u32 1.1754944e-38, %v2500
    %v2502 = vsel %vm2499, %v2501, %v2497
    %v2503 = vmul.f32 1.0, %v2502
    %v2504 = vrot.slane %v2462, 4
    %v2506 = vtanh.pop %v2504
    %v2507 = vrot.slane %v2462, 6
    %v2509 = vxor.u32 %v2507, 2147483648
    %v2510 = vmul.f32 %v2509, 1.442695
    %v2511 = vpow.pop %v2510
    %v2512 = vadd.f32 %v2511, 1.0
    %v2513 = vrcp.pop %v2512
    %v2514 = vmul.f32 %v2512, %v2513
    %v2515 = vsub.f32 1.0, %v2514
    %v2516 = vmul.f32 %v2513, %v2515
    %v2517 = vadd.f32 %v2513, %v2516
    %vm2518 = vweird.f32 %v2512
    %vm2519 = vweird.f32 %v2513
    %vm2520 = vmor %vm2518, %vm2519
    %v2521 = vsel %vm2520, %v2513, %v2517
    %v2522 = vand.u32 2147483647, %v2512
    %vm2523 = vcmp.eq.f32.partialorder %v2522, 8.507059e+37
    %v2524 = vand.u32 %v2512, 2147483648
    %v2525 = vor.u32 1.1754944e-38, %v2524
    %v2526 = vsel %vm2523, %v2525, %v2521
    %v2527 = vmul.f32 1.0, %v2526
    %v2528 = vmul.f32 %v2503, 0.0
    %v2529 = vmul.f32 %v2481, %v2506
    %v2530 = vadd.f32 %v2528, %v2529
    %v2531 = vtanh.pop %v2530
    %v2532 = vmul.f32 %v2527, %v2531
    %2533 = vst [vmem:[#allocation3] sm:$0x3] %v2532
    %2534 = vst [vmem:[#allocation4 + $0x1c] sm:$0x3] %v2532
    %v2535 = vld [vmem:[#allocation2 + $0x8] sm:$0xff]
    %v2536 = vld [vmem:[%s7] sm:$0xff]
    %v2537 = vld [vmem:[%s7 + $0x8] sm:$0xff]
    %v2538 = vld [vmem:[%s7 + $0x10] sm:$0xff]
    %v2539 = vld [vmem:[%s7 + $0x18] sm:$0xff]
    %v2540 = vld [vmem:[%s7 + $0x20] sm:$0xff]
    %v2541 = vld [vmem:[%s7 + $0x28] sm:$0xff]
    %v2542 = vld [vmem:[%s7 + $0x30] sm:$0xff]
    %v2543 = vld [vmem:[%s7 + $0x38] sm:$0xff]
    %v2544 = vld [vmem:[%s7 + $0x40] sm:$0xff]
    %v2545 = vld [vmem:[%s7 + $0x48] sm:$0xff]
    %v2546 = vld [vmem:[%s7 + $0x50] sm:$0xff]
    %v2547 = vld [vmem:[%s7 + $0x58] sm:$0xff]
    %v2548 = vld [vmem:[%s7 + $0x60] sm:$0xff]
    %v2549 = vld [vmem:[%s7 + $0x68] sm:$0xff]
    %v2550 = vld [vmem:[%s7 + $0x70] sm:$0xff]
    %v2551 = vld [vmem:[%s7 + $0x78] sm:$0xff]
    %v2552 = vld [vmem:[%s7 + $0x80] sm:$0xff]
    %v2553 = vld [vmem:[%s7 + $0x88] sm:$0xff]
    %v2554 = vld [vmem:[%s7 + $0x90] sm:$0xff]
    %v2555 = vld [vmem:[%s7 + $0x98] sm:$0xff]
    %v2556 = vld [vmem:[%s7 + $0xa0] sm:$0xff]
    %v2557 = vld [vmem:[%s7 + $0xa8] sm:$0xff]
    %v2558 = vld [vmem:[%s7 + $0xb0] sm:$0xff]
    %v2559 = vld [vmem:[%s7 + $0xb8] sm:$0xff]
    %v2560 = vld [vmem:[%s7 + $0xc0] sm:$0xff]
    %v2561 = vld [vmem:[%s7 + $0xc8] sm:$0xff]
    %v2562 = vld [vmem:[%s7 + $0xd0] sm:$0xff]
    %v2563 = vld [vmem:[%s7 + $0xd8] sm:$0xff]
    %v2564 = vld [vmem:[%s7 + $0xe0] sm:$0xff]
    %v2565 = vld [vmem:[%s7 + $0xe8] sm:$0xff]
    %v2566 = vld [vmem:[%s7 + $0xf0] sm:$0xff]
    %v2567 = vld [vmem:[%s7 + $0xf8] sm:$0xff]
    %v2568 = vld [vmem:[%s7 + $0x100] sm:$0xff]
    %v2569 = vld [vmem:[%s7 + $0x108] sm:$0xff]
    %v2570 = vld [vmem:[%s7 + $0x110] sm:$0xff]
    %v2571 = vld [vmem:[%s7 + $0x118] sm:$0xff]
    %v2572 = vld [vmem:[%s7 + $0x120] sm:$0xff]
    %v2573 = vld [vmem:[%s7 + $0x128] sm:$0xff]
    %v2574 = vld [vmem:[%s7 + $0x130] sm:$0xff]
    %v2575 = vld [vmem:[%s7 + $0x138] sm:$0xff]
    %v2576 = vld [vmem:[%s7 + $0x140] sm:$0xff]
    %v2577 = vld [vmem:[%s7 + $0x148] sm:$0xff]
    %v2578 = vld [vmem:[%s7 + $0x150] sm:$0xff]
    %v2579 = vld [vmem:[%s7 + $0x158] sm:$0xff]
    %v2580 = vld [vmem:[%s7 + $0x160] sm:$0xff]
    %v2581 = vld [vmem:[%s7 + $0x168] sm:$0xff]
    %v2582 = vld [vmem:[%s7 + $0x170] sm:$0xff]
    %v2583 = vld [vmem:[%s7 + $0x178] sm:$0xff]
    %v2584 = vld [vmem:[%s7 + $0x180] sm:$0xff]
    %v2585 = vld [vmem:[%s7 + $0x188] sm:$0xff]
    %v2586 = vld [vmem:[%s7 + $0x190] sm:$0xff]
    %v2587 = vld [vmem:[%s7 + $0x198] sm:$0xff]
    %v2588 = vld [vmem:[%s7 + $0x1a0] sm:$0xff]
    %v2589 = vld [vmem:[%s7 + $0x1a8] sm:$0xff]
    %v2590 = vld [vmem:[%s7 + $0x1b0] sm:$0xff]
    %v2591 = vld [vmem:[%s7 + $0x1b8] sm:$0xff]
    %v2592 = vld [vmem:[%s7 + $0x1c0] sm:$0xff]
    %v2593 = vld [vmem:[%s7 + $0x1c8] sm:$0xff]
    %v2594 = vld [vmem:[%s7 + $0x1d0] sm:$0xff]
    %v2595 = vld [vmem:[%s7 + $0x1d8] sm:$0xff]
    %v2596 = vld [vmem:[%s7 + $0x1e0] sm:$0xff]
    %v2597 = vld [vmem:[%s7 + $0x1e8] sm:$0xff]
    %v2598 = vld [vmem:[%s7 + $0x1f0] sm:$0xff]
    %v2599 = vld [vmem:[%s7 + $0x1f8] sm:$0xff]
    %2600 = vmatpush.msra.mxu0 %v2596
    %2601 = vmatpush.msra.mxu0 %v2592
    %2602 = vmatpush.msra.mxu0 %v2588
    %2603 = vmatpush.msra.mxu0 %v2584
    %2604 = vmatpush.msra.mxu0 %v2580
    %2605 = vmatpush.msra.mxu0 %v2576
    %2606 = vmatpush.msra.mxu0 %v2572
    %2607 = vmatpush.msra.mxu0 %v2568
    %2608 = vmatpush.msra.mxu0 %v2564
    %2609 = vmatpush.msra.mxu0 %v2560
    %2610 = vmatpush.msra.mxu0 %v2556
    %2611 = vmatpush.msra.mxu0 %v2552
    %2612 = vmatpush.msra.mxu0 %v2548
    %2613 = vmatpush.msra.mxu0 %v2544
    %2614 = vmatpush.msra.mxu0 %v2540
    %2615 = vmatpush.msra.mxu0 %v2536
    %2616 = vmatmul.f32.gmra.mxu0 %v2532
    %v2617 = vpop.f32.mrf.mxu0
    %v2618 = vadd.f32 0.0, %v2617
    %2619 = vdwg.mxu0
    %2620 = vmatpush.msra.mxu0 %v2597
    %2621 = vmatpush.msra.mxu0 %v2593
    %2622 = vmatpush.msra.mxu0 %v2589
    %2623 = vmatpush.msra.mxu0 %v2585
    %2624 = vmatpush.msra.mxu0 %v2581
    %2625 = vmatpush.msra.mxu0 %v2577
    %2626 = vmatpush.msra.mxu0 %v2573
    %2627 = vmatpush.msra.mxu0 %v2569
    %2628 = vmatpush.msra.mxu0 %v2565
    %2629 = vmatpush.msra.mxu0 %v2561
    %2630 = vmatpush.msra.mxu0 %v2557
    %2631 = vmatpush.msra.mxu0 %v2553
    %2632 = vmatpush.msra.mxu0 %v2549
    %2633 = vmatpush.msra.mxu0 %v2545
    %2634 = vmatpush.msra.mxu0 %v2541
    %2635 = vmatpush.msra.mxu0 %v2537
    %2636 = vmatmul.f32.gmra.mxu0 %v2532
    %v2637 = vpop.f32.mrf.mxu0
    %v2638 = vadd.f32 0.0, %v2637
    %2639 = vdwg.mxu0
    %2640 = vmatpush.msra.mxu0 %v2598
    %2641 = vmatpush.msra.mxu0 %v2594
    %2642 = vmatpush.msra.mxu0 %v2590
    %2643 = vmatpush.msra.mxu0 %v2586
    %2644 = vmatpush.msra.mxu0 %v2582
    %2645 = vmatpush.msra.mxu0 %v2578
    %2646 = vmatpush.msra.mxu0 %v2574
    %2647 = vmatpush.msra.mxu0 %v2570
    %2648 = vmatpush.msra.mxu0 %v2566
    %2649 = vmatpush.msra.mxu0 %v2562
    %2650 = vmatpush.msra.mxu0 %v2558
    %2651 = vmatpush.msra.mxu0 %v2554
    %2652 = vmatpush.msra.mxu0 %v2550
    %2653 = vmatpush.msra.mxu0 %v2546
    %2654 = vmatpush.msra.mxu0 %v2542
    %2655 = vmatpush.msra.mxu0 %v2538
    %2656 = vmatmul.f32.gmra.mxu0 %v2532
    %v2657 = vpop.f32.mrf.mxu0
    %v2658 = vadd.f32 0.0, %v2657
    %2659 = vdwg.mxu0
    %2660 = vmatpush.msra.mxu0 %v2599
    %2661 = vmatpush.msra.mxu0 %v2595
    %2662 = vmatpush.msra.mxu0 %v2591
    %2663 = vmatpush.msra.mxu0 %v2587
    %2664 = vmatpush.msra.mxu0 %v2583
    %2665 = vmatpush.msra.mxu0 %v2579
    %2666 = vmatpush.msra.mxu0 %v2575
    %2667 = vmatpush.msra.mxu0 %v2571
    %2668 = vmatpush.msra.mxu0 %v2567
    %2669 = vmatpush.msra.mxu0 %v2563
    %2670 = vmatpush.msra.mxu0 %v2559
    %2671 = vmatpush.msra.mxu0 %v2555
    %2672 = vmatpush.msra.mxu0 %v2551
    %2673 = vmatpush.msra.mxu0 %v2547
    %2674 = vmatpush.msra.mxu0 %v2543
    %2675 = vmatpush.msra.mxu0 %v2539
    %2676 = vmatmul.f32.gmra.mxu0 %v2532
    %v2677 = vpop.f32.mrf.mxu0
    %v2678 = vadd.f32 0.0, %v2677
    %2679 = vdwg.mxu0
    %v2684 = vrot.slane %v2638, 6
    %v2685 = vrot.slane %v2658, 4
    %v2686 = vrot.slane %v2678, 2
    %v2687 = vsel %vm590, %v2618, %v2684
    %v2688 = vsel %vm592, %v2685, %v2686
    %v2689 = vsel %vm594, %v2687, %v2688
    %v2691 = vadd.f32 %v2535, %v2689
    %v2692 = vxor.u32 %v2691, 2147483648
    %v2693 = vmul.f32 %v2692, 1.442695
    %v2694 = vpow.pop %v2693
    %v2695 = vadd.f32 %v2694, 1.0
    %v2696 = vrcp.pop %v2695
    %v2697 = vmul.f32 %v2695, %v2696
    %v2698 = vsub.f32 1.0, %v2697
    %v2699 = vmul.f32 %v2696, %v2698
    %v2700 = vadd.f32 %v2696, %v2699
    %vm2701 = vweird.f32 %v2695
    %vm2702 = vweird.f32 %v2696
    %vm2703 = vmor %vm2701, %vm2702
    %v2704 = vsel %vm2703, %v2696, %v2700
    %v2705 = vand.u32 2147483647, %v2695
    %vm2706 = vcmp.eq.f32.partialorder %v2705, 8.507059e+37
    %v2707 = vand.u32 %v2695, 2147483648
    %v2708 = vor.u32 1.1754944e-38, %v2707
    %v2709 = vsel %vm2706, %v2708, %v2704
    %v2710 = vmul.f32 1.0, %v2709
    %v2712 = vrot.slane %v2691, 2
    %v2714 = vxor.u32 %v2712, 2147483648
    %v2715 = vmul.f32 %v2714, 1.442695
    %v2716 = vpow.pop %v2715
    %v2717 = vadd.f32 %v2716, 1.0
    %v2718 = vrcp.pop %v2717
    %v2719 = vmul.f32 %v2717, %v2718
    %v2720 = vsub.f32 1.0, %v2719
    %v2721 = vmul.f32 %v2718, %v2720
    %v2722 = vadd.f32 %v2718, %v2721
    %vm2723 = vweird.f32 %v2717
    %vm2724 = vweird.f32 %v2718
    %vm2725 = vmor %vm2723, %vm2724
    %v2726 = vsel %vm2725, %v2718, %v2722
    %v2727 = vand.u32 2147483647, %v2717
    %vm2728 = vcmp.eq.f32.partialorder %v2727, 8.507059e+37
    %v2729 = vand.u32 %v2717, 2147483648
    %v2730 = vor.u32 1.1754944e-38, %v2729
    %v2731 = vsel %vm2728, %v2730, %v2726
    %v2732 = vmul.f32 1.0, %v2731
    %v2733 = vrot.slane %v2691, 4
    %v2735 = vtanh.pop %v2733
    %v2736 = vrot.slane %v2691, 6
    %v2738 = vxor.u32 %v2736, 2147483648
    %v2739 = vmul.f32 %v2738, 1.442695
    %v2740 = vpow.pop %v2739
    %v2741 = vadd.f32 %v2740, 1.0
    %v2742 = vrcp.pop %v2741
    %v2743 = vmul.f32 %v2741, %v2742
    %v2744 = vsub.f32 1.0, %v2743
    %v2745 = vmul.f32 %v2742, %v2744
    %v2746 = vadd.f32 %v2742, %v2745
    %vm2747 = vweird.f32 %v2741
    %vm2748 = vweird.f32 %v2742
    %vm2749 = vmor %vm2747, %vm2748
    %v2750 = vsel %vm2749, %v2742, %v2746
    %v2751 = vand.u32 2147483647, %v2741
    %vm2752 = vcmp.eq.f32.partialorder %v2751, 8.507059e+37
    %v2753 = vand.u32 %v2741, 2147483648
    %v2754 = vor.u32 1.1754944e-38, %v2753
    %v2755 = vsel %vm2752, %v2754, %v2750
    %v2756 = vmul.f32 1.0, %v2755
    %v2757 = vmul.f32 %v2732, %v2530
    %v2758 = vmul.f32 %v2710, %v2735
    %v2759 = vadd.f32 %v2757, %v2758
    %v2760 = vtanh.pop %v2759
    %v2761 = vmul.f32 %v2756, %v2760
    %2762 = vst [vmem:[#allocation3 + $0x2] sm:$0x3] %v2761
    %2763 = vst [vmem:[#allocation4 + $0x1a] sm:$0x3] %v2761
    %v2764 = vld [vmem:[#allocation2 + $0x10] sm:$0xff]
    %v2765 = vld [vmem:[%s7] sm:$0xff]
    %v2766 = vld [vmem:[%s7 + $0x8] sm:$0xff]
    %v2767 = vld [vmem:[%s7 + $0x10] sm:$0xff]
    %v2768 = vld [vmem:[%s7 + $0x18] sm:$0xff]
    %v2769 = vld [vmem:[%s7 + $0x20] sm:$0xff]
    %v2770 = vld [vmem:[%s7 + $0x28] sm:$0xff]
    %v2771 = vld [vmem:[%s7 + $0x30] sm:$0xff]
    %v2772 = vld [vmem:[%s7 + $0x38] sm:$0xff]
    %v2773 = vld [vmem:[%s7 + $0x40] sm:$0xff]
    %v2774 = vld [vmem:[%s7 + $0x48] sm:$0xff]
    %v2775 = vld [vmem:[%s7 + $0x50] sm:$0xff]
    %v2776 = vld [vmem:[%s7 + $0x58] sm:$0xff]
    %v2777 = vld [vmem:[%s7 + $0x60] sm:$0xff]
    %v2778 = vld [vmem:[%s7 + $0x68] sm:$0xff]
    %v2779 = vld [vmem:[%s7 + $0x70] sm:$0xff]
    %v2780 = vld [vmem:[%s7 + $0x78] sm:$0xff]
    %v2781 = vld [vmem:[%s7 + $0x80] sm:$0xff]
    %v2782 = vld [vmem:[%s7 + $0x88] sm:$0xff]
    %v2783 = vld [vmem:[%s7 + $0x90] sm:$0xff]
    %v2784 = vld [vmem:[%s7 + $0x98] sm:$0xff]
    %v2785 = vld [vmem:[%s7 + $0xa0] sm:$0xff]
    %v2786 = vld [vmem:[%s7 + $0xa8] sm:$0xff]
    %v2787 = vld [vmem:[%s7 + $0xb0] sm:$0xff]
    %v2788 = vld [vmem:[%s7 + $0xb8] sm:$0xff]
    %v2789 = vld [vmem:[%s7 + $0xc0] sm:$0xff]
    %v2790 = vld [vmem:[%s7 + $0xc8] sm:$0xff]
    %v2791 = vld [vmem:[%s7 + $0xd0] sm:$0xff]
    %v2792 = vld [vmem:[%s7 + $0xd8] sm:$0xff]
    %v2793 = vld [vmem:[%s7 + $0xe0] sm:$0xff]
    %v2794 = vld [vmem:[%s7 + $0xe8] sm:$0xff]
    %v2795 = vld [vmem:[%s7 + $0xf0] sm:$0xff]
    %v2796 = vld [vmem:[%s7 + $0xf8] sm:$0xff]
    %v2797 = vld [vmem:[%s7 + $0x100] sm:$0xff]
    %v2798 = vld [vmem:[%s7 + $0x108] sm:$0xff]
    %v2799 = vld [vmem:[%s7 + $0x110] sm:$0xff]
    %v2800 = vld [vmem:[%s7 + $0x118] sm:$0xff]
    %v2801 = vld [vmem:[%s7 + $0x120] sm:$0xff]
    %v2802 = vld [vmem:[%s7 + $0x128] sm:$0xff]
    %v2803 = vld [vmem:[%s7 + $0x130] sm:$0xff]
    %v2804 = vld [vmem:[%s7 + $0x138] sm:$0xff]
    %v2805 = vld [vmem:[%s7 + $0x140] sm:$0xff]
    %v2806 = vld [vmem:[%s7 + $0x148] sm:$0xff]
    %v2807 = vld [vmem:[%s7 + $0x150] sm:$0xff]
    %v2808 = vld [vmem:[%s7 + $0x158] sm:$0xff]
    %v2809 = vld [vmem:[%s7 + $0x160] sm:$0xff]
    %v2810 = vld [vmem:[%s7 + $0x168] sm:$0xff]
    %v2811 = vld [vmem:[%s7 + $0x170] sm:$0xff]
    %v2812 = vld [vmem:[%s7 + $0x178] sm:$0xff]
    %v2813 = vld [vmem:[%s7 + $0x180] sm:$0xff]
    %v2814 = vld [vmem:[%s7 + $0x188] sm:$0xff]
    %v2815 = vld [vmem:[%s7 + $0x190] sm:$0xff]
    %v2816 = vld [vmem:[%s7 + $0x198] sm:$0xff]
    %v2817 = vld [vmem:[%s7 + $0x1a0] sm:$0xff]
    %v2818 = vld [vmem:[%s7 + $0x1a8] sm:$0xff]
    %v2819 = vld [vmem:[%s7 + $0x1b0] sm:$0xff]
    %v2820 = vld [vmem:[%s7 + $0x1b8] sm:$0xff]
    %v2821 = vld [vmem:[%s7 + $0x1c0] sm:$0xff]
    %v2822 = vld [vmem:[%s7 + $0x1c8] sm:$0xff]
    %v2823 = vld [vmem:[%s7 + $0x1d0] sm:$0xff]
    %v2824 = vld [vmem:[%s7 + $0x1d8] sm:$0xff]
    %v2825 = vld [vmem:[%s7 + $0x1e0] sm:$0xff]
    %v2826 = vld [vmem:[%s7 + $0x1e8] sm:$0xff]
    %v2827 = vld [vmem:[%s7 + $0x1f0] sm:$0xff]
    %v2828 = vld [vmem:[%s7 + $0x1f8] sm:$0xff]
    %2829 = vmatpush.msra.mxu0 %v2825
    %2830 = vmatpush.msra.mxu0 %v2821
    %2831 = vmatpush.msra.mxu0 %v2817
    %2832 = vmatpush.msra.mxu0 %v2813
    %2833 = vmatpush.msra.mxu0 %v2809
    %2834 = vmatpush.msra.mxu0 %v2805
    %2835 = vmatpush.msra.mxu0 %v2801
    %2836 = vmatpush.msra.mxu0 %v2797
    %2837 = vmatpush.msra.mxu0 %v2793
    %2838 = vmatpush.msra.mxu0 %v2789
    %2839 = vmatpush.msra.mxu0 %v2785
    %2840 = vmatpush.msra.mxu0 %v2781
    %2841 = vmatpush.msra.mxu0 %v2777
    %2842 = vmatpush.msra.mxu0 %v2773
    %2843 = vmatpush.msra.mxu0 %v2769
    %2844 = vmatpush.msra.mxu0 %v2765
    %2845 = vmatmul.f32.gmra.mxu0 %v2761
    %v2846 = vpop.f32.mrf.mxu0
    %v2847 = vadd.f32 0.0, %v2846
    %2848 = vdwg.mxu0
    %2849 = vmatpush.msra.mxu0 %v2826
    %2850 = vmatpush.msra.mxu0 %v2822
    %2851 = vmatpush.msra.mxu0 %v2818
    %2852 = vmatpush.msra.mxu0 %v2814
    %2853 = vmatpush.msra.mxu0 %v2810
    %2854 = vmatpush.msra.mxu0 %v2806
    %2855 = vmatpush.msra.mxu0 %v2802
    %2856 = vmatpush.msra.mxu0 %v2798
    %2857 = vmatpush.msra.mxu0 %v2794
    %2858 = vmatpush.msra.mxu0 %v2790
    %2859 = vmatpush.msra.mxu0 %v2786
    %2860 = vmatpush.msra.mxu0 %v2782
    %2861 = vmatpush.msra.mxu0 %v2778
    %2862 = vmatpush.msra.mxu0 %v2774
    %2863 = vmatpush.msra.mxu0 %v2770
    %2864 = vmatpush.msra.mxu0 %v2766
    %2865 = vmatmul.f32.gmra.mxu0 %v2761
    %v2866 = vpop.f32.mrf.mxu0
    %v2867 = vadd.f32 0.0, %v2866
    %2868 = vdwg.mxu0
    %2869 = vmatpush.msra.mxu0 %v2827
    %2870 = vmatpush.msra.mxu0 %v2823
    %2871 = vmatpush.msra.mxu0 %v2819
    %2872 = vmatpush.msra.mxu0 %v2815
    %2873 = vmatpush.msra.mxu0 %v2811
    %2874 = vmatpush.msra.mxu0 %v2807
    %2875 = vmatpush.msra.mxu0 %v2803
    %2876 = vmatpush.msra.mxu0 %v2799
    %2877 = vmatpush.msra.mxu0 %v2795
    %2878 = vmatpush.msra.mxu0 %v2791
    %2879 = vmatpush.msra.mxu0 %v2787
    %2880 = vmatpush.msra.mxu0 %v2783
    %2881 = vmatpush.msra.mxu0 %v2779
    %2882 = vmatpush.msra.mxu0 %v2775
    %2883 = vmatpush.msra.mxu0 %v2771
    %2884 = vmatpush.msra.mxu0 %v2767
    %2885 = vmatmul.f32.gmra.mxu0 %v2761
    %v2886 = vpop.f32.mrf.mxu0
    %v2887 = vadd.f32 0.0, %v2886
    %2888 = vdwg.mxu0
    %2889 = vmatpush.msra.mxu0 %v2828
    %2890 = vmatpush.msra.mxu0 %v2824
    %2891 = vmatpush.msra.mxu0 %v2820
    %2892 = vmatpush.msra.mxu0 %v2816
    %2893 = vmatpush.msra.mxu0 %v2812
    %2894 = vmatpush.msra.mxu0 %v2808
    %2895 = vmatpush.msra.mxu0 %v2804
    %2896 = vmatpush.msra.mxu0 %v2800
    %2897 = vmatpush.msra.mxu0 %v2796
    %2898 = vmatpush.msra.mxu0 %v2792
    %2899 = vmatpush.msra.mxu0 %v2788
    %2900 = vmatpush.msra.mxu0 %v2784
    %2901 = vmatpush.msra.mxu0 %v2780
    %2902 = vmatpush.msra.mxu0 %v2776
    %2903 = vmatpush.msra.mxu0 %v2772
    %2904 = vmatpush.msra.mxu0 %v2768
    %2905 = vmatmul.f32.gmra.mxu0 %v2761
    %v2906 = vpop.f32.mrf.mxu0
    %v2907 = vadd.f32 0.0, %v2906
    %2908 = vdwg.mxu0
    %v2913 = vrot.slane %v2867, 6
    %v2914 = vrot.slane %v2887, 4
    %v2915 = vrot.slane %v2907, 2
    %v2916 = vsel %vm590, %v2847, %v2913
    %v2917 = vsel %vm592, %v2914, %v2915
    %v2918 = vsel %vm594, %v2916, %v2917
    %v2920 = vadd.f32 %v2764, %v2918
    %v2921 = vxor.u32 %v2920, 2147483648
    %v2922 = vmul.f32 %v2921, 1.442695
    %v2923 = vpow.pop %v2922
    %v2924 = vadd.f32 %v2923, 1.0
    %v2925 = vrcp.pop %v2924
    %v2926 = vmul.f32 %v2924, %v2925
    %v2927 = vsub.f32 1.0, %v2926
    %v2928 = vmul.f32 %v2925, %v2927
    %v2929 = vadd.f32 %v2925, %v2928
    %vm2930 = vweird.f32 %v2924
    %vm2931 = vweird.f32 %v2925
    %vm2932 = vmor %vm2930, %vm2931
    %v2933 = vsel %vm2932, %v2925, %v2929
    %v2934 = vand.u32 2147483647, %v2924
    %vm2935 = vcmp.eq.f32.partialorder %v2934, 8.507059e+37
    %v2936 = vand.u32 %v2924, 2147483648
    %v2937 = vor.u32 1.1754944e-38, %v2936
    %v2938 = vsel %vm2935, %v2937, %v2933
    %v2939 = vmul.f32 1.0, %v2938
    %v2941 = vrot.slane %v2920, 2
    %v2943 = vxor.u32 %v2941, 2147483648
    %v2944 = vmul.f32 %v2943, 1.442695
    %v2945 = vpow.pop %v2944
    %v2946 = vadd.f32 %v2945, 1.0
    %v2947 = vrcp.pop %v2946
    %v2948 = vmul.f32 %v2946, %v2947
    %v2949 = vsub.f32 1.0, %v2948
    %v2950 = vmul.f32 %v2947, %v2949
    %v2951 = vadd.f32 %v2947, %v2950
    %vm2952 = vweird.f32 %v2946
    %vm2953 = vweird.f32 %v2947
    %vm2954 = vmor %vm2952, %vm2953
    %v2955 = vsel %vm2954, %v2947, %v2951
    %v2956 = vand.u32 2147483647, %v2946
    %vm2957 = vcmp.eq.f32.partialorder %v2956, 8.507059e+37
    %v2958 = vand.u32 %v2946, 2147483648
    %v2959 = vor.u32 1.1754944e-38, %v2958
    %v2960 = vsel %vm2957, %v2959, %v2955
    %v2961 = vmul.f32 1.0, %v2960
    %v2962 = vrot.slane %v2920, 4
    %v2964 = vtanh.pop %v2962
    %v2965 = vrot.slane %v2920, 6
    %v2967 = vxor.u32 %v2965, 2147483648
    %v2968 = vmul.f32 %v2967, 1.442695
    %v2969 = vpow.pop %v2968
    %v2970 = vadd.f32 %v2969, 1.0
    %v2971 = vrcp.pop %v2970
    %v2972 = vmul.f32 %v2970, %v2971
    %v2973 = vsub.f32 1.0, %v2972
    %v2974 = vmul.f32 %v2971, %v2973
    %v2975 = vadd.f32 %v2971, %v2974
    %vm2976 = vweird.f32 %v2970
    %vm2977 = vweird.f32 %v2971
    %vm2978 = vmor %vm2976, %vm2977
    %v2979 = vsel %vm2978, %v2971, %v2975
    %v2980 = vand.u32 2147483647, %v2970
    %vm2981 = vcmp.eq.f32.partialorder %v2980, 8.507059e+37
    %v2982 = vand.u32 %v2970, 2147483648
    %v2983 = vor.u32 1.1754944e-38, %v2982
    %v2984 = vsel %vm2981, %v2983, %v2979
    %v2985 = vmul.f32 1.0, %v2984
    %v2986 = vmul.f32 %v2961, %v2759
    %v2987 = vmul.f32 %v2939, %v2964
    %v2988 = vadd.f32 %v2986, %v2987
    %v2989 = vtanh.pop %v2988
    %v2990 = vmul.f32 %v2985, %v2989
    %2991 = vst [vmem:[#allocation3 + $0x4] sm:$0x3] %v2990
    %2992 = vst [vmem:[#allocation4 + $0x18] sm:$0x3] %v2990
    %v2993 = vld [vmem:[#allocation2 + $0x18] sm:$0xff]
    %v2994 = vld [vmem:[%s7] sm:$0xff]
    %v2995 = vld [vmem:[%s7 + $0x8] sm:$0xff]
    %v2996 = vld [vmem:[%s7 + $0x10] sm:$0xff]
    %v2997 = vld [vmem:[%s7 + $0x18] sm:$0xff]
    %v2998 = vld [vmem:[%s7 + $0x20] sm:$0xff]
    %v2999 = vld [vmem:[%s7 + $0x28] sm:$0xff]
    %v3000 = vld [vmem:[%s7 + $0x30] sm:$0xff]
    %v3001 = vld [vmem:[%s7 + $0x38] sm:$0xff]
    %v3002 = vld [vmem:[%s7 + $0x40] sm:$0xff]
    %v3003 = vld [vmem:[%s7 + $0x48] sm:$0xff]
    %v3004 = vld [vmem:[%s7 + $0x50] sm:$0xff]
    %v3005 = vld [vmem:[%s7 + $0x58] sm:$0xff]
    %v3006 = vld [vmem:[%s7 + $0x60] sm:$0xff]
    %v3007 = vld [vmem:[%s7 + $0x68] sm:$0xff]
    %v3008 = vld [vmem:[%s7 + $0x70] sm:$0xff]
    %v3009 = vld [vmem:[%s7 + $0x78] sm:$0xff]
    %v3010 = vld [vmem:[%s7 + $0x80] sm:$0xff]
    %v3011 = vld [vmem:[%s7 + $0x88] sm:$0xff]
    %v3012 = vld [vmem:[%s7 + $0x90] sm:$0xff]
    %v3013 = vld [vmem:[%s7 + $0x98] sm:$0xff]
    %v3014 = vld [vmem:[%s7 + $0xa0] sm:$0xff]
    %v3015 = vld [vmem:[%s7 + $0xa8] sm:$0xff]
    %v3016 = vld [vmem:[%s7 + $0xb0] sm:$0xff]
    %v3017 = vld [vmem:[%s7 + $0xb8] sm:$0xff]
    %v3018 = vld [vmem:[%s7 + $0xc0] sm:$0xff]
    %v3019 = vld [vmem:[%s7 + $0xc8] sm:$0xff]
    %v3020 = vld [vmem:[%s7 + $0xd0] sm:$0xff]
    %v3021 = vld [vmem:[%s7 + $0xd8] sm:$0xff]
    %v3022 = vld [vmem:[%s7 + $0xe0] sm:$0xff]
    %v3023 = vld [vmem:[%s7 + $0xe8] sm:$0xff]
    %v3024 = vld [vmem:[%s7 + $0xf0] sm:$0xff]
    %v3025 = vld [vmem:[%s7 + $0xf8] sm:$0xff]
    %v3026 = vld [vmem:[%s7 + $0x100] sm:$0xff]
    %v3027 = vld [vmem:[%s7 + $0x108] sm:$0xff]
    %v3028 = vld [vmem:[%s7 + $0x110] sm:$0xff]
    %v3029 = vld [vmem:[%s7 + $0x118] sm:$0xff]
    %v3030 = vld [vmem:[%s7 + $0x120] sm:$0xff]
    %v3031 = vld [vmem:[%s7 + $0x128] sm:$0xff]
    %v3032 = vld [vmem:[%s7 + $0x130] sm:$0xff]
    %v3033 = vld [vmem:[%s7 + $0x138] sm:$0xff]
    %v3034 = vld [vmem:[%s7 + $0x140] sm:$0xff]
    %v3035 = vld [vmem:[%s7 + $0x148] sm:$0xff]
    %v3036 = vld [vmem:[%s7 + $0x150] sm:$0xff]
    %v3037 = vld [vmem:[%s7 + $0x158] sm:$0xff]
    %v3038 = vld [vmem:[%s7 + $0x160] sm:$0xff]
    %v3039 = vld [vmem:[%s7 + $0x168] sm:$0xff]
    %v3040 = vld [vmem:[%s7 + $0x170] sm:$0xff]
    %v3041 = vld [vmem:[%s7 + $0x178] sm:$0xff]
    %v3042 = vld [vmem:[%s7 + $0x180] sm:$0xff]
    %v3043 = vld [vmem:[%s7 + $0x188] sm:$0xff]
    %v3044 = vld [vmem:[%s7 + $0x190] sm:$0xff]
    %v3045 = vld [vmem:[%s7 + $0x198] sm:$0xff]
    %v3046 = vld [vmem:[%s7 + $0x1a0] sm:$0xff]
    %v3047 = vld [vmem:[%s7 + $0x1a8] sm:$0xff]
    %v3048 = vld [vmem:[%s7 + $0x1b0] sm:$0xff]
    %v3049 = vld [vmem:[%s7 + $0x1b8] sm:$0xff]
    %v3050 = vld [vmem:[%s7 + $0x1c0] sm:$0xff]
    %v3051 = vld [vmem:[%s7 + $0x1c8] sm:$0xff]
    %v3052 = vld [vmem:[%s7 + $0x1d0] sm:$0xff]
    %v3053 = vld [vmem:[%s7 + $0x1d8] sm:$0xff]
    %v3054 = vld [vmem:[%s7 + $0x1e0] sm:$0xff]
    %v3055 = vld [vmem:[%s7 + $0x1e8] sm:$0xff]
    %v3056 = vld [vmem:[%s7 + $0x1f0] sm:$0xff]
    %v3057 = vld [vmem:[%s7 + $0x1f8] sm:$0xff]
    %3058 = vmatpush.msra.mxu0 %v3054
    %3059 = vmatpush.msra.mxu0 %v3050
    %3060 = vmatpush.msra.mxu0 %v3046
    %3061 = vmatpush.msra.mxu0 %v3042
    %3062 = vmatpush.msra.mxu0 %v3038
    %3063 = vmatpush.msra.mxu0 %v3034
    %3064 = vmatpush.msra.mxu0 %v3030
    %3065 = vmatpush.msra.mxu0 %v3026
    %3066 = vmatpush.msra.mxu0 %v3022
    %3067 = vmatpush.msra.mxu0 %v3018
    %3068 = vmatpush.msra.mxu0 %v3014
    %3069 = vmatpush.msra.mxu0 %v3010
    %3070 = vmatpush.msra.mxu0 %v3006
    %3071 = vmatpush.msra.mxu0 %v3002
    %3072 = vmatpush.msra.mxu0 %v2998
    %3073 = vmatpush.msra.mxu0 %v2994
    %3074 = vmatmul.f32.gmra.mxu0 %v2990
    %v3075 = vpop.f32.mrf.mxu0
    %v3076 = vadd.f32 0.0, %v3075
    %3077 = vdwg.mxu0
    %3078 = vmatpush.msra.mxu0 %v3055
    %3079 = vmatpush.msra.mxu0 %v3051
    %3080 = vmatpush.msra.mxu0 %v3047
    %3081 = vmatpush.msra.mxu0 %v3043
    %3082 = vmatpush.msra.mxu0 %v3039
    %3083 = vmatpush.msra.mxu0 %v3035
    %3084 = vmatpush.msra.mxu0 %v3031
    %3085 = vmatpush.msra.mxu0 %v3027
    %3086 = vmatpush.msra.mxu0 %v3023
    %3087 = vmatpush.msra.mxu0 %v3019
    %3088 = vmatpush.msra.mxu0 %v3015
    %3089 = vmatpush.msra.mxu0 %v3011
    %3090 = vmatpush.msra.mxu0 %v3007
    %3091 = vmatpush.msra.mxu0 %v3003
    %3092 = vmatpush.msra.mxu0 %v2999
    %3093 = vmatpush.msra.mxu0 %v2995
    %3094 = vmatmul.f32.gmra.mxu0 %v2990
    %v3095 = vpop.f32.mrf.mxu0
    %v3096 = vadd.f32 0.0, %v3095
    %3097 = vdwg.mxu0
    %3098 = vmatpush.msra.mxu0 %v3056
    %3099 = vmatpush.msra.mxu0 %v3052
    %3100 = vmatpush.msra.mxu0 %v3048
    %3101 = vmatpush.msra.mxu0 %v3044
    %3102 = vmatpush.msra.mxu0 %v3040
    %3103 = vmatpush.msra.mxu0 %v3036
    %3104 = vmatpush.msra.mxu0 %v3032
    %3105 = vmatpush.msra.mxu0 %v3028
    %3106 = vmatpush.msra.mxu0 %v3024
    %3107 = vmatpush.msra.mxu0 %v3020
    %3108 = vmatpush.msra.mxu0 %v3016
    %3109 = vmatpush.msra.mxu0 %v3012
    %3110 = vmatpush.msra.mxu0 %v3008
    %3111 = vmatpush.msra.mxu0 %v3004
    %3112 = vmatpush.msra.mxu0 %v3000
    %3113 = vmatpush.msra.mxu0 %v2996
    %3114 = vmatmul.f32.gmra.mxu0 %v2990
    %v3115 = vpop.f32.mrf.mxu0
    %v3116 = vadd.f32 0.0, %v3115
    %3117 = vdwg.mxu0
    %3118 = vmatpush.msra.mxu0 %v3057
    %3119 = vmatpush.msra.mxu0 %v3053
    %3120 = vmatpush.msra.mxu0 %v3049
    %3121 = vmatpush.msra.mxu0 %v3045
    %3122 = vmatpush.msra.mxu0 %v3041
    %3123 = vmatpush.msra.mxu0 %v3037
    %3124 = vmatpush.msra.mxu0 %v3033
    %3125 = vmatpush.msra.mxu0 %v3029
    %3126 = vmatpush.msra.mxu0 %v3025
    %3127 = vmatpush.msra.mxu0 %v3021
    %3128 = vmatpush.msra.mxu0 %v3017
    %3129 = vmatpush.msra.mxu0 %v3013
    %3130 = vmatpush.msra.mxu0 %v3009
    %3131 = vmatpush.msra.mxu0 %v3005
    %3132 = vmatpush.msra.mxu0 %v3001
    %3133 = vmatpush.msra.mxu0 %v2997
    %3134 = vmatmul.f32.gmra.mxu0 %v2990
    %v3135 = vpop.f32.mrf.mxu0
    %v3136 = vadd.f32 0.0, %v3135
    %3137 = vdwg.mxu0
    %v3142 = vrot.slane %v3096, 6
    %v3143 = vrot.slane %v3116, 4
    %v3144 = vrot.slane %v3136, 2
    %v3145 = vsel %vm590, %v3076, %v3142
    %v3146 = vsel %vm592, %v3143, %v3144
    %v3147 = vsel %vm594, %v3145, %v3146
    %v3149 = vadd.f32 %v2993, %v3147
    %v3150 = vxor.u32 %v3149, 2147483648
    %v3151 = vmul.f32 %v3150, 1.442695
    %v3152 = vpow.pop %v3151
    %v3153 = vadd.f32 %v3152, 1.0
    %v3154 = vrcp.pop %v3153
    %v3155 = vmul.f32 %v3153, %v3154
    %v3156 = vsub.f32 1.0, %v3155
    %v3157 = vmul.f32 %v3154, %v3156
    %v3158 = vadd.f32 %v3154, %v3157
    %vm3159 = vweird.f32 %v3153
    %vm3160 = vweird.f32 %v3154
    %vm3161 = vmor %vm3159, %vm3160
    %v3162 = vsel %vm3161, %v3154, %v3158
    %v3163 = vand.u32 2147483647, %v3153
    %vm3164 = vcmp.eq.f32.partialorder %v3163, 8.507059e+37
    %v3165 = vand.u32 %v3153, 2147483648
    %v3166 = vor.u32 1.1754944e-38, %v3165
    %v3167 = vsel %vm3164, %v3166, %v3162
    %v3168 = vmul.f32 1.0, %v3167
    %v3170 = vrot.slane %v3149, 2
    %v3172 = vxor.u32 %v3170, 2147483648
    %v3173 = vmul.f32 %v3172, 1.442695
    %v3174 = vpow.pop %v3173
    %v3175 = vadd.f32 %v3174, 1.0
    %v3176 = vrcp.pop %v3175
    %v3177 = vmul.f32 %v3175, %v3176
    %v3178 = vsub.f32 1.0, %v3177
    %v3179 = vmul.f32 %v3176, %v3178
    %v3180 = vadd.f32 %v3176, %v3179
    %vm3181 = vweird.f32 %v3175
    %vm3182 = vweird.f32 %v3176
    %vm3183 = vmor %vm3181, %vm3182
    %v3184 = vsel %vm3183, %v3176, %v3180
    %v3185 = vand.u32 2147483647, %v3175
    %vm3186 = vcmp.eq.f32.partialorder %v3185, 8.507059e+37
    %v3187 = vand.u32 %v3175, 2147483648
    %v3188 = vor.u32 1.1754944e-38, %v3187
    %v3189 = vsel %vm3186, %v3188, %v3184
    %v3190 = vmul.f32 1.0, %v3189
    %v3191 = vrot.slane %v3149, 4
    %v3193 = vtanh.pop %v3191
    %v3194 = vrot.slane %v3149, 6
    %v3196 = vxor.u32 %v3194, 2147483648
    %v3197 = vmul.f32 %v3196, 1.442695
    %v3198 = vpow.pop %v3197
    %v3199 = vadd.f32 %v3198, 1.0
    %v3200 = vrcp.pop %v3199
    %v3201 = vmul.f32 %v3199, %v3200
    %v3202 = vsub.f32 1.0, %v3201
    %v3203 = vmul.f32 %v3200, %v3202
    %v3204 = vadd.f32 %v3200, %v3203
    %vm3205 = vweird.f32 %v3199
    %vm3206 = vweird.f32 %v3200
    %vm3207 = vmor %vm3205, %vm3206
    %v3208 = vsel %vm3207, %v3200, %v3204
    %v3209 = vand.u32 2147483647, %v3199
    %vm3210 = vcmp.eq.f32.partialorder %v3209, 8.507059e+37
    %v3211 = vand.u32 %v3199, 2147483648
    %v3212 = vor.u32 1.1754944e-38, %v3211
    %v3213 = vsel %vm3210, %v3212, %v3208
    %v3214 = vmul.f32 1.0, %v3213
    %v3215 = vmul.f32 %v3190, %v2988
    %v3216 = vmul.f32 %v3168, %v3193
    %v3217 = vadd.f32 %v3215, %v3216
    %v3218 = vtanh.pop %v3217
    %v3219 = vmul.f32 %v3214, %v3218
    %3220 = vst [vmem:[#allocation3 + $0x6] sm:$0x3] %v3219
    %3221 = vst [vmem:[#allocation4 + $0x16] sm:$0x3] %v3219
    %v3222 = vld [vmem:[#allocation2 + $0x20] sm:$0xff]
    %v3223 = vld [vmem:[%s7] sm:$0xff]
    %v3224 = vld [vmem:[%s7 + $0x8] sm:$0xff]
    %v3225 = vld [vmem:[%s7 + $0x10] sm:$0xff]
    %v3226 = vld [vmem:[%s7 + $0x18] sm:$0xff]
    %v3227 = vld [vmem:[%s7 + $0x20] sm:$0xff]
    %v3228 = vld [vmem:[%s7 + $0x28] sm:$0xff]
    %v3229 = vld [vmem:[%s7 + $0x30] sm:$0xff]
    %v3230 = vld [vmem:[%s7 + $0x38] sm:$0xff]
    %v3231 = vld [vmem:[%s7 + $0x40] sm:$0xff]
    %v3232 = vld [vmem:[%s7 + $0x48] sm:$0xff]
    %v3233 = vld [vmem:[%s7 + $0x50] sm:$0xff]
    %v3234 = vld [vmem:[%s7 + $0x58] sm:$0xff]
    %v3235 = vld [vmem:[%s7 + $0x60] sm:$0xff]
    %v3236 = vld [vmem:[%s7 + $0x68] sm:$0xff]
    %v3237 = vld [vmem:[%s7 + $0x70] sm:$0xff]
    %v3238 = vld [vmem:[%s7 + $0x78] sm:$0xff]
    %v3239 = vld [vmem:[%s7 + $0x80] sm:$0xff]
    %v3240 = vld [vmem:[%s7 + $0x88] sm:$0xff]
    %v3241 = vld [vmem:[%s7 + $0x90] sm:$0xff]
    %v3242 = vld [vmem:[%s7 + $0x98] sm:$0xff]
    %v3243 = vld [vmem:[%s7 + $0xa0] sm:$0xff]
    %v3244 = vld [vmem:[%s7 + $0xa8] sm:$0xff]
    %v3245 = vld [vmem:[%s7 + $0xb0] sm:$0xff]
    %v3246 = vld [vmem:[%s7 + $0xb8] sm:$0xff]
    %v3247 = vld [vmem:[%s7 + $0xc0] sm:$0xff]
    %v3248 = vld [vmem:[%s7 + $0xc8] sm:$0xff]
    %v3249 = vld [vmem:[%s7 + $0xd0] sm:$0xff]
    %v3250 = vld [vmem:[%s7 + $0xd8] sm:$0xff]
    %v3251 = vld [vmem:[%s7 + $0xe0] sm:$0xff]
    %v3252 = vld [vmem:[%s7 + $0xe8] sm:$0xff]
    %v3253 = vld [vmem:[%s7 + $0xf0] sm:$0xff]
    %v3254 = vld [vmem:[%s7 + $0xf8] sm:$0xff]
    %v3255 = vld [vmem:[%s7 + $0x100] sm:$0xff]
    %v3256 = vld [vmem:[%s7 + $0x108] sm:$0xff]
    %v3257 = vld [vmem:[%s7 + $0x110] sm:$0xff]
    %v3258 = vld [vmem:[%s7 + $0x118] sm:$0xff]
    %v3259 = vld [vmem:[%s7 + $0x120] sm:$0xff]
    %v3260 = vld [vmem:[%s7 + $0x128] sm:$0xff]
    %v3261 = vld [vmem:[%s7 + $0x130] sm:$0xff]
    %v3262 = vld [vmem:[%s7 + $0x138] sm:$0xff]
    %v3263 = vld [vmem:[%s7 + $0x140] sm:$0xff]
    %v3264 = vld [vmem:[%s7 + $0x148] sm:$0xff]
    %v3265 = vld [vmem:[%s7 + $0x150] sm:$0xff]
    %v3266 = vld [vmem:[%s7 + $0x158] sm:$0xff]
    %v3267 = vld [vmem:[%s7 + $0x160] sm:$0xff]
    %v3268 = vld [vmem:[%s7 + $0x168] sm:$0xff]
    %v3269 = vld [vmem:[%s7 + $0x170] sm:$0xff]
    %v3270 = vld [vmem:[%s7 + $0x178] sm:$0xff]
    %v3271 = vld [vmem:[%s7 + $0x180] sm:$0xff]
    %v3272 = vld [vmem:[%s7 + $0x188] sm:$0xff]
    %v3273 = vld [vmem:[%s7 + $0x190] sm:$0xff]
    %v3274 = vld [vmem:[%s7 + $0x198] sm:$0xff]
    %v3275 = vld [vmem:[%s7 + $0x1a0] sm:$0xff]
    %v3276 = vld [vmem:[%s7 + $0x1a8] sm:$0xff]
    %v3277 = vld [vmem:[%s7 + $0x1b0] sm:$0xff]
    %v3278 = vld [vmem:[%s7 + $0x1b8] sm:$0xff]
    %v3279 = vld [vmem:[%s7 + $0x1c0] sm:$0xff]
    %v3280 = vld [vmem:[%s7 + $0x1c8] sm:$0xff]
    %v3281 = vld [vmem:[%s7 + $0x1d0] sm:$0xff]
    %v3282 = vld [vmem:[%s7 + $0x1d8] sm:$0xff]
    %v3283 = vld [vmem:[%s7 + $0x1e0] sm:$0xff]
    %v3284 = vld [vmem:[%s7 + $0x1e8] sm:$0xff]
    %v3285 = vld [vmem:[%s7 + $0x1f0] sm:$0xff]
    %v3286 = vld [vmem:[%s7 + $0x1f8] sm:$0xff]
    %3287 = vmatpush.msra.mxu0 %v3283
    %3288 = vmatpush.msra.mxu0 %v3279
    %3289 = vmatpush.msra.mxu0 %v3275
    %3290 = vmatpush.msra.mxu0 %v3271
    %3291 = vmatpush.msra.mxu0 %v3267
    %3292 = vmatpush.msra.mxu0 %v3263
    %3293 = vmatpush.msra.mxu0 %v3259
    %3294 = vmatpush.msra.mxu0 %v3255
    %3295 = vmatpush.msra.mxu0 %v3251
    %3296 = vmatpush.msra.mxu0 %v3247
    %3297 = vmatpush.msra.mxu0 %v3243
    %3298 = vmatpush.msra.mxu0 %v3239
    %3299 = vmatpush.msra.mxu0 %v3235
    %3300 = vmatpush.msra.mxu0 %v3231
    %3301 = vmatpush.msra.mxu0 %v3227
    %3302 = vmatpush.msra.mxu0 %v3223
    %3303 = vmatmul.f32.gmra.mxu0 %v3219
    %v3304 = vpop.f32.mrf.mxu0
    %v3305 = vadd.f32 0.0, %v3304
    %3306 = vdwg.mxu0
    %3307 = vmatpush.msra.mxu0 %v3284
    %3308 = vmatpush.msra.mxu0 %v3280
    %3309 = vmatpush.msra.mxu0 %v3276
    %3310 = vmatpush.msra.mxu0 %v3272
    %3311 = vmatpush.msra.mxu0 %v3268
    %3312 = vmatpush.msra.mxu0 %v3264
    %3313 = vmatpush.msra.mxu0 %v3260
    %3314 = vmatpush.msra.mxu0 %v3256
    %3315 = vmatpush.msra.mxu0 %v3252
    %3316 = vmatpush.msra.mxu0 %v3248
    %3317 = vmatpush.msra.mxu0 %v3244
    %3318 = vmatpush.msra.mxu0 %v3240
    %3319 = vmatpush.msra.mxu0 %v3236
    %3320 = vmatpush.msra.mxu0 %v3232
    %3321 = vmatpush.msra.mxu0 %v3228
    %3322 = vmatpush.msra.mxu0 %v3224
    %3323 = vmatmul.f32.gmra.mxu0 %v3219
    %v3324 = vpop.f32.mrf.mxu0
    %v3325 = vadd.f32 0.0, %v3324
    %3326 = vdwg.mxu0
    %3327 = vmatpush.msra.mxu0 %v3285
    %3328 = vmatpush.msra.mxu0 %v3281
    %3329 = vmatpush.msra.mxu0 %v3277
    %3330 = vmatpush.msra.mxu0 %v3273
    %3331 = vmatpush.msra.mxu0 %v3269
    %3332 = vmatpush.msra.mxu0 %v3265
    %3333 = vmatpush.msra.mxu0 %v3261
    %3334 = vmatpush.msra.mxu0 %v3257
    %3335 = vmatpush.msra.mxu0 %v3253
    %3336 = vmatpush.msra.mxu0 %v3249
    %3337 = vmatpush.msra.mxu0 %v3245
    %3338 = vmatpush.msra.mxu0 %v3241
    %3339 = vmatpush.msra.mxu0 %v3237
    %3340 = vmatpush.msra.mxu0 %v3233
    %3341 = vmatpush.msra.mxu0 %v3229
    %3342 = vmatpush.msra.mxu0 %v3225
    %3343 = vmatmul.f32.gmra.mxu0 %v3219
    %v3344 = vpop.f32.mrf.mxu0
    %v3345 = vadd.f32 0.0, %v3344
    %3346 = vdwg.mxu0
    %3347 = vmatpush.msra.mxu0 %v3286
    %3348 = vmatpush.msra.mxu0 %v3282
    %3349 = vmatpush.msra.mxu0 %v3278
    %3350 = vmatpush.msra.mxu0 %v3274
    %3351 = vmatpush.msra.mxu0 %v3270
    %3352 = vmatpush.msra.mxu0 %v3266
    %3353 = vmatpush.msra.mxu0 %v3262
    %3354 = vmatpush.msra.mxu0 %v3258
    %3355 = vmatpush.msra.mxu0 %v3254
    %3356 = vmatpush.msra.mxu0 %v3250
    %3357 = vmatpush.msra.mxu0 %v3246
    %3358 = vmatpush.msra.mxu0 %v3242
    %3359 = vmatpush.msra.mxu0 %v3238
    %3360 = vmatpush.msra.mxu0 %v3234
    %3361 = vmatpush.msra.mxu0 %v3230
    %3362 = vmatpush.msra.mxu0 %v3226
    %3363 = vmatmul.f32.gmra.mxu0 %v3219
    %v3364 = vpop.f32.mrf.mxu0
    %v3365 = vadd.f32 0.0, %v3364
    %3366 = vdwg.mxu0
    %v3371 = vrot.slane %v3325, 6
    %v3372 = vrot.slane %v3345, 4
    %v3373 = vrot.slane %v3365, 2
    %v3374 = vsel %vm590, %v3305, %v3371
    %v3375 = vsel %vm592, %v3372, %v3373
    %v3376 = vsel %vm594, %v3374, %v3375
    %v3378 = vadd.f32 %v3222, %v3376
    %v3379 = vxor.u32 %v3378, 2147483648
    %v3380 = vmul.f32 %v3379, 1.442695
    %v3381 = vpow.pop %v3380
    %v3382 = vadd.f32 %v3381, 1.0
    %v3383 = vrcp.pop %v3382
    %v3384 = vmul.f32 %v3382, %v3383
    %v3385 = vsub.f32 1.0, %v3384
    %v3386 = vmul.f32 %v3383, %v3385
    %v3387 = vadd.f32 %v3383, %v3386
    %vm3388 = vweird.f32 %v3382
    %vm3389 = vweird.f32 %v3383
    %vm3390 = vmor %vm3388, %vm3389
    %v3391 = vsel %vm3390, %v3383, %v3387
    %v3392 = vand.u32 2147483647, %v3382
    %vm3393 = vcmp.eq.f32.partialorder %v3392, 8.507059e+37
    %v3394 = vand.u32 %v3382, 2147483648
    %v3395 = vor.u32 1.1754944e-38, %v3394
    %v3396 = vsel %vm3393, %v3395, %v3391
    %v3397 = vmul.f32 1.0, %v3396
    %v3399 = vrot.slane %v3378, 2
    %v3401 = vxor.u32 %v3399, 2147483648
    %v3402 = vmul.f32 %v3401, 1.442695
    %v3403 = vpow.pop %v3402
    %v3404 = vadd.f32 %v3403, 1.0
    %v3405 = vrcp.pop %v3404
    %v3406 = vmul.f32 %v3404, %v3405
    %v3407 = vsub.f32 1.0, %v3406
    %v3408 = vmul.f32 %v3405, %v3407
    %v3409 = vadd.f32 %v3405, %v3408
    %vm3410 = vweird.f32 %v3404
    %vm3411 = vweird.f32 %v3405
    %vm3412 = vmor %vm3410, %vm3411
    %v3413 = vsel %vm3412, %v3405, %v3409
    %v3414 = vand.u32 2147483647, %v3404
    %vm3415 = vcmp.eq.f32.partialorder %v3414, 8.507059e+37
    %v3416 = vand.u32 %v3404, 2147483648
    %v3417 = vor.u32 1.1754944e-38, %v3416
    %v3418 = vsel %vm3415, %v3417, %v3413
    %v3419 = vmul.f32 1.0, %v3418
    %v3420 = vrot.slane %v3378, 4
    %v3422 = vtanh.pop %v3420
    %v3423 = vrot.slane %v3378, 6
    %v3425 = vxor.u32 %v3423, 2147483648
    %v3426 = vmul.f32 %v3425, 1.442695
    %v3427 = vpow.pop %v3426
    %v3428 = vadd.f32 %v3427, 1.0
    %v3429 = vrcp.pop %v3428
    %v3430 = vmul.f32 %v3428, %v3429
    %v3431 = vsub.f32 1.0, %v3430
    %v3432 = vmul.f32 %v3429, %v3431
    %v3433 = vadd.f32 %v3429, %v3432
    %vm3434 = vweird.f32 %v3428
    %vm3435 = vweird.f32 %v3429
    %vm3436 = vmor %vm3434, %vm3435
    %v3437 = vsel %vm3436, %v3429, %v3433
    %v3438 = vand.u32 2147483647, %v3428
    %vm3439 = vcmp.eq.f32.partialorder %v3438, 8.507059e+37
    %v3440 = vand.u32 %v3428, 2147483648
    %v3441 = vor.u32 1.1754944e-38, %v3440
    %v3442 = vsel %vm3439, %v3441, %v3437
    %v3443 = vmul.f32 1.0, %v3442
    %v3444 = vmul.f32 %v3419, %v3217
    %v3445 = vmul.f32 %v3397, %v3422
    %v3446 = vadd.f32 %v3444, %v3445
    %v3447 = vtanh.pop %v3446
    %v3448 = vmul.f32 %v3443, %v3447
    %3449 = vst [vmem:[#allocation3 + $0x8] sm:$0x3] %v3448
    %3450 = vst [vmem:[#allocation4 + $0x14] sm:$0x3] %v3448
    %v3451 = vld [vmem:[#allocation2 + $0x28] sm:$0xff]
    %v3452 = vld [vmem:[%s7] sm:$0xff]
    %v3453 = vld [vmem:[%s7 + $0x8] sm:$0xff]
    %v3454 = vld [vmem:[%s7 + $0x10] sm:$0xff]
    %v3455 = vld [vmem:[%s7 + $0x18] sm:$0xff]
    %v3456 = vld [vmem:[%s7 + $0x20] sm:$0xff]
    %v3457 = vld [vmem:[%s7 + $0x28] sm:$0xff]
    %v3458 = vld [vmem:[%s7 + $0x30] sm:$0xff]
    %v3459 = vld [vmem:[%s7 + $0x38] sm:$0xff]
    %v3460 = vld [vmem:[%s7 + $0x40] sm:$0xff]
    %v3461 = vld [vmem:[%s7 + $0x48] sm:$0xff]
    %v3462 = vld [vmem:[%s7 + $0x50] sm:$0xff]
    %v3463 = vld [vmem:[%s7 + $0x58] sm:$0xff]
    %v3464 = vld [vmem:[%s7 + $0x60] sm:$0xff]
    %v3465 = vld [vmem:[%s7 + $0x68] sm:$0xff]
    %v3466 = vld [vmem:[%s7 + $0x70] sm:$0xff]
    %v3467 = vld [vmem:[%s7 + $0x78] sm:$0xff]
    %v3468 = vld [vmem:[%s7 + $0x80] sm:$0xff]
    %v3469 = vld [vmem:[%s7 + $0x88] sm:$0xff]
    %v3470 = vld [vmem:[%s7 + $0x90] sm:$0xff]
    %v3471 = vld [vmem:[%s7 + $0x98] sm:$0xff]
    %v3472 = vld [vmem:[%s7 + $0xa0] sm:$0xff]
    %v3473 = vld [vmem:[%s7 + $0xa8] sm:$0xff]
    %v3474 = vld [vmem:[%s7 + $0xb0] sm:$0xff]
    %v3475 = vld [vmem:[%s7 + $0xb8] sm:$0xff]
    %v3476 = vld [vmem:[%s7 + $0xc0] sm:$0xff]
    %v3477 = vld [vmem:[%s7 + $0xc8] sm:$0xff]
    %v3478 = vld [vmem:[%s7 + $0xd0] sm:$0xff]
    %v3479 = vld [vmem:[%s7 + $0xd8] sm:$0xff]
    %v3480 = vld [vmem:[%s7 + $0xe0] sm:$0xff]
    %v3481 = vld [vmem:[%s7 + $0xe8] sm:$0xff]
    %v3482 = vld [vmem:[%s7 + $0xf0] sm:$0xff]
    %v3483 = vld [vmem:[%s7 + $0xf8] sm:$0xff]
    %v3484 = vld [vmem:[%s7 + $0x100] sm:$0xff]
    %v3485 = vld [vmem:[%s7 + $0x108] sm:$0xff]
    %v3486 = vld [vmem:[%s7 + $0x110] sm:$0xff]
    %v3487 = vld [vmem:[%s7 + $0x118] sm:$0xff]
    %v3488 = vld [vmem:[%s7 + $0x120] sm:$0xff]
    %v3489 = vld [vmem:[%s7 + $0x128] sm:$0xff]
    %v3490 = vld [vmem:[%s7 + $0x130] sm:$0xff]
    %v3491 = vld [vmem:[%s7 + $0x138] sm:$0xff]
    %v3492 = vld [vmem:[%s7 + $0x140] sm:$0xff]
    %v3493 = vld [vmem:[%s7 + $0x148] sm:$0xff]
    %v3494 = vld [vmem:[%s7 + $0x150] sm:$0xff]
    %v3495 = vld [vmem:[%s7 + $0x158] sm:$0xff]
    %v3496 = vld [vmem:[%s7 + $0x160] sm:$0xff]
    %v3497 = vld [vmem:[%s7 + $0x168] sm:$0xff]
    %v3498 = vld [vmem:[%s7 + $0x170] sm:$0xff]
    %v3499 = vld [vmem:[%s7 + $0x178] sm:$0xff]
    %v3500 = vld [vmem:[%s7 + $0x180] sm:$0xff]
    %v3501 = vld [vmem:[%s7 + $0x188] sm:$0xff]
    %v3502 = vld [vmem:[%s7 + $0x190] sm:$0xff]
    %v3503 = vld [vmem:[%s7 + $0x198] sm:$0xff]
    %v3504 = vld [vmem:[%s7 + $0x1a0] sm:$0xff]
    %v3505 = vld [vmem:[%s7 + $0x1a8] sm:$0xff]
    %v3506 = vld [vmem:[%s7 + $0x1b0] sm:$0xff]
    %v3507 = vld [vmem:[%s7 + $0x1b8] sm:$0xff]
    %v3508 = vld [vmem:[%s7 + $0x1c0] sm:$0xff]
    %v3509 = vld [vmem:[%s7 + $0x1c8] sm:$0xff]
    %v3510 = vld [vmem:[%s7 + $0x1d0] sm:$0xff]
    %v3511 = vld [vmem:[%s7 + $0x1d8] sm:$0xff]
    %v3512 = vld [vmem:[%s7 + $0x1e0] sm:$0xff]
    %v3513 = vld [vmem:[%s7 + $0x1e8] sm:$0xff]
    %v3514 = vld [vmem:[%s7 + $0x1f0] sm:$0xff]
    %v3515 = vld [vmem:[%s7 + $0x1f8] sm:$0xff]
    %3516 = vmatpush.msra.mxu0 %v3512
    %3517 = vmatpush.msra.mxu0 %v3508
    %3518 = vmatpush.msra.mxu0 %v3504
    %3519 = vmatpush.msra.mxu0 %v3500
    %3520 = vmatpush.msra.mxu0 %v3496
    %3521 = vmatpush.msra.mxu0 %v3492
    %3522 = vmatpush.msra.mxu0 %v3488
    %3523 = vmatpush.msra.mxu0 %v3484
    %3524 = vmatpush.msra.mxu0 %v3480
    %3525 = vmatpush.msra.mxu0 %v3476
    %3526 = vmatpush.msra.mxu0 %v3472
    %3527 = vmatpush.msra.mxu0 %v3468
    %3528 = vmatpush.msra.mxu0 %v3464
    %3529 = vmatpush.msra.mxu0 %v3460
    %3530 = vmatpush.msra.mxu0 %v3456
    %3531 = vmatpush.msra.mxu0 %v3452
    %3532 = vmatmul.f32.gmra.mxu0 %v3448
    %v3533 = vpop.f32.mrf.mxu0
    %v3534 = vadd.f32 0.0, %v3533
    %3535 = vdwg.mxu0
    %3536 = vmatpush.msra.mxu0 %v3513
    %3537 = vmatpush.msra.mxu0 %v3509
    %3538 = vmatpush.msra.mxu0 %v3505
    %3539 = vmatpush.msra.mxu0 %v3501
    %3540 = vmatpush.msra.mxu0 %v3497
    %3541 = vmatpush.msra.mxu0 %v3493
    %3542 = vmatpush.msra.mxu0 %v3489
    %3543 = vmatpush.msra.mxu0 %v3485
    %3544 = vmatpush.msra.mxu0 %v3481
    %3545 = vmatpush.msra.mxu0 %v3477
    %3546 = vmatpush.msra.mxu0 %v3473
    %3547 = vmatpush.msra.mxu0 %v3469
    %3548 = vmatpush.msra.mxu0 %v3465
    %3549 = vmatpush.msra.mxu0 %v3461
    %3550 = vmatpush.msra.mxu0 %v3457
    %3551 = vmatpush.msra.mxu0 %v3453
    %3552 = vmatmul.f32.gmra.mxu0 %v3448
    %v3553 = vpop.f32.mrf.mxu0
    %v3554 = vadd.f32 0.0, %v3553
    %3555 = vdwg.mxu0
    %3556 = vmatpush.msra.mxu0 %v3514
    %3557 = vmatpush.msra.mxu0 %v3510
    %3558 = vmatpush.msra.mxu0 %v3506
    %3559 = vmatpush.msra.mxu0 %v3502
    %3560 = vmatpush.msra.mxu0 %v3498
    %3561 = vmatpush.msra.mxu0 %v3494
    %3562 = vmatpush.msra.mxu0 %v3490
    %3563 = vmatpush.msra.mxu0 %v3486
    %3564 = vmatpush.msra.mxu0 %v3482
    %3565 = vmatpush.msra.mxu0 %v3478
    %3566 = vmatpush.msra.mxu0 %v3474
    %3567 = vmatpush.msra.mxu0 %v3470
    %3568 = vmatpush.msra.mxu0 %v3466
    %3569 = vmatpush.msra.mxu0 %v3462
    %3570 = vmatpush.msra.mxu0 %v3458
    %3571 = vmatpush.msra.mxu0 %v3454
    %3572 = vmatmul.f32.gmra.mxu0 %v3448
    %v3573 = vpop.f32.mrf.mxu0
    %v3574 = vadd.f32 0.0, %v3573
    %3575 = vdwg.mxu0
    %3576 = vmatpush.msra.mxu0 %v3515
    %3577 = vmatpush.msra.mxu0 %v3511
    %3578 = vmatpush.msra.mxu0 %v3507
    %3579 = vmatpush.msra.mxu0 %v3503
    %3580 = vmatpush.msra.mxu0 %v3499
    %3581 = vmatpush.msra.mxu0 %v3495
    %3582 = vmatpush.msra.mxu0 %v3491
    %3583 = vmatpush.msra.mxu0 %v3487
    %3584 = vmatpush.msra.mxu0 %v3483
    %3585 = vmatpush.msra.mxu0 %v3479
    %3586 = vmatpush.msra.mxu0 %v3475
    %3587 = vmatpush.msra.mxu0 %v3471
    %3588 = vmatpush.msra.mxu0 %v3467
    %3589 = vmatpush.msra.mxu0 %v3463
    %3590 = vmatpush.msra.mxu0 %v3459
    %3591 = vmatpush.msra.mxu0 %v3455
    %3592 = vmatmul.f32.gmra.mxu0 %v3448
    %v3593 = vpop.f32.mrf.mxu0
    %v3594 = vadd.f32 0.0, %v3593
    %3595 = vdwg.mxu0
    %v3600 = vrot.slane %v3554, 6
    %v3601 = vrot.slane %v3574, 4
    %v3602 = vrot.slane %v3594, 2
    %v3603 = vsel %vm590, %v3534, %v3600
    %v3604 = vsel %vm592, %v3601, %v3602
    %v3605 = vsel %vm594, %v3603, %v3604
    %v3607 = vadd.f32 %v3451, %v3605
    %v3608 = vxor.u32 %v3607, 2147483648
    %v3609 = vmul.f32 %v3608, 1.442695
    %v3610 = vpow.pop %v3609
    %v3611 = vadd.f32 %v3610, 1.0
    %v3612 = vrcp.pop %v3611
    %v3613 = vmul.f32 %v3611, %v3612
    %v3614 = vsub.f32 1.0, %v3613
    %v3615 = vmul.f32 %v3612, %v3614
    %v3616 = vadd.f32 %v3612, %v3615
    %vm3617 = vweird.f32 %v3611
    %vm3618 = vweird.f32 %v3612
    %vm3619 = vmor %vm3617, %vm3618
    %v3620 = vsel %vm3619, %v3612, %v3616
    %v3621 = vand.u32 2147483647, %v3611
    %vm3622 = vcmp.eq.f32.partialorder %v3621, 8.507059e+37
    %v3623 = vand.u32 %v3611, 2147483648
    %v3624 = vor.u32 1.1754944e-38, %v3623
    %v3625 = vsel %vm3622, %v3624, %v3620
    %v3626 = vmul.f32 1.0, %v3625
    %v3628 = vrot.slane %v3607, 2
    %v3630 = vxor.u32 %v3628, 2147483648
    %v3631 = vmul.f32 %v3630, 1.442695
    %v3632 = vpow.pop %v3631
    %v3633 = vadd.f32 %v3632, 1.0
    %v3634 = vrcp.pop %v3633
    %v3635 = vmul.f32 %v3633, %v3634
    %v3636 = vsub.f32 1.0, %v3635
    %v3637 = vmul.f32 %v3634, %v3636
    %v3638 = vadd.f32 %v3634, %v3637
    %vm3639 = vweird.f32 %v3633
    %vm3640 = vweird.f32 %v3634
    %vm3641 = vmor %vm3639, %vm3640
    %v3642 = vsel %vm3641, %v3634, %v3638
    %v3643 = vand.u32 2147483647, %v3633
    %vm3644 = vcmp.eq.f32.partialorder %v3643, 8.507059e+37
    %v3645 = vand.u32 %v3633, 2147483648
    %v3646 = vor.u32 1.1754944e-38, %v3645
    %v3647 = vsel %vm3644, %v3646, %v3642
    %v3648 = vmul.f32 1.0, %v3647
    %v3649 = vrot.slane %v3607, 4
    %v3651 = vtanh.pop %v3649
    %v3652 = vrot.slane %v3607, 6
    %v3654 = vxor.u32 %v3652, 2147483648
    %v3655 = vmul.f32 %v3654, 1.442695
    %v3656 = vpow.pop %v3655
    %v3657 = vadd.f32 %v3656, 1.0
    %v3658 = vrcp.pop %v3657
    %v3659 = vmul.f32 %v3657, %v3658
    %v3660 = vsub.f32 1.0, %v3659
    %v3661 = vmul.f32 %v3658, %v3660
    %v3662 = vadd.f32 %v3658, %v3661
    %vm3663 = vweird.f32 %v3657
    %vm3664 = vweird.f32 %v3658
    %vm3665 = vmor %vm3663, %vm3664
    %v3666 = vsel %vm3665, %v3658, %v3662
    %v3667 = vand.u32 2147483647, %v3657
    %vm3668 = vcmp.eq.f32.partialorder %v3667, 8.507059e+37
    %v3669 = vand.u32 %v3657, 2147483648
    %v3670 = vor.u32 1.1754944e-38, %v3669
    %v3671 = vsel %vm3668, %v3670, %v3666
    %v3672 = vmul.f32 1.0, %v3671
    %v3673 = vmul.f32 %v3648, %v3446
    %v3674 = vmul.f32 %v3626, %v3651
    %v3675 = vadd.f32 %v3673, %v3674
    %v3676 = vtanh.pop %v3675
    %v3677 = vmul.f32 %v3672, %v3676
    %3678 = vst [vmem:[#allocation3 + $0xa] sm:$0x3] %v3677
    %3679 = vst [vmem:[#allocation4 + $0x12] sm:$0x3] %v3677
    %v3680 = vld [vmem:[#allocation2 + $0x30] sm:$0xff]
    %v3681 = vld [vmem:[%s7] sm:$0xff]
    %v3682 = vld [vmem:[%s7 + $0x8] sm:$0xff]
    %v3683 = vld [vmem:[%s7 + $0x10] sm:$0xff]
    %v3684 = vld [vmem:[%s7 + $0x18] sm:$0xff]
    %v3685 = vld [vmem:[%s7 + $0x20] sm:$0xff]
    %v3686 = vld [vmem:[%s7 + $0x28] sm:$0xff]
    %v3687 = vld [vmem:[%s7 + $0x30] sm:$0xff]
    %v3688 = vld [vmem:[%s7 + $0x38] sm:$0xff]
    %v3689 = vld [vmem:[%s7 + $0x40] sm:$0xff]
    %v3690 = vld [vmem:[%s7 + $0x48] sm:$0xff]
    %v3691 = vld [vmem:[%s7 + $0x50] sm:$0xff]
    %v3692 = vld [vmem:[%s7 + $0x58] sm:$0xff]
    %v3693 = vld [vmem:[%s7 + $0x60] sm:$0xff]
    %v3694 = vld [vmem:[%s7 + $0x68] sm:$0xff]
    %v3695 = vld [vmem:[%s7 + $0x70] sm:$0xff]
    %v3696 = vld [vmem:[%s7 + $0x78] sm:$0xff]
    %v3697 = vld [vmem:[%s7 + $0x80] sm:$0xff]
    %v3698 = vld [vmem:[%s7 + $0x88] sm:$0xff]
    %v3699 = vld [vmem:[%s7 + $0x90] sm:$0xff]
    %v3700 = vld [vmem:[%s7 + $0x98] sm:$0xff]
    %v3701 = vld [vmem:[%s7 + $0xa0] sm:$0xff]
    %v3702 = vld [vmem:[%s7 + $0xa8] sm:$0xff]
    %v3703 = vld [vmem:[%s7 + $0xb0] sm:$0xff]
    %v3704 = vld [vmem:[%s7 + $0xb8] sm:$0xff]
    %v3705 = vld [vmem:[%s7 + $0xc0] sm:$0xff]
    %v3706 = vld [vmem:[%s7 + $0xc8] sm:$0xff]
    %v3707 = vld [vmem:[%s7 + $0xd0] sm:$0xff]
    %v3708 = vld [vmem:[%s7 + $0xd8] sm:$0xff]
    %v3709 = vld [vmem:[%s7 + $0xe0] sm:$0xff]
    %v3710 = vld [vmem:[%s7 + $0xe8] sm:$0xff]
    %v3711 = vld [vmem:[%s7 + $0xf0] sm:$0xff]
    %v3712 = vld [vmem:[%s7 + $0xf8] sm:$0xff]
    %v3713 = vld [vmem:[%s7 + $0x100] sm:$0xff]
    %v3714 = vld [vmem:[%s7 + $0x108] sm:$0xff]
    %v3715 = vld [vmem:[%s7 + $0x110] sm:$0xff]
    %v3716 = vld [vmem:[%s7 + $0x118] sm:$0xff]
    %v3717 = vld [vmem:[%s7 + $0x120] sm:$0xff]
    %v3718 = vld [vmem:[%s7 + $0x128] sm:$0xff]
    %v3719 = vld [vmem:[%s7 + $0x130] sm:$0xff]
    %v3720 = vld [vmem:[%s7 + $0x138] sm:$0xff]
    %v3721 = vld [vmem:[%s7 + $0x140] sm:$0xff]
    %v3722 = vld [vmem:[%s7 + $0x148] sm:$0xff]
    %v3723 = vld [vmem:[%s7 + $0x150] sm:$0xff]
    %v3724 = vld [vmem:[%s7 + $0x158] sm:$0xff]
    %v3725 = vld [vmem:[%s7 + $0x160] sm:$0xff]
    %v3726 = vld [vmem:[%s7 + $0x168] sm:$0xff]
    %v3727 = vld [vmem:[%s7 + $0x170] sm:$0xff]
    %v3728 = vld [vmem:[%s7 + $0x178] sm:$0xff]
    %v3729 = vld [vmem:[%s7 + $0x180] sm:$0xff]
    %v3730 = vld [vmem:[%s7 + $0x188] sm:$0xff]
    %v3731 = vld [vmem:[%s7 + $0x190] sm:$0xff]
    %v3732 = vld [vmem:[%s7 + $0x198] sm:$0xff]
    %v3733 = vld [vmem:[%s7 + $0x1a0] sm:$0xff]
    %v3734 = vld [vmem:[%s7 + $0x1a8] sm:$0xff]
    %v3735 = vld [vmem:[%s7 + $0x1b0] sm:$0xff]
    %v3736 = vld [vmem:[%s7 + $0x1b8] sm:$0xff]
    %v3737 = vld [vmem:[%s7 + $0x1c0] sm:$0xff]
    %v3738 = vld [vmem:[%s7 + $0x1c8] sm:$0xff]
    %v3739 = vld [vmem:[%s7 + $0x1d0] sm:$0xff]
    %v3740 = vld [vmem:[%s7 + $0x1d8] sm:$0xff]
    %v3741 = vld [vmem:[%s7 + $0x1e0] sm:$0xff]
    %v3742 = vld [vmem:[%s7 + $0x1e8] sm:$0xff]
    %v3743 = vld [vmem:[%s7 + $0x1f0] sm:$0xff]
    %v3744 = vld [vmem:[%s7 + $0x1f8] sm:$0xff]
    %3745 = vmatpush.msra.mxu0 %v3741
    %3746 = vmatpush.msra.mxu0 %v3737
    %3747 = vmatpush.msra.mxu0 %v3733
    %3748 = vmatpush.msra.mxu0 %v3729
    %3749 = vmatpush.msra.mxu0 %v3725
    %3750 = vmatpush.msra.mxu0 %v3721
    %3751 = vmatpush.msra.mxu0 %v3717
    %3752 = vmatpush.msra.mxu0 %v3713
    %3753 = vmatpush.msra.mxu0 %v3709
    %3754 = vmatpush.msra.mxu0 %v3705
    %3755 = vmatpush.msra.mxu0 %v3701
    %3756 = vmatpush.msra.mxu0 %v3697
    %3757 = vmatpush.msra.mxu0 %v3693
    %3758 = vmatpush.msra.mxu0 %v3689
    %3759 = vmatpush.msra.mxu0 %v3685
    %3760 = vmatpush.msra.mxu0 %v3681
    %3761 = vmatmul.f32.gmra.mxu0 %v3677
    %v3762 = vpop.f32.mrf.mxu0
    %v3763 = vadd.f32 0.0, %v3762
    %3764 = vdwg.mxu0
    %3765 = vmatpush.msra.mxu0 %v3742
    %3766 = vmatpush.msra.mxu0 %v3738
    %3767 = vmatpush.msra.mxu0 %v3734
    %3768 = vmatpush.msra.mxu0 %v3730
    %3769 = vmatpush.msra.mxu0 %v3726
    %3770 = vmatpush.msra.mxu0 %v3722
    %3771 = vmatpush.msra.mxu0 %v3718
    %3772 = vmatpush.msra.mxu0 %v3714
    %3773 = vmatpush.msra.mxu0 %v3710
    %3774 = vmatpush.msra.mxu0 %v3706
    %3775 = vmatpush.msra.mxu0 %v3702
    %3776 = vmatpush.msra.mxu0 %v3698
    %3777 = vmatpush.msra.mxu0 %v3694
    %3778 = vmatpush.msra.mxu0 %v3690
    %3779 = vmatpush.msra.mxu0 %v3686
    %3780 = vmatpush.msra.mxu0 %v3682
    %3781 = vmatmul.f32.gmra.mxu0 %v3677
    %v3782 = vpop.f32.mrf.mxu0
    %v3783 = vadd.f32 0.0, %v3782
    %3784 = vdwg.mxu0
    %3785 = vmatpush.msra.mxu0 %v3743
    %3786 = vmatpush.msra.mxu0 %v3739
    %3787 = vmatpush.msra.mxu0 %v3735
    %3788 = vmatpush.msra.mxu0 %v3731
    %3789 = vmatpush.msra.mxu0 %v3727
    %3790 = vmatpush.msra.mxu0 %v3723
    %3791 = vmatpush.msra.mxu0 %v3719
    %3792 = vmatpush.msra.mxu0 %v3715
    %3793 = vmatpush.msra.mxu0 %v3711
    %3794 = vmatpush.msra.mxu0 %v3707
    %3795 = vmatpush.msra.mxu0 %v3703
    %3796 = vmatpush.msra.mxu0 %v3699
    %3797 = vmatpush.msra.mxu0 %v3695
    %3798 = vmatpush.msra.mxu0 %v3691
    %3799 = vmatpush.msra.mxu0 %v3687
    %3800 = vmatpush.msra.mxu0 %v3683
    %3801 = vmatmul.f32.gmra.mxu0 %v3677
    %v3802 = vpop.f32.mrf.mxu0
    %v3803 = vadd.f32 0.0, %v3802
    %3804 = vdwg.mxu0
    %3805 = vmatpush.msra.mxu0 %v3744
    %3806 = vmatpush.msra.mxu0 %v3740
    %3807 = vmatpush.msra.mxu0 %v3736
    %3808 = vmatpush.msra.mxu0 %v3732
    %3809 = vmatpush.msra.mxu0 %v3728
    %3810 = vmatpush.msra.mxu0 %v3724
    %3811 = vmatpush.msra.mxu0 %v3720
    %3812 = vmatpush.msra.mxu0 %v3716
    %3813 = vmatpush.msra.mxu0 %v3712
    %3814 = vmatpush.msra.mxu0 %v3708
    %3815 = vmatpush.msra.mxu0 %v3704
    %3816 = vmatpush.msra.mxu0 %v3700
    %3817 = vmatpush.msra.mxu0 %v3696
    %3818 = vmatpush.msra.mxu0 %v3692
    %3819 = vmatpush.msra.mxu0 %v3688
    %3820 = vmatpush.msra.mxu0 %v3684
    %3821 = vmatmul.f32.gmra.mxu0 %v3677
    %v3822 = vpop.f32.mrf.mxu0
    %v3823 = vadd.f32 0.0, %v3822
    %3824 = vdwg.mxu0
    %v3829 = vrot.slane %v3783, 6
    %v3830 = vrot.slane %v3803, 4
    %v3831 = vrot.slane %v3823, 2
    %v3832 = vsel %vm590, %v3763, %v3829
    %v3833 = vsel %vm592, %v3830, %v3831
    %v3834 = vsel %vm594, %v3832, %v3833
    %v3836 = vadd.f32 %v3680, %v3834
    %v3837 = vxor.u32 %v3836, 2147483648
    %v3838 = vmul.f32 %v3837, 1.442695
    %v3839 = vpow.pop %v3838
    %v3840 = vadd.f32 %v3839, 1.0
    %v3841 = vrcp.pop %v3840
    %v3842 = vmul.f32 %v3840, %v3841
    %v3843 = vsub.f32 1.0, %v3842
    %v3844 = vmul.f32 %v3841, %v3843
    %v3845 = vadd.f32 %v3841, %v3844
    %vm3846 = vweird.f32 %v3840
    %vm3847 = vweird.f32 %v3841
    %vm3848 = vmor %vm3846, %vm3847
    %v3849 = vsel %vm3848, %v3841, %v3845
    %v3850 = vand.u32 2147483647, %v3840
    %vm3851 = vcmp.eq.f32.partialorder %v3850, 8.507059e+37
    %v3852 = vand.u32 %v3840, 2147483648
    %v3853 = vor.u32 1.1754944e-38, %v3852
    %v3854 = vsel %vm3851, %v3853, %v3849
    %v3855 = vmul.f32 1.0, %v3854
    %v3857 = vrot.slane %v3836, 2
    %v3859 = vxor.u32 %v3857, 2147483648
    %v3860 = vmul.f32 %v3859, 1.442695
    %v3861 = vpow.pop %v3860
    %v3862 = vadd.f32 %v3861, 1.0
    %v3863 = vrcp.pop %v3862
    %v3864 = vmul.f32 %v3862, %v3863
    %v3865 = vsub.f32 1.0, %v3864
    %v3866 = vmul.f32 %v3863, %v3865
    %v3867 = vadd.f32 %v3863, %v3866
    %vm3868 = vweird.f32 %v3862
    %vm3869 = vweird.f32 %v3863
    %vm3870 = vmor %vm3868, %vm3869
    %v3871 = vsel %vm3870, %v3863, %v3867
    %v3872 = vand.u32 2147483647, %v3862
    %vm3873 = vcmp.eq.f32.partialorder %v3872, 8.507059e+37
    %v3874 = vand.u32 %v3862, 2147483648
    %v3875 = vor.u32 1.1754944e-38, %v3874
    %v3876 = vsel %vm3873, %v3875, %v3871
    %v3877 = vmul.f32 1.0, %v3876
    %v3878 = vrot.slane %v3836, 4
    %v3880 = vtanh.pop %v3878
    %v3881 = vrot.slane %v3836, 6
    %v3883 = vxor.u32 %v3881, 2147483648
    %v3884 = vmul.f32 %v3883, 1.442695
    %v3885 = vpow.pop %v3884
    %v3886 = vadd.f32 %v3885, 1.0
    %v3887 = vrcp.pop %v3886
    %v3888 = vmul.f32 %v3886, %v3887
    %v3889 = vsub.f32 1.0, %v3888
    %v3890 = vmul.f32 %v3887, %v3889
    %v3891 = vadd.f32 %v3887, %v3890
    %vm3892 = vweird.f32 %v3886
    %vm3893 = vweird.f32 %v3887
    %vm3894 = vmor %vm3892, %vm3893
    %v3895 = vsel %vm3894, %v3887, %v3891
    %v3896 = vand.u32 2147483647, %v3886
    %vm3897 = vcmp.eq.f32.partialorder %v3896, 8.507059e+37
    %v3898 = vand.u32 %v3886, 2147483648
    %v3899 = vor.u32 1.1754944e-38, %v3898
    %v3900 = vsel %vm3897, %v3899, %v3895
    %v3901 = vmul.f32 1.0, %v3900
    %v3902 = vmul.f32 %v3877, %v3675
    %v3903 = vmul.f32 %v3855, %v3880
    %v3904 = vadd.f32 %v3902, %v3903
    %v3905 = vtanh.pop %v3904
    %v3906 = vmul.f32 %v3901, %v3905
    %3907 = vst [vmem:[#allocation3 + $0xc] sm:$0x3] %v3906
    %3908 = vst [vmem:[#allocation4 + $0x10] sm:$0x3] %v3906
    %v3909 = vld [vmem:[#allocation2 + $0x38] sm:$0xff]
    %v3910 = vld [vmem:[%s7] sm:$0xff]
    %v3911 = vld [vmem:[%s7 + $0x8] sm:$0xff]
    %v3912 = vld [vmem:[%s7 + $0x10] sm:$0xff]
    %v3913 = vld [vmem:[%s7 + $0x18] sm:$0xff]
    %v3914 = vld [vmem:[%s7 + $0x20] sm:$0xff]
    %v3915 = vld [vmem:[%s7 + $0x28] sm:$0xff]
    %v3916 = vld [vmem:[%s7 + $0x30] sm:$0xff]
    %v3917 = vld [vmem:[%s7 + $0x38] sm:$0xff]
    %v3918 = vld [vmem:[%s7 + $0x40] sm:$0xff]
    %v3919 = vld [vmem:[%s7 + $0x48] sm:$0xff]
    %v3920 = vld [vmem:[%s7 + $0x50] sm:$0xff]
    %v3921 = vld [vmem:[%s7 + $0x58] sm:$0xff]
    %v3922 = vld [vmem:[%s7 + $0x60] sm:$0xff]
    %v3923 = vld [vmem:[%s7 + $0x68] sm:$0xff]
    %v3924 = vld [vmem:[%s7 + $0x70] sm:$0xff]
    %v3925 = vld [vmem:[%s7 + $0x78] sm:$0xff]
    %v3926 = vld [vmem:[%s7 + $0x80] sm:$0xff]
    %v3927 = vld [vmem:[%s7 + $0x88] sm:$0xff]
    %v3928 = vld [vmem:[%s7 + $0x90] sm:$0xff]
    %v3929 = vld [vmem:[%s7 + $0x98] sm:$0xff]
    %v3930 = vld [vmem:[%s7 + $0xa0] sm:$0xff]
    %v3931 = vld [vmem:[%s7 + $0xa8] sm:$0xff]
    %v3932 = vld [vmem:[%s7 + $0xb0] sm:$0xff]
    %v3933 = vld [vmem:[%s7 + $0xb8] sm:$0xff]
    %v3934 = vld [vmem:[%s7 + $0xc0] sm:$0xff]
    %v3935 = vld [vmem:[%s7 + $0xc8] sm:$0xff]
    %v3936 = vld [vmem:[%s7 + $0xd0] sm:$0xff]
    %v3937 = vld [vmem:[%s7 + $0xd8] sm:$0xff]
    %v3938 = vld [vmem:[%s7 + $0xe0] sm:$0xff]
    %v3939 = vld [vmem:[%s7 + $0xe8] sm:$0xff]
    %v3940 = vld [vmem:[%s7 + $0xf0] sm:$0xff]
    %v3941 = vld [vmem:[%s7 + $0xf8] sm:$0xff]
    %v3942 = vld [vmem:[%s7 + $0x100] sm:$0xff]
    %v3943 = vld [vmem:[%s7 + $0x108] sm:$0xff]
    %v3944 = vld [vmem:[%s7 + $0x110] sm:$0xff]
    %v3945 = vld [vmem:[%s7 + $0x118] sm:$0xff]
    %v3946 = vld [vmem:[%s7 + $0x120] sm:$0xff]
    %v3947 = vld [vmem:[%s7 + $0x128] sm:$0xff]
    %v3948 = vld [vmem:[%s7 + $0x130] sm:$0xff]
    %v3949 = vld [vmem:[%s7 + $0x138] sm:$0xff]
    %v3950 = vld [vmem:[%s7 + $0x140] sm:$0xff]
    %v3951 = vld [vmem:[%s7 + $0x148] sm:$0xff]
    %v3952 = vld [vmem:[%s7 + $0x150] sm:$0xff]
    %v3953 = vld [vmem:[%s7 + $0x158] sm:$0xff]
    %v3954 = vld [vmem:[%s7 + $0x160] sm:$0xff]
    %v3955 = vld [vmem:[%s7 + $0x168] sm:$0xff]
    %v3956 = vld [vmem:[%s7 + $0x170] sm:$0xff]
    %v3957 = vld [vmem:[%s7 + $0x178] sm:$0xff]
    %v3958 = vld [vmem:[%s7 + $0x180] sm:$0xff]
    %v3959 = vld [vmem:[%s7 + $0x188] sm:$0xff]
    %v3960 = vld [vmem:[%s7 + $0x190] sm:$0xff]
    %v3961 = vld [vmem:[%s7 + $0x198] sm:$0xff]
    %v3962 = vld [vmem:[%s7 + $0x1a0] sm:$0xff]
    %v3963 = vld [vmem:[%s7 + $0x1a8] sm:$0xff]
    %v3964 = vld [vmem:[%s7 + $0x1b0] sm:$0xff]
    %v3965 = vld [vmem:[%s7 + $0x1b8] sm:$0xff]
    %v3966 = vld [vmem:[%s7 + $0x1c0] sm:$0xff]
    %v3967 = vld [vmem:[%s7 + $0x1c8] sm:$0xff]
    %v3968 = vld [vmem:[%s7 + $0x1d0] sm:$0xff]
    %v3969 = vld [vmem:[%s7 + $0x1d8] sm:$0xff]
    %v3970 = vld [vmem:[%s7 + $0x1e0] sm:$0xff]
    %v3971 = vld [vmem:[%s7 + $0x1e8] sm:$0xff]
    %v3972 = vld [vmem:[%s7 + $0x1f0] sm:$0xff]
    %v3973 = vld [vmem:[%s7 + $0x1f8] sm:$0xff]
    %3974 = vmatpush.msra.mxu0 %v3970
    %3975 = vmatpush.msra.mxu0 %v3966
    %3976 = vmatpush.msra.mxu0 %v3962
    %3977 = vmatpush.msra.mxu0 %v3958
    %3978 = vmatpush.msra.mxu0 %v3954
    %3979 = vmatpush.msra.mxu0 %v3950
    %3980 = vmatpush.msra.mxu0 %v3946
    %3981 = vmatpush.msra.mxu0 %v3942
    %3982 = vmatpush.msra.mxu0 %v3938
    %3983 = vmatpush.msra.mxu0 %v3934
    %3984 = vmatpush.msra.mxu0 %v3930
    %3985 = vmatpush.msra.mxu0 %v3926
    %3986 = vmatpush.msra.mxu0 %v3922
    %3987 = vmatpush.msra.mxu0 %v3918
    %3988 = vmatpush.msra.mxu0 %v3914
    %3989 = vmatpush.msra.mxu0 %v3910
    %3990 = vmatmul.f32.gmra.mxu0 %v3906
    %v3991 = vpop.f32.mrf.mxu0
    %v3992 = vadd.f32 0.0, %v3991
    %3993 = vdwg.mxu0
    %3994 = vmatpush.msra.mxu0 %v3971
    %3995 = vmatpush.msra.mxu0 %v3967
    %3996 = vmatpush.msra.mxu0 %v3963
    %3997 = vmatpush.msra.mxu0 %v3959
    %3998 = vmatpush.msra.mxu0 %v3955
    %3999 = vmatpush.msra.mxu0 %v3951
    %4000 = vmatpush.msra.mxu0 %v3947
    %4001 = vmatpush.msra.mxu0 %v3943
    %4002 = vmatpush.msra.mxu0 %v3939
    %4003 = vmatpush.msra.mxu0 %v3935
    %4004 = vmatpush.msra.mxu0 %v3931
    %4005 = vmatpush.msra.mxu0 %v3927
    %4006 = vmatpush.msra.mxu0 %v3923
    %4007 = vmatpush.msra.mxu0 %v3919
    %4008 = vmatpush.msra.mxu0 %v3915
    %4009 = vmatpush.msra.mxu0 %v3911
    %4010 = vmatmul.f32.gmra.mxu0 %v3906
    %v4011 = vpop.f32.mrf.mxu0
    %v4012 = vadd.f32 0.0, %v4011
    %4013 = vdwg.mxu0
    %4014 = vmatpush.msra.mxu0 %v3972
    %4015 = vmatpush.msra.mxu0 %v3968
    %4016 = vmatpush.msra.mxu0 %v3964
    %4017 = vmatpush.msra.mxu0 %v3960
    %4018 = vmatpush.msra.mxu0 %v3956
    %4019 = vmatpush.msra.mxu0 %v3952
    %4020 = vmatpush.msra.mxu0 %v3948
    %4021 = vmatpush.msra.mxu0 %v3944
    %4022 = vmatpush.msra.mxu0 %v3940
    %4023 = vmatpush.msra.mxu0 %v3936
    %4024 = vmatpush.msra.mxu0 %v3932
    %4025 = vmatpush.msra.mxu0 %v3928
    %4026 = vmatpush.msra.mxu0 %v3924
    %4027 = vmatpush.msra.mxu0 %v3920
    %4028 = vmatpush.msra.mxu0 %v3916
    %4029 = vmatpush.msra.mxu0 %v3912
    %4030 = vmatmul.f32.gmra.mxu0 %v3906
    %v4031 = vpop.f32.mrf.mxu0
    %v4032 = vadd.f32 0.0, %v4031
    %4033 = vdwg.mxu0
    %4034 = vmatpush.msra.mxu0 %v3973
    %4035 = vmatpush.msra.mxu0 %v3969
    %4036 = vmatpush.msra.mxu0 %v3965
    %4037 = vmatpush.msra.mxu0 %v3961
    %4038 = vmatpush.msra.mxu0 %v3957
    %4039 = vmatpush.msra.mxu0 %v3953
    %4040 = vmatpush.msra.mxu0 %v3949
    %4041 = vmatpush.msra.mxu0 %v3945
    %4042 = vmatpush.msra.mxu0 %v3941
    %4043 = vmatpush.msra.mxu0 %v3937
    %4044 = vmatpush.msra.mxu0 %v3933
    %4045 = vmatpush.msra.mxu0 %v3929
    %4046 = vmatpush.msra.mxu0 %v3925
    %4047 = vmatpush.msra.mxu0 %v3921
    %4048 = vmatpush.msra.mxu0 %v3917
    %4049 = vmatpush.msra.mxu0 %v3913
    %4050 = vmatmul.f32.gmra.mxu0 %v3906
    %v4051 = vpop.f32.mrf.mxu0
    %v4052 = vadd.f32 0.0, %v4051
    %4053 = vdwg.mxu0
    %v4058 = vrot.slane %v4012, 6
    %v4059 = vrot.slane %v4032, 4
    %v4060 = vrot.slane %v4052, 2
    %v4061 = vsel %vm590, %v3992, %v4058
    %v4062 = vsel %vm592, %v4059, %v4060
    %v4063 = vsel %vm594, %v4061, %v4062
    %v4065 = vadd.f32 %v3909, %v4063
    %v4066 = vxor.u32 %v4065, 2147483648
    %v4067 = vmul.f32 %v4066, 1.442695
    %v4068 = vpow.pop %v4067
    %v4069 = vadd.f32 %v4068, 1.0
    %v4070 = vrcp.pop %v4069
    %v4071 = vmul.f32 %v4069, %v4070
    %v4072 = vsub.f32 1.0, %v4071
    %v4073 = vmul.f32 %v4070, %v4072
    %v4074 = vadd.f32 %v4070, %v4073
    %vm4075 = vweird.f32 %v4069
    %vm4076 = vweird.f32 %v4070
    %vm4077 = vmor %vm4075, %vm4076
    %v4078 = vsel %vm4077, %v4070, %v4074
    %v4079 = vand.u32 2147483647, %v4069
    %vm4080 = vcmp.eq.f32.partialorder %v4079, 8.507059e+37
    %v4081 = vand.u32 %v4069, 2147483648
    %v4082 = vor.u32 1.1754944e-38, %v4081
    %v4083 = vsel %vm4080, %v4082, %v4078
    %v4084 = vmul.f32 1.0, %v4083
    %v4086 = vrot.slane %v4065, 2
    %v4088 = vxor.u32 %v4086, 2147483648
    %v4089 = vmul.f32 %v4088, 1.442695
    %v4090 = vpow.pop %v4089
    %v4091 = vadd.f32 %v4090, 1.0
    %v4092 = vrcp.pop %v4091
    %v4093 = vmul.f32 %v4091, %v4092
    %v4094 = vsub.f32 1.0, %v4093
    %v4095 = vmul.f32 %v4092, %v4094
    %v4096 = vadd.f32 %v4092, %v4095
    %vm4097 = vweird.f32 %v4091
    %vm4098 = vweird.f32 %v4092
    %vm4099 = vmor %vm4097, %vm4098
    %v4100 = vsel %vm4099, %v4092, %v4096
    %v4101 = vand.u32 2147483647, %v4091
    %vm4102 = vcmp.eq.f32.partialorder %v4101, 8.507059e+37
    %v4103 = vand.u32 %v4091, 2147483648
    %v4104 = vor.u32 1.1754944e-38, %v4103
    %v4105 = vsel %vm4102, %v4104, %v4100
    %v4106 = vmul.f32 1.0, %v4105
    %v4107 = vrot.slane %v4065, 4
    %v4109 = vtanh.pop %v4107
    %v4110 = vrot.slane %v4065, 6
    %v4112 = vxor.u32 %v4110, 2147483648
    %v4113 = vmul.f32 %v4112, 1.442695
    %v4114 = vpow.pop %v4113
    %v4115 = vadd.f32 %v4114, 1.0
    %v4116 = vrcp.pop %v4115
    %v4117 = vmul.f32 %v4115, %v4116
    %v4118 = vsub.f32 1.0, %v4117
    %v4119 = vmul.f32 %v4116, %v4118
    %v4120 = vadd.f32 %v4116, %v4119
    %vm4121 = vweird.f32 %v4115
    %vm4122 = vweird.f32 %v4116
    %vm4123 = vmor %vm4121, %vm4122
    %v4124 = vsel %vm4123, %v4116, %v4120
    %v4125 = vand.u32 2147483647, %v4115
    %vm4126 = vcmp.eq.f32.partialorder %v4125, 8.507059e+37
    %v4127 = vand.u32 %v4115, 2147483648
    %v4128 = vor.u32 1.1754944e-38, %v4127
    %v4129 = vsel %vm4126, %v4128, %v4124
    %v4130 = vmul.f32 1.0, %v4129
    %v4131 = vmul.f32 %v4106, %v3904
    %v4132 = vmul.f32 %v4084, %v4109
    %v4133 = vadd.f32 %v4131, %v4132
    %v4134 = vtanh.pop %v4133
    %v4135 = vmul.f32 %v4130, %v4134
    %4136 = vst [vmem:[#allocation3 + $0xe] sm:$0x3] %v4135
    %4137 = vst [vmem:[#allocation4 + $0xe] sm:$0x3] %v4135
    %v4138 = vld [vmem:[#allocation2 + $0x40] sm:$0xff]
    %v4139 = vld [vmem:[%s7] sm:$0xff]
    %v4140 = vld [vmem:[%s7 + $0x8] sm:$0xff]
    %v4141 = vld [vmem:[%s7 + $0x10] sm:$0xff]
    %v4142 = vld [vmem:[%s7 + $0x18] sm:$0xff]
    %v4143 = vld [vmem:[%s7 + $0x20] sm:$0xff]
    %v4144 = vld [vmem:[%s7 + $0x28] sm:$0xff]
    %v4145 = vld [vmem:[%s7 + $0x30] sm:$0xff]
    %v4146 = vld [vmem:[%s7 + $0x38] sm:$0xff]
    %v4147 = vld [vmem:[%s7 + $0x40] sm:$0xff]
    %v4148 = vld [vmem:[%s7 + $0x48] sm:$0xff]
    %v4149 = vld [vmem:[%s7 + $0x50] sm:$0xff]
    %v4150 = vld [vmem:[%s7 + $0x58] sm:$0xff]
    %v4151 = vld [vmem:[%s7 + $0x60] sm:$0xff]
    %v4152 = vld [vmem:[%s7 + $0x68] sm:$0xff]
    %v4153 = vld [vmem:[%s7 + $0x70] sm:$0xff]
    %v4154 = vld [vmem:[%s7 + $0x78] sm:$0xff]
    %v4155 = vld [vmem:[%s7 + $0x80] sm:$0xff]
    %v4156 = vld [vmem:[%s7 + $0x88] sm:$0xff]
    %v4157 = vld [vmem:[%s7 + $0x90] sm:$0xff]
    %v4158 = vld [vmem:[%s7 + $0x98] sm:$0xff]
    %v4159 = vld [vmem:[%s7 + $0xa0] sm:$0xff]
    %v4160 = vld [vmem:[%s7 + $0xa8] sm:$0xff]
    %v4161 = vld [vmem:[%s7 + $0xb0] sm:$0xff]
    %v4162 = vld [vmem:[%s7 + $0xb8] sm:$0xff]
    %v4163 = vld [vmem:[%s7 + $0xc0] sm:$0xff]
    %v4164 = vld [vmem:[%s7 + $0xc8] sm:$0xff]
    %v4165 = vld [vmem:[%s7 + $0xd0] sm:$0xff]
    %v4166 = vld [vmem:[%s7 + $0xd8] sm:$0xff]
    %v4167 = vld [vmem:[%s7 + $0xe0] sm:$0xff]
    %v4168 = vld [vmem:[%s7 + $0xe8] sm:$0xff]
    %v4169 = vld [vmem:[%s7 + $0xf0] sm:$0xff]
    %v4170 = vld [vmem:[%s7 + $0xf8] sm:$0xff]
    %v4171 = vld [vmem:[%s7 + $0x100] sm:$0xff]
    %v4172 = vld [vmem:[%s7 + $0x108] sm:$0xff]
    %v4173 = vld [vmem:[%s7 + $0x110] sm:$0xff]
    %v4174 = vld [vmem:[%s7 + $0x118] sm:$0xff]
    %v4175 = vld [vmem:[%s7 + $0x120] sm:$0xff]
    %v4176 = vld [vmem:[%s7 + $0x128] sm:$0xff]
    %v4177 = vld [vmem:[%s7 + $0x130] sm:$0xff]
    %v4178 = vld [vmem:[%s7 + $0x138] sm:$0xff]
    %v4179 = vld [vmem:[%s7 + $0x140] sm:$0xff]
    %v4180 = vld [vmem:[%s7 + $0x148] sm:$0xff]
    %v4181 = vld [vmem:[%s7 + $0x150] sm:$0xff]
    %v4182 = vld [vmem:[%s7 + $0x158] sm:$0xff]
    %v4183 = vld [vmem:[%s7 + $0x160] sm:$0xff]
    %v4184 = vld [vmem:[%s7 + $0x168] sm:$0xff]
    %v4185 = vld [vmem:[%s7 + $0x170] sm:$0xff]
    %v4186 = vld [vmem:[%s7 + $0x178] sm:$0xff]
    %v4187 = vld [vmem:[%s7 + $0x180] sm:$0xff]
    %v4188 = vld [vmem:[%s7 + $0x188] sm:$0xff]
    %v4189 = vld [vmem:[%s7 + $0x190] sm:$0xff]
    %v4190 = vld [vmem:[%s7 + $0x198] sm:$0xff]
    %v4191 = vld [vmem:[%s7 + $0x1a0] sm:$0xff]
    %v4192 = vld [vmem:[%s7 + $0x1a8] sm:$0xff]
    %v4193 = vld [vmem:[%s7 + $0x1b0] sm:$0xff]
    %v4194 = vld [vmem:[%s7 + $0x1b8] sm:$0xff]
    %v4195 = vld [vmem:[%s7 + $0x1c0] sm:$0xff]
    %v4196 = vld [vmem:[%s7 + $0x1c8] sm:$0xff]
    %v4197 = vld [vmem:[%s7 + $0x1d0] sm:$0xff]
    %v4198 = vld [vmem:[%s7 + $0x1d8] sm:$0xff]
    %v4199 = vld [vmem:[%s7 + $0x1e0] sm:$0xff]
    %v4200 = vld [vmem:[%s7 + $0x1e8] sm:$0xff]
    %v4201 = vld [vmem:[%s7 + $0x1f0] sm:$0xff]
    %v4202 = vld [vmem:[%s7 + $0x1f8] sm:$0xff]
    %4203 = vmatpush.msra.mxu0 %v4199
    %4204 = vmatpush.msra.mxu0 %v4195
    %4205 = vmatpush.msra.mxu0 %v4191
    %4206 = vmatpush.msra.mxu0 %v4187
    %4207 = vmatpush.msra.mxu0 %v4183
    %4208 = vmatpush.msra.mxu0 %v4179
    %4209 = vmatpush.msra.mxu0 %v4175
    %4210 = vmatpush.msra.mxu0 %v4171
    %4211 = vmatpush.msra.mxu0 %v4167
    %4212 = vmatpush.msra.mxu0 %v4163
    %4213 = vmatpush.msra.mxu0 %v4159
    %4214 = vmatpush.msra.mxu0 %v4155
    %4215 = vmatpush.msra.mxu0 %v4151
    %4216 = vmatpush.msra.mxu0 %v4147
    %4217 = vmatpush.msra.mxu0 %v4143
    %4218 = vmatpush.msra.mxu0 %v4139
    %4219 = vmatmul.f32.gmra.mxu0 %v4135
    %v4220 = vpop.f32.mrf.mxu0
    %v4221 = vadd.f32 0.0, %v4220
    %4222 = vdwg.mxu0
    %4223 = vmatpush.msra.mxu0 %v4200
    %4224 = vmatpush.msra.mxu0 %v4196
    %4225 = vmatpush.msra.mxu0 %v4192
    %4226 = vmatpush.msra.mxu0 %v4188
    %4227 = vmatpush.msra.mxu0 %v4184
    %4228 = vmatpush.msra.mxu0 %v4180
    %4229 = vmatpush.msra.mxu0 %v4176
    %4230 = vmatpush.msra.mxu0 %v4172
    %4231 = vmatpush.msra.mxu0 %v4168
    %4232 = vmatpush.msra.mxu0 %v4164
    %4233 = vmatpush.msra.mxu0 %v4160
    %4234 = vmatpush.msra.mxu0 %v4156
    %4235 = vmatpush.msra.mxu0 %v4152
    %4236 = vmatpush.msra.mxu0 %v4148
    %4237 = vmatpush.msra.mxu0 %v4144
    %4238 = vmatpush.msra.mxu0 %v4140
    %4239 = vmatmul.f32.gmra.mxu0 %v4135
    %v4240 = vpop.f32.mrf.mxu0
    %v4241 = vadd.f32 0.0, %v4240
    %4242 = vdwg.mxu0
    %4243 = vmatpush.msra.mxu0 %v4201
    %4244 = vmatpush.msra.mxu0 %v4197
    %4245 = vmatpush.msra.mxu0 %v4193
    %4246 = vmatpush.msra.mxu0 %v4189
    %4247 = vmatpush.msra.mxu0 %v4185
    %4248 = vmatpush.msra.mxu0 %v4181
    %4249 = vmatpush.msra.mxu0 %v4177
    %4250 = vmatpush.msra.mxu0 %v4173
    %4251 = vmatpush.msra.mxu0 %v4169
    %4252 = vmatpush.msra.mxu0 %v4165
    %4253 = vmatpush.msra.mxu0 %v4161
    %4254 = vmatpush.msra.mxu0 %v4157
    %4255 = vmatpush.msra.mxu0 %v4153
    %4256 = vmatpush.msra.mxu0 %v4149
    %4257 = vmatpush.msra.mxu0 %v4145
    %4258 = vmatpush.msra.mxu0 %v4141
    %4259 = vmatmul.f32.gmra.mxu0 %v4135
    %v4260 = vpop.f32.mrf.mxu0
    %v4261 = vadd.f32 0.0, %v4260
    %4262 = vdwg.mxu0
    %4263 = vmatpush.msra.mxu0 %v4202
    %4264 = vmatpush.msra.mxu0 %v4198
    %4265 = vmatpush.msra.mxu0 %v4194
    %4266 = vmatpush.msra.mxu0 %v4190
    %4267 = vmatpush.msra.mxu0 %v4186
    %4268 = vmatpush.msra.mxu0 %v4182
    %4269 = vmatpush.msra.mxu0 %v4178
    %4270 = vmatpush.msra.mxu0 %v4174
    %4271 = vmatpush.msra.mxu0 %v4170
    %4272 = vmatpush.msra.mxu0 %v4166
    %4273 = vmatpush.msra.mxu0 %v4162
    %4274 = vmatpush.msra.mxu0 %v4158
    %4275 = vmatpush.msra.mxu0 %v4154
    %4276 = vmatpush.msra.mxu0 %v4150
    %4277 = vmatpush.msra.mxu0 %v4146
    %4278 = vmatpush.msra.mxu0 %v4142
    %4279 = vmatmul.f32.gmra.mxu0 %v4135
    %v4280 = vpop.f32.mrf.mxu0
    %v4281 = vadd.f32 0.0, %v4280
    %4282 = vdwg.mxu0
    %v4287 = vrot.slane %v4241, 6
    %v4288 = vrot.slane %v4261, 4
    %v4289 = vrot.slane %v4281, 2
    %v4290 = vsel %vm590, %v4221, %v4287
    %v4291 = vsel %vm592, %v4288, %v4289
    %v4292 = vsel %vm594, %v4290, %v4291
    %v4294 = vadd.f32 %v4138, %v4292
    %v4295 = vxor.u32 %v4294, 2147483648
    %v4296 = vmul.f32 %v4295, 1.442695
    %v4297 = vpow.pop %v4296
    %v4298 = vadd.f32 %v4297, 1.0
    %v4299 = vrcp.pop %v4298
    %v4300 = vmul.f32 %v4298, %v4299
    %v4301 = vsub.f32 1.0, %v4300
    %v4302 = vmul.f32 %v4299, %v4301
    %v4303 = vadd.f32 %v4299, %v4302
    %vm4304 = vweird.f32 %v4298
    %vm4305 = vweird.f32 %v4299
    %vm4306 = vmor %vm4304, %vm4305
    %v4307 = vsel %vm4306, %v4299, %v4303
    %v4308 = vand.u32 2147483647, %v4298
    %vm4309 = vcmp.eq.f32.partialorder %v4308, 8.507059e+37
    %v4310 = vand.u32 %v4298, 2147483648
    %v4311 = vor.u32 1.1754944e-38, %v4310
    %v4312 = vsel %vm4309, %v4311, %v4307
    %v4313 = vmul.f32 1.0, %v4312
    %v4315 = vrot.slane %v4294, 2
    %v4317 = vxor.u32 %v4315, 2147483648
    %v4318 = vmul.f32 %v4317, 1.442695
    %v4319 = vpow.pop %v4318
    %v4320 = vadd.f32 %v4319, 1.0
    %v4321 = vrcp.pop %v4320
    %v4322 = vmul.f32 %v4320, %v4321
    %v4323 = vsub.f32 1.0, %v4322
    %v4324 = vmul.f32 %v4321, %v4323
    %v4325 = vadd.f32 %v4321, %v4324
    %vm4326 = vweird.f32 %v4320
    %vm4327 = vweird.f32 %v4321
    %vm4328 = vmor %vm4326, %vm4327
    %v4329 = vsel %vm4328, %v4321, %v4325
    %v4330 = vand.u32 2147483647, %v4320
    %vm4331 = vcmp.eq.f32.partialorder %v4330, 8.507059e+37
    %v4332 = vand.u32 %v4320, 2147483648
    %v4333 = vor.u32 1.1754944e-38, %v4332
    %v4334 = vsel %vm4331, %v4333, %v4329
    %v4335 = vmul.f32 1.0, %v4334
    %v4336 = vrot.slane %v4294, 4
    %v4338 = vtanh.pop %v4336
    %v4339 = vrot.slane %v4294, 6
    %v4341 = vxor.u32 %v4339, 2147483648
    %v4342 = vmul.f32 %v4341, 1.442695
    %v4343 = vpow.pop %v4342
    %v4344 = vadd.f32 %v4343, 1.0
    %v4345 = vrcp.pop %v4344
    %v4346 = vmul.f32 %v4344, %v4345
    %v4347 = vsub.f32 1.0, %v4346
    %v4348 = vmul.f32 %v4345, %v4347
    %v4349 = vadd.f32 %v4345, %v4348
    %vm4350 = vweird.f32 %v4344
    %vm4351 = vweird.f32 %v4345
    %vm4352 = vmor %vm4350, %vm4351
    %v4353 = vsel %vm4352, %v4345, %v4349
    %v4354 = vand.u32 2147483647, %v4344
    %vm4355 = vcmp.eq.f32.partialorder %v4354, 8.507059e+37
    %v4356 = vand.u32 %v4344, 2147483648
    %v4357 = vor.u32 1.1754944e-38, %v4356
    %v4358 = vsel %vm4355, %v4357, %v4353
    %v4359 = vmul.f32 1.0, %v4358
    %v4360 = vmul.f32 %v4335, %v4133
    %v4361 = vmul.f32 %v4313, %v4338
    %v4362 = vadd.f32 %v4360, %v4361
    %v4363 = vtanh.pop %v4362
    %v4364 = vmul.f32 %v4359, %v4363
    %4365 = vst [vmem:[#allocation3 + $0x10] sm:$0x3] %v4364
    %4366 = vst [vmem:[#allocation4 + $0xc] sm:$0x3] %v4364
    %v4367 = vld [vmem:[#allocation2 + $0x48] sm:$0xff]
    %v4368 = vld [vmem:[%s7] sm:$0xff]
    %v4369 = vld [vmem:[%s7 + $0x8] sm:$0xff]
    %v4370 = vld [vmem:[%s7 + $0x10] sm:$0xff]
    %v4371 = vld [vmem:[%s7 + $0x18] sm:$0xff]
    %v4372 = vld [vmem:[%s7 + $0x20] sm:$0xff]
    %v4373 = vld [vmem:[%s7 + $0x28] sm:$0xff]
    %v4374 = vld [vmem:[%s7 + $0x30] sm:$0xff]
    %v4375 = vld [vmem:[%s7 + $0x38] sm:$0xff]
    %v4376 = vld [vmem:[%s7 + $0x40] sm:$0xff]
    %v4377 = vld [vmem:[%s7 + $0x48] sm:$0xff]
    %v4378 = vld [vmem:[%s7 + $0x50] sm:$0xff]
    %v4379 = vld [vmem:[%s7 + $0x58] sm:$0xff]
    %v4380 = vld [vmem:[%s7 + $0x60] sm:$0xff]
    %v4381 = vld [vmem:[%s7 + $0x68] sm:$0xff]
    %v4382 = vld [vmem:[%s7 + $0x70] sm:$0xff]
    %v4383 = vld [vmem:[%s7 + $0x78] sm:$0xff]
    %v4384 = vld [vmem:[%s7 + $0x80] sm:$0xff]
    %v4385 = vld [vmem:[%s7 + $0x88] sm:$0xff]
    %v4386 = vld [vmem:[%s7 + $0x90] sm:$0xff]
    %v4387 = vld [vmem:[%s7 + $0x98] sm:$0xff]
    %v4388 = vld [vmem:[%s7 + $0xa0] sm:$0xff]
    %v4389 = vld [vmem:[%s7 + $0xa8] sm:$0xff]
    %v4390 = vld [vmem:[%s7 + $0xb0] sm:$0xff]
    %v4391 = vld [vmem:[%s7 + $0xb8] sm:$0xff]
    %v4392 = vld [vmem:[%s7 + $0xc0] sm:$0xff]
    %v4393 = vld [vmem:[%s7 + $0xc8] sm:$0xff]
    %v4394 = vld [vmem:[%s7 + $0xd0] sm:$0xff]
    %v4395 = vld [vmem:[%s7 + $0xd8] sm:$0xff]
    %v4396 = vld [vmem:[%s7 + $0xe0] sm:$0xff]
    %v4397 = vld [vmem:[%s7 + $0xe8] sm:$0xff]
    %v4398 = vld [vmem:[%s7 + $0xf0] sm:$0xff]
    %v4399 = vld [vmem:[%s7 + $0xf8] sm:$0xff]
    %v4400 = vld [vmem:[%s7 + $0x100] sm:$0xff]
    %v4401 = vld [vmem:[%s7 + $0x108] sm:$0xff]
    %v4402 = vld [vmem:[%s7 + $0x110] sm:$0xff]
    %v4403 = vld [vmem:[%s7 + $0x118] sm:$0xff]
    %v4404 = vld [vmem:[%s7 + $0x120] sm:$0xff]
    %v4405 = vld [vmem:[%s7 + $0x128] sm:$0xff]
    %v4406 = vld [vmem:[%s7 + $0x130] sm:$0xff]
    %v4407 = vld [vmem:[%s7 + $0x138] sm:$0xff]
    %v4408 = vld [vmem:[%s7 + $0x140] sm:$0xff]
    %v4409 = vld [vmem:[%s7 + $0x148] sm:$0xff]
    %v4410 = vld [vmem:[%s7 + $0x150] sm:$0xff]
    %v4411 = vld [vmem:[%s7 + $0x158] sm:$0xff]
    %v4412 = vld [vmem:[%s7 + $0x160] sm:$0xff]
    %v4413 = vld [vmem:[%s7 + $0x168] sm:$0xff]
    %v4414 = vld [vmem:[%s7 + $0x170] sm:$0xff]
    %v4415 = vld [vmem:[%s7 + $0x178] sm:$0xff]
    %v4416 = vld [vmem:[%s7 + $0x180] sm:$0xff]
    %v4417 = vld [vmem:[%s7 + $0x188] sm:$0xff]
    %v4418 = vld [vmem:[%s7 + $0x190] sm:$0xff]
    %v4419 = vld [vmem:[%s7 + $0x198] sm:$0xff]
    %v4420 = vld [vmem:[%s7 + $0x1a0] sm:$0xff]
    %v4421 = vld [vmem:[%s7 + $0x1a8] sm:$0xff]
    %v4422 = vld [vmem:[%s7 + $0x1b0] sm:$0xff]
    %v4423 = vld [vmem:[%s7 + $0x1b8] sm:$0xff]
    %v4424 = vld [vmem:[%s7 + $0x1c0] sm:$0xff]
    %v4425 = vld [vmem:[%s7 + $0x1c8] sm:$0xff]
    %v4426 = vld [vmem:[%s7 + $0x1d0] sm:$0xff]
    %v4427 = vld [vmem:[%s7 + $0x1d8] sm:$0xff]
    %v4428 = vld [vmem:[%s7 + $0x1e0] sm:$0xff]
    %v4429 = vld [vmem:[%s7 + $0x1e8] sm:$0xff]
    %v4430 = vld [vmem:[%s7 + $0x1f0] sm:$0xff]
    %v4431 = vld [vmem:[%s7 + $0x1f8] sm:$0xff]
    %4432 = vmatpush.msra.mxu0 %v4428
    %4433 = vmatpush.msra.mxu0 %v4424
    %4434 = vmatpush.msra.mxu0 %v4420
    %4435 = vmatpush.msra.mxu0 %v4416
    %4436 = vmatpush.msra.mxu0 %v4412
    %4437 = vmatpush.msra.mxu0 %v4408
    %4438 = vmatpush.msra.mxu0 %v4404
    %4439 = vmatpush.msra.mxu0 %v4400
    %4440 = vmatpush.msra.mxu0 %v4396
    %4441 = vmatpush.msra.mxu0 %v4392
    %4442 = vmatpush.msra.mxu0 %v4388
    %4443 = vmatpush.msra.mxu0 %v4384
    %4444 = vmatpush.msra.mxu0 %v4380
    %4445 = vmatpush.msra.mxu0 %v4376
    %4446 = vmatpush.msra.mxu0 %v4372
    %4447 = vmatpush.msra.mxu0 %v4368
    %4448 = vmatmul.f32.gmra.mxu0 %v4364
    %v4449 = vpop.f32.mrf.mxu0
    %v4450 = vadd.f32 0.0, %v4449
    %4451 = vdwg.mxu0
    %4452 = vmatpush.msra.mxu0 %v4429
    %4453 = vmatpush.msra.mxu0 %v4425
    %4454 = vmatpush.msra.mxu0 %v4421
    %4455 = vmatpush.msra.mxu0 %v4417
    %4456 = vmatpush.msra.mxu0 %v4413
    %4457 = vmatpush.msra.mxu0 %v4409
    %4458 = vmatpush.msra.mxu0 %v4405
    %4459 = vmatpush.msra.mxu0 %v4401
    %4460 = vmatpush.msra.mxu0 %v4397
    %4461 = vmatpush.msra.mxu0 %v4393
    %4462 = vmatpush.msra.mxu0 %v4389
    %4463 = vmatpush.msra.mxu0 %v4385
    %4464 = vmatpush.msra.mxu0 %v4381
    %4465 = vmatpush.msra.mxu0 %v4377
    %4466 = vmatpush.msra.mxu0 %v4373
    %4467 = vmatpush.msra.mxu0 %v4369
    %4468 = vmatmul.f32.gmra.mxu0 %v4364
    %v4469 = vpop.f32.mrf.mxu0
    %v4470 = vadd.f32 0.0, %v4469
    %4471 = vdwg.mxu0
    %4472 = vmatpush.msra.mxu0 %v4430
    %4473 = vmatpush.msra.mxu0 %v4426
    %4474 = vmatpush.msra.mxu0 %v4422
    %4475 = vmatpush.msra.mxu0 %v4418
    %4476 = vmatpush.msra.mxu0 %v4414
    %4477 = vmatpush.msra.mxu0 %v4410
    %4478 = vmatpush.msra.mxu0 %v4406
    %4479 = vmatpush.msra.mxu0 %v4402
    %4480 = vmatpush.msra.mxu0 %v4398
    %4481 = vmatpush.msra.mxu0 %v4394
    %4482 = vmatpush.msra.mxu0 %v4390
    %4483 = vmatpush.msra.mxu0 %v4386
    %4484 = vmatpush.msra.mxu0 %v4382
    %4485 = vmatpush.msra.mxu0 %v4378
    %4486 = vmatpush.msra.mxu0 %v4374
    %4487 = vmatpush.msra.mxu0 %v4370
    %4488 = vmatmul.f32.gmra.mxu0 %v4364
    %v4489 = vpop.f32.mrf.mxu0
    %v4490 = vadd.f32 0.0, %v4489
    %4491 = vdwg.mxu0
    %4492 = vmatpush.msra.mxu0 %v4431
    %4493 = vmatpush.msra.mxu0 %v4427
    %4494 = vmatpush.msra.mxu0 %v4423
    %4495 = vmatpush.msra.mxu0 %v4419
    %4496 = vmatpush.msra.mxu0 %v4415
    %4497 = vmatpush.msra.mxu0 %v4411
    %4498 = vmatpush.msra.mxu0 %v4407
    %4499 = vmatpush.msra.mxu0 %v4403
    %4500 = vmatpush.msra.mxu0 %v4399
    %4501 = vmatpush.msra.mxu0 %v4395
    %4502 = vmatpush.msra.mxu0 %v4391
    %4503 = vmatpush.msra.mxu0 %v4387
    %4504 = vmatpush.msra.mxu0 %v4383
    %4505 = vmatpush.msra.mxu0 %v4379
    %4506 = vmatpush.msra.mxu0 %v4375
    %4507 = vmatpush.msra.mxu0 %v4371
    %4508 = vmatmul.f32.gmra.mxu0 %v4364
    %v4509 = vpop.f32.mrf.mxu0
    %v4510 = vadd.f32 0.0, %v4509
    %4511 = vdwg.mxu0
    %v4516 = vrot.slane %v4470, 6
    %v4517 = vrot.slane %v4490, 4
    %v4518 = vrot.slane %v4510, 2
    %v4519 = vsel %vm590, %v4450, %v4516
    %v4520 = vsel %vm592, %v4517, %v4518
    %v4521 = vsel %vm594, %v4519, %v4520
    %v4523 = vadd.f32 %v4367, %v4521
    %v4524 = vxor.u32 %v4523, 2147483648
    %v4525 = vmul.f32 %v4524, 1.442695
    %v4526 = vpow.pop %v4525
    %v4527 = vadd.f32 %v4526, 1.0
    %v4528 = vrcp.pop %v4527
    %v4529 = vmul.f32 %v4527, %v4528
    %v4530 = vsub.f32 1.0, %v4529
    %v4531 = vmul.f32 %v4528, %v4530
    %v4532 = vadd.f32 %v4528, %v4531
    %vm4533 = vweird.f32 %v4527
    %vm4534 = vweird.f32 %v4528
    %vm4535 = vmor %vm4533, %vm4534
    %v4536 = vsel %vm4535, %v4528, %v4532
    %v4537 = vand.u32 2147483647, %v4527
    %vm4538 = vcmp.eq.f32.partialorder %v4537, 8.507059e+37
    %v4539 = vand.u32 %v4527, 2147483648
    %v4540 = vor.u32 1.1754944e-38, %v4539
    %v4541 = vsel %vm4538, %v4540, %v4536
    %v4542 = vmul.f32 1.0, %v4541
    %v4544 = vrot.slane %v4523, 2
    %v4546 = vxor.u32 %v4544, 2147483648
    %v4547 = vmul.f32 %v4546, 1.442695
    %v4548 = vpow.pop %v4547
    %v4549 = vadd.f32 %v4548, 1.0
    %v4550 = vrcp.pop %v4549
    %v4551 = vmul.f32 %v4549, %v4550
    %v4552 = vsub.f32 1.0, %v4551
    %v4553 = vmul.f32 %v4550, %v4552
    %v4554 = vadd.f32 %v4550, %v4553
    %vm4555 = vweird.f32 %v4549
    %vm4556 = vweird.f32 %v4550
    %vm4557 = vmor %vm4555, %vm4556
    %v4558 = vsel %vm4557, %v4550, %v4554
    %v4559 = vand.u32 2147483647, %v4549
    %vm4560 = vcmp.eq.f32.partialorder %v4559, 8.507059e+37
    %v4561 = vand.u32 %v4549, 2147483648
    %v4562 = vor.u32 1.1754944e-38, %v4561
    %v4563 = vsel %vm4560, %v4562, %v4558
    %v4564 = vmul.f32 1.0, %v4563
    %v4565 = vrot.slane %v4523, 4
    %v4567 = vtanh.pop %v4565
    %v4568 = vrot.slane %v4523, 6
    %v4570 = vxor.u32 %v4568, 2147483648
    %v4571 = vmul.f32 %v4570, 1.442695
    %v4572 = vpow.pop %v4571
    %v4573 = vadd.f32 %v4572, 1.0
    %v4574 = vrcp.pop %v4573
    %v4575 = vmul.f32 %v4573, %v4574
    %v4576 = vsub.f32 1.0, %v4575
    %v4577 = vmul.f32 %v4574, %v4576
    %v4578 = vadd.f32 %v4574, %v4577
    %vm4579 = vweird.f32 %v4573
    %vm4580 = vweird.f32 %v4574
    %vm4581 = vmor %vm4579, %vm4580
    %v4582 = vsel %vm4581, %v4574, %v4578
    %v4583 = vand.u32 2147483647, %v4573
    %vm4584 = vcmp.eq.f32.partialorder %v4583, 8.507059e+37
    %v4585 = vand.u32 %v4573, 2147483648
    %v4586 = vor.u32 1.1754944e-38, %v4585
    %v4587 = vsel %vm4584, %v4586, %v4582
    %v4588 = vmul.f32 1.0, %v4587
    %v4589 = vmul.f32 %v4564, %v4362
    %v4590 = vmul.f32 %v4542, %v4567
    %v4591 = vadd.f32 %v4589, %v4590
    %v4592 = vtanh.pop %v4591
    %v4593 = vmul.f32 %v4588, %v4592
    %4594 = vst [vmem:[#allocation3 + $0x12] sm:$0x3] %v4593
    %4595 = vst [vmem:[#allocation4 + $0xa] sm:$0x3] %v4593
    %v4596 = vld [vmem:[#allocation2 + $0x50] sm:$0xff]
    %v4597 = vld [vmem:[%s7] sm:$0xff]
    %v4598 = vld [vmem:[%s7 + $0x8] sm:$0xff]
    %v4599 = vld [vmem:[%s7 + $0x10] sm:$0xff]
    %v4600 = vld [vmem:[%s7 + $0x18] sm:$0xff]
    %v4601 = vld [vmem:[%s7 + $0x20] sm:$0xff]
    %v4602 = vld [vmem:[%s7 + $0x28] sm:$0xff]
    %v4603 = vld [vmem:[%s7 + $0x30] sm:$0xff]
    %v4604 = vld [vmem:[%s7 + $0x38] sm:$0xff]
    %v4605 = vld [vmem:[%s7 + $0x40] sm:$0xff]
    %v4606 = vld [vmem:[%s7 + $0x48] sm:$0xff]
    %v4607 = vld [vmem:[%s7 + $0x50] sm:$0xff]
    %v4608 = vld [vmem:[%s7 + $0x58] sm:$0xff]
    %v4609 = vld [vmem:[%s7 + $0x60] sm:$0xff]
    %v4610 = vld [vmem:[%s7 + $0x68] sm:$0xff]
    %v4611 = vld [vmem:[%s7 + $0x70] sm:$0xff]
    %v4612 = vld [vmem:[%s7 + $0x78] sm:$0xff]
    %v4613 = vld [vmem:[%s7 + $0x80] sm:$0xff]
    %v4614 = vld [vmem:[%s7 + $0x88] sm:$0xff]
    %v4615 = vld [vmem:[%s7 + $0x90] sm:$0xff]
    %v4616 = vld [vmem:[%s7 + $0x98] sm:$0xff]
    %v4617 = vld [vmem:[%s7 + $0xa0] sm:$0xff]
    %v4618 = vld [vmem:[%s7 + $0xa8] sm:$0xff]
    %v4619 = vld [vmem:[%s7 + $0xb0] sm:$0xff]
    %v4620 = vld [vmem:[%s7 + $0xb8] sm:$0xff]
    %v4621 = vld [vmem:[%s7 + $0xc0] sm:$0xff]
    %v4622 = vld [vmem:[%s7 + $0xc8] sm:$0xff]
    %v4623 = vld [vmem:[%s7 + $0xd0] sm:$0xff]
    %v4624 = vld [vmem:[%s7 + $0xd8] sm:$0xff]
    %v4625 = vld [vmem:[%s7 + $0xe0] sm:$0xff]
    %v4626 = vld [vmem:[%s7 + $0xe8] sm:$0xff]
    %v4627 = vld [vmem:[%s7 + $0xf0] sm:$0xff]
    %v4628 = vld [vmem:[%s7 + $0xf8] sm:$0xff]
    %v4629 = vld [vmem:[%s7 + $0x100] sm:$0xff]
    %v4630 = vld [vmem:[%s7 + $0x108] sm:$0xff]
    %v4631 = vld [vmem:[%s7 + $0x110] sm:$0xff]
    %v4632 = vld [vmem:[%s7 + $0x118] sm:$0xff]
    %v4633 = vld [vmem:[%s7 + $0x120] sm:$0xff]
    %v4634 = vld [vmem:[%s7 + $0x128] sm:$0xff]
    %v4635 = vld [vmem:[%s7 + $0x130] sm:$0xff]
    %v4636 = vld [vmem:[%s7 + $0x138] sm:$0xff]
    %v4637 = vld [vmem:[%s7 + $0x140] sm:$0xff]
    %v4638 = vld [vmem:[%s7 + $0x148] sm:$0xff]
    %v4639 = vld [vmem:[%s7 + $0x150] sm:$0xff]
    %v4640 = vld [vmem:[%s7 + $0x158] sm:$0xff]
    %v4641 = vld [vmem:[%s7 + $0x160] sm:$0xff]
    %v4642 = vld [vmem:[%s7 + $0x168] sm:$0xff]
    %v4643 = vld [vmem:[%s7 + $0x170] sm:$0xff]
    %v4644 = vld [vmem:[%s7 + $0x178] sm:$0xff]
    %v4645 = vld [vmem:[%s7 + $0x180] sm:$0xff]
    %v4646 = vld [vmem:[%s7 + $0x188] sm:$0xff]
    %v4647 = vld [vmem:[%s7 + $0x190] sm:$0xff]
    %v4648 = vld [vmem:[%s7 + $0x198] sm:$0xff]
    %v4649 = vld [vmem:[%s7 + $0x1a0] sm:$0xff]
    %v4650 = vld [vmem:[%s7 + $0x1a8] sm:$0xff]
    %v4651 = vld [vmem:[%s7 + $0x1b0] sm:$0xff]
    %v4652 = vld [vmem:[%s7 + $0x1b8] sm:$0xff]
    %v4653 = vld [vmem:[%s7 + $0x1c0] sm:$0xff]
    %v4654 = vld [vmem:[%s7 + $0x1c8] sm:$0xff]
    %v4655 = vld [vmem:[%s7 + $0x1d0] sm:$0xff]
    %v4656 = vld [vmem:[%s7 + $0x1d8] sm:$0xff]
    %v4657 = vld [vmem:[%s7 + $0x1e0] sm:$0xff]
    %v4658 = vld [vmem:[%s7 + $0x1e8] sm:$0xff]
    %v4659 = vld [vmem:[%s7 + $0x1f0] sm:$0xff]
    %v4660 = vld [vmem:[%s7 + $0x1f8] sm:$0xff]
    %4661 = vmatpush.msra.mxu0 %v4657
    %4662 = vmatpush.msra.mxu0 %v4653
    %4663 = vmatpush.msra.mxu0 %v4649
    %4664 = vmatpush.msra.mxu0 %v4645
    %4665 = vmatpush.msra.mxu0 %v4641
    %4666 = vmatpush.msra.mxu0 %v4637
    %4667 = vmatpush.msra.mxu0 %v4633
    %4668 = vmatpush.msra.mxu0 %v4629
    %4669 = vmatpush.msra.mxu0 %v4625
    %4670 = vmatpush.msra.mxu0 %v4621
    %4671 = vmatpush.msra.mxu0 %v4617
    %4672 = vmatpush.msra.mxu0 %v4613
    %4673 = vmatpush.msra.mxu0 %v4609
    %4674 = vmatpush.msra.mxu0 %v4605
    %4675 = vmatpush.msra.mxu0 %v4601
    %4676 = vmatpush.msra.mxu0 %v4597
    %4677 = vmatmul.f32.gmra.mxu0 %v4593
    %v4678 = vpop.f32.mrf.mxu0
    %v4679 = vadd.f32 0.0, %v4678
    %4680 = vdwg.mxu0
    %4681 = vmatpush.msra.mxu0 %v4658
    %4682 = vmatpush.msra.mxu0 %v4654
    %4683 = vmatpush.msra.mxu0 %v4650
    %4684 = vmatpush.msra.mxu0 %v4646
    %4685 = vmatpush.msra.mxu0 %v4642
    %4686 = vmatpush.msra.mxu0 %v4638
    %4687 = vmatpush.msra.mxu0 %v4634
    %4688 = vmatpush.msra.mxu0 %v4630
    %4689 = vmatpush.msra.mxu0 %v4626
    %4690 = vmatpush.msra.mxu0 %v4622
    %4691 = vmatpush.msra.mxu0 %v4618
    %4692 = vmatpush.msra.mxu0 %v4614
    %4693 = vmatpush.msra.mxu0 %v4610
    %4694 = vmatpush.msra.mxu0 %v4606
    %4695 = vmatpush.msra.mxu0 %v4602
    %4696 = vmatpush.msra.mxu0 %v4598
    %4697 = vmatmul.f32.gmra.mxu0 %v4593
    %v4698 = vpop.f32.mrf.mxu0
    %v4699 = vadd.f32 0.0, %v4698
    %4700 = vdwg.mxu0
    %4701 = vmatpush.msra.mxu0 %v4659
    %4702 = vmatpush.msra.mxu0 %v4655
    %4703 = vmatpush.msra.mxu0 %v4651
    %4704 = vmatpush.msra.mxu0 %v4647
    %4705 = vmatpush.msra.mxu0 %v4643
    %4706 = vmatpush.msra.mxu0 %v4639
    %4707 = vmatpush.msra.mxu0 %v4635
    %4708 = vmatpush.msra.mxu0 %v4631
    %4709 = vmatpush.msra.mxu0 %v4627
    %4710 = vmatpush.msra.mxu0 %v4623
    %4711 = vmatpush.msra.mxu0 %v4619
    %4712 = vmatpush.msra.mxu0 %v4615
    %4713 = vmatpush.msra.mxu0 %v4611
    %4714 = vmatpush.msra.mxu0 %v4607
    %4715 = vmatpush.msra.mxu0 %v4603
    %4716 = vmatpush.msra.mxu0 %v4599
    %4717 = vmatmul.f32.gmra.mxu0 %v4593
    %v4718 = vpop.f32.mrf.mxu0
    %v4719 = vadd.f32 0.0, %v4718
    %4720 = vdwg.mxu0
    %4721 = vmatpush.msra.mxu0 %v4660
    %4722 = vmatpush.msra.mxu0 %v4656
    %4723 = vmatpush.msra.mxu0 %v4652
    %4724 = vmatpush.msra.mxu0 %v4648
    %4725 = vmatpush.msra.mxu0 %v4644
    %4726 = vmatpush.msra.mxu0 %v4640
    %4727 = vmatpush.msra.mxu0 %v4636
    %4728 = vmatpush.msra.mxu0 %v4632
    %4729 = vmatpush.msra.mxu0 %v4628
    %4730 = vmatpush.msra.mxu0 %v4624
    %4731 = vmatpush.msra.mxu0 %v4620
    %4732 = vmatpush.msra.mxu0 %v4616
    %4733 = vmatpush.msra.mxu0 %v4612
    %4734 = vmatpush.msra.mxu0 %v4608
    %4735 = vmatpush.msra.mxu0 %v4604
    %4736 = vmatpush.msra.mxu0 %v4600
    %4737 = vmatmul.f32.gmra.mxu0 %v4593
    %v4738 = vpop.f32.mrf.mxu0
    %v4739 = vadd.f32 0.0, %v4738
    %4740 = vdwg.mxu0
    %v4745 = vrot.slane %v4699, 6
    %v4746 = vrot.slane %v4719, 4
    %v4747 = vrot.slane %v4739, 2
    %v4748 = vsel %vm590, %v4679, %v4745
    %v4749 = vsel %vm592, %v4746, %v4747
    %v4750 = vsel %vm594, %v4748, %v4749
    %v4752 = vadd.f32 %v4596, %v4750
    %v4753 = vxor.u32 %v4752, 2147483648
    %v4754 = vmul.f32 %v4753, 1.442695
    %v4755 = vpow.pop %v4754
    %v4756 = vadd.f32 %v4755, 1.0
    %v4757 = vrcp.pop %v4756
    %v4758 = vmul.f32 %v4756, %v4757
    %v4759 = vsub.f32 1.0, %v4758
    %v4760 = vmul.f32 %v4757, %v4759
    %v4761 = vadd.f32 %v4757, %v4760
    %vm4762 = vweird.f32 %v4756
    %vm4763 = vweird.f32 %v4757
    %vm4764 = vmor %vm4762, %vm4763
    %v4765 = vsel %vm4764, %v4757, %v4761
    %v4766 = vand.u32 2147483647, %v4756
    %vm4767 = vcmp.eq.f32.partialorder %v4766, 8.507059e+37
    %v4768 = vand.u32 %v4756, 2147483648
    %v4769 = vor.u32 1.1754944e-38, %v4768
    %v4770 = vsel %vm4767, %v4769, %v4765
    %v4771 = vmul.f32 1.0, %v4770
    %v4773 = vrot.slane %v4752, 2
    %v4775 = vxor.u32 %v4773, 2147483648
    %v4776 = vmul.f32 %v4775, 1.442695
    %v4777 = vpow.pop %v4776
    %v4778 = vadd.f32 %v4777, 1.0
    %v4779 = vrcp.pop %v4778
    %v4780 = vmul.f32 %v4778, %v4779
    %v4781 = vsub.f32 1.0, %v4780
    %v4782 = vmul.f32 %v4779, %v4781
    %v4783 = vadd.f32 %v4779, %v4782
    %vm4784 = vweird.f32 %v4778
    %vm4785 = vweird.f32 %v4779
    %vm4786 = vmor %vm4784, %vm4785
    %v4787 = vsel %vm4786, %v4779, %v4783
    %v4788 = vand.u32 2147483647, %v4778
    %vm4789 = vcmp.eq.f32.partialorder %v4788, 8.507059e+37
    %v4790 = vand.u32 %v4778, 2147483648
    %v4791 = vor.u32 1.1754944e-38, %v4790
    %v4792 = vsel %vm4789, %v4791, %v4787
    %v4793 = vmul.f32 1.0, %v4792
    %v4794 = vrot.slane %v4752, 4
    %v4796 = vtanh.pop %v4794
    %v4797 = vrot.slane %v4752, 6
    %v4799 = vxor.u32 %v4797, 2147483648
    %v4800 = vmul.f32 %v4799, 1.442695
    %v4801 = vpow.pop %v4800
    %v4802 = vadd.f32 %v4801, 1.0
    %v4803 = vrcp.pop %v4802
    %v4804 = vmul.f32 %v4802, %v4803
    %v4805 = vsub.f32 1.0, %v4804
    %v4806 = vmul.f32 %v4803, %v4805
    %v4807 = vadd.f32 %v4803, %v4806
    %vm4808 = vweird.f32 %v4802
    %vm4809 = vweird.f32 %v4803
    %vm4810 = vmor %vm4808, %vm4809
    %v4811 = vsel %vm4810, %v4803, %v4807
    %v4812 = vand.u32 2147483647, %v4802
    %vm4813 = vcmp.eq.f32.partialorder %v4812, 8.507059e+37
    %v4814 = vand.u32 %v4802, 2147483648
    %v4815 = vor.u32 1.1754944e-38, %v4814
    %v4816 = vsel %vm4813, %v4815, %v4811
    %v4817 = vmul.f32 1.0, %v4816
    %v4818 = vmul.f32 %v4793, %v4591
    %v4819 = vmul.f32 %v4771, %v4796
    %v4820 = vadd.f32 %v4818, %v4819
    %v4821 = vtanh.pop %v4820
    %v4822 = vmul.f32 %v4817, %v4821
    %4823 = vst [vmem:[#allocation3 + $0x14] sm:$0x3] %v4822
    %4824 = vst [vmem:[#allocation4 + $0x8] sm:$0x3] %v4822
    %v4825 = vld [vmem:[#allocation2 + $0x58] sm:$0xff]
    %v4826 = vld [vmem:[%s7] sm:$0xff]
    %v4827 = vld [vmem:[%s7 + $0x8] sm:$0xff]
    %v4828 = vld [vmem:[%s7 + $0x10] sm:$0xff]
    %v4829 = vld [vmem:[%s7 + $0x18] sm:$0xff]
    %v4830 = vld [vmem:[%s7 + $0x20] sm:$0xff]
    %v4831 = vld [vmem:[%s7 + $0x28] sm:$0xff]
    %v4832 = vld [vmem:[%s7 + $0x30] sm:$0xff]
    %v4833 = vld [vmem:[%s7 + $0x38] sm:$0xff]
    %v4834 = vld [vmem:[%s7 + $0x40] sm:$0xff]
    %v4835 = vld [vmem:[%s7 + $0x48] sm:$0xff]
    %v4836 = vld [vmem:[%s7 + $0x50] sm:$0xff]
    %v4837 = vld [vmem:[%s7 + $0x58] sm:$0xff]
    %v4838 = vld [vmem:[%s7 + $0x60] sm:$0xff]
    %v4839 = vld [vmem:[%s7 + $0x68] sm:$0xff]
    %v4840 = vld [vmem:[%s7 + $0x70] sm:$0xff]
    %v4841 = vld [vmem:[%s7 + $0x78] sm:$0xff]
    %v4842 = vld [vmem:[%s7 + $0x80] sm:$0xff]
    %v4843 = vld [vmem:[%s7 + $0x88] sm:$0xff]
    %v4844 = vld [vmem:[%s7 + $0x90] sm:$0xff]
    %v4845 = vld [vmem:[%s7 + $0x98] sm:$0xff]
    %v4846 = vld [vmem:[%s7 + $0xa0] sm:$0xff]
    %v4847 = vld [vmem:[%s7 + $0xa8] sm:$0xff]
    %v4848 = vld [vmem:[%s7 + $0xb0] sm:$0xff]
    %v4849 = vld [vmem:[%s7 + $0xb8] sm:$0xff]
    %v4850 = vld [vmem:[%s7 + $0xc0] sm:$0xff]
    %v4851 = vld [vmem:[%s7 + $0xc8] sm:$0xff]
    %v4852 = vld [vmem:[%s7 + $0xd0] sm:$0xff]
    %v4853 = vld [vmem:[%s7 + $0xd8] sm:$0xff]
    %v4854 = vld [vmem:[%s7 + $0xe0] sm:$0xff]
    %v4855 = vld [vmem:[%s7 + $0xe8] sm:$0xff]
    %v4856 = vld [vmem:[%s7 + $0xf0] sm:$0xff]
    %v4857 = vld [vmem:[%s7 + $0xf8] sm:$0xff]
    %v4858 = vld [vmem:[%s7 + $0x100] sm:$0xff]
    %v4859 = vld [vmem:[%s7 + $0x108] sm:$0xff]
    %v4860 = vld [vmem:[%s7 + $0x110] sm:$0xff]
    %v4861 = vld [vmem:[%s7 + $0x118] sm:$0xff]
    %v4862 = vld [vmem:[%s7 + $0x120] sm:$0xff]
    %v4863 = vld [vmem:[%s7 + $0x128] sm:$0xff]
    %v4864 = vld [vmem:[%s7 + $0x130] sm:$0xff]
    %v4865 = vld [vmem:[%s7 + $0x138] sm:$0xff]
    %v4866 = vld [vmem:[%s7 + $0x140] sm:$0xff]
    %v4867 = vld [vmem:[%s7 + $0x148] sm:$0xff]
    %v4868 = vld [vmem:[%s7 + $0x150] sm:$0xff]
    %v4869 = vld [vmem:[%s7 + $0x158] sm:$0xff]
    %v4870 = vld [vmem:[%s7 + $0x160] sm:$0xff]
    %v4871 = vld [vmem:[%s7 + $0x168] sm:$0xff]
    %v4872 = vld [vmem:[%s7 + $0x170] sm:$0xff]
    %v4873 = vld [vmem:[%s7 + $0x178] sm:$0xff]
    %v4874 = vld [vmem:[%s7 + $0x180] sm:$0xff]
    %v4875 = vld [vmem:[%s7 + $0x188] sm:$0xff]
    %v4876 = vld [vmem:[%s7 + $0x190] sm:$0xff]
    %v4877 = vld [vmem:[%s7 + $0x198] sm:$0xff]
    %v4878 = vld [vmem:[%s7 + $0x1a0] sm:$0xff]
    %v4879 = vld [vmem:[%s7 + $0x1a8] sm:$0xff]
    %v4880 = vld [vmem:[%s7 + $0x1b0] sm:$0xff]
    %v4881 = vld [vmem:[%s7 + $0x1b8] sm:$0xff]
    %v4882 = vld [vmem:[%s7 + $0x1c0] sm:$0xff]
    %v4883 = vld [vmem:[%s7 + $0x1c8] sm:$0xff]
    %v4884 = vld [vmem:[%s7 + $0x1d0] sm:$0xff]
    %v4885 = vld [vmem:[%s7 + $0x1d8] sm:$0xff]
    %v4886 = vld [vmem:[%s7 + $0x1e0] sm:$0xff]
    %v4887 = vld [vmem:[%s7 + $0x1e8] sm:$0xff]
    %v4888 = vld [vmem:[%s7 + $0x1f0] sm:$0xff]
    %v4889 = vld [vmem:[%s7 + $0x1f8] sm:$0xff]
    %4890 = vmatpush.msra.mxu0 %v4886
    %4891 = vmatpush.msra.mxu0 %v4882
    %4892 = vmatpush.msra.mxu0 %v4878
    %4893 = vmatpush.msra.mxu0 %v4874
    %4894 = vmatpush.msra.mxu0 %v4870
    %4895 = vmatpush.msra.mxu0 %v4866
    %4896 = vmatpush.msra.mxu0 %v4862
    %4897 = vmatpush.msra.mxu0 %v4858
    %4898 = vmatpush.msra.mxu0 %v4854
    %4899 = vmatpush.msra.mxu0 %v4850
    %4900 = vmatpush.msra.mxu0 %v4846
    %4901 = vmatpush.msra.mxu0 %v4842
    %4902 = vmatpush.msra.mxu0 %v4838
    %4903 = vmatpush.msra.mxu0 %v4834
    %4904 = vmatpush.msra.mxu0 %v4830
    %4905 = vmatpush.msra.mxu0 %v4826
    %4906 = vmatmul.f32.gmra.mxu0 %v4822
    %v4907 = vpop.f32.mrf.mxu0
    %v4908 = vadd.f32 0.0, %v4907
    %4909 = vdwg.mxu0
    %4910 = vmatpush.msra.mxu0 %v4887
    %4911 = vmatpush.msra.mxu0 %v4883
    %4912 = vmatpush.msra.mxu0 %v4879
    %4913 = vmatpush.msra.mxu0 %v4875
    %4914 = vmatpush.msra.mxu0 %v4871
    %4915 = vmatpush.msra.mxu0 %v4867
    %4916 = vmatpush.msra.mxu0 %v4863
    %4917 = vmatpush.msra.mxu0 %v4859
    %4918 = vmatpush.msra.mxu0 %v4855
    %4919 = vmatpush.msra.mxu0 %v4851
    %4920 = vmatpush.msra.mxu0 %v4847
    %4921 = vmatpush.msra.mxu0 %v4843
    %4922 = vmatpush.msra.mxu0 %v4839
    %4923 = vmatpush.msra.mxu0 %v4835
    %4924 = vmatpush.msra.mxu0 %v4831
    %4925 = vmatpush.msra.mxu0 %v4827
    %4926 = vmatmul.f32.gmra.mxu0 %v4822
    %v4927 = vpop.f32.mrf.mxu0
    %v4928 = vadd.f32 0.0, %v4927
    %4929 = vdwg.mxu0
    %4930 = vmatpush.msra.mxu0 %v4888
    %4931 = vmatpush.msra.mxu0 %v4884
    %4932 = vmatpush.msra.mxu0 %v4880
    %4933 = vmatpush.msra.mxu0 %v4876
    %4934 = vmatpush.msra.mxu0 %v4872
    %4935 = vmatpush.msra.mxu0 %v4868
    %4936 = vmatpush.msra.mxu0 %v4864
    %4937 = vmatpush.msra.mxu0 %v4860
    %4938 = vmatpush.msra.mxu0 %v4856
    %4939 = vmatpush.msra.mxu0 %v4852
    %4940 = vmatpush.msra.mxu0 %v4848
    %4941 = vmatpush.msra.mxu0 %v4844
    %4942 = vmatpush.msra.mxu0 %v4840
    %4943 = vmatpush.msra.mxu0 %v4836
    %4944 = vmatpush.msra.mxu0 %v4832
    %4945 = vmatpush.msra.mxu0 %v4828
    %4946 = vmatmul.f32.gmra.mxu0 %v4822
    %v4947 = vpop.f32.mrf.mxu0
    %v4948 = vadd.f32 0.0, %v4947
    %4949 = vdwg.mxu0
    %4950 = vmatpush.msra.mxu0 %v4889
    %4951 = vmatpush.msra.mxu0 %v4885
    %4952 = vmatpush.msra.mxu0 %v4881
    %4953 = vmatpush.msra.mxu0 %v4877
    %4954 = vmatpush.msra.mxu0 %v4873
    %4955 = vmatpush.msra.mxu0 %v4869
    %4956 = vmatpush.msra.mxu0 %v4865
    %4957 = vmatpush.msra.mxu0 %v4861
    %4958 = vmatpush.msra.mxu0 %v4857
    %4959 = vmatpush.msra.mxu0 %v4853
    %4960 = vmatpush.msra.mxu0 %v4849
    %4961 = vmatpush.msra.mxu0 %v4845
    %4962 = vmatpush.msra.mxu0 %v4841
    %4963 = vmatpush.msra.mxu0 %v4837
    %4964 = vmatpush.msra.mxu0 %v4833
    %4965 = vmatpush.msra.mxu0 %v4829
    %4966 = vmatmul.f32.gmra.mxu0 %v4822
    %v4967 = vpop.f32.mrf.mxu0
    %v4968 = vadd.f32 0.0, %v4967
    %4969 = vdwg.mxu0
    %v4974 = vrot.slane %v4928, 6
    %v4975 = vrot.slane %v4948, 4
    %v4976 = vrot.slane %v4968, 2
    %v4977 = vsel %vm590, %v4908, %v4974
    %v4978 = vsel %vm592, %v4975, %v4976
    %v4979 = vsel %vm594, %v4977, %v4978
    %v4981 = vadd.f32 %v4825, %v4979
    %v4982 = vxor.u32 %v4981, 2147483648
    %v4983 = vmul.f32 %v4982, 1.442695
    %v4984 = vpow.pop %v4983
    %v4985 = vadd.f32 %v4984, 1.0
    %v4986 = vrcp.pop %v4985
    %v4987 = vmul.f32 %v4985, %v4986
    %v4988 = vsub.f32 1.0, %v4987
    %v4989 = vmul.f32 %v4986, %v4988
    %v4990 = vadd.f32 %v4986, %v4989
    %vm4991 = vweird.f32 %v4985
    %vm4992 = vweird.f32 %v4986
    %vm4993 = vmor %vm4991, %vm4992
    %v4994 = vsel %vm4993, %v4986, %v4990
    %v4995 = vand.u32 2147483647, %v4985
    %vm4996 = vcmp.eq.f32.partialorder %v4995, 8.507059e+37
    %v4997 = vand.u32 %v4985, 2147483648
    %v4998 = vor.u32 1.1754944e-38, %v4997
    %v4999 = vsel %vm4996, %v4998, %v4994
    %v5000 = vmul.f32 1.0, %v4999
    %v5002 = vrot.slane %v4981, 2
    %v5004 = vxor.u32 %v5002, 2147483648
    %v5005 = vmul.f32 %v5004, 1.442695
    %v5006 = vpow.pop %v5005
    %v5007 = vadd.f32 %v5006, 1.0
    %v5008 = vrcp.pop %v5007
    %v5009 = vmul.f32 %v5007, %v5008
    %v5010 = vsub.f32 1.0, %v5009
    %v5011 = vmul.f32 %v5008, %v5010
    %v5012 = vadd.f32 %v5008, %v5011
    %vm5013 = vweird.f32 %v5007
    %vm5014 = vweird.f32 %v5008
    %vm5015 = vmor %vm5013, %vm5014
    %v5016 = vsel %vm5015, %v5008, %v5012
    %v5017 = vand.u32 2147483647, %v5007
    %vm5018 = vcmp.eq.f32.partialorder %v5017, 8.507059e+37
    %v5019 = vand.u32 %v5007, 2147483648
    %v5020 = vor.u32 1.1754944e-38, %v5019
    %v5021 = vsel %vm5018, %v5020, %v5016
    %v5022 = vmul.f32 1.0, %v5021
    %v5023 = vrot.slane %v4981, 4
    %v5025 = vtanh.pop %v5023
    %v5026 = vrot.slane %v4981, 6
    %v5028 = vxor.u32 %v5026, 2147483648
    %v5029 = vmul.f32 %v5028, 1.442695
    %v5030 = vpow.pop %v5029
    %v5031 = vadd.f32 %v5030, 1.0
    %v5032 = vrcp.pop %v5031
    %v5033 = vmul.f32 %v5031, %v5032
    %v5034 = vsub.f32 1.0, %v5033
    %v5035 = vmul.f32 %v5032, %v5034
    %v5036 = vadd.f32 %v5032, %v5035
    %vm5037 = vweird.f32 %v5031
    %vm5038 = vweird.f32 %v5032
    %vm5039 = vmor %vm5037, %vm5038
    %v5040 = vsel %vm5039, %v5032, %v5036
    %v5041 = vand.u32 2147483647, %v5031
    %vm5042 = vcmp.eq.f32.partialorder %v5041, 8.507059e+37
    %v5043 = vand.u32 %v5031, 2147483648
    %v5044 = vor.u32 1.1754944e-38, %v5043
    %v5045 = vsel %vm5042, %v5044, %v5040
    %v5046 = vmul.f32 1.0, %v5045
    %v5047 = vmul.f32 %v5022, %v4820
    %v5048 = vmul.f32 %v5000, %v5025
    %v5049 = vadd.f32 %v5047, %v5048
    %v5050 = vtanh.pop %v5049
    %v5051 = vmul.f32 %v5046, %v5050
    %5052 = vst [vmem:[#allocation3 + $0x16] sm:$0x3] %v5051
    %5053 = vst [vmem:[#allocation4 + $0x6] sm:$0x3] %v5051
    %v5054 = vld [vmem:[#allocation2 + $0x60] sm:$0xff]
    %v5055 = vld [vmem:[%s7] sm:$0xff]
    %v5056 = vld [vmem:[%s7 + $0x8] sm:$0xff]
    %v5057 = vld [vmem:[%s7 + $0x10] sm:$0xff]
    %v5058 = vld [vmem:[%s7 + $0x18] sm:$0xff]
    %v5059 = vld [vmem:[%s7 + $0x20] sm:$0xff]
    %v5060 = vld [vmem:[%s7 + $0x28] sm:$0xff]
    %v5061 = vld [vmem:[%s7 + $0x30] sm:$0xff]
    %v5062 = vld [vmem:[%s7 + $0x38] sm:$0xff]
    %v5063 = vld [vmem:[%s7 + $0x40] sm:$0xff]
    %v5064 = vld [vmem:[%s7 + $0x48] sm:$0xff]
    %v5065 = vld [vmem:[%s7 + $0x50] sm:$0xff]
    %v5066 = vld [vmem:[%s7 + $0x58] sm:$0xff]
    %v5067 = vld [vmem:[%s7 + $0x60] sm:$0xff]
    %v5068 = vld [vmem:[%s7 + $0x68] sm:$0xff]
    %v5069 = vld [vmem:[%s7 + $0x70] sm:$0xff]
    %v5070 = vld [vmem:[%s7 + $0x78] sm:$0xff]
    %v5071 = vld [vmem:[%s7 + $0x80] sm:$0xff]
    %v5072 = vld [vmem:[%s7 + $0x88] sm:$0xff]
    %v5073 = vld [vmem:[%s7 + $0x90] sm:$0xff]
    %v5074 = vld [vmem:[%s7 + $0x98] sm:$0xff]
    %v5075 = vld [vmem:[%s7 + $0xa0] sm:$0xff]
    %v5076 = vld [vmem:[%s7 + $0xa8] sm:$0xff]
    %v5077 = vld [vmem:[%s7 + $0xb0] sm:$0xff]
    %v5078 = vld [vmem:[%s7 + $0xb8] sm:$0xff]
    %v5079 = vld [vmem:[%s7 + $0xc0] sm:$0xff]
    %v5080 = vld [vmem:[%s7 + $0xc8] sm:$0xff]
    %v5081 = vld [vmem:[%s7 + $0xd0] sm:$0xff]
    %v5082 = vld [vmem:[%s7 + $0xd8] sm:$0xff]
    %v5083 = vld [vmem:[%s7 + $0xe0] sm:$0xff]
    %v5084 = vld [vmem:[%s7 + $0xe8] sm:$0xff]
    %v5085 = vld [vmem:[%s7 + $0xf0] sm:$0xff]
    %v5086 = vld [vmem:[%s7 + $0xf8] sm:$0xff]
    %v5087 = vld [vmem:[%s7 + $0x100] sm:$0xff]
    %v5088 = vld [vmem:[%s7 + $0x108] sm:$0xff]
    %v5089 = vld [vmem:[%s7 + $0x110] sm:$0xff]
    %v5090 = vld [vmem:[%s7 + $0x118] sm:$0xff]
    %v5091 = vld [vmem:[%s7 + $0x120] sm:$0xff]
    %v5092 = vld [vmem:[%s7 + $0x128] sm:$0xff]
    %v5093 = vld [vmem:[%s7 + $0x130] sm:$0xff]
    %v5094 = vld [vmem:[%s7 + $0x138] sm:$0xff]
    %v5095 = vld [vmem:[%s7 + $0x140] sm:$0xff]
    %v5096 = vld [vmem:[%s7 + $0x148] sm:$0xff]
    %v5097 = vld [vmem:[%s7 + $0x150] sm:$0xff]
    %v5098 = vld [vmem:[%s7 + $0x158] sm:$0xff]
    %v5099 = vld [vmem:[%s7 + $0x160] sm:$0xff]
    %v5100 = vld [vmem:[%s7 + $0x168] sm:$0xff]
    %v5101 = vld [vmem:[%s7 + $0x170] sm:$0xff]
    %v5102 = vld [vmem:[%s7 + $0x178] sm:$0xff]
    %v5103 = vld [vmem:[%s7 + $0x180] sm:$0xff]
    %v5104 = vld [vmem:[%s7 + $0x188] sm:$0xff]
    %v5105 = vld [vmem:[%s7 + $0x190] sm:$0xff]
    %v5106 = vld [vmem:[%s7 + $0x198] sm:$0xff]
    %v5107 = vld [vmem:[%s7 + $0x1a0] sm:$0xff]
    %v5108 = vld [vmem:[%s7 + $0x1a8] sm:$0xff]
    %v5109 = vld [vmem:[%s7 + $0x1b0] sm:$0xff]
    %v5110 = vld [vmem:[%s7 + $0x1b8] sm:$0xff]
    %v5111 = vld [vmem:[%s7 + $0x1c0] sm:$0xff]
    %v5112 = vld [vmem:[%s7 + $0x1c8] sm:$0xff]
    %v5113 = vld [vmem:[%s7 + $0x1d0] sm:$0xff]
    %v5114 = vld [vmem:[%s7 + $0x1d8] sm:$0xff]
    %v5115 = vld [vmem:[%s7 + $0x1e0] sm:$0xff]
    %v5116 = vld [vmem:[%s7 + $0x1e8] sm:$0xff]
    %v5117 = vld [vmem:[%s7 + $0x1f0] sm:$0xff]
    %v5118 = vld [vmem:[%s7 + $0x1f8] sm:$0xff]
    %5119 = vmatpush.msra.mxu0 %v5115
    %5120 = vmatpush.msra.mxu0 %v5111
    %5121 = vmatpush.msra.mxu0 %v5107
    %5122 = vmatpush.msra.mxu0 %v5103
    %5123 = vmatpush.msra.mxu0 %v5099
    %5124 = vmatpush.msra.mxu0 %v5095
    %5125 = vmatpush.msra.mxu0 %v5091
    %5126 = vmatpush.msra.mxu0 %v5087
    %5127 = vmatpush.msra.mxu0 %v5083
    %5128 = vmatpush.msra.mxu0 %v5079
    %5129 = vmatpush.msra.mxu0 %v5075
    %5130 = vmatpush.msra.mxu0 %v5071
    %5131 = vmatpush.msra.mxu0 %v5067
    %5132 = vmatpush.msra.mxu0 %v5063
    %5133 = vmatpush.msra.mxu0 %v5059
    %5134 = vmatpush.msra.mxu0 %v5055
    %5135 = vmatmul.f32.gmra.mxu0 %v5051
    %v5136 = vpop.f32.mrf.mxu0
    %v5137 = vadd.f32 0.0, %v5136
    %5138 = vdwg.mxu0
    %5139 = vmatpush.msra.mxu0 %v5116
    %5140 = vmatpush.msra.mxu0 %v5112
    %5141 = vmatpush.msra.mxu0 %v5108
    %5142 = vmatpush.msra.mxu0 %v5104
    %5143 = vmatpush.msra.mxu0 %v5100
    %5144 = vmatpush.msra.mxu0 %v5096
    %5145 = vmatpush.msra.mxu0 %v5092
    %5146 = vmatpush.msra.mxu0 %v5088
    %5147 = vmatpush.msra.mxu0 %v5084
    %5148 = vmatpush.msra.mxu0 %v5080
    %5149 = vmatpush.msra.mxu0 %v5076
    %5150 = vmatpush.msra.mxu0 %v5072
    %5151 = vmatpush.msra.mxu0 %v5068
    %5152 = vmatpush.msra.mxu0 %v5064
    %5153 = vmatpush.msra.mxu0 %v5060
    %5154 = vmatpush.msra.mxu0 %v5056
    %5155 = vmatmul.f32.gmra.mxu0 %v5051
    %v5156 = vpop.f32.mrf.mxu0
    %v5157 = vadd.f32 0.0, %v5156
    %5158 = vdwg.mxu0
    %5159 = vmatpush.msra.mxu0 %v5117
    %5160 = vmatpush.msra.mxu0 %v5113
    %5161 = vmatpush.msra.mxu0 %v5109
    %5162 = vmatpush.msra.mxu0 %v5105
    %5163 = vmatpush.msra.mxu0 %v5101
    %5164 = vmatpush.msra.mxu0 %v5097
    %5165 = vmatpush.msra.mxu0 %v5093
    %5166 = vmatpush.msra.mxu0 %v5089
    %5167 = vmatpush.msra.mxu0 %v5085
    %5168 = vmatpush.msra.mxu0 %v5081
    %5169 = vmatpush.msra.mxu0 %v5077
    %5170 = vmatpush.msra.mxu0 %v5073
    %5171 = vmatpush.msra.mxu0 %v5069
    %5172 = vmatpush.msra.mxu0 %v5065
    %5173 = vmatpush.msra.mxu0 %v5061
    %5174 = vmatpush.msra.mxu0 %v5057
    %5175 = vmatmul.f32.gmra.mxu0 %v5051
    %v5176 = vpop.f32.mrf.mxu0
    %v5177 = vadd.f32 0.0, %v5176
    %5178 = vdwg.mxu0
    %5179 = vmatpush.msra.mxu0 %v5118
    %5180 = vmatpush.msra.mxu0 %v5114
    %5181 = vmatpush.msra.mxu0 %v5110
    %5182 = vmatpush.msra.mxu0 %v5106
    %5183 = vmatpush.msra.mxu0 %v5102
    %5184 = vmatpush.msra.mxu0 %v5098
    %5185 = vmatpush.msra.mxu0 %v5094
    %5186 = vmatpush.msra.mxu0 %v5090
    %5187 = vmatpush.msra.mxu0 %v5086
    %5188 = vmatpush.msra.mxu0 %v5082
    %5189 = vmatpush.msra.mxu0 %v5078
    %5190 = vmatpush.msra.mxu0 %v5074
    %5191 = vmatpush.msra.mxu0 %v5070
    %5192 = vmatpush.msra.mxu0 %v5066
    %5193 = vmatpush.msra.mxu0 %v5062
    %5194 = vmatpush.msra.mxu0 %v5058
    %5195 = vmatmul.f32.gmra.mxu0 %v5051
    %v5196 = vpop.f32.mrf.mxu0
    %v5197 = vadd.f32 0.0, %v5196
    %5198 = vdwg.mxu0
    %v5203 = vrot.slane %v5157, 6
    %v5204 = vrot.slane %v5177, 4
    %v5205 = vrot.slane %v5197, 2
    %v5206 = vsel %vm590, %v5137, %v5203
    %v5207 = vsel %vm592, %v5204, %v5205
    %v5208 = vsel %vm594, %v5206, %v5207
    %v5210 = vadd.f32 %v5054, %v5208
    %v5211 = vxor.u32 %v5210, 2147483648
    %v5212 = vmul.f32 %v5211, 1.442695
    %v5213 = vpow.pop %v5212
    %v5214 = vadd.f32 %v5213, 1.0
    %v5215 = vrcp.pop %v5214
    %v5216 = vmul.f32 %v5214, %v5215
    %v5217 = vsub.f32 1.0, %v5216
    %v5218 = vmul.f32 %v5215, %v5217
    %v5219 = vadd.f32 %v5215, %v5218
    %vm5220 = vweird.f32 %v5214
    %vm5221 = vweird.f32 %v5215
    %vm5222 = vmor %vm5220, %vm5221
    %v5223 = vsel %vm5222, %v5215, %v5219
    %v5224 = vand.u32 2147483647, %v5214
    %vm5225 = vcmp.eq.f32.partialorder %v5224, 8.507059e+37
    %v5226 = vand.u32 %v5214, 2147483648
    %v5227 = vor.u32 1.1754944e-38, %v5226
    %v5228 = vsel %vm5225, %v5227, %v5223
    %v5229 = vmul.f32 1.0, %v5228
    %v5231 = vrot.slane %v5210, 2
    %v5233 = vxor.u32 %v5231, 2147483648
    %v5234 = vmul.f32 %v5233, 1.442695
    %v5235 = vpow.pop %v5234
    %v5236 = vadd.f32 %v5235, 1.0
    %v5237 = vrcp.pop %v5236
    %v5238 = vmul.f32 %v5236, %v5237
    %v5239 = vsub.f32 1.0, %v5238
    %v5240 = vmul.f32 %v5237, %v5239
    %v5241 = vadd.f32 %v5237, %v5240
    %vm5242 = vweird.f32 %v5236
    %vm5243 = vweird.f32 %v5237
    %vm5244 = vmor %vm5242, %vm5243
    %v5245 = vsel %vm5244, %v5237, %v5241
    %v5246 = vand.u32 2147483647, %v5236
    %vm5247 = vcmp.eq.f32.partialorder %v5246, 8.507059e+37
    %v5248 = vand.u32 %v5236, 2147483648
    %v5249 = vor.u32 1.1754944e-38, %v5248
    %v5250 = vsel %vm5247, %v5249, %v5245
    %v5251 = vmul.f32 1.0, %v5250
    %v5252 = vrot.slane %v5210, 4
    %v5254 = vtanh.pop %v5252
    %v5255 = vrot.slane %v5210, 6
    %v5257 = vxor.u32 %v5255, 2147483648
    %v5258 = vmul.f32 %v5257, 1.442695
    %v5259 = vpow.pop %v5258
    %v5260 = vadd.f32 %v5259, 1.0
    %v5261 = vrcp.pop %v5260
    %v5262 = vmul.f32 %v5260, %v5261
    %v5263 = vsub.f32 1.0, %v5262
    %v5264 = vmul.f32 %v5261, %v5263
    %v5265 = vadd.f32 %v5261, %v5264
    %vm5266 = vweird.f32 %v5260
    %vm5267 = vweird.f32 %v5261
    %vm5268 = vmor %vm5266, %vm5267
    %v5269 = vsel %vm5268, %v5261, %v5265
    %v5270 = vand.u32 2147483647, %v5260
    %vm5271 = vcmp.eq.f32.partialorder %v5270, 8.507059e+37
    %v5272 = vand.u32 %v5260, 2147483648
    %v5273 = vor.u32 1.1754944e-38, %v5272
    %v5274 = vsel %vm5271, %v5273, %v5269
    %v5275 = vmul.f32 1.0, %v5274
    %v5276 = vmul.f32 %v5251, %v5049
    %v5277 = vmul.f32 %v5229, %v5254
    %v5278 = vadd.f32 %v5276, %v5277
    %v5279 = vtanh.pop %v5278
    %v5280 = vmul.f32 %v5275, %v5279
    %5281 = vst [vmem:[#allocation3 + $0x18] sm:$0x3] %v5280
    %5282 = vst [vmem:[#allocation4 + $0x4] sm:$0x3] %v5280
    %v5283 = vld [vmem:[#allocation2 + $0x68] sm:$0xff]
    %v5284 = vld [vmem:[%s7] sm:$0xff]
    %v5285 = vld [vmem:[%s7 + $0x8] sm:$0xff]
    %v5286 = vld [vmem:[%s7 + $0x10] sm:$0xff]
    %v5287 = vld [vmem:[%s7 + $0x18] sm:$0xff]
    %v5288 = vld [vmem:[%s7 + $0x20] sm:$0xff]
    %v5289 = vld [vmem:[%s7 + $0x28] sm:$0xff]
    %v5290 = vld [vmem:[%s7 + $0x30] sm:$0xff]
    %v5291 = vld [vmem:[%s7 + $0x38] sm:$0xff]
    %v5292 = vld [vmem:[%s7 + $0x40] sm:$0xff]
    %v5293 = vld [vmem:[%s7 + $0x48] sm:$0xff]
    %v5294 = vld [vmem:[%s7 + $0x50] sm:$0xff]
    %v5295 = vld [vmem:[%s7 + $0x58] sm:$0xff]
    %v5296 = vld [vmem:[%s7 + $0x60] sm:$0xff]
    %v5297 = vld [vmem:[%s7 + $0x68] sm:$0xff]
    %v5298 = vld [vmem:[%s7 + $0x70] sm:$0xff]
    %v5299 = vld [vmem:[%s7 + $0x78] sm:$0xff]
    %v5300 = vld [vmem:[%s7 + $0x80] sm:$0xff]
    %v5301 = vld [vmem:[%s7 + $0x88] sm:$0xff]
    %v5302 = vld [vmem:[%s7 + $0x90] sm:$0xff]
    %v5303 = vld [vmem:[%s7 + $0x98] sm:$0xff]
    %v5304 = vld [vmem:[%s7 + $0xa0] sm:$0xff]
    %v5305 = vld [vmem:[%s7 + $0xa8] sm:$0xff]
    %v5306 = vld [vmem:[%s7 + $0xb0] sm:$0xff]
    %v5307 = vld [vmem:[%s7 + $0xb8] sm:$0xff]
    %v5308 = vld [vmem:[%s7 + $0xc0] sm:$0xff]
    %v5309 = vld [vmem:[%s7 + $0xc8] sm:$0xff]
    %v5310 = vld [vmem:[%s7 + $0xd0] sm:$0xff]
    %v5311 = vld [vmem:[%s7 + $0xd8] sm:$0xff]
    %v5312 = vld [vmem:[%s7 + $0xe0] sm:$0xff]
    %v5313 = vld [vmem:[%s7 + $0xe8] sm:$0xff]
    %v5314 = vld [vmem:[%s7 + $0xf0] sm:$0xff]
    %v5315 = vld [vmem:[%s7 + $0xf8] sm:$0xff]
    %v5316 = vld [vmem:[%s7 + $0x100] sm:$0xff]
    %v5317 = vld [vmem:[%s7 + $0x108] sm:$0xff]
    %v5318 = vld [vmem:[%s7 + $0x110] sm:$0xff]
    %v5319 = vld [vmem:[%s7 + $0x118] sm:$0xff]
    %v5320 = vld [vmem:[%s7 + $0x120] sm:$0xff]
    %v5321 = vld [vmem:[%s7 + $0x128] sm:$0xff]
    %v5322 = vld [vmem:[%s7 + $0x130] sm:$0xff]
    %v5323 = vld [vmem:[%s7 + $0x138] sm:$0xff]
    %v5324 = vld [vmem:[%s7 + $0x140] sm:$0xff]
    %v5325 = vld [vmem:[%s7 + $0x148] sm:$0xff]
    %v5326 = vld [vmem:[%s7 + $0x150] sm:$0xff]
    %v5327 = vld [vmem:[%s7 + $0x158] sm:$0xff]
    %v5328 = vld [vmem:[%s7 + $0x160] sm:$0xff]
    %v5329 = vld [vmem:[%s7 + $0x168] sm:$0xff]
    %v5330 = vld [vmem:[%s7 + $0x170] sm:$0xff]
    %v5331 = vld [vmem:[%s7 + $0x178] sm:$0xff]
    %v5332 = vld [vmem:[%s7 + $0x180] sm:$0xff]
    %v5333 = vld [vmem:[%s7 + $0x188] sm:$0xff]
    %v5334 = vld [vmem:[%s7 + $0x190] sm:$0xff]
    %v5335 = vld [vmem:[%s7 + $0x198] sm:$0xff]
    %v5336 = vld [vmem:[%s7 + $0x1a0] sm:$0xff]
    %v5337 = vld [vmem:[%s7 + $0x1a8] sm:$0xff]
    %v5338 = vld [vmem:[%s7 + $0x1b0] sm:$0xff]
    %v5339 = vld [vmem:[%s7 + $0x1b8] sm:$0xff]
    %v5340 = vld [vmem:[%s7 + $0x1c0] sm:$0xff]
    %v5341 = vld [vmem:[%s7 + $0x1c8] sm:$0xff]
    %v5342 = vld [vmem:[%s7 + $0x1d0] sm:$0xff]
    %v5343 = vld [vmem:[%s7 + $0x1d8] sm:$0xff]
    %v5344 = vld [vmem:[%s7 + $0x1e0] sm:$0xff]
    %v5345 = vld [vmem:[%s7 + $0x1e8] sm:$0xff]
    %v5346 = vld [vmem:[%s7 + $0x1f0] sm:$0xff]
    %v5347 = vld [vmem:[%s7 + $0x1f8] sm:$0xff]
    %5348 = vmatpush.msra.mxu0 %v5344
    %5349 = vmatpush.msra.mxu0 %v5340
    %5350 = vmatpush.msra.mxu0 %v5336
    %5351 = vmatpush.msra.mxu0 %v5332
    %5352 = vmatpush.msra.mxu0 %v5328
    %5353 = vmatpush.msra.mxu0 %v5324
    %5354 = vmatpush.msra.mxu0 %v5320
    %5355 = vmatpush.msra.mxu0 %v5316
    %5356 = vmatpush.msra.mxu0 %v5312
    %5357 = vmatpush.msra.mxu0 %v5308
    %5358 = vmatpush.msra.mxu0 %v5304
    %5359 = vmatpush.msra.mxu0 %v5300
    %5360 = vmatpush.msra.mxu0 %v5296
    %5361 = vmatpush.msra.mxu0 %v5292
    %5362 = vmatpush.msra.mxu0 %v5288
    %5363 = vmatpush.msra.mxu0 %v5284
    %5364 = vmatmul.f32.gmra.mxu0 %v5280
    %v5365 = vpop.f32.mrf.mxu0
    %v5366 = vadd.f32 0.0, %v5365
    %5367 = vdwg.mxu0
    %5368 = vmatpush.msra.mxu0 %v5345
    %5369 = vmatpush.msra.mxu0 %v5341
    %5370 = vmatpush.msra.mxu0 %v5337
    %5371 = vmatpush.msra.mxu0 %v5333
    %5372 = vmatpush.msra.mxu0 %v5329
    %5373 = vmatpush.msra.mxu0 %v5325
    %5374 = vmatpush.msra.mxu0 %v5321
    %5375 = vmatpush.msra.mxu0 %v5317
    %5376 = vmatpush.msra.mxu0 %v5313
    %5377 = vmatpush.msra.mxu0 %v5309
    %5378 = vmatpush.msra.mxu0 %v5305
    %5379 = vmatpush.msra.mxu0 %v5301
    %5380 = vmatpush.msra.mxu0 %v5297
    %5381 = vmatpush.msra.mxu0 %v5293
    %5382 = vmatpush.msra.mxu0 %v5289
    %5383 = vmatpush.msra.mxu0 %v5285
    %5384 = vmatmul.f32.gmra.mxu0 %v5280
    %v5385 = vpop.f32.mrf.mxu0
    %v5386 = vadd.f32 0.0, %v5385
    %5387 = vdwg.mxu0
    %5388 = vmatpush.msra.mxu0 %v5346
    %5389 = vmatpush.msra.mxu0 %v5342
    %5390 = vmatpush.msra.mxu0 %v5338
    %5391 = vmatpush.msra.mxu0 %v5334
    %5392 = vmatpush.msra.mxu0 %v5330
    %5393 = vmatpush.msra.mxu0 %v5326
    %5394 = vmatpush.msra.mxu0 %v5322
    %5395 = vmatpush.msra.mxu0 %v5318
    %5396 = vmatpush.msra.mxu0 %v5314
    %5397 = vmatpush.msra.mxu0 %v5310
    %5398 = vmatpush.msra.mxu0 %v5306
    %5399 = vmatpush.msra.mxu0 %v5302
    %5400 = vmatpush.msra.mxu0 %v5298
    %5401 = vmatpush.msra.mxu0 %v5294
    %5402 = vmatpush.msra.mxu0 %v5290
    %5403 = vmatpush.msra.mxu0 %v5286
    %5404 = vmatmul.f32.gmra.mxu0 %v5280
    %v5405 = vpop.f32.mrf.mxu0
    %v5406 = vadd.f32 0.0, %v5405
    %5407 = vdwg.mxu0
    %5408 = vmatpush.msra.mxu0 %v5347
    %5409 = vmatpush.msra.mxu0 %v5343
    %5410 = vmatpush.msra.mxu0 %v5339
    %5411 = vmatpush.msra.mxu0 %v5335
    %5412 = vmatpush.msra.mxu0 %v5331
    %5413 = vmatpush.msra.mxu0 %v5327
    %5414 = vmatpush.msra.mxu0 %v5323
    %5415 = vmatpush.msra.mxu0 %v5319
    %5416 = vmatpush.msra.mxu0 %v5315
    %5417 = vmatpush.msra.mxu0 %v5311
    %5418 = vmatpush.msra.mxu0 %v5307
    %5419 = vmatpush.msra.mxu0 %v5303
    %5420 = vmatpush.msra.mxu0 %v5299
    %5421 = vmatpush.msra.mxu0 %v5295
    %5422 = vmatpush.msra.mxu0 %v5291
    %5423 = vmatpush.msra.mxu0 %v5287
    %5424 = vmatmul.f32.gmra.mxu0 %v5280
    %v5425 = vpop.f32.mrf.mxu0
    %v5426 = vadd.f32 0.0, %v5425
    %5427 = vdwg.mxu0
    %v5432 = vrot.slane %v5386, 6
    %v5433 = vrot.slane %v5406, 4
    %v5434 = vrot.slane %v5426, 2
    %v5435 = vsel %vm590, %v5366, %v5432
    %v5436 = vsel %vm592, %v5433, %v5434
    %v5437 = vsel %vm594, %v5435, %v5436
    %v5439 = vadd.f32 %v5283, %v5437
    %v5440 = vxor.u32 %v5439, 2147483648
    %v5441 = vmul.f32 %v5440, 1.442695
    %v5442 = vpow.pop %v5441
    %v5443 = vadd.f32 %v5442, 1.0
    %v5444 = vrcp.pop %v5443
    %v5445 = vmul.f32 %v5443, %v5444
    %v5446 = vsub.f32 1.0, %v5445
    %v5447 = vmul.f32 %v5444, %v5446
    %v5448 = vadd.f32 %v5444, %v5447
    %vm5449 = vweird.f32 %v5443
    %vm5450 = vweird.f32 %v5444
    %vm5451 = vmor %vm5449, %vm5450
    %v5452 = vsel %vm5451, %v5444, %v5448
    %v5453 = vand.u32 2147483647, %v5443
    %vm5454 = vcmp.eq.f32.partialorder %v5453, 8.507059e+37
    %v5455 = vand.u32 %v5443, 2147483648
    %v5456 = vor.u32 1.1754944e-38, %v5455
    %v5457 = vsel %vm5454, %v5456, %v5452
    %v5458 = vmul.f32 1.0, %v5457
    %v5460 = vrot.slane %v5439, 2
    %v5462 = vxor.u32 %v5460, 2147483648
    %v5463 = vmul.f32 %v5462, 1.442695
    %v5464 = vpow.pop %v5463
    %v5465 = vadd.f32 %v5464, 1.0
    %v5466 = vrcp.pop %v5465
    %v5467 = vmul.f32 %v5465, %v5466
    %v5468 = vsub.f32 1.0, %v5467
    %v5469 = vmul.f32 %v5466, %v5468
    %v5470 = vadd.f32 %v5466, %v5469
    %vm5471 = vweird.f32 %v5465
    %vm5472 = vweird.f32 %v5466
    %vm5473 = vmor %vm5471, %vm5472
    %v5474 = vsel %vm5473, %v5466, %v5470
    %v5475 = vand.u32 2147483647, %v5465
    %vm5476 = vcmp.eq.f32.partialorder %v5475, 8.507059e+37
    %v5477 = vand.u32 %v5465, 2147483648
    %v5478 = vor.u32 1.1754944e-38, %v5477
    %v5479 = vsel %vm5476, %v5478, %v5474
    %v5480 = vmul.f32 1.0, %v5479
    %v5481 = vrot.slane %v5439, 4
    %v5483 = vtanh.pop %v5481
    %v5484 = vrot.slane %v5439, 6
    %v5486 = vxor.u32 %v5484, 2147483648
    %v5487 = vmul.f32 %v5486, 1.442695
    %v5488 = vpow.pop %v5487
    %v5489 = vadd.f32 %v5488, 1.0
    %v5490 = vrcp.pop %v5489
    %v5491 = vmul.f32 %v5489, %v5490
    %v5492 = vsub.f32 1.0, %v5491
    %v5493 = vmul.f32 %v5490, %v5492
    %v5494 = vadd.f32 %v5490, %v5493
    %vm5495 = vweird.f32 %v5489
    %vm5496 = vweird.f32 %v5490
    %vm5497 = vmor %vm5495, %vm5496
    %v5498 = vsel %vm5497, %v5490, %v5494
    %v5499 = vand.u32 2147483647, %v5489
    %vm5500 = vcmp.eq.f32.partialorder %v5499, 8.507059e+37
    %v5501 = vand.u32 %v5489, 2147483648
    %v5502 = vor.u32 1.1754944e-38, %v5501
    %v5503 = vsel %vm5500, %v5502, %v5498
    %v5504 = vmul.f32 1.0, %v5503
    %v5505 = vmul.f32 %v5480, %v5278
    %v5506 = vmul.f32 %v5458, %v5483
    %v5507 = vadd.f32 %v5505, %v5506
    %v5508 = vtanh.pop %v5507
    %v5509 = vmul.f32 %v5504, %v5508
    %5510 = vst [vmem:[#allocation3 + $0x1a] sm:$0x3] %v5509
    %5511 = vst [vmem:[#allocation4 + $0x2] sm:$0x3] %v5509
    %v5512 = vld [vmem:[#allocation2 + $0x70] sm:$0xff]
    %v5513 = vld [vmem:[%s7] sm:$0xff]
    %v5514 = vld [vmem:[%s7 + $0x8] sm:$0xff]
    %v5515 = vld [vmem:[%s7 + $0x10] sm:$0xff]
    %v5516 = vld [vmem:[%s7 + $0x18] sm:$0xff]
    %v5517 = vld [vmem:[%s7 + $0x20] sm:$0xff]
    %v5518 = vld [vmem:[%s7 + $0x28] sm:$0xff]
    %v5519 = vld [vmem:[%s7 + $0x30] sm:$0xff]
    %v5520 = vld [vmem:[%s7 + $0x38] sm:$0xff]
    %v5521 = vld [vmem:[%s7 + $0x40] sm:$0xff]
    %v5522 = vld [vmem:[%s7 + $0x48] sm:$0xff]
    %v5523 = vld [vmem:[%s7 + $0x50] sm:$0xff]
    %v5524 = vld [vmem:[%s7 + $0x58] sm:$0xff]
    %v5525 = vld [vmem:[%s7 + $0x60] sm:$0xff]
    %v5526 = vld [vmem:[%s7 + $0x68] sm:$0xff]
    %v5527 = vld [vmem:[%s7 + $0x70] sm:$0xff]
    %v5528 = vld [vmem:[%s7 + $0x78] sm:$0xff]
    %v5529 = vld [vmem:[%s7 + $0x80] sm:$0xff]
    %v5530 = vld [vmem:[%s7 + $0x88] sm:$0xff]
    %v5531 = vld [vmem:[%s7 + $0x90] sm:$0xff]
    %v5532 = vld [vmem:[%s7 + $0x98] sm:$0xff]
    %v5533 = vld [vmem:[%s7 + $0xa0] sm:$0xff]
    %v5534 = vld [vmem:[%s7 + $0xa8] sm:$0xff]
    %v5535 = vld [vmem:[%s7 + $0xb0] sm:$0xff]
    %v5536 = vld [vmem:[%s7 + $0xb8] sm:$0xff]
    %v5537 = vld [vmem:[%s7 + $0xc0] sm:$0xff]
    %v5538 = vld [vmem:[%s7 + $0xc8] sm:$0xff]
    %v5539 = vld [vmem:[%s7 + $0xd0] sm:$0xff]
    %v5540 = vld [vmem:[%s7 + $0xd8] sm:$0xff]
    %v5541 = vld [vmem:[%s7 + $0xe0] sm:$0xff]
    %v5542 = vld [vmem:[%s7 + $0xe8] sm:$0xff]
    %v5543 = vld [vmem:[%s7 + $0xf0] sm:$0xff]
    %v5544 = vld [vmem:[%s7 + $0xf8] sm:$0xff]
    %v5545 = vld [vmem:[%s7 + $0x100] sm:$0xff]
    %v5546 = vld [vmem:[%s7 + $0x108] sm:$0xff]
    %v5547 = vld [vmem:[%s7 + $0x110] sm:$0xff]
    %v5548 = vld [vmem:[%s7 + $0x118] sm:$0xff]
    %v5549 = vld [vmem:[%s7 + $0x120] sm:$0xff]
    %v5550 = vld [vmem:[%s7 + $0x128] sm:$0xff]
    %v5551 = vld [vmem:[%s7 + $0x130] sm:$0xff]
    %v5552 = vld [vmem:[%s7 + $0x138] sm:$0xff]
    %v5553 = vld [vmem:[%s7 + $0x140] sm:$0xff]
    %v5554 = vld [vmem:[%s7 + $0x148] sm:$0xff]
    %v5555 = vld [vmem:[%s7 + $0x150] sm:$0xff]
    %v5556 = vld [vmem:[%s7 + $0x158] sm:$0xff]
    %v5557 = vld [vmem:[%s7 + $0x160] sm:$0xff]
    %v5558 = vld [vmem:[%s7 + $0x168] sm:$0xff]
    %v5559 = vld [vmem:[%s7 + $0x170] sm:$0xff]
    %v5560 = vld [vmem:[%s7 + $0x178] sm:$0xff]
    %v5561 = vld [vmem:[%s7 + $0x180] sm:$0xff]
    %v5562 = vld [vmem:[%s7 + $0x188] sm:$0xff]
    %v5563 = vld [vmem:[%s7 + $0x190] sm:$0xff]
    %v5564 = vld [vmem:[%s7 + $0x198] sm:$0xff]
    %v5565 = vld [vmem:[%s7 + $0x1a0] sm:$0xff]
    %v5566 = vld [vmem:[%s7 + $0x1a8] sm:$0xff]
    %v5567 = vld [vmem:[%s7 + $0x1b0] sm:$0xff]
    %v5568 = vld [vmem:[%s7 + $0x1b8] sm:$0xff]
    %v5569 = vld [vmem:[%s7 + $0x1c0] sm:$0xff]
    %v5570 = vld [vmem:[%s7 + $0x1c8] sm:$0xff]
    %v5571 = vld [vmem:[%s7 + $0x1d0] sm:$0xff]
    %v5572 = vld [vmem:[%s7 + $0x1d8] sm:$0xff]
    %v5573 = vld [vmem:[%s7 + $0x1e0] sm:$0xff]
    %v5574 = vld [vmem:[%s7 + $0x1e8] sm:$0xff]
    %v5575 = vld [vmem:[%s7 + $0x1f0] sm:$0xff]
    %v5576 = vld [vmem:[%s7 + $0x1f8] sm:$0xff]
    %5577 = vmatpush.msra.mxu0 %v5573
    %5578 = vmatpush.msra.mxu0 %v5569
    %5579 = vmatpush.msra.mxu0 %v5565
    %5580 = vmatpush.msra.mxu0 %v5561
    %5581 = vmatpush.msra.mxu0 %v5557
    %5582 = vmatpush.msra.mxu0 %v5553
    %5583 = vmatpush.msra.mxu0 %v5549
    %5584 = vmatpush.msra.mxu0 %v5545
    %5585 = vmatpush.msra.mxu0 %v5541
    %5586 = vmatpush.msra.mxu0 %v5537
    %5587 = vmatpush.msra.mxu0 %v5533
    %5588 = vmatpush.msra.mxu0 %v5529
    %5589 = vmatpush.msra.mxu0 %v5525
    %5590 = vmatpush.msra.mxu0 %v5521
    %5591 = vmatpush.msra.mxu0 %v5517
    %5592 = vmatpush.msra.mxu0 %v5513
    %5593 = vmatmul.f32.gmra.mxu0 %v5509
    %v5594 = vpop.f32.mrf.mxu0
    %v5595 = vadd.f32 0.0, %v5594
    %5596 = vdwg.mxu0
    %5597 = vmatpush.msra.mxu0 %v5574
    %5598 = vmatpush.msra.mxu0 %v5570
    %5599 = vmatpush.msra.mxu0 %v5566
    %5600 = vmatpush.msra.mxu0 %v5562
    %5601 = vmatpush.msra.mxu0 %v5558
    %5602 = vmatpush.msra.mxu0 %v5554
    %5603 = vmatpush.msra.mxu0 %v5550
    %5604 = vmatpush.msra.mxu0 %v5546
    %5605 = vmatpush.msra.mxu0 %v5542
    %5606 = vmatpush.msra.mxu0 %v5538
    %5607 = vmatpush.msra.mxu0 %v5534
    %5608 = vmatpush.msra.mxu0 %v5530
    %5609 = vmatpush.msra.mxu0 %v5526
    %5610 = vmatpush.msra.mxu0 %v5522
    %5611 = vmatpush.msra.mxu0 %v5518
    %5612 = vmatpush.msra.mxu0 %v5514
    %5613 = vmatmul.f32.gmra.mxu0 %v5509
    %v5614 = vpop.f32.mrf.mxu0
    %v5615 = vadd.f32 0.0, %v5614
    %5616 = vdwg.mxu0
    %5617 = vmatpush.msra.mxu0 %v5575
    %5618 = vmatpush.msra.mxu0 %v5571
    %5619 = vmatpush.msra.mxu0 %v5567
    %5620 = vmatpush.msra.mxu0 %v5563
    %5621 = vmatpush.msra.mxu0 %v5559
    %5622 = vmatpush.msra.mxu0 %v5555
    %5623 = vmatpush.msra.mxu0 %v5551
    %5624 = vmatpush.msra.mxu0 %v5547
    %5625 = vmatpush.msra.mxu0 %v5543
    %5626 = vmatpush.msra.mxu0 %v5539
    %5627 = vmatpush.msra.mxu0 %v5535
    %5628 = vmatpush.msra.mxu0 %v5531
    %5629 = vmatpush.msra.mxu0 %v5527
    %5630 = vmatpush.msra.mxu0 %v5523
    %5631 = vmatpush.msra.mxu0 %v5519
    %5632 = vmatpush.msra.mxu0 %v5515
    %5633 = vmatmul.f32.gmra.mxu0 %v5509
    %v5634 = vpop.f32.mrf.mxu0
    %v5635 = vadd.f32 0.0, %v5634
    %5636 = vdwg.mxu0
    %5637 = vmatpush.msra.mxu0 %v5576
    %5638 = vmatpush.msra.mxu0 %v5572
    %5639 = vmatpush.msra.mxu0 %v5568
    %5640 = vmatpush.msra.mxu0 %v5564
    %5641 = vmatpush.msra.mxu0 %v5560
    %5642 = vmatpush.msra.mxu0 %v5556
    %5643 = vmatpush.msra.mxu0 %v5552
    %5644 = vmatpush.msra.mxu0 %v5548
    %5645 = vmatpush.msra.mxu0 %v5544
    %5646 = vmatpush.msra.mxu0 %v5540
    %5647 = vmatpush.msra.mxu0 %v5536
    %5648 = vmatpush.msra.mxu0 %v5532
    %5649 = vmatpush.msra.mxu0 %v5528
    %5650 = vmatpush.msra.mxu0 %v5524
    %5651 = vmatpush.msra.mxu0 %v5520
    %5652 = vmatpush.msra.mxu0 %v5516
    %5653 = vmatmul.f32.gmra.mxu0 %v5509
    %v5654 = vpop.f32.mrf.mxu0
    %v5655 = vadd.f32 0.0, %v5654
    %5656 = vdwg.mxu0
    %v5661 = vrot.slane %v5615, 6
    %v5662 = vrot.slane %v5635, 4
    %v5663 = vrot.slane %v5655, 2
    %v5664 = vsel %vm590, %v5595, %v5661
    %v5665 = vsel %vm592, %v5662, %v5663
    %v5666 = vsel %vm594, %v5664, %v5665
    %v5668 = vadd.f32 %v5512, %v5666
    %v5669 = vxor.u32 %v5668, 2147483648
    %v5670 = vmul.f32 %v5669, 1.442695
    %v5671 = vpow.pop %v5670
    %v5672 = vadd.f32 %v5671, 1.0
    %v5673 = vrcp.pop %v5672
    %v5674 = vmul.f32 %v5672, %v5673
    %v5675 = vsub.f32 1.0, %v5674
    %v5676 = vmul.f32 %v5673, %v5675
    %v5677 = vadd.f32 %v5673, %v5676
    %vm5678 = vweird.f32 %v5672
    %vm5679 = vweird.f32 %v5673
    %vm5680 = vmor %vm5678, %vm5679
    %v5681 = vsel %vm5680, %v5673, %v5677
    %v5682 = vand.u32 2147483647, %v5672
    %vm5683 = vcmp.eq.f32.partialorder %v5682, 8.507059e+37
    %v5684 = vand.u32 %v5672, 2147483648
    %v5685 = vor.u32 1.1754944e-38, %v5684
    %v5686 = vsel %vm5683, %v5685, %v5681
    %v5687 = vmul.f32 1.0, %v5686
    %v5689 = vrot.slane %v5668, 2
    %v5691 = vxor.u32 %v5689, 2147483648
    %v5692 = vmul.f32 %v5691, 1.442695
    %v5693 = vpow.pop %v5692
    %v5694 = vadd.f32 %v5693, 1.0
    %v5695 = vrcp.pop %v5694
    %v5696 = vmul.f32 %v5694, %v5695
    %v5697 = vsub.f32 1.0, %v5696
    %v5698 = vmul.f32 %v5695, %v5697
    %v5699 = vadd.f32 %v5695, %v5698
    %vm5700 = vweird.f32 %v5694
    %vm5701 = vweird.f32 %v5695
    %vm5702 = vmor %vm5700, %vm5701
    %v5703 = vsel %vm5702, %v5695, %v5699
    %v5704 = vand.u32 2147483647, %v5694
    %vm5705 = vcmp.eq.f32.partialorder %v5704, 8.507059e+37
    %v5706 = vand.u32 %v5694, 2147483648
    %v5707 = vor.u32 1.1754944e-38, %v5706
    %v5708 = vsel %vm5705, %v5707, %v5703
    %v5709 = vmul.f32 1.0, %v5708
    %v5710 = vrot.slane %v5668, 4
    %v5712 = vtanh.pop %v5710
    %v5713 = vrot.slane %v5668, 6
    %v5715 = vxor.u32 %v5713, 2147483648
    %v5716 = vmul.f32 %v5715, 1.442695
    %v5717 = vpow.pop %v5716
    %v5718 = vadd.f32 %v5717, 1.0
    %v5719 = vrcp.pop %v5718
    %v5720 = vmul.f32 %v5718, %v5719
    %v5721 = vsub.f32 1.0, %v5720
    %v5722 = vmul.f32 %v5719, %v5721
    %v5723 = vadd.f32 %v5719, %v5722
    %vm5724 = vweird.f32 %v5718
    %vm5725 = vweird.f32 %v5719
    %vm5726 = vmor %vm5724, %vm5725
    %v5727 = vsel %vm5726, %v5719, %v5723
    %v5728 = vand.u32 2147483647, %v5718
    %vm5729 = vcmp.eq.f32.partialorder %v5728, 8.507059e+37
    %v5730 = vand.u32 %v5718, 2147483648
    %v5731 = vor.u32 1.1754944e-38, %v5730
    %v5732 = vsel %vm5729, %v5731, %v5727
    %v5733 = vmul.f32 1.0, %v5732
    %v5734 = vmul.f32 %v5709, %v5507
    %v5735 = vmul.f32 %v5687, %v5712
    %v5736 = vadd.f32 %v5734, %v5735
    %v5737 = vtanh.pop %v5736
    %v5738 = vmul.f32 %v5733, %v5737
    %5739 = vst [vmem:[#allocation3 + $0x1c] sm:$0x3] %v5738
    %5740 = vst [vmem:[#allocation4] sm:$0x3] %v5738
    %v5741 = vld [vmem:[#allocation3] sm:$0xff]
    %v5742 = vld [vmem:[#allocation3 + $0x8] sm:$0xff]
    %v5743 = vld [vmem:[#allocation3 + $0x10] sm:$0xff]
    %v5744 = vld [vmem:[#allocation3 + $0x18] sm:$0x3f]
    %v5745 = vld [vmem:[#allocation11] sm:$0xff]
    %v5746 = vld [vmem:[#allocation11 + $0x8] sm:$0xff]
    %v5747 = vld [vmem:[#allocation11 + $0x10] sm:$0xff]
    %v5748 = vld [vmem:[#allocation11 + $0x18] sm:$0xff]
    %v5749 = vld [vmem:[#allocation11 + $0x20] sm:$0xff]
    %v5750 = vld [vmem:[#allocation11 + $0x28] sm:$0xff]
    %v5751 = vld [vmem:[#allocation11 + $0x30] sm:$0xff]
    %v5752 = vld [vmem:[#allocation11 + $0x38] sm:$0xff]
    %v5753 = vld [vmem:[#allocation11 + $0x40] sm:$0xff]
    %v5754 = vld [vmem:[#allocation11 + $0x48] sm:$0xff]
    %v5755 = vld [vmem:[#allocation11 + $0x50] sm:$0xff]
    %v5756 = vld [vmem:[#allocation11 + $0x58] sm:$0xff]
    %v5757 = vld [vmem:[#allocation11 + $0x60] sm:$0xff]
    %v5758 = vld [vmem:[#allocation11 + $0x68] sm:$0xff]
    %v5759 = vld [vmem:[#allocation11 + $0x70] sm:$0xff]
    %v5760 = vld [vmem:[#allocation11 + $0x78] sm:$0xff]
    %v5761 = vld [vmem:[#allocation11 + $0x80] sm:$0xff]
    %v5762 = vld [vmem:[#allocation11 + $0x88] sm:$0xff]
    %v5763 = vld [vmem:[#allocation11 + $0x90] sm:$0xff]
    %v5764 = vld [vmem:[#allocation11 + $0x98] sm:$0xff]
    %v5765 = vld [vmem:[#allocation11 + $0xa0] sm:$0xff]
    %v5766 = vld [vmem:[#allocation11 + $0xa8] sm:$0xff]
    %v5767 = vld [vmem:[#allocation11 + $0xb0] sm:$0xff]
    %v5768 = vld [vmem:[#allocation11 + $0xb8] sm:$0xff]
    %v5769 = vld [vmem:[#allocation11 + $0xc0] sm:$0xff]
    %v5770 = vld [vmem:[#allocation11 + $0xc8] sm:$0xff]
    %v5771 = vld [vmem:[#allocation11 + $0xd0] sm:$0xff]
    %v5772 = vld [vmem:[#allocation11 + $0xd8] sm:$0xff]
    %v5773 = vld [vmem:[#allocation11 + $0xe0] sm:$0xff]
    %v5774 = vld [vmem:[#allocation11 + $0xe8] sm:$0xff]
    %v5775 = vld [vmem:[#allocation11 + $0xf0] sm:$0xff]
    %v5776 = vld [vmem:[#allocation11 + $0xf8] sm:$0xff]
    %v5777 = vld [vmem:[#allocation11 + $0x100] sm:$0xff]
    %v5778 = vld [vmem:[#allocation11 + $0x108] sm:$0xff]
    %v5779 = vld [vmem:[#allocation11 + $0x110] sm:$0xff]
    %v5780 = vld [vmem:[#allocation11 + $0x118] sm:$0xff]
    %v5781 = vld [vmem:[#allocation11 + $0x120] sm:$0xff]
    %v5782 = vld [vmem:[#allocation11 + $0x128] sm:$0xff]
    %v5783 = vld [vmem:[#allocation11 + $0x130] sm:$0xff]
    %v5784 = vld [vmem:[#allocation11 + $0x138] sm:$0xff]
    %v5785 = vld [vmem:[#allocation11 + $0x140] sm:$0xff]
    %v5786 = vld [vmem:[#allocation11 + $0x148] sm:$0xff]
    %v5787 = vld [vmem:[#allocation11 + $0x150] sm:$0xff]
    %v5788 = vld [vmem:[#allocation11 + $0x158] sm:$0xff]
    %v5789 = vld [vmem:[#allocation11 + $0x160] sm:$0xff]
    %v5790 = vld [vmem:[#allocation11 + $0x168] sm:$0xff]
    %v5791 = vld [vmem:[#allocation11 + $0x170] sm:$0xff]
    %v5792 = vld [vmem:[#allocation11 + $0x178] sm:$0xff]
    %v5793 = vld [vmem:[#allocation11 + $0x180] sm:$0xff]
    %v5794 = vld [vmem:[#allocation11 + $0x188] sm:$0xff]
    %v5795 = vld [vmem:[#allocation11 + $0x190] sm:$0xff]
    %v5796 = vld [vmem:[#allocation11 + $0x198] sm:$0xff]
    %v5797 = vld [vmem:[#allocation11 + $0x1a0] sm:$0xff]
    %v5798 = vld [vmem:[#allocation11 + $0x1a8] sm:$0xff]
    %v5799 = vld [vmem:[#allocation11 + $0x1b0] sm:$0xff]
    %v5800 = vld [vmem:[#allocation11 + $0x1b8] sm:$0xff]
    %v5801 = vld [vmem:[#allocation11 + $0x1c0] sm:$0xff]
    %v5802 = vld [vmem:[#allocation11 + $0x1c8] sm:$0xff]
    %v5803 = vld [vmem:[#allocation11 + $0x1d0] sm:$0xff]
    %v5804 = vld [vmem:[#allocation11 + $0x1d8] sm:$0xff]
    %v5805 = vld [vmem:[#allocation11 + $0x1e0] sm:$0xff]
    %v5806 = vld [vmem:[#allocation11 + $0x1e8] sm:$0xff]
    %v5807 = vld [vmem:[#allocation11 + $0x1f0] sm:$0xff]
    %v5808 = vld [vmem:[#allocation11 + $0x1f8] sm:$0xff]
    %v5809 = vld [vmem:[#allocation4] sm:$0xff]
    %v5810 = vld [vmem:[#allocation4 + $0x8] sm:$0xff]
    %v5811 = vld [vmem:[#allocation4 + $0x10] sm:$0xff]
    %v5812 = vld [vmem:[#allocation4 + $0x18] sm:$0x3f]
    %v5813 = vld [vmem:[#allocation13] sm:$0xff]
    %v5814 = vld [vmem:[#allocation13 + $0x8] sm:$0xff]
    %v5815 = vld [vmem:[#allocation13 + $0x10] sm:$0xff]
    %v5816 = vld [vmem:[#allocation13 + $0x18] sm:$0xff]
    %v5817 = vld [vmem:[#allocation13 + $0x20] sm:$0xff]
    %v5818 = vld [vmem:[#allocation13 + $0x28] sm:$0xff]
    %v5819 = vld [vmem:[#allocation13 + $0x30] sm:$0xff]
    %v5820 = vld [vmem:[#allocation13 + $0x38] sm:$0xff]
    %v5821 = vld [vmem:[#allocation13 + $0x40] sm:$0xff]
    %v5822 = vld [vmem:[#allocation13 + $0x48] sm:$0xff]
    %v5823 = vld [vmem:[#allocation13 + $0x50] sm:$0xff]
    %v5824 = vld [vmem:[#allocation13 + $0x58] sm:$0xff]
    %v5825 = vld [vmem:[#allocation13 + $0x60] sm:$0xff]
    %v5826 = vld [vmem:[#allocation13 + $0x68] sm:$0xff]
    %v5827 = vld [vmem:[#allocation13 + $0x70] sm:$0xff]
    %v5828 = vld [vmem:[#allocation13 + $0x78] sm:$0xff]
    %v5829 = vld [vmem:[#allocation13 + $0x80] sm:$0xff]
    %v5830 = vld [vmem:[#allocation13 + $0x88] sm:$0xff]
    %v5831 = vld [vmem:[#allocation13 + $0x90] sm:$0xff]
    %v5832 = vld [vmem:[#allocation13 + $0x98] sm:$0xff]
    %v5833 = vld [vmem:[#allocation13 + $0xa0] sm:$0xff]
    %v5834 = vld [vmem:[#allocation13 + $0xa8] sm:$0xff]
    %v5835 = vld [vmem:[#allocation13 + $0xb0] sm:$0xff]
    %v5836 = vld [vmem:[#allocation13 + $0xb8] sm:$0xff]
    %v5837 = vld [vmem:[#allocation13 + $0xc0] sm:$0xff]
    %v5838 = vld [vmem:[#allocation13 + $0xc8] sm:$0xff]
    %v5839 = vld [vmem:[#allocation13 + $0xd0] sm:$0xff]
    %v5840 = vld [vmem:[#allocation13 + $0xd8] sm:$0xff]
    %v5841 = vld [vmem:[#allocation13 + $0xe0] sm:$0xff]
    %v5842 = vld [vmem:[#allocation13 + $0xe8] sm:$0xff]
    %v5843 = vld [vmem:[#allocation13 + $0xf0] sm:$0xff]
    %v5844 = vld [vmem:[#allocation13 + $0xf8] sm:$0xff]
    %v5845 = vld [vmem:[#allocation13 + $0x100] sm:$0xff]
    %v5846 = vld [vmem:[#allocation13 + $0x108] sm:$0xff]
    %v5847 = vld [vmem:[#allocation13 + $0x110] sm:$0xff]
    %v5848 = vld [vmem:[#allocation13 + $0x118] sm:$0xff]
    %v5849 = vld [vmem:[#allocation13 + $0x120] sm:$0xff]
    %v5850 = vld [vmem:[#allocation13 + $0x128] sm:$0xff]
    %v5851 = vld [vmem:[#allocation13 + $0x130] sm:$0xff]
    %v5852 = vld [vmem:[#allocation13 + $0x138] sm:$0xff]
    %v5853 = vld [vmem:[#allocation13 + $0x140] sm:$0xff]
    %v5854 = vld [vmem:[#allocation13 + $0x148] sm:$0xff]
    %v5855 = vld [vmem:[#allocation13 + $0x150] sm:$0xff]
    %v5856 = vld [vmem:[#allocation13 + $0x158] sm:$0xff]
    %v5857 = vld [vmem:[#allocation13 + $0x160] sm:$0xff]
    %v5858 = vld [vmem:[#allocation13 + $0x168] sm:$0xff]
    %v5859 = vld [vmem:[#allocation13 + $0x170] sm:$0xff]
    %v5860 = vld [vmem:[#allocation13 + $0x178] sm:$0xff]
    %v5861 = vld [vmem:[#allocation13 + $0x180] sm:$0xff]
    %v5862 = vld [vmem:[#allocation13 + $0x188] sm:$0xff]
    %v5863 = vld [vmem:[#allocation13 + $0x190] sm:$0xff]
    %v5864 = vld [vmem:[#allocation13 + $0x198] sm:$0xff]
    %v5865 = vld [vmem:[#allocation13 + $0x1a0] sm:$0xff]
    %v5866 = vld [vmem:[#allocation13 + $0x1a8] sm:$0xff]
    %v5867 = vld [vmem:[#allocation13 + $0x1b0] sm:$0xff]
    %v5868 = vld [vmem:[#allocation13 + $0x1b8] sm:$0xff]
    %v5869 = vld [vmem:[#allocation13 + $0x1c0] sm:$0xff]
    %v5870 = vld [vmem:[#allocation13 + $0x1c8] sm:$0xff]
    %v5871 = vld [vmem:[#allocation13 + $0x1d0] sm:$0xff]
    %v5872 = vld [vmem:[#allocation13 + $0x1d8] sm:$0xff]
    %v5873 = vld [vmem:[#allocation13 + $0x1e0] sm:$0xff]
    %v5874 = vld [vmem:[#allocation13 + $0x1e8] sm:$0xff]
    %v5875 = vld [vmem:[#allocation13 + $0x1f0] sm:$0xff]
    %v5876 = vld [vmem:[#allocation13 + $0x1f8] sm:$0xff]
    %5877 = vmatpush.msra.mxu0 %v5873
    %5878 = vmatpush.msra.mxu0 %v5869
    %5879 = vmatpush.msra.mxu0 %v5865
    %5880 = vmatpush.msra.mxu0 %v5861
    %5881 = vmatpush.msra.mxu0 %v5857
    %5882 = vmatpush.msra.mxu0 %v5853
    %5883 = vmatpush.msra.mxu0 %v5849
    %5884 = vmatpush.msra.mxu0 %v5845
    %5885 = vmatpush.msra.mxu0 %v5841
    %5886 = vmatpush.msra.mxu0 %v5837
    %5887 = vmatpush.msra.mxu0 %v5833
    %5888 = vmatpush.msra.mxu0 %v5829
    %5889 = vmatpush.msra.mxu0 %v5825
    %5890 = vmatpush.msra.mxu0 %v5821
    %5891 = vmatpush.msra.mxu0 %v5817
    %5892 = vmatpush.msra.mxu0 %v5813
    %5893 = vmatmul.f32.gmra.mxu0 %v5809
    %v5894 = vpop.f32.mrf.mxu0
    %v5895 = vadd.f32 0.0, %v5894
    %5896 = vmatmul.f32.gmra.mxu0 %v5810
    %v5897 = vpop.f32.mrf.mxu0
    %v5898 = vadd.f32 0.0, %v5897
    %5899 = vmatmul.f32.gmra.mxu0 %v5811
    %v5900 = vpop.f32.mrf.mxu0
    %v5901 = vadd.f32 0.0, %v5900
    %5902 = vmatmul.f32.gmra.mxu0 %v5812
    %v5903 = vpop.f32.mrf.mxu0
    %v5904 = vadd.f32 0.0, %v5903
    %5905 = vdwg.mxu0
    %5906 = vmatpush.msra.mxu0 %v5874
    %5907 = vmatpush.msra.mxu0 %v5870
    %5908 = vmatpush.msra.mxu0 %v5866
    %5909 = vmatpush.msra.mxu0 %v5862
    %5910 = vmatpush.msra.mxu0 %v5858
    %5911 = vmatpush.msra.mxu0 %v5854
    %5912 = vmatpush.msra.mxu0 %v5850
    %5913 = vmatpush.msra.mxu0 %v5846
    %5914 = vmatpush.msra.mxu0 %v5842
    %5915 = vmatpush.msra.mxu0 %v5838
    %5916 = vmatpush.msra.mxu0 %v5834
    %5917 = vmatpush.msra.mxu0 %v5830
    %5918 = vmatpush.msra.mxu0 %v5826
    %5919 = vmatpush.msra.mxu0 %v5822
    %5920 = vmatpush.msra.mxu0 %v5818
    %5921 = vmatpush.msra.mxu0 %v5814
    %5922 = vmatmul.f32.gmra.mxu0 %v5809
    %v5923 = vpop.f32.mrf.mxu0
    %v5924 = vadd.f32 0.0, %v5923
    %5925 = vmatmul.f32.gmra.mxu0 %v5810
    %v5926 = vpop.f32.mrf.mxu0
    %v5927 = vadd.f32 0.0, %v5926
    %5928 = vmatmul.f32.gmra.mxu0 %v5811
    %v5929 = vpop.f32.mrf.mxu0
    %v5930 = vadd.f32 0.0, %v5929
    %5931 = vmatmul.f32.gmra.mxu0 %v5812
    %v5932 = vpop.f32.mrf.mxu0
    %v5933 = vadd.f32 0.0, %v5932
    %5934 = vdwg.mxu0
    %5935 = vmatpush.msra.mxu0 %v5875
    %5936 = vmatpush.msra.mxu0 %v5871
    %5937 = vmatpush.msra.mxu0 %v5867
    %5938 = vmatpush.msra.mxu0 %v5863
    %5939 = vmatpush.msra.mxu0 %v5859
    %5940 = vmatpush.msra.mxu0 %v5855
    %5941 = vmatpush.msra.mxu0 %v5851
    %5942 = vmatpush.msra.mxu0 %v5847
    %5943 = vmatpush.msra.mxu0 %v5843
    %5944 = vmatpush.msra.mxu0 %v5839
    %5945 = vmatpush.msra.mxu0 %v5835
    %5946 = vmatpush.msra.mxu0 %v5831
    %5947 = vmatpush.msra.mxu0 %v5827
    %5948 = vmatpush.msra.mxu0 %v5823
    %5949 = vmatpush.msra.mxu0 %v5819
    %5950 = vmatpush.msra.mxu0 %v5815
    %5951 = vmatmul.f32.gmra.mxu0 %v5809
    %v5952 = vpop.f32.mrf.mxu0
    %v5953 = vadd.f32 0.0, %v5952
    %5954 = vmatmul.f32.gmra.mxu0 %v5810
    %v5955 = vpop.f32.mrf.mxu0
    %v5956 = vadd.f32 0.0, %v5955
    %5957 = vmatmul.f32.gmra.mxu0 %v5811
    %v5958 = vpop.f32.mrf.mxu0
    %v5959 = vadd.f32 0.0, %v5958
    %5960 = vmatmul.f32.gmra.mxu0 %v5812
    %v5961 = vpop.f32.mrf.mxu0
    %v5962 = vadd.f32 0.0, %v5961
    %5963 = vdwg.mxu0
    %5964 = vmatpush.msra.mxu0 %v5876
    %5965 = vmatpush.msra.mxu0 %v5872
    %5966 = vmatpush.msra.mxu0 %v5868
    %5967 = vmatpush.msra.mxu0 %v5864
    %5968 = vmatpush.msra.mxu0 %v5860
    %5969 = vmatpush.msra.mxu0 %v5856
    %5970 = vmatpush.msra.mxu0 %v5852
    %5971 = vmatpush.msra.mxu0 %v5848
    %5972 = vmatpush.msra.mxu0 %v5844
    %5973 = vmatpush.msra.mxu0 %v5840
    %5974 = vmatpush.msra.mxu0 %v5836
    %5975 = vmatpush.msra.mxu0 %v5832
    %5976 = vmatpush.msra.mxu0 %v5828
    %5977 = vmatpush.msra.mxu0 %v5824
    %5978 = vmatpush.msra.mxu0 %v5820
    %5979 = vmatpush.msra.mxu0 %v5816
    %5980 = vmatmul.f32.gmra.mxu0 %v5809
    %v5981 = vpop.f32.mrf.mxu0
    %v5982 = vadd.f32 0.0, %v5981
    %5983 = vmatmul.f32.gmra.mxu0 %v5810
    %v5984 = vpop.f32.mrf.mxu0
    %v5985 = vadd.f32 0.0, %v5984
    %5986 = vmatmul.f32.gmra.mxu0 %v5811
    %v5987 = vpop.f32.mrf.mxu0
    %v5988 = vadd.f32 0.0, %v5987
    %5989 = vmatmul.f32.gmra.mxu0 %v5812
    %v5990 = vpop.f32.mrf.mxu0
    %v5991 = vadd.f32 0.0, %v5990
    %5992 = vdwg.mxu0
    %5993 = vmatpush.msra.mxu0 %v5805
    %5994 = vmatpush.msra.mxu0 %v5801
    %5995 = vmatpush.msra.mxu0 %v5797
    %5996 = vmatpush.msra.mxu0 %v5793
    %5997 = vmatpush.msra.mxu0 %v5789
    %5998 = vmatpush.msra.mxu0 %v5785
    %5999 = vmatpush.msra.mxu0 %v5781
    %6000 = vmatpush.msra.mxu0 %v5777
    %6001 = vmatpush.msra.mxu0 %v5773
    %6002 = vmatpush.msra.mxu0 %v5769
    %6003 = vmatpush.msra.mxu0 %v5765
    %6004 = vmatpush.msra.mxu0 %v5761
    %6005 = vmatpush.msra.mxu0 %v5757
    %6006 = vmatpush.msra.mxu0 %v5753
    %6007 = vmatpush.msra.mxu0 %v5749
    %6008 = vmatpush.msra.mxu0 %v5745
    %6009 = vmatmul.f32.gmra.mxu0 %v5741
    %v6010 = vpop.f32.mrf.mxu0
    %v6011 = vadd.f32 %v5895, %v6010
    %6012 = vmatmul.f32.gmra.mxu0 %v5742
    %v6013 = vpop.f32.mrf.mxu0
    %v6014 = vadd.f32 %v5898, %v6013
    %6015 = vmatmul.f32.gmra.mxu0 %v5743
    %v6016 = vpop.f32.mrf.mxu0
    %v6017 = vadd.f32 %v5901, %v6016
    %6018 = vmatmul.f32.gmra.mxu0 %v5744
    %v6019 = vpop.f32.mrf.mxu0
    %v6020 = vadd.f32 %v5904, %v6019
    %6021 = vdwg.mxu0
    %6022 = vmatpush.msra.mxu0 %v5806
    %6023 = vmatpush.msra.mxu0 %v5802
    %6024 = vmatpush.msra.mxu0 %v5798
    %6025 = vmatpush.msra.mxu0 %v5794
    %6026 = vmatpush.msra.mxu0 %v5790
    %6027 = vmatpush.msra.mxu0 %v5786
    %6028 = vmatpush.msra.mxu0 %v5782
    %6029 = vmatpush.msra.mxu0 %v5778
    %6030 = vmatpush.msra.mxu0 %v5774
    %6031 = vmatpush.msra.mxu0 %v5770
    %6032 = vmatpush.msra.mxu0 %v5766
    %6033 = vmatpush.msra.mxu0 %v5762
    %6034 = vmatpush.msra.mxu0 %v5758
    %6035 = vmatpush.msra.mxu0 %v5754
    %6036 = vmatpush.msra.mxu0 %v5750
    %6037 = vmatpush.msra.mxu0 %v5746
    %6038 = vmatmul.f32.gmra.mxu0 %v5741
    %v6039 = vpop.f32.mrf.mxu0
    %v6040 = vadd.f32 %v5924, %v6039
    %6041 = vmatmul.f32.gmra.mxu0 %v5742
    %v6042 = vpop.f32.mrf.mxu0
    %v6043 = vadd.f32 %v5927, %v6042
    %6044 = vmatmul.f32.gmra.mxu0 %v5743
    %v6045 = vpop.f32.mrf.mxu0
    %v6046 = vadd.f32 %v5930, %v6045
    %6047 = vmatmul.f32.gmra.mxu0 %v5744
    %v6048 = vpop.f32.mrf.mxu0
    %v6049 = vadd.f32 %v5933, %v6048
    %6050 = vdwg.mxu0
    %6051 = vmatpush.msra.mxu0 %v5807
    %6052 = vmatpush.msra.mxu0 %v5803
    %6053 = vmatpush.msra.mxu0 %v5799
    %6054 = vmatpush.msra.mxu0 %v5795
    %6055 = vmatpush.msra.mxu0 %v5791
    %6056 = vmatpush.msra.mxu0 %v5787
    %6057 = vmatpush.msra.mxu0 %v5783
    %6058 = vmatpush.msra.mxu0 %v5779
    %6059 = vmatpush.msra.mxu0 %v5775
    %6060 = vmatpush.msra.mxu0 %v5771
    %6061 = vmatpush.msra.mxu0 %v5767
    %6062 = vmatpush.msra.mxu0 %v5763
    %6063 = vmatpush.msra.mxu0 %v5759
    %6064 = vmatpush.msra.mxu0 %v5755
    %6065 = vmatpush.msra.mxu0 %v5751
    %6066 = vmatpush.msra.mxu0 %v5747
    %6067 = vmatmul.f32.gmra.mxu0 %v5741
    %v6068 = vpop.f32.mrf.mxu0
    %v6069 = vadd.f32 %v5953, %v6068
    %6070 = vmatmul.f32.gmra.mxu0 %v5742
    %v6071 = vpop.f32.mrf.mxu0
    %v6072 = vadd.f32 %v5956, %v6071
    %6073 = vmatmul.f32.gmra.mxu0 %v5743
    %v6074 = vpop.f32.mrf.mxu0
    %v6075 = vadd.f32 %v5959, %v6074
    %6076 = vmatmul.f32.gmra.mxu0 %v5744
    %v6077 = vpop.f32.mrf.mxu0
    %v6078 = vadd.f32 %v5962, %v6077
    %6079 = vdwg.mxu0
    %6080 = vmatpush.msra.mxu0 %v5808
    %6081 = vmatpush.msra.mxu0 %v5804
    %6082 = vmatpush.msra.mxu0 %v5800
    %6083 = vmatpush.msra.mxu0 %v5796
    %6084 = vmatpush.msra.mxu0 %v5792
    %6085 = vmatpush.msra.mxu0 %v5788
    %6086 = vmatpush.msra.mxu0 %v5784
    %6087 = vmatpush.msra.mxu0 %v5780
    %6088 = vmatpush.msra.mxu0 %v5776
    %6089 = vmatpush.msra.mxu0 %v5772
    %6090 = vmatpush.msra.mxu0 %v5768
    %6091 = vmatpush.msra.mxu0 %v5764
    %6092 = vmatpush.msra.mxu0 %v5760
    %6093 = vmatpush.msra.mxu0 %v5756
    %6094 = vmatpush.msra.mxu0 %v5752
    %6095 = vmatpush.msra.mxu0 %v5748
    %6096 = vmatmul.f32.gmra.mxu0 %v5741
    %v6097 = vpop.f32.mrf.mxu0
    %v6098 = vadd.f32 %v5982, %v6097
    %6099 = vmatmul.f32.gmra.mxu0 %v5742
    %v6100 = vpop.f32.mrf.mxu0
    %v6101 = vadd.f32 %v5985, %v6100
    %6102 = vmatmul.f32.gmra.mxu0 %v5743
    %v6103 = vpop.f32.mrf.mxu0
    %v6104 = vadd.f32 %v5988, %v6103
    %6105 = vmatmul.f32.gmra.mxu0 %v5744
    %v6106 = vpop.f32.mrf.mxu0
    %v6107 = vadd.f32 %v5991, %v6106
    %6108 = vdwg.mxu0
    %v6109 = vld [vmem:[#allocation14] sm:$0xf]
    %v6111 = vperm.slane %v6109, 0
    %v6112 = vperm.slane %v6109, 1
    %v6113 = vperm.slane %v6109, 2
    %v6114 = vperm.slane %v6109, 3
    %v6119 = vadd.f32 %v6011, %v6111
    %v6120 = vadd.f32 %v6040, %v6112
    %v6121 = vadd.f32 %v6069, %v6113
    %v6122 = vadd.f32 %v6098, %v6114
    %v6123 = vadd.f32 %v6014, %v6111
    %v6124 = vadd.f32 %v6043, %v6112
    %v6125 = vadd.f32 %v6072, %v6113
    %v6126 = vadd.f32 %v6101, %v6114
    %v6127 = vadd.f32 %v6017, %v6111
    %v6128 = vadd.f32 %v6046, %v6112
    %v6129 = vadd.f32 %v6075, %v6113
    %v6130 = vadd.f32 %v6104, %v6114
    %v6131 = vadd.f32 %v6020, %v6111
    %v6132 = vadd.f32 %v6049, %v6112
    %v6133 = vadd.f32 %v6078, %v6113
    %v6134 = vadd.f32 %v6107, %v6114
    %6135 = vst [vmem:[#allocation5] sm:$0xff] %v6119
    %6136 = vst [vmem:[#allocation5 + $0x8] sm:$0xff] %v6120
    %6137 = vst [vmem:[#allocation5 + $0x10] sm:$0xff] %v6121
    %6138 = vst [vmem:[#allocation5 + $0x18] sm:$0xff] %v6122
    %6139 = vst [vmem:[#allocation5 + $0x20] sm:$0xff] %v6123
    %6140 = vst [vmem:[#allocation5 + $0x28] sm:$0xff] %v6124
    %6141 = vst [vmem:[#allocation5 + $0x30] sm:$0xff] %v6125
    %6142 = vst [vmem:[#allocation5 + $0x38] sm:$0xff] %v6126
    %6143 = vst [vmem:[#allocation5 + $0x40] sm:$0xff] %v6127
    %6144 = vst [vmem:[#allocation5 + $0x48] sm:$0xff] %v6128
    %6145 = vst [vmem:[#allocation5 + $0x50] sm:$0xff] %v6129
    %6146 = vst [vmem:[#allocation5 + $0x58] sm:$0xff] %v6130
    %6147 = vst [vmem:[#allocation5 + $0x60] sm:$0x3f] %v6131
    %6148 = vst [vmem:[#allocation5 + $0x68] sm:$0x3f] %v6132
    %6149 = vst [vmem:[#allocation5 + $0x70] sm:$0x3f] %v6133
    %6150 = vst [vmem:[#allocation5 + $0x78] sm:$0x3f] %v6134
    %v6151 = vld [vmem:[#allocation5] sm:$0x3]
    %v6152 = vld [vmem:[#allocation5 + $0x8] sm:$0x3]
    %v6153 = vld [vmem:[#allocation5 + $0x10] sm:$0x3]
    %v6154 = vld [vmem:[#allocation5 + $0x18] sm:$0x3]
    %v6155 = vld [vmem:[#allocation16] sm:$0xff]
    %v6156 = vld [vmem:[#allocation16 + $0x8] sm:$0xff]
    %v6157 = vld [vmem:[#allocation16 + $0x10] sm:$0xff]
    %v6158 = vld [vmem:[#allocation16 + $0x18] sm:$0xff]
    %v6159 = vld [vmem:[#allocation16 + $0x20] sm:$0xff]
    %v6160 = vld [vmem:[#allocation16 + $0x28] sm:$0xff]
    %v6161 = vld [vmem:[#allocation16 + $0x30] sm:$0xff]
    %v6162 = vld [vmem:[#allocation16 + $0x38] sm:$0xff]
    %v6163 = vld [vmem:[#allocation16 + $0x40] sm:$0xff]
    %v6164 = vld [vmem:[#allocation16 + $0x48] sm:$0xff]
    %v6165 = vld [vmem:[#allocation16 + $0x50] sm:$0xff]
    %v6166 = vld [vmem:[#allocation16 + $0x58] sm:$0xff]
    %v6167 = vld [vmem:[#allocation16 + $0x60] sm:$0xff]
    %v6168 = vld [vmem:[#allocation16 + $0x68] sm:$0xff]
    %v6169 = vld [vmem:[#allocation16 + $0x70] sm:$0xff]
    %v6170 = vld [vmem:[#allocation16 + $0x78] sm:$0xff]
    %v6171 = vld [vmem:[#allocation16 + $0x80] sm:$0xff]
    %v6172 = vld [vmem:[#allocation16 + $0x88] sm:$0xff]
    %v6173 = vld [vmem:[#allocation16 + $0x90] sm:$0xff]
    %v6174 = vld [vmem:[#allocation16 + $0x98] sm:$0xff]
    %v6175 = vld [vmem:[#allocation16 + $0xa0] sm:$0xff]
    %v6176 = vld [vmem:[#allocation16 + $0xa8] sm:$0xff]
    %v6177 = vld [vmem:[#allocation16 + $0xb0] sm:$0xff]
    %v6178 = vld [vmem:[#allocation16 + $0xb8] sm:$0xff]
    %v6179 = vld [vmem:[#allocation16 + $0xc0] sm:$0xff]
    %v6180 = vld [vmem:[#allocation16 + $0xc8] sm:$0xff]
    %v6181 = vld [vmem:[#allocation16 + $0xd0] sm:$0xff]
    %v6182 = vld [vmem:[#allocation16 + $0xd8] sm:$0xff]
    %v6183 = vld [vmem:[#allocation16 + $0xe0] sm:$0xff]
    %v6184 = vld [vmem:[#allocation16 + $0xe8] sm:$0xff]
    %v6185 = vld [vmem:[#allocation16 + $0xf0] sm:$0xff]
    %v6186 = vld [vmem:[#allocation16 + $0xf8] sm:$0xff]
    %v6187 = vld [vmem:[#allocation16 + $0x100] sm:$0xff]
    %v6188 = vld [vmem:[#allocation16 + $0x108] sm:$0xff]
    %v6189 = vld [vmem:[#allocation16 + $0x110] sm:$0xff]
    %v6190 = vld [vmem:[#allocation16 + $0x118] sm:$0xff]
    %v6191 = vld [vmem:[#allocation16 + $0x120] sm:$0xff]
    %v6192 = vld [vmem:[#allocation16 + $0x128] sm:$0xff]
    %v6193 = vld [vmem:[#allocation16 + $0x130] sm:$0xff]
    %v6194 = vld [vmem:[#allocation16 + $0x138] sm:$0xff]
    %v6195 = vld [vmem:[#allocation16 + $0x140] sm:$0xff]
    %v6196 = vld [vmem:[#allocation16 + $0x148] sm:$0xff]
    %v6197 = vld [vmem:[#allocation16 + $0x150] sm:$0xff]
    %v6198 = vld [vmem:[#allocation16 + $0x158] sm:$0xff]
    %v6199 = vld [vmem:[#allocation16 + $0x160] sm:$0xff]
    %v6200 = vld [vmem:[#allocation16 + $0x168] sm:$0xff]
    %v6201 = vld [vmem:[#allocation16 + $0x170] sm:$0xff]
    %v6202 = vld [vmem:[#allocation16 + $0x178] sm:$0xff]
    %v6203 = vld [vmem:[#allocation16 + $0x180] sm:$0xff]
    %v6204 = vld [vmem:[#allocation16 + $0x188] sm:$0xff]
    %v6205 = vld [vmem:[#allocation16 + $0x190] sm:$0xff]
    %v6206 = vld [vmem:[#allocation16 + $0x198] sm:$0xff]
    %v6207 = vld [vmem:[#allocation16 + $0x1a0] sm:$0xff]
    %v6208 = vld [vmem:[#allocation16 + $0x1a8] sm:$0xff]
    %v6209 = vld [vmem:[#allocation16 + $0x1b0] sm:$0xff]
    %v6210 = vld [vmem:[#allocation16 + $0x1b8] sm:$0xff]
    %v6211 = vld [vmem:[#allocation16 + $0x1c0] sm:$0xff]
    %v6212 = vld [vmem:[#allocation16 + $0x1c8] sm:$0xff]
    %v6213 = vld [vmem:[#allocation16 + $0x1d0] sm:$0xff]
    %v6214 = vld [vmem:[#allocation16 + $0x1d8] sm:$0xff]
    %v6215 = vld [vmem:[#allocation16 + $0x1e0] sm:$0xff]
    %v6216 = vld [vmem:[#allocation16 + $0x1e8] sm:$0xff]
    %v6217 = vld [vmem:[#allocation16 + $0x1f0] sm:$0xff]
    %v6218 = vld [vmem:[#allocation16 + $0x1f8] sm:$0xff]
    %6219 = vmatpush.msra.mxu0 %v6215
    %6220 = vmatpush.msra.mxu0 %v6211
    %6221 = vmatpush.msra.mxu0 %v6207
    %6222 = vmatpush.msra.mxu0 %v6203
    %6223 = vmatpush.msra.mxu0 %v6199
    %6224 = vmatpush.msra.mxu0 %v6195
    %6225 = vmatpush.msra.mxu0 %v6191
    %6226 = vmatpush.msra.mxu0 %v6187
    %6227 = vmatpush.msra.mxu0 %v6183
    %6228 = vmatpush.msra.mxu0 %v6179
    %6229 = vmatpush.msra.mxu0 %v6175
    %6230 = vmatpush.msra.mxu0 %v6171
    %6231 = vmatpush.msra.mxu0 %v6167
    %6232 = vmatpush.msra.mxu0 %v6163
    %6233 = vmatpush.msra.mxu0 %v6159
    %6234 = vmatpush.msra.mxu0 %v6155
    %6235 = vmatmul.f32.gmra.mxu0 0.0
    %v6236 = vpop.f32.mrf.mxu0
    %v6237 = vadd.f32 0.0, %v6236
    %6238 = vdwg.mxu0
    %6239 = vmatpush.msra.mxu0 %v6216
    %6240 = vmatpush.msra.mxu0 %v6212
    %6241 = vmatpush.msra.mxu0 %v6208
    %6242 = vmatpush.msra.mxu0 %v6204
    %6243 = vmatpush.msra.mxu0 %v6200
    %6244 = vmatpush.msra.mxu0 %v6196
    %6245 = vmatpush.msra.mxu0 %v6192
    %6246 = vmatpush.msra.mxu0 %v6188
    %6247 = vmatpush.msra.mxu0 %v6184
    %6248 = vmatpush.msra.mxu0 %v6180
    %6249 = vmatpush.msra.mxu0 %v6176
    %6250 = vmatpush.msra.mxu0 %v6172
    %6251 = vmatpush.msra.mxu0 %v6168
    %6252 = vmatpush.msra.mxu0 %v6164
    %6253 = vmatpush.msra.mxu0 %v6160
    %6254 = vmatpush.msra.mxu0 %v6156
    %6255 = vmatmul.f32.gmra.mxu0 0.0
    %v6256 = vpop.f32.mrf.mxu0
    %v6257 = vadd.f32 0.0, %v6256
    %6258 = vdwg.mxu0
    %6259 = vmatpush.msra.mxu0 %v6217
    %6260 = vmatpush.msra.mxu0 %v6213
    %6261 = vmatpush.msra.mxu0 %v6209
    %6262 = vmatpush.msra.mxu0 %v6205
    %6263 = vmatpush.msra.mxu0 %v6201
    %6264 = vmatpush.msra.mxu0 %v6197
    %6265 = vmatpush.msra.mxu0 %v6193
    %6266 = vmatpush.msra.mxu0 %v6189
    %6267 = vmatpush.msra.mxu0 %v6185
    %6268 = vmatpush.msra.mxu0 %v6181
    %6269 = vmatpush.msra.mxu0 %v6177
    %6270 = vmatpush.msra.mxu0 %v6173
    %6271 = vmatpush.msra.mxu0 %v6169
    %6272 = vmatpush.msra.mxu0 %v6165
    %6273 = vmatpush.msra.mxu0 %v6161
    %6274 = vmatpush.msra.mxu0 %v6157
    %6275 = vmatmul.f32.gmra.mxu0 0.0
    %v6276 = vpop.f32.mrf.mxu0
    %v6277 = vadd.f32 0.0, %v6276
    %6278 = vdwg.mxu0
    %6279 = vmatpush.msra.mxu0 %v6218
    %6280 = vmatpush.msra.mxu0 %v6214
    %6281 = vmatpush.msra.mxu0 %v6210
    %6282 = vmatpush.msra.mxu0 %v6206
    %6283 = vmatpush.msra.mxu0 %v6202
    %6284 = vmatpush.msra.mxu0 %v6198
    %6285 = vmatpush.msra.mxu0 %v6194
    %6286 = vmatpush.msra.mxu0 %v6190
    %6287 = vmatpush.msra.mxu0 %v6186
    %6288 = vmatpush.msra.mxu0 %v6182
    %6289 = vmatpush.msra.mxu0 %v6178
    %6290 = vmatpush.msra.mxu0 %v6174
    %6291 = vmatpush.msra.mxu0 %v6170
    %6292 = vmatpush.msra.mxu0 %v6166
    %6293 = vmatpush.msra.mxu0 %v6162
    %6294 = vmatpush.msra.mxu0 %v6158
    %6295 = vmatmul.f32.gmra.mxu0 0.0
    %v6296 = vpop.f32.mrf.mxu0
    %v6297 = vadd.f32 0.0, %v6296
    %6298 = vdwg.mxu0
    %v6299 = vadd.f32 %v6151, %v6237
    %v6300 = vadd.f32 %v6152, %v6257
    %v6301 = vadd.f32 %v6153, %v6277
    %v6302 = vadd.f32 %v6154, %v6297
    %v6303 = vxor.u32 %v6299, 2147483648
    %v6304 = vmul.f32 %v6303, 1.442695
    %v6305 = vpow.pop %v6304
    %v6306 = vadd.f32 %v6305, 1.0
    %v6307 = vrcp.pop %v6306
    %v6308 = vmul.f32 %v6306, %v6307
    %v6309 = vsub.f32 1.0, %v6308
    %v6310 = vmul.f32 %v6307, %v6309
    %v6311 = vadd.f32 %v6307, %v6310
    %vm6312 = vweird.f32 %v6306
    %vm6313 = vweird.f32 %v6307
    %vm6314 = vmor %vm6312, %vm6313
    %v6315 = vsel %vm6314, %v6307, %v6311
    %v6316 = vand.u32 2147483647, %v6306
    %vm6317 = vcmp.eq.f32.partialorder %v6316, 8.507059e+37
    %v6318 = vand.u32 %v6306, 2147483648
    %v6319 = vor.u32 1.1754944e-38, %v6318
    %v6320 = vsel %vm6317, %v6319, %v6315
    %v6321 = vmul.f32 1.0, %v6320
    %v6322 = vxor.u32 %v6300, 2147483648
    %v6323 = vmul.f32 %v6322, 1.442695
    %v6324 = vpow.pop %v6323
    %v6325 = vadd.f32 %v6324, 1.0
    %v6326 = vrcp.pop %v6325
    %v6327 = vmul.f32 %v6325, %v6326
    %v6328 = vsub.f32 1.0, %v6327
    %v6329 = vmul.f32 %v6326, %v6328
    %v6330 = vadd.f32 %v6326, %v6329
    %vm6331 = vweird.f32 %v6325
    %vm6332 = vweird.f32 %v6326
    %vm6333 = vmor %vm6331, %vm6332
    %v6334 = vsel %vm6333, %v6326, %v6330
    %v6335 = vand.u32 2147483647, %v6325
    %vm6336 = vcmp.eq.f32.partialorder %v6335, 8.507059e+37
    %v6337 = vand.u32 %v6325, 2147483648
    %v6338 = vor.u32 1.1754944e-38, %v6337
    %v6339 = vsel %vm6336, %v6338, %v6334
    %v6340 = vmul.f32 1.0, %v6339
    %v6341 = vtanh.pop %v6301
    %v6342 = vxor.u32 %v6302, 2147483648
    %v6343 = vmul.f32 %v6342, 1.442695
    %v6344 = vpow.pop %v6343
    %v6345 = vadd.f32 %v6344, 1.0
    %v6346 = vrcp.pop %v6345
    %v6347 = vmul.f32 %v6345, %v6346
    %v6348 = vsub.f32 1.0, %v6347
    %v6349 = vmul.f32 %v6346, %v6348
    %v6350 = vadd.f32 %v6346, %v6349
    %vm6351 = vweird.f32 %v6345
    %vm6352 = vweird.f32 %v6346
    %vm6353 = vmor %vm6351, %vm6352
    %v6354 = vsel %vm6353, %v6346, %v6350
    %v6355 = vand.u32 2147483647, %v6345
    %vm6356 = vcmp.eq.f32.partialorder %v6355, 8.507059e+37
    %v6357 = vand.u32 %v6345, 2147483648
    %v6358 = vor.u32 1.1754944e-38, %v6357
    %v6359 = vsel %vm6356, %v6358, %v6354
    %v6360 = vmul.f32 1.0, %v6359
    %v6361 = vmul.f32 %v6340, 0.0
    %v6362 = vmul.f32 %v6321, %v6341
    %v6363 = vadd.f32 %v6361, %v6362
    %v6364 = vtanh.pop %v6363
    %v6365 = vmul.f32 %v6360, %v6364
    %v6366 = vld [vmem:[#allocation5] sm:$0xc]
    %v6367 = vld [vmem:[#allocation5 + $0x8] sm:$0xc]
    %v6368 = vld [vmem:[#allocation5 + $0x10] sm:$0xc]
    %v6369 = vld [vmem:[#allocation5 + $0x18] sm:$0xc]
    %6370 = vmatpush.msra.mxu0 %v6215
    %6371 = vmatpush.msra.mxu0 %v6211
    %6372 = vmatpush.msra.mxu0 %v6207
    %6373 = vmatpush.msra.mxu0 %v6203
    %6374 = vmatpush.msra.mxu0 %v6199
    %6375 = vmatpush.msra.mxu0 %v6195
    %6376 = vmatpush.msra.mxu0 %v6191
    %6377 = vmatpush.msra.mxu0 %v6187
    %6378 = vmatpush.msra.mxu0 %v6183
    %6379 = vmatpush.msra.mxu0 %v6179
    %6380 = vmatpush.msra.mxu0 %v6175
    %6381 = vmatpush.msra.mxu0 %v6171
    %6382 = vmatpush.msra.mxu0 %v6167
    %6383 = vmatpush.msra.mxu0 %v6163
    %6384 = vmatpush.msra.mxu0 %v6159
    %6385 = vmatpush.msra.mxu0 %v6155
    %6386 = vmatmul.f32.gmra.mxu0 %v6365
    %v6387 = vpop.f32.mrf.mxu0
    %v6388 = vadd.f32 0.0, %v6387
    %6389 = vdwg.mxu0
    %6390 = vmatpush.msra.mxu0 %v6216
    %6391 = vmatpush.msra.mxu0 %v6212
    %6392 = vmatpush.msra.mxu0 %v6208
    %6393 = vmatpush.msra.mxu0 %v6204
    %6394 = vmatpush.msra.mxu0 %v6200
    %6395 = vmatpush.msra.mxu0 %v6196
    %6396 = vmatpush.msra.mxu0 %v6192
    %6397 = vmatpush.msra.mxu0 %v6188
    %6398 = vmatpush.msra.mxu0 %v6184
    %6399 = vmatpush.msra.mxu0 %v6180
    %6400 = vmatpush.msra.mxu0 %v6176
    %6401 = vmatpush.msra.mxu0 %v6172
    %6402 = vmatpush.msra.mxu0 %v6168
    %6403 = vmatpush.msra.mxu0 %v6164
    %6404 = vmatpush.msra.mxu0 %v6160
    %6405 = vmatpush.msra.mxu0 %v6156
    %6406 = vmatmul.f32.gmra.mxu0 %v6365
    %v6407 = vpop.f32.mrf.mxu0
    %v6408 = vadd.f32 0.0, %v6407
    %6409 = vdwg.mxu0
    %6410 = vmatpush.msra.mxu0 %v6217
    %6411 = vmatpush.msra.mxu0 %v6213
    %6412 = vmatpush.msra.mxu0 %v6209
    %6413 = vmatpush.msra.mxu0 %v6205
    %6414 = vmatpush.msra.mxu0 %v6201
    %6415 = vmatpush.msra.mxu0 %v6197
    %6416 = vmatpush.msra.mxu0 %v6193
    %6417 = vmatpush.msra.mxu0 %v6189
    %6418 = vmatpush.msra.mxu0 %v6185
    %6419 = vmatpush.msra.mxu0 %v6181
    %6420 = vmatpush.msra.mxu0 %v6177
    %6421 = vmatpush.msra.mxu0 %v6173
    %6422 = vmatpush.msra.mxu0 %v6169
    %6423 = vmatpush.msra.mxu0 %v6165
    %6424 = vmatpush.msra.mxu0 %v6161
    %6425 = vmatpush.msra.mxu0 %v6157
    %6426 = vmatmul.f32.gmra.mxu0 %v6365
    %v6427 = vpop.f32.mrf.mxu0
    %v6428 = vadd.f32 0.0, %v6427
    %6429 = vdwg.mxu0
    %6430 = vmatpush.msra.mxu0 %v6218
    %6431 = vmatpush.msra.mxu0 %v6214
    %6432 = vmatpush.msra.mxu0 %v6210
    %6433 = vmatpush.msra.mxu0 %v6206
    %6434 = vmatpush.msra.mxu0 %v6202
    %6435 = vmatpush.msra.mxu0 %v6198
    %6436 = vmatpush.msra.mxu0 %v6194
    %6437 = vmatpush.msra.mxu0 %v6190
    %6438 = vmatpush.msra.mxu0 %v6186
    %6439 = vmatpush.msra.mxu0 %v6182
    %6440 = vmatpush.msra.mxu0 %v6178
    %6441 = vmatpush.msra.mxu0 %v6174
    %6442 = vmatpush.msra.mxu0 %v6170
    %6443 = vmatpush.msra.mxu0 %v6166
    %6444 = vmatpush.msra.mxu0 %v6162
    %6445 = vmatpush.msra.mxu0 %v6158
    %6446 = vmatmul.f32.gmra.mxu0 %v6365
    %v6447 = vpop.f32.mrf.mxu0
    %v6448 = vadd.f32 0.0, %v6447
    %6449 = vdwg.mxu0
    %v6454 = vrot.slane %v6388, 6
    %v6455 = vrot.slane %v6408, 6
    %v6456 = vrot.slane %v6428, 6
    %v6457 = vrot.slane %v6448, 6
    %v6462 = vadd.f32 %v6366, %v6454
    %v6463 = vadd.f32 %v6367, %v6455
    %v6464 = vadd.f32 %v6368, %v6456
    %v6465 = vadd.f32 %v6369, %v6457
    %v6466 = vxor.u32 %v6462, 2147483648
    %v6467 = vmul.f32 %v6466, 1.442695
    %v6468 = vpow.pop %v6467
    %v6469 = vadd.f32 %v6468, 1.0
    %v6470 = vrcp.pop %v6469
    %v6471 = vmul.f32 %v6469, %v6470
    %v6472 = vsub.f32 1.0, %v6471
    %v6473 = vmul.f32 %v6470, %v6472
    %v6474 = vadd.f32 %v6470, %v6473
    %vm6475 = vweird.f32 %v6469
    %vm6476 = vweird.f32 %v6470
    %vm6477 = vmor %vm6475, %vm6476
    %v6478 = vsel %vm6477, %v6470, %v6474
    %v6479 = vand.u32 2147483647, %v6469
    %vm6480 = vcmp.eq.f32.partialorder %v6479, 8.507059e+37
    %v6481 = vand.u32 %v6469, 2147483648
    %v6482 = vor.u32 1.1754944e-38, %v6481
    %v6483 = vsel %vm6480, %v6482, %v6478
    %v6484 = vmul.f32 1.0, %v6483
    %v6485 = vxor.u32 %v6463, 2147483648
    %v6486 = vmul.f32 %v6485, 1.442695
    %v6487 = vpow.pop %v6486
    %v6488 = vadd.f32 %v6487, 1.0
    %v6489 = vrcp.pop %v6488
    %v6490 = vmul.f32 %v6488, %v6489
    %v6491 = vsub.f32 1.0, %v6490
    %v6492 = vmul.f32 %v6489, %v6491
    %v6493 = vadd.f32 %v6489, %v6492
    %vm6494 = vweird.f32 %v6488
    %vm6495 = vweird.f32 %v6489
    %vm6496 = vmor %vm6494, %vm6495
    %v6497 = vsel %vm6496, %v6489, %v6493
    %v6498 = vand.u32 2147483647, %v6488
    %vm6499 = vcmp.eq.f32.partialorder %v6498, 8.507059e+37
    %v6500 = vand.u32 %v6488, 2147483648
    %v6501 = vor.u32 1.1754944e-38, %v6500
    %v6502 = vsel %vm6499, %v6501, %v6497
    %v6503 = vmul.f32 1.0, %v6502
    %v6504 = vtanh.pop %v6464
    %v6505 = vxor.u32 %v6465, 2147483648
    %v6506 = vmul.f32 %v6505, 1.442695
    %v6507 = vpow.pop %v6506
    %v6508 = vadd.f32 %v6507, 1.0
    %v6509 = vrcp.pop %v6508
    %v6510 = vmul.f32 %v6508, %v6509
    %v6511 = vsub.f32 1.0, %v6510
    %v6512 = vmul.f32 %v6509, %v6511
    %v6513 = vadd.f32 %v6509, %v6512
    %vm6514 = vweird.f32 %v6508
    %vm6515 = vweird.f32 %v6509
    %vm6516 = vmor %vm6514, %vm6515
    %v6517 = vsel %vm6516, %v6509, %v6513
    %v6518 = vand.u32 2147483647, %v6508
    %vm6519 = vcmp.eq.f32.partialorder %v6518, 8.507059e+37
    %v6520 = vand.u32 %v6508, 2147483648
    %v6521 = vor.u32 1.1754944e-38, %v6520
    %v6522 = vsel %vm6519, %v6521, %v6517
    %v6523 = vmul.f32 1.0, %v6522
    %v6525 = vrot.slane %v6363, 6
    %v6527 = vmul.f32 %v6503, %v6525
    %v6528 = vmul.f32 %v6484, %v6504
    %v6529 = vadd.f32 %v6527, %v6528
    %v6530 = vtanh.pop %v6529
    %v6531 = vmul.f32 %v6523, %v6530
    %v6532 = vld [vmem:[#allocation5] sm:$0x30]
    %v6533 = vld [vmem:[#allocation5 + $0x8] sm:$0x30]
    %v6534 = vld [vmem:[#allocation5 + $0x10] sm:$0x30]
    %v6535 = vld [vmem:[#allocation5 + $0x18] sm:$0x30]
    %v6537 = vrot.slane %v6531, 2
    %6539 = vmatpush.msra.mxu0 %v6215
    %6540 = vmatpush.msra.mxu0 %v6211
    %6541 = vmatpush.msra.mxu0 %v6207
    %6542 = vmatpush.msra.mxu0 %v6203
    %6543 = vmatpush.msra.mxu0 %v6199
    %6544 = vmatpush.msra.mxu0 %v6195
    %6545 = vmatpush.msra.mxu0 %v6191
    %6546 = vmatpush.msra.mxu0 %v6187
    %6547 = vmatpush.msra.mxu0 %v6183
    %6548 = vmatpush.msra.mxu0 %v6179
    %6549 = vmatpush.msra.mxu0 %v6175
    %6550 = vmatpush.msra.mxu0 %v6171
    %6551 = vmatpush.msra.mxu0 %v6167
    %6552 = vmatpush.msra.mxu0 %v6163
    %6553 = vmatpush.msra.mxu0 %v6159
    %6554 = vmatpush.msra.mxu0 %v6155
    %6555 = vmatmul.f32.gmra.mxu0 %v6537
    %v6556 = vpop.f32.mrf.mxu0
    %v6557 = vadd.f32 0.0, %v6556
    %6558 = vdwg.mxu0
    %6559 = vmatpush.msra.mxu0 %v6216
    %6560 = vmatpush.msra.mxu0 %v6212
    %6561 = vmatpush.msra.mxu0 %v6208
    %6562 = vmatpush.msra.mxu0 %v6204
    %6563 = vmatpush.msra.mxu0 %v6200
    %6564 = vmatpush.msra.mxu0 %v6196
    %6565 = vmatpush.msra.mxu0 %v6192
    %6566 = vmatpush.msra.mxu0 %v6188
    %6567 = vmatpush.msra.mxu0 %v6184
    %6568 = vmatpush.msra.mxu0 %v6180
    %6569 = vmatpush.msra.mxu0 %v6176
    %6570 = vmatpush.msra.mxu0 %v6172
    %6571 = vmatpush.msra.mxu0 %v6168
    %6572 = vmatpush.msra.mxu0 %v6164
    %6573 = vmatpush.msra.mxu0 %v6160
    %6574 = vmatpush.msra.mxu0 %v6156
    %6575 = vmatmul.f32.gmra.mxu0 %v6537
    %v6576 = vpop.f32.mrf.mxu0
    %v6577 = vadd.f32 0.0, %v6576
    %6578 = vdwg.mxu0
    %6579 = vmatpush.msra.mxu0 %v6217
    %6580 = vmatpush.msra.mxu0 %v6213
    %6581 = vmatpush.msra.mxu0 %v6209
    %6582 = vmatpush.msra.mxu0 %v6205
    %6583 = vmatpush.msra.mxu0 %v6201
    %6584 = vmatpush.msra.mxu0 %v6197
    %6585 = vmatpush.msra.mxu0 %v6193
    %6586 = vmatpush.msra.mxu0 %v6189
    %6587 = vmatpush.msra.mxu0 %v6185
    %6588 = vmatpush.msra.mxu0 %v6181
    %6589 = vmatpush.msra.mxu0 %v6177
    %6590 = vmatpush.msra.mxu0 %v6173
    %6591 = vmatpush.msra.mxu0 %v6169
    %6592 = vmatpush.msra.mxu0 %v6165
    %6593 = vmatpush.msra.mxu0 %v6161
    %6594 = vmatpush.msra.mxu0 %v6157
    %6595 = vmatmul.f32.gmra.mxu0 %v6537
    %v6596 = vpop.f32.mrf.mxu0
    %v6597 = vadd.f32 0.0, %v6596
    %6598 = vdwg.mxu0
    %6599 = vmatpush.msra.mxu0 %v6218
    %6600 = vmatpush.msra.mxu0 %v6214
    %6601 = vmatpush.msra.mxu0 %v6210
    %6602 = vmatpush.msra.mxu0 %v6206
    %6603 = vmatpush.msra.mxu0 %v6202
    %6604 = vmatpush.msra.mxu0 %v6198
    %6605 = vmatpush.msra.mxu0 %v6194
    %6606 = vmatpush.msra.mxu0 %v6190
    %6607 = vmatpush.msra.mxu0 %v6186
    %6608 = vmatpush.msra.mxu0 %v6182
    %6609 = vmatpush.msra.mxu0 %v6178
    %6610 = vmatpush.msra.mxu0 %v6174
    %6611 = vmatpush.msra.mxu0 %v6170
    %6612 = vmatpush.msra.mxu0 %v6166
    %6613 = vmatpush.msra.mxu0 %v6162
    %6614 = vmatpush.msra.mxu0 %v6158
    %6615 = vmatmul.f32.gmra.mxu0 %v6537
    %v6616 = vpop.f32.mrf.mxu0
    %v6617 = vadd.f32 0.0, %v6616
    %6618 = vdwg.mxu0
    %v6623 = vrot.slane %v6557, 4
    %v6624 = vrot.slane %v6577, 4
    %v6625 = vrot.slane %v6597, 4
    %v6626 = vrot.slane %v6617, 4
    %v6631 = vadd.f32 %v6532, %v6623
    %v6632 = vadd.f32 %v6533, %v6624
    %v6633 = vadd.f32 %v6534, %v6625
    %v6634 = vadd.f32 %v6535, %v6626
    %v6635 = vxor.u32 %v6631, 2147483648
    %v6636 = vmul.f32 %v6635, 1.442695
    %v6637 = vpow.pop %v6636
    %v6638 = vadd.f32 %v6637, 1.0
    %v6639 = vrcp.pop %v6638
    %v6640 = vmul.f32 %v6638, %v6639
    %v6641 = vsub.f32 1.0, %v6640
    %v6642 = vmul.f32 %v6639, %v6641
    %v6643 = vadd.f32 %v6639, %v6642
    %vm6644 = vweird.f32 %v6638
    %vm6645 = vweird.f32 %v6639
    %vm6646 = vmor %vm6644, %vm6645
    %v6647 = vsel %vm6646, %v6639, %v6643
    %v6648 = vand.u32 2147483647, %v6638
    %vm6649 = vcmp.eq.f32.partialorder %v6648, 8.507059e+37
    %v6650 = vand.u32 %v6638, 2147483648
    %v6651 = vor.u32 1.1754944e-38, %v6650
    %v6652 = vsel %vm6649, %v6651, %v6647
    %v6653 = vmul.f32 1.0, %v6652
    %v6654 = vxor.u32 %v6632, 2147483648
    %v6655 = vmul.f32 %v6654, 1.442695
    %v6656 = vpow.pop %v6655
    %v6657 = vadd.f32 %v6656, 1.0
    %v6658 = vrcp.pop %v6657
    %v6659 = vmul.f32 %v6657, %v6658
    %v6660 = vsub.f32 1.0, %v6659
    %v6661 = vmul.f32 %v6658, %v6660
    %v6662 = vadd.f32 %v6658, %v6661
    %vm6663 = vweird.f32 %v6657
    %vm6664 = vweird.f32 %v6658
    %vm6665 = vmor %vm6663, %vm6664
    %v6666 = vsel %vm6665, %v6658, %v6662
    %v6667 = vand.u32 2147483647, %v6657
    %vm6668 = vcmp.eq.f32.partialorder %v6667, 8.507059e+37
    %v6669 = vand.u32 %v6657, 2147483648
    %v6670 = vor.u32 1.1754944e-38, %v6669
    %v6671 = vsel %vm6668, %v6670, %v6666
    %v6672 = vmul.f32 1.0, %v6671
    %v6673 = vtanh.pop %v6633
    %v6674 = vxor.u32 %v6634, 2147483648
    %v6675 = vmul.f32 %v6674, 1.442695
    %v6676 = vpow.pop %v6675
    %v6677 = vadd.f32 %v6676, 1.0
    %v6678 = vrcp.pop %v6677
    %v6679 = vmul.f32 %v6677, %v6678
    %v6680 = vsub.f32 1.0, %v6679
    %v6681 = vmul.f32 %v6678, %v6680
    %v6682 = vadd.f32 %v6678, %v6681
    %vm6683 = vweird.f32 %v6677
    %vm6684 = vweird.f32 %v6678
    %vm6685 = vmor %vm6683, %vm6684
    %v6686 = vsel %vm6685, %v6678, %v6682
    %v6687 = vand.u32 2147483647, %v6677
    %vm6688 = vcmp.eq.f32.partialorder %v6687, 8.507059e+37
    %v6689 = vand.u32 %v6677, 2147483648
    %v6690 = vor.u32 1.1754944e-38, %v6689
    %v6691 = vsel %vm6688, %v6690, %v6686
    %v6692 = vmul.f32 1.0, %v6691
    %v6694 = vrot.slane %v6529, 6
    %v6696 = vmul.f32 %v6672, %v6694
    %v6697 = vmul.f32 %v6653, %v6673
    %v6698 = vadd.f32 %v6696, %v6697
    %v6699 = vtanh.pop %v6698
    %v6700 = vmul.f32 %v6692, %v6699
    %v6701 = vld [vmem:[#allocation5] sm:$0xc0]
    %v6702 = vld [vmem:[#allocation5 + $0x8] sm:$0xc0]
    %v6703 = vld [vmem:[#allocation5 + $0x10] sm:$0xc0]
    %v6704 = vld [vmem:[#allocation5 + $0x18] sm:$0xc0]
    %v6706 = vrot.slane %v6700, 4
    %6708 = vmatpush.msra.mxu0 %v6215
    %6709 = vmatpush.msra.mxu0 %v6211
    %6710 = vmatpush.msra.mxu0 %v6207
    %6711 = vmatpush.msra.mxu0 %v6203
    %6712 = vmatpush.msra.mxu0 %v6199
    %6713 = vmatpush.msra.mxu0 %v6195
    %6714 = vmatpush.msra.mxu0 %v6191
    %6715 = vmatpush.msra.mxu0 %v6187
    %6716 = vmatpush.msra.mxu0 %v6183
    %6717 = vmatpush.msra.mxu0 %v6179
    %6718 = vmatpush.msra.mxu0 %v6175
    %6719 = vmatpush.msra.mxu0 %v6171
    %6720 = vmatpush.msra.mxu0 %v6167
    %6721 = vmatpush.msra.mxu0 %v6163
    %6722 = vmatpush.msra.mxu0 %v6159
    %6723 = vmatpush.msra.mxu0 %v6155
    %6724 = vmatmul.f32.gmra.mxu0 %v6706
    %v6725 = vpop.f32.mrf.mxu0
    %v6726 = vadd.f32 0.0, %v6725
    %6727 = vdwg.mxu0
    %6728 = vmatpush.msra.mxu0 %v6216
    %6729 = vmatpush.msra.mxu0 %v6212
    %6730 = vmatpush.msra.mxu0 %v6208
    %6731 = vmatpush.msra.mxu0 %v6204
    %6732 = vmatpush.msra.mxu0 %v6200
    %6733 = vmatpush.msra.mxu0 %v6196
    %6734 = vmatpush.msra.mxu0 %v6192
    %6735 = vmatpush.msra.mxu0 %v6188
    %6736 = vmatpush.msra.mxu0 %v6184
    %6737 = vmatpush.msra.mxu0 %v6180
    %6738 = vmatpush.msra.mxu0 %v6176
    %6739 = vmatpush.msra.mxu0 %v6172
    %6740 = vmatpush.msra.mxu0 %v6168
    %6741 = vmatpush.msra.mxu0 %v6164
    %6742 = vmatpush.msra.mxu0 %v6160
    %6743 = vmatpush.msra.mxu0 %v6156
    %6744 = vmatmul.f32.gmra.mxu0 %v6706
    %v6745 = vpop.f32.mrf.mxu0
    %v6746 = vadd.f32 0.0, %v6745
    %6747 = vdwg.mxu0
    %6748 = vmatpush.msra.mxu0 %v6217
    %6749 = vmatpush.msra.mxu0 %v6213
    %6750 = vmatpush.msra.mxu0 %v6209
    %6751 = vmatpush.msra.mxu0 %v6205
    %6752 = vmatpush.msra.mxu0 %v6201
    %6753 = vmatpush.msra.mxu0 %v6197
    %6754 = vmatpush.msra.mxu0 %v6193
    %6755 = vmatpush.msra.mxu0 %v6189
    %6756 = vmatpush.msra.mxu0 %v6185
    %6757 = vmatpush.msra.mxu0 %v6181
    %6758 = vmatpush.msra.mxu0 %v6177
    %6759 = vmatpush.msra.mxu0 %v6173
    %6760 = vmatpush.msra.mxu0 %v6169
    %6761 = vmatpush.msra.mxu0 %v6165
    %6762 = vmatpush.msra.mxu0 %v6161
    %6763 = vmatpush.msra.mxu0 %v6157
    %6764 = vmatmul.f32.gmra.mxu0 %v6706
    %v6765 = vpop.f32.mrf.mxu0
    %v6766 = vadd.f32 0.0, %v6765
    %6767 = vdwg.mxu0
    %6768 = vmatpush.msra.mxu0 %v6218
    %6769 = vmatpush.msra.mxu0 %v6214
    %6770 = vmatpush.msra.mxu0 %v6210
    %6771 = vmatpush.msra.mxu0 %v6206
    %6772 = vmatpush.msra.mxu0 %v6202
    %6773 = vmatpush.msra.mxu0 %v6198
    %6774 = vmatpush.msra.mxu0 %v6194
    %6775 = vmatpush.msra.mxu0 %v6190
    %6776 = vmatpush.msra.mxu0 %v6186
    %6777 = vmatpush.msra.mxu0 %v6182
    %6778 = vmatpush.msra.mxu0 %v6178
    %6779 = vmatpush.msra.mxu0 %v6174
    %6780 = vmatpush.msra.mxu0 %v6170
    %6781 = vmatpush.msra.mxu0 %v6166
    %6782 = vmatpush.msra.mxu0 %v6162
    %6783 = vmatpush.msra.mxu0 %v6158
    %6784 = vmatmul.f32.gmra.mxu0 %v6706
    %v6785 = vpop.f32.mrf.mxu0
    %v6786 = vadd.f32 0.0, %v6785
    %6787 = vdwg.mxu0
    %v6792 = vrot.slane %v6726, 2
    %v6793 = vrot.slane %v6746, 2
    %v6794 = vrot.slane %v6766, 2
    %v6795 = vrot.slane %v6786, 2
    %v6800 = vadd.f32 %v6701, %v6792
    %v6801 = vadd.f32 %v6702, %v6793
    %v6802 = vadd.f32 %v6703, %v6794
    %v6803 = vadd.f32 %v6704, %v6795
    %v6804 = vxor.u32 %v6800, 2147483648
    %v6805 = vmul.f32 %v6804, 1.442695
    %v6806 = vpow.pop %v6805
    %v6807 = vadd.f32 %v6806, 1.0
    %v6808 = vrcp.pop %v6807
    %v6809 = vmul.f32 %v6807, %v6808
    %v6810 = vsub.f32 1.0, %v6809
    %v6811 = vmul.f32 %v6808, %v6810
    %v6812 = vadd.f32 %v6808, %v6811
    %vm6813 = vweird.f32 %v6807
    %vm6814 = vweird.f32 %v6808
    %vm6815 = vmor %vm6813, %vm6814
    %v6816 = vsel %vm6815, %v6808, %v6812
    %v6817 = vand.u32 2147483647, %v6807
    %vm6818 = vcmp.eq.f32.partialorder %v6817, 8.507059e+37
    %v6819 = vand.u32 %v6807, 2147483648
    %v6820 = vor.u32 1.1754944e-38, %v6819
    %v6821 = vsel %vm6818, %v6820, %v6816
    %v6822 = vmul.f32 1.0, %v6821
    %v6823 = vxor.u32 %v6801, 2147483648
    %v6824 = vmul.f32 %v6823, 1.442695
    %v6825 = vpow.pop %v6824
    %v6826 = vadd.f32 %v6825, 1.0
    %v6827 = vrcp.pop %v6826
    %v6828 = vmul.f32 %v6826, %v6827
    %v6829 = vsub.f32 1.0, %v6828
    %v6830 = vmul.f32 %v6827, %v6829
    %v6831 = vadd.f32 %v6827, %v6830
    %vm6832 = vweird.f32 %v6826
    %vm6833 = vweird.f32 %v6827
    %vm6834 = vmor %vm6832, %vm6833
    %v6835 = vsel %vm6834, %v6827, %v6831
    %v6836 = vand.u32 2147483647, %v6826
    %vm6837 = vcmp.eq.f32.partialorder %v6836, 8.507059e+37
    %v6838 = vand.u32 %v6826, 2147483648
    %v6839 = vor.u32 1.1754944e-38, %v6838
    %v6840 = vsel %vm6837, %v6839, %v6835
    %v6841 = vmul.f32 1.0, %v6840
    %v6842 = vtanh.pop %v6802
    %v6843 = vxor.u32 %v6803, 2147483648
    %v6844 = vmul.f32 %v6843, 1.442695
    %v6845 = vpow.pop %v6844
    %v6846 = vadd.f32 %v6845, 1.0
    %v6847 = vrcp.pop %v6846
    %v6848 = vmul.f32 %v6846, %v6847
    %v6849 = vsub.f32 1.0, %v6848
    %v6850 = vmul.f32 %v6847, %v6849
    %v6851 = vadd.f32 %v6847, %v6850
    %vm6852 = vweird.f32 %v6846
    %vm6853 = vweird.f32 %v6847
    %vm6854 = vmor %vm6852, %vm6853
    %v6855 = vsel %vm6854, %v6847, %v6851
    %v6856 = vand.u32 2147483647, %v6846
    %vm6857 = vcmp.eq.f32.partialorder %v6856, 8.507059e+37
    %v6858 = vand.u32 %v6846, 2147483648
    %v6859 = vor.u32 1.1754944e-38, %v6858
    %v6860 = vsel %vm6857, %v6859, %v6855
    %v6861 = vmul.f32 1.0, %v6860
    %v6863 = vrot.slane %v6698, 6
    %v6865 = vmul.f32 %v6841, %v6863
    %v6866 = vmul.f32 %v6822, %v6842
    %v6867 = vadd.f32 %v6865, %v6866
    %v6868 = vtanh.pop %v6867
    %v6869 = vmul.f32 %v6861, %v6868
    %v6870 = vld [vmem:[#allocation5 + $0x20] sm:$0x3]
    %v6871 = vld [vmem:[#allocation5 + $0x28] sm:$0x3]
    %v6872 = vld [vmem:[#allocation5 + $0x30] sm:$0x3]
    %v6873 = vld [vmem:[#allocation5 + $0x38] sm:$0x3]
    %v6875 = vrot.slane %v6869, 6
    %6877 = vmatpush.msra.mxu0 %v6215
    %6878 = vmatpush.msra.mxu0 %v6211
    %6879 = vmatpush.msra.mxu0 %v6207
    %6880 = vmatpush.msra.mxu0 %v6203
    %6881 = vmatpush.msra.mxu0 %v6199
    %6882 = vmatpush.msra.mxu0 %v6195
    %6883 = vmatpush.msra.mxu0 %v6191
    %6884 = vmatpush.msra.mxu0 %v6187
    %6885 = vmatpush.msra.mxu0 %v6183
    %6886 = vmatpush.msra.mxu0 %v6179
    %6887 = vmatpush.msra.mxu0 %v6175
    %6888 = vmatpush.msra.mxu0 %v6171
    %6889 = vmatpush.msra.mxu0 %v6167
    %6890 = vmatpush.msra.mxu0 %v6163
    %6891 = vmatpush.msra.mxu0 %v6159
    %6892 = vmatpush.msra.mxu0 %v6155
    %6893 = vmatmul.f32.gmra.mxu0 %v6875
    %v6894 = vpop.f32.mrf.mxu0
    %v6895 = vadd.f32 0.0, %v6894
    %6896 = vdwg.mxu0
    %6897 = vmatpush.msra.mxu0 %v6216
    %6898 = vmatpush.msra.mxu0 %v6212
    %6899 = vmatpush.msra.mxu0 %v6208
    %6900 = vmatpush.msra.mxu0 %v6204
    %6901 = vmatpush.msra.mxu0 %v6200
    %6902 = vmatpush.msra.mxu0 %v6196
    %6903 = vmatpush.msra.mxu0 %v6192
    %6904 = vmatpush.msra.mxu0 %v6188
    %6905 = vmatpush.msra.mxu0 %v6184
    %6906 = vmatpush.msra.mxu0 %v6180
    %6907 = vmatpush.msra.mxu0 %v6176
    %6908 = vmatpush.msra.mxu0 %v6172
    %6909 = vmatpush.msra.mxu0 %v6168
    %6910 = vmatpush.msra.mxu0 %v6164
    %6911 = vmatpush.msra.mxu0 %v6160
    %6912 = vmatpush.msra.mxu0 %v6156
    %6913 = vmatmul.f32.gmra.mxu0 %v6875
    %v6914 = vpop.f32.mrf.mxu0
    %v6915 = vadd.f32 0.0, %v6914
    %6916 = vdwg.mxu0
    %6917 = vmatpush.msra.mxu0 %v6217
    %6918 = vmatpush.msra.mxu0 %v6213
    %6919 = vmatpush.msra.mxu0 %v6209
    %6920 = vmatpush.msra.mxu0 %v6205
    %6921 = vmatpush.msra.mxu0 %v6201
    %6922 = vmatpush.msra.mxu0 %v6197
    %6923 = vmatpush.msra.mxu0 %v6193
    %6924 = vmatpush.msra.mxu0 %v6189
    %6925 = vmatpush.msra.mxu0 %v6185
    %6926 = vmatpush.msra.mxu0 %v6181
    %6927 = vmatpush.msra.mxu0 %v6177
    %6928 = vmatpush.msra.mxu0 %v6173
    %6929 = vmatpush.msra.mxu0 %v6169
    %6930 = vmatpush.msra.mxu0 %v6165
    %6931 = vmatpush.msra.mxu0 %v6161
    %6932 = vmatpush.msra.mxu0 %v6157
    %6933 = vmatmul.f32.gmra.mxu0 %v6875
    %v6934 = vpop.f32.mrf.mxu0
    %v6935 = vadd.f32 0.0, %v6934
    %6936 = vdwg.mxu0
    %6937 = vmatpush.msra.mxu0 %v6218
    %6938 = vmatpush.msra.mxu0 %v6214
    %6939 = vmatpush.msra.mxu0 %v6210
    %6940 = vmatpush.msra.mxu0 %v6206
    %6941 = vmatpush.msra.mxu0 %v6202
    %6942 = vmatpush.msra.mxu0 %v6198
    %6943 = vmatpush.msra.mxu0 %v6194
    %6944 = vmatpush.msra.mxu0 %v6190
    %6945 = vmatpush.msra.mxu0 %v6186
    %6946 = vmatpush.msra.mxu0 %v6182
    %6947 = vmatpush.msra.mxu0 %v6178
    %6948 = vmatpush.msra.mxu0 %v6174
    %6949 = vmatpush.msra.mxu0 %v6170
    %6950 = vmatpush.msra.mxu0 %v6166
    %6951 = vmatpush.msra.mxu0 %v6162
    %6952 = vmatpush.msra.mxu0 %v6158
    %6953 = vmatmul.f32.gmra.mxu0 %v6875
    %v6954 = vpop.f32.mrf.mxu0
    %v6955 = vadd.f32 0.0, %v6954
    %6956 = vdwg.mxu0
    %v6957 = vadd.f32 %v6870, %v6895
    %v6958 = vadd.f32 %v6871, %v6915
    %v6959 = vadd.f32 %v6872, %v6935
    %v6960 = vadd.f32 %v6873, %v6955
    %v6961 = vxor.u32 %v6957, 2147483648
    %v6962 = vmul.f32 %v6961, 1.442695
    %v6963 = vpow.pop %v6962
    %v6964 = vadd.f32 %v6963, 1.0
    %v6965 = vrcp.pop %v6964
    %v6966 = vmul.f32 %v6964, %v6965
    %v6967 = vsub.f32 1.0, %v6966
    %v6968 = vmul.f32 %v6965, %v6967
    %v6969 = vadd.f32 %v6965, %v6968
    %vm6970 = vweird.f32 %v6964
    %vm6971 = vweird.f32 %v6965
    %vm6972 = vmor %vm6970, %vm6971
    %v6973 = vsel %vm6972, %v6965, %v6969
    %v6974 = vand.u32 2147483647, %v6964
    %vm6975 = vcmp.eq.f32.partialorder %v6974, 8.507059e+37
    %v6976 = vand.u32 %v6964, 2147483648
    %v6977 = vor.u32 1.1754944e-38, %v6976
    %v6978 = vsel %vm6975, %v6977, %v6973
    %v6979 = vmul.f32 1.0, %v6978
    %v6980 = vxor.u32 %v6958, 2147483648
    %v6981 = vmul.f32 %v6980, 1.442695
    %v6982 = vpow.pop %v6981
    %v6983 = vadd.f32 %v6982, 1.0
    %v6984 = vrcp.pop %v6983
    %v6985 = vmul.f32 %v6983, %v6984
    %v6986 = vsub.f32 1.0, %v6985
    %v6987 = vmul.f32 %v6984, %v6986
    %v6988 = vadd.f32 %v6984, %v6987
    %vm6989 = vweird.f32 %v6983
    %vm6990 = vweird.f32 %v6984
    %vm6991 = vmor %vm6989, %vm6990
    %v6992 = vsel %vm6991, %v6984, %v6988
    %v6993 = vand.u32 2147483647, %v6983
    %vm6994 = vcmp.eq.f32.partialorder %v6993, 8.507059e+37
    %v6995 = vand.u32 %v6983, 2147483648
    %v6996 = vor.u32 1.1754944e-38, %v6995
    %v6997 = vsel %vm6994, %v6996, %v6992
    %v6998 = vmul.f32 1.0, %v6997
    %v6999 = vtanh.pop %v6959
    %v7000 = vxor.u32 %v6960, 2147483648
    %v7001 = vmul.f32 %v7000, 1.442695
    %v7002 = vpow.pop %v7001
    %v7003 = vadd.f32 %v7002, 1.0
    %v7004 = vrcp.pop %v7003
    %v7005 = vmul.f32 %v7003, %v7004
    %v7006 = vsub.f32 1.0, %v7005
    %v7007 = vmul.f32 %v7004, %v7006
    %v7008 = vadd.f32 %v7004, %v7007
    %vm7009 = vweird.f32 %v7003
    %vm7010 = vweird.f32 %v7004
    %vm7011 = vmor %vm7009, %vm7010
    %v7012 = vsel %vm7011, %v7004, %v7008
    %v7013 = vand.u32 2147483647, %v7003
    %vm7014 = vcmp.eq.f32.partialorder %v7013, 8.507059e+37
    %v7015 = vand.u32 %v7003, 2147483648
    %v7016 = vor.u32 1.1754944e-38, %v7015
    %v7017 = vsel %vm7014, %v7016, %v7012
    %v7018 = vmul.f32 1.0, %v7017
    %v7020 = vrot.slane %v6867, 6
    %v7022 = vmul.f32 %v6998, %v7020
    %v7023 = vmul.f32 %v6979, %v6999
    %v7024 = vadd.f32 %v7022, %v7023
    %v7025 = vtanh.pop %v7024
    %v7026 = vmul.f32 %v7018, %v7025
    %v7027 = vld [vmem:[#allocation5 + $0x20] sm:$0xc]
    %v7028 = vld [vmem:[#allocation5 + $0x28] sm:$0xc]
    %v7029 = vld [vmem:[#allocation5 + $0x30] sm:$0xc]
    %v7030 = vld [vmem:[#allocation5 + $0x38] sm:$0xc]
    %7031 = vmatpush.msra.mxu0 %v6215
    %7032 = vmatpush.msra.mxu0 %v6211
    %7033 = vmatpush.msra.mxu0 %v6207
    %7034 = vmatpush.msra.mxu0 %v6203
    %7035 = vmatpush.msra.mxu0 %v6199
    %7036 = vmatpush.msra.mxu0 %v6195
    %7037 = vmatpush.msra.mxu0 %v6191
    %7038 = vmatpush.msra.mxu0 %v6187
    %7039 = vmatpush.msra.mxu0 %v6183
    %7040 = vmatpush.msra.mxu0 %v6179
    %7041 = vmatpush.msra.mxu0 %v6175
    %7042 = vmatpush.msra.mxu0 %v6171
    %7043 = vmatpush.msra.mxu0 %v6167
    %7044 = vmatpush.msra.mxu0 %v6163
    %7045 = vmatpush.msra.mxu0 %v6159
    %7046 = vmatpush.msra.mxu0 %v6155
    %7047 = vmatmul.f32.gmra.mxu0 %v7026
    %v7048 = vpop.f32.mrf.mxu0
    %v7049 = vadd.f32 0.0, %v7048
    %7050 = vdwg.mxu0
    %7051 = vmatpush.msra.mxu0 %v6216
    %7052 = vmatpush.msra.mxu0 %v6212
    %7053 = vmatpush.msra.mxu0 %v6208
    %7054 = vmatpush.msra.mxu0 %v6204
    %7055 = vmatpush.msra.mxu0 %v6200
    %7056 = vmatpush.msra.mxu0 %v6196
    %7057 = vmatpush.msra.mxu0 %v6192
    %7058 = vmatpush.msra.mxu0 %v6188
    %7059 = vmatpush.msra.mxu0 %v6184
    %7060 = vmatpush.msra.mxu0 %v6180
    %7061 = vmatpush.msra.mxu0 %v6176
    %7062 = vmatpush.msra.mxu0 %v6172
    %7063 = vmatpush.msra.mxu0 %v6168
    %7064 = vmatpush.msra.mxu0 %v6164
    %7065 = vmatpush.msra.mxu0 %v6160
    %7066 = vmatpush.msra.mxu0 %v6156
    %7067 = vmatmul.f32.gmra.mxu0 %v7026
    %v7068 = vpop.f32.mrf.mxu0
    %v7069 = vadd.f32 0.0, %v7068
    %7070 = vdwg.mxu0
    %7071 = vmatpush.msra.mxu0 %v6217
    %7072 = vmatpush.msra.mxu0 %v6213
    %7073 = vmatpush.msra.mxu0 %v6209
    %7074 = vmatpush.msra.mxu0 %v6205
    %7075 = vmatpush.msra.mxu0 %v6201
    %7076 = vmatpush.msra.mxu0 %v6197
    %7077 = vmatpush.msra.mxu0 %v6193
    %7078 = vmatpush.msra.mxu0 %v6189
    %7079 = vmatpush.msra.mxu0 %v6185
    %7080 = vmatpush.msra.mxu0 %v6181
    %7081 = vmatpush.msra.mxu0 %v6177
    %7082 = vmatpush.msra.mxu0 %v6173
    %7083 = vmatpush.msra.mxu0 %v6169
    %7084 = vmatpush.msra.mxu0 %v6165
    %7085 = vmatpush.msra.mxu0 %v6161
    %7086 = vmatpush.msra.mxu0 %v6157
    %7087 = vmatmul.f32.gmra.mxu0 %v7026
    %v7088 = vpop.f32.mrf.mxu0
    %v7089 = vadd.f32 0.0, %v7088
    %7090 = vdwg.mxu0
    %7091 = vmatpush.msra.mxu0 %v6218
    %7092 = vmatpush.msra.mxu0 %v6214
    %7093 = vmatpush.msra.mxu0 %v6210
    %7094 = vmatpush.msra.mxu0 %v6206
    %7095 = vmatpush.msra.mxu0 %v6202
    %7096 = vmatpush.msra.mxu0 %v6198
    %7097 = vmatpush.msra.mxu0 %v6194
    %7098 = vmatpush.msra.mxu0 %v6190
    %7099 = vmatpush.msra.mxu0 %v6186
    %7100 = vmatpush.msra.mxu0 %v6182
    %7101 = vmatpush.msra.mxu0 %v6178
    %7102 = vmatpush.msra.mxu0 %v6174
    %7103 = vmatpush.msra.mxu0 %v6170
    %7104 = vmatpush.msra.mxu0 %v6166
    %7105 = vmatpush.msra.mxu0 %v6162
    %7106 = vmatpush.msra.mxu0 %v6158
    %7107 = vmatmul.f32.gmra.mxu0 %v7026
    %v7108 = vpop.f32.mrf.mxu0
    %v7109 = vadd.f32 0.0, %v7108
    %7110 = vdwg.mxu0
    %v7115 = vrot.slane %v7049, 6
    %v7116 = vrot.slane %v7069, 6
    %v7117 = vrot.slane %v7089, 6
    %v7118 = vrot.slane %v7109, 6
    %v7123 = vadd.f32 %v7027, %v7115
    %v7124 = vadd.f32 %v7028, %v7116
    %v7125 = vadd.f32 %v7029, %v7117
    %v7126 = vadd.f32 %v7030, %v7118
    %v7127 = vxor.u32 %v7123, 2147483648
    %v7128 = vmul.f32 %v7127, 1.442695
    %v7129 = vpow.pop %v7128
    %v7130 = vadd.f32 %v7129, 1.0
    %v7131 = vrcp.pop %v7130
    %v7132 = vmul.f32 %v7130, %v7131
    %v7133 = vsub.f32 1.0, %v7132
    %v7134 = vmul.f32 %v7131, %v7133
    %v7135 = vadd.f32 %v7131, %v7134
    %vm7136 = vweird.f32 %v7130
    %vm7137 = vweird.f32 %v7131
    %vm7138 = vmor %vm7136, %vm7137
    %v7139 = vsel %vm7138, %v7131, %v7135
    %v7140 = vand.u32 2147483647, %v7130
    %vm7141 = vcmp.eq.f32.partialorder %v7140, 8.507059e+37
    %v7142 = vand.u32 %v7130, 2147483648
    %v7143 = vor.u32 1.1754944e-38, %v7142
    %v7144 = vsel %vm7141, %v7143, %v7139
    %v7145 = vmul.f32 1.0, %v7144
    %v7146 = vxor.u32 %v7124, 2147483648
    %v7147 = vmul.f32 %v7146, 1.442695
    %v7148 = vpow.pop %v7147
    %v7149 = vadd.f32 %v7148, 1.0
    %v7150 = vrcp.pop %v7149
    %v7151 = vmul.f32 %v7149, %v7150
    %v7152 = vsub.f32 1.0, %v7151
    %v7153 = vmul.f32 %v7150, %v7152
    %v7154 = vadd.f32 %v7150, %v7153
    %vm7155 = vweird.f32 %v7149
    %vm7156 = vweird.f32 %v7150
    %vm7157 = vmor %vm7155, %vm7156
    %v7158 = vsel %vm7157, %v7150, %v7154
    %v7159 = vand.u32 2147483647, %v7149
    %vm7160 = vcmp.eq.f32.partialorder %v7159, 8.507059e+37
    %v7161 = vand.u32 %v7149, 2147483648
    %v7162 = vor.u32 1.1754944e-38, %v7161
    %v7163 = vsel %vm7160, %v7162, %v7158
    %v7164 = vmul.f32 1.0, %v7163
    %v7165 = vtanh.pop %v7125
    %v7166 = vxor.u32 %v7126, 2147483648
    %v7167 = vmul.f32 %v7166, 1.442695
    %v7168 = vpow.pop %v7167
    %v7169 = vadd.f32 %v7168, 1.0
    %v7170 = vrcp.pop %v7169
    %v7171 = vmul.f32 %v7169, %v7170
    %v7172 = vsub.f32 1.0, %v7171
    %v7173 = vmul.f32 %v7170, %v7172
    %v7174 = vadd.f32 %v7170, %v7173
    %vm7175 = vweird.f32 %v7169
    %vm7176 = vweird.f32 %v7170
    %vm7177 = vmor %vm7175, %vm7176
    %v7178 = vsel %vm7177, %v7170, %v7174
    %v7179 = vand.u32 2147483647, %v7169
    %vm7180 = vcmp.eq.f32.partialorder %v7179, 8.507059e+37
    %v7181 = vand.u32 %v7169, 2147483648
    %v7182 = vor.u32 1.1754944e-38, %v7181
    %v7183 = vsel %vm7180, %v7182, %v7178
    %v7184 = vmul.f32 1.0, %v7183
    %v7186 = vrot.slane %v7024, 6
    %v7188 = vmul.f32 %v7164, %v7186
    %v7189 = vmul.f32 %v7145, %v7165
    %v7190 = vadd.f32 %v7188, %v7189
    %v7191 = vtanh.pop %v7190
    %v7192 = vmul.f32 %v7184, %v7191
    %v7193 = vld [vmem:[#allocation5 + $0x20] sm:$0x30]
    %v7194 = vld [vmem:[#allocation5 + $0x28] sm:$0x30]
    %v7195 = vld [vmem:[#allocation5 + $0x30] sm:$0x30]
    %v7196 = vld [vmem:[#allocation5 + $0x38] sm:$0x30]
    %v7198 = vrot.slane %v7192, 2
    %7200 = vmatpush.msra.mxu0 %v6215
    %7201 = vmatpush.msra.mxu0 %v6211
    %7202 = vmatpush.msra.mxu0 %v6207
    %7203 = vmatpush.msra.mxu0 %v6203
    %7204 = vmatpush.msra.mxu0 %v6199
    %7205 = vmatpush.msra.mxu0 %v6195
    %7206 = vmatpush.msra.mxu0 %v6191
    %7207 = vmatpush.msra.mxu0 %v6187
    %7208 = vmatpush.msra.mxu0 %v6183
    %7209 = vmatpush.msra.mxu0 %v6179
    %7210 = vmatpush.msra.mxu0 %v6175
    %7211 = vmatpush.msra.mxu0 %v6171
    %7212 = vmatpush.msra.mxu0 %v6167
    %7213 = vmatpush.msra.mxu0 %v6163
    %7214 = vmatpush.msra.mxu0 %v6159
    %7215 = vmatpush.msra.mxu0 %v6155
    %7216 = vmatmul.f32.gmra.mxu0 %v7198
    %v7217 = vpop.f32.mrf.mxu0
    %v7218 = vadd.f32 0.0, %v7217
    %7219 = vdwg.mxu0
    %7220 = vmatpush.msra.mxu0 %v6216
    %7221 = vmatpush.msra.mxu0 %v6212
    %7222 = vmatpush.msra.mxu0 %v6208
    %7223 = vmatpush.msra.mxu0 %v6204
    %7224 = vmatpush.msra.mxu0 %v6200
    %7225 = vmatpush.msra.mxu0 %v6196
    %7226 = vmatpush.msra.mxu0 %v6192
    %7227 = vmatpush.msra.mxu0 %v6188
    %7228 = vmatpush.msra.mxu0 %v6184
    %7229 = vmatpush.msra.mxu0 %v6180
    %7230 = vmatpush.msra.mxu0 %v6176
    %7231 = vmatpush.msra.mxu0 %v6172
    %7232 = vmatpush.msra.mxu0 %v6168
    %7233 = vmatpush.msra.mxu0 %v6164
    %7234 = vmatpush.msra.mxu0 %v6160
    %7235 = vmatpush.msra.mxu0 %v6156
    %7236 = vmatmul.f32.gmra.mxu0 %v7198
    %v7237 = vpop.f32.mrf.mxu0
    %v7238 = vadd.f32 0.0, %v7237
    %7239 = vdwg.mxu0
    %7240 = vmatpush.msra.mxu0 %v6217
    %7241 = vmatpush.msra.mxu0 %v6213
    %7242 = vmatpush.msra.mxu0 %v6209
    %7243 = vmatpush.msra.mxu0 %v6205
    %7244 = vmatpush.msra.mxu0 %v6201
    %7245 = vmatpush.msra.mxu0 %v6197
    %7246 = vmatpush.msra.mxu0 %v6193
    %7247 = vmatpush.msra.mxu0 %v6189
    %7248 = vmatpush.msra.mxu0 %v6185
    %7249 = vmatpush.msra.mxu0 %v6181
    %7250 = vmatpush.msra.mxu0 %v6177
    %7251 = vmatpush.msra.mxu0 %v6173
    %7252 = vmatpush.msra.mxu0 %v6169
    %7253 = vmatpush.msra.mxu0 %v6165
    %7254 = vmatpush.msra.mxu0 %v6161
    %7255 = vmatpush.msra.mxu0 %v6157
    %7256 = vmatmul.f32.gmra.mxu0 %v7198
    %v7257 = vpop.f32.mrf.mxu0
    %v7258 = vadd.f32 0.0, %v7257
    %7259 = vdwg.mxu0
    %7260 = vmatpush.msra.mxu0 %v6218
    %7261 = vmatpush.msra.mxu0 %v6214
    %7262 = vmatpush.msra.mxu0 %v6210
    %7263 = vmatpush.msra.mxu0 %v6206
    %7264 = vmatpush.msra.mxu0 %v6202
    %7265 = vmatpush.msra.mxu0 %v6198
    %7266 = vmatpush.msra.mxu0 %v6194
    %7267 = vmatpush.msra.mxu0 %v6190
    %7268 = vmatpush.msra.mxu0 %v6186
    %7269 = vmatpush.msra.mxu0 %v6182
    %7270 = vmatpush.msra.mxu0 %v6178
    %7271 = vmatpush.msra.mxu0 %v6174
    %7272 = vmatpush.msra.mxu0 %v6170
    %7273 = vmatpush.msra.mxu0 %v6166
    %7274 = vmatpush.msra.mxu0 %v6162
    %7275 = vmatpush.msra.mxu0 %v6158
    %7276 = vmatmul.f32.gmra.mxu0 %v7198
    %v7277 = vpop.f32.mrf.mxu0
    %v7278 = vadd.f32 0.0, %v7277
    %7279 = vdwg.mxu0
    %v7284 = vrot.slane %v7218, 4
    %v7285 = vrot.slane %v7238, 4
    %v7286 = vrot.slane %v7258, 4
    %v7287 = vrot.slane %v7278, 4
    %v7292 = vadd.f32 %v7193, %v7284
    %v7293 = vadd.f32 %v7194, %v7285
    %v7294 = vadd.f32 %v7195, %v7286
    %v7295 = vadd.f32 %v7196, %v7287
    %v7296 = vxor.u32 %v7292, 2147483648
    %v7297 = vmul.f32 %v7296, 1.442695
    %v7298 = vpow.pop %v7297
    %v7299 = vadd.f32 %v7298, 1.0
    %v7300 = vrcp.pop %v7299
    %v7301 = vmul.f32 %v7299, %v7300
    %v7302 = vsub.f32 1.0, %v7301
    %v7303 = vmul.f32 %v7300, %v7302
    %v7304 = vadd.f32 %v7300, %v7303
    %vm7305 = vweird.f32 %v7299
    %vm7306 = vweird.f32 %v7300
    %vm7307 = vmor %vm7305, %vm7306
    %v7308 = vsel %vm7307, %v7300, %v7304
    %v7309 = vand.u32 2147483647, %v7299
    %vm7310 = vcmp.eq.f32.partialorder %v7309, 8.507059e+37
    %v7311 = vand.u32 %v7299, 2147483648
    %v7312 = vor.u32 1.1754944e-38, %v7311
    %v7313 = vsel %vm7310, %v7312, %v7308
    %v7314 = vmul.f32 1.0, %v7313
    %v7315 = vxor.u32 %v7293, 2147483648
    %v7316 = vmul.f32 %v7315, 1.442695
    %v7317 = vpow.pop %v7316
    %v7318 = vadd.f32 %v7317, 1.0
    %v7319 = vrcp.pop %v7318
    %v7320 = vmul.f32 %v7318, %v7319
    %v7321 = vsub.f32 1.0, %v7320
    %v7322 = vmul.f32 %v7319, %v7321
    %v7323 = vadd.f32 %v7319, %v7322
    %vm7324 = vweird.f32 %v7318
    %vm7325 = vweird.f32 %v7319
    %vm7326 = vmor %vm7324, %vm7325
    %v7327 = vsel %vm7326, %v7319, %v7323
    %v7328 = vand.u32 2147483647, %v7318
    %vm7329 = vcmp.eq.f32.partialorder %v7328, 8.507059e+37
    %v7330 = vand.u32 %v7318, 2147483648
    %v7331 = vor.u32 1.1754944e-38, %v7330
    %v7332 = vsel %vm7329, %v7331, %v7327
    %v7333 = vmul.f32 1.0, %v7332
    %v7334 = vtanh.pop %v7294
    %v7335 = vxor.u32 %v7295, 2147483648
    %v7336 = vmul.f32 %v7335, 1.442695
    %v7337 = vpow.pop %v7336
    %v7338 = vadd.f32 %v7337, 1.0
    %v7339 = vrcp.pop %v7338
    %v7340 = vmul.f32 %v7338, %v7339
    %v7341 = vsub.f32 1.0, %v7340
    %v7342 = vmul.f32 %v7339, %v7341
    %v7343 = vadd.f32 %v7339, %v7342
    %vm7344 = vweird.f32 %v7338
    %vm7345 = vweird.f32 %v7339
    %vm7346 = vmor %vm7344, %vm7345
    %v7347 = vsel %vm7346, %v7339, %v7343
    %v7348 = vand.u32 2147483647, %v7338
    %vm7349 = vcmp.eq.f32.partialorder %v7348, 8.507059e+37
    %v7350 = vand.u32 %v7338, 2147483648
    %v7351 = vor.u32 1.1754944e-38, %v7350
    %v7352 = vsel %vm7349, %v7351, %v7347
    %v7353 = vmul.f32 1.0, %v7352
    %v7355 = vrot.slane %v7190, 6
    %v7357 = vmul.f32 %v7333, %v7355
    %v7358 = vmul.f32 %v7314, %v7334
    %v7359 = vadd.f32 %v7357, %v7358
    %v7360 = vtanh.pop %v7359
    %v7361 = vmul.f32 %v7353, %v7360
    %v7362 = vld [vmem:[#allocation5 + $0x20] sm:$0xc0]
    %v7363 = vld [vmem:[#allocation5 + $0x28] sm:$0xc0]
    %v7364 = vld [vmem:[#allocation5 + $0x30] sm:$0xc0]
    %v7365 = vld [vmem:[#allocation5 + $0x38] sm:$0xc0]
    %v7367 = vrot.slane %v7361, 4
    %7369 = vmatpush.msra.mxu0 %v6215
    %7370 = vmatpush.msra.mxu0 %v6211
    %7371 = vmatpush.msra.mxu0 %v6207
    %7372 = vmatpush.msra.mxu0 %v6203
    %7373 = vmatpush.msra.mxu0 %v6199
    %7374 = vmatpush.msra.mxu0 %v6195
    %7375 = vmatpush.msra.mxu0 %v6191
    %7376 = vmatpush.msra.mxu0 %v6187
    %7377 = vmatpush.msra.mxu0 %v6183
    %7378 = vmatpush.msra.mxu0 %v6179
    %7379 = vmatpush.msra.mxu0 %v6175
    %7380 = vmatpush.msra.mxu0 %v6171
    %7381 = vmatpush.msra.mxu0 %v6167
    %7382 = vmatpush.msra.mxu0 %v6163
    %7383 = vmatpush.msra.mxu0 %v6159
    %7384 = vmatpush.msra.mxu0 %v6155
    %7385 = vmatmul.f32.gmra.mxu0 %v7367
    %v7386 = vpop.f32.mrf.mxu0
    %v7387 = vadd.f32 0.0, %v7386
    %7388 = vdwg.mxu0
    %7389 = vmatpush.msra.mxu0 %v6216
    %7390 = vmatpush.msra.mxu0 %v6212
    %7391 = vmatpush.msra.mxu0 %v6208
    %7392 = vmatpush.msra.mxu0 %v6204
    %7393 = vmatpush.msra.mxu0 %v6200
    %7394 = vmatpush.msra.mxu0 %v6196
    %7395 = vmatpush.msra.mxu0 %v6192
    %7396 = vmatpush.msra.mxu0 %v6188
    %7397 = vmatpush.msra.mxu0 %v6184
    %7398 = vmatpush.msra.mxu0 %v6180
    %7399 = vmatpush.msra.mxu0 %v6176
    %7400 = vmatpush.msra.mxu0 %v6172
    %7401 = vmatpush.msra.mxu0 %v6168
    %7402 = vmatpush.msra.mxu0 %v6164
    %7403 = vmatpush.msra.mxu0 %v6160
    %7404 = vmatpush.msra.mxu0 %v6156
    %7405 = vmatmul.f32.gmra.mxu0 %v7367
    %v7406 = vpop.f32.mrf.mxu0
    %v7407 = vadd.f32 0.0, %v7406
    %7408 = vdwg.mxu0
    %7409 = vmatpush.msra.mxu0 %v6217
    %7410 = vmatpush.msra.mxu0 %v6213
    %7411 = vmatpush.msra.mxu0 %v6209
    %7412 = vmatpush.msra.mxu0 %v6205
    %7413 = vmatpush.msra.mxu0 %v6201
    %7414 = vmatpush.msra.mxu0 %v6197
    %7415 = vmatpush.msra.mxu0 %v6193
    %7416 = vmatpush.msra.mxu0 %v6189
    %7417 = vmatpush.msra.mxu0 %v6185
    %7418 = vmatpush.msra.mxu0 %v6181
    %7419 = vmatpush.msra.mxu0 %v6177
    %7420 = vmatpush.msra.mxu0 %v6173
    %7421 = vmatpush.msra.mxu0 %v6169
    %7422 = vmatpush.msra.mxu0 %v6165
    %7423 = vmatpush.msra.mxu0 %v6161
    %7424 = vmatpush.msra.mxu0 %v6157
    %7425 = vmatmul.f32.gmra.mxu0 %v7367
    %v7426 = vpop.f32.mrf.mxu0
    %v7427 = vadd.f32 0.0, %v7426
    %7428 = vdwg.mxu0
    %7429 = vmatpush.msra.mxu0 %v6218
    %7430 = vmatpush.msra.mxu0 %v6214
    %7431 = vmatpush.msra.mxu0 %v6210
    %7432 = vmatpush.msra.mxu0 %v6206
    %7433 = vmatpush.msra.mxu0 %v6202
    %7434 = vmatpush.msra.mxu0 %v6198
    %7435 = vmatpush.msra.mxu0 %v6194
    %7436 = vmatpush.msra.mxu0 %v6190
    %7437 = vmatpush.msra.mxu0 %v6186
    %7438 = vmatpush.msra.mxu0 %v6182
    %7439 = vmatpush.msra.mxu0 %v6178
    %7440 = vmatpush.msra.mxu0 %v6174
    %7441 = vmatpush.msra.mxu0 %v6170
    %7442 = vmatpush.msra.mxu0 %v6166
    %7443 = vmatpush.msra.mxu0 %v6162
    %7444 = vmatpush.msra.mxu0 %v6158
    %7445 = vmatmul.f32.gmra.mxu0 %v7367
    %v7446 = vpop.f32.mrf.mxu0
    %v7447 = vadd.f32 0.0, %v7446
    %7448 = vdwg.mxu0
    %v7453 = vrot.slane %v7387, 2
    %v7454 = vrot.slane %v7407, 2
    %v7455 = vrot.slane %v7427, 2
    %v7456 = vrot.slane %v7447, 2
    %v7461 = vadd.f32 %v7362, %v7453
    %v7462 = vadd.f32 %v7363, %v7454
    %v7463 = vadd.f32 %v7364, %v7455
    %v7464 = vadd.f32 %v7365, %v7456
    %v7465 = vxor.u32 %v7461, 2147483648
    %v7466 = vmul.f32 %v7465, 1.442695
    %v7467 = vpow.pop %v7466
    %v7468 = vadd.f32 %v7467, 1.0
    %v7469 = vrcp.pop %v7468
    %v7470 = vmul.f32 %v7468, %v7469
    %v7471 = vsub.f32 1.0, %v7470
    %v7472 = vmul.f32 %v7469, %v7471
    %v7473 = vadd.f32 %v7469, %v7472
    %vm7474 = vweird.f32 %v7468
    %vm7475 = vweird.f32 %v7469
    %vm7476 = vmor %vm7474, %vm7475
    %v7477 = vsel %vm7476, %v7469, %v7473
    %v7478 = vand.u32 2147483647, %v7468
    %vm7479 = vcmp.eq.f32.partialorder %v7478, 8.507059e+37
    %v7480 = vand.u32 %v7468, 2147483648
    %v7481 = vor.u32 1.1754944e-38, %v7480
    %v7482 = vsel %vm7479, %v7481, %v7477
    %v7483 = vmul.f32 1.0, %v7482
    %v7484 = vxor.u32 %v7462, 2147483648
    %v7485 = vmul.f32 %v7484, 1.442695
    %v7486 = vpow.pop %v7485
    %v7487 = vadd.f32 %v7486, 1.0
    %v7488 = vrcp.pop %v7487
    %v7489 = vmul.f32 %v7487, %v7488
    %v7490 = vsub.f32 1.0, %v7489
    %v7491 = vmul.f32 %v7488, %v7490
    %v7492 = vadd.f32 %v7488, %v7491
    %vm7493 = vweird.f32 %v7487
    %vm7494 = vweird.f32 %v7488
    %vm7495 = vmor %vm7493, %vm7494
    %v7496 = vsel %vm7495, %v7488, %v7492
    %v7497 = vand.u32 2147483647, %v7487
    %vm7498 = vcmp.eq.f32.partialorder %v7497, 8.507059e+37
    %v7499 = vand.u32 %v7487, 2147483648
    %v7500 = vor.u32 1.1754944e-38, %v7499
    %v7501 = vsel %vm7498, %v7500, %v7496
    %v7502 = vmul.f32 1.0, %v7501
    %v7503 = vtanh.pop %v7463
    %v7504 = vxor.u32 %v7464, 2147483648
    %v7505 = vmul.f32 %v7504, 1.442695
    %v7506 = vpow.pop %v7505
    %v7507 = vadd.f32 %v7506, 1.0
    %v7508 = vrcp.pop %v7507
    %v7509 = vmul.f32 %v7507, %v7508
    %v7510 = vsub.f32 1.0, %v7509
    %v7511 = vmul.f32 %v7508, %v7510
    %v7512 = vadd.f32 %v7508, %v7511
    %vm7513 = vweird.f32 %v7507
    %vm7514 = vweird.f32 %v7508
    %vm7515 = vmor %vm7513, %vm7514
    %v7516 = vsel %vm7515, %v7508, %v7512
    %v7517 = vand.u32 2147483647, %v7507
    %vm7518 = vcmp.eq.f32.partialorder %v7517, 8.507059e+37
    %v7519 = vand.u32 %v7507, 2147483648
    %v7520 = vor.u32 1.1754944e-38, %v7519
    %v7521 = vsel %vm7518, %v7520, %v7516
    %v7522 = vmul.f32 1.0, %v7521
    %v7524 = vrot.slane %v7359, 6
    %v7526 = vmul.f32 %v7502, %v7524
    %v7527 = vmul.f32 %v7483, %v7503
    %v7528 = vadd.f32 %v7526, %v7527
    %v7529 = vtanh.pop %v7528
    %v7530 = vmul.f32 %v7522, %v7529
    %v7531 = vld [vmem:[#allocation5 + $0x40] sm:$0x3]
    %v7532 = vld [vmem:[#allocation5 + $0x48] sm:$0x3]
    %v7533 = vld [vmem:[#allocation5 + $0x50] sm:$0x3]
    %v7534 = vld [vmem:[#allocation5 + $0x58] sm:$0x3]
    %v7536 = vrot.slane %v7530, 6
    %7538 = vmatpush.msra.mxu0 %v6215
    %7539 = vmatpush.msra.mxu0 %v6211
    %7540 = vmatpush.msra.mxu0 %v6207
    %7541 = vmatpush.msra.mxu0 %v6203
    %7542 = vmatpush.msra.mxu0 %v6199
    %7543 = vmatpush.msra.mxu0 %v6195
    %7544 = vmatpush.msra.mxu0 %v6191
    %7545 = vmatpush.msra.mxu0 %v6187
    %7546 = vmatpush.msra.mxu0 %v6183
    %7547 = vmatpush.msra.mxu0 %v6179
    %7548 = vmatpush.msra.mxu0 %v6175
    %7549 = vmatpush.msra.mxu0 %v6171
    %7550 = vmatpush.msra.mxu0 %v6167
    %7551 = vmatpush.msra.mxu0 %v6163
    %7552 = vmatpush.msra.mxu0 %v6159
    %7553 = vmatpush.msra.mxu0 %v6155
    %7554 = vmatmul.f32.gmra.mxu0 %v7536
    %v7555 = vpop.f32.mrf.mxu0
    %v7556 = vadd.f32 0.0, %v7555
    %7557 = vdwg.mxu0
    %7558 = vmatpush.msra.mxu0 %v6216
    %7559 = vmatpush.msra.mxu0 %v6212
    %7560 = vmatpush.msra.mxu0 %v6208
    %7561 = vmatpush.msra.mxu0 %v6204
    %7562 = vmatpush.msra.mxu0 %v6200
    %7563 = vmatpush.msra.mxu0 %v6196
    %7564 = vmatpush.msra.mxu0 %v6192
    %7565 = vmatpush.msra.mxu0 %v6188
    %7566 = vmatpush.msra.mxu0 %v6184
    %7567 = vmatpush.msra.mxu0 %v6180
    %7568 = vmatpush.msra.mxu0 %v6176
    %7569 = vmatpush.msra.mxu0 %v6172
    %7570 = vmatpush.msra.mxu0 %v6168
    %7571 = vmatpush.msra.mxu0 %v6164
    %7572 = vmatpush.msra.mxu0 %v6160
    %7573 = vmatpush.msra.mxu0 %v6156
    %7574 = vmatmul.f32.gmra.mxu0 %v7536
    %v7575 = vpop.f32.mrf.mxu0
    %v7576 = vadd.f32 0.0, %v7575
    %7577 = vdwg.mxu0
    %7578 = vmatpush.msra.mxu0 %v6217
    %7579 = vmatpush.msra.mxu0 %v6213
    %7580 = vmatpush.msra.mxu0 %v6209
    %7581 = vmatpush.msra.mxu0 %v6205
    %7582 = vmatpush.msra.mxu0 %v6201
    %7583 = vmatpush.msra.mxu0 %v6197
    %7584 = vmatpush.msra.mxu0 %v6193
    %7585 = vmatpush.msra.mxu0 %v6189
    %7586 = vmatpush.msra.mxu0 %v6185
    %7587 = vmatpush.msra.mxu0 %v6181
    %7588 = vmatpush.msra.mxu0 %v6177
    %7589 = vmatpush.msra.mxu0 %v6173
    %7590 = vmatpush.msra.mxu0 %v6169
    %7591 = vmatpush.msra.mxu0 %v6165
    %7592 = vmatpush.msra.mxu0 %v6161
    %7593 = vmatpush.msra.mxu0 %v6157
    %7594 = vmatmul.f32.gmra.mxu0 %v7536
    %v7595 = vpop.f32.mrf.mxu0
    %v7596 = vadd.f32 0.0, %v7595
    %7597 = vdwg.mxu0
    %7598 = vmatpush.msra.mxu0 %v6218
    %7599 = vmatpush.msra.mxu0 %v6214
    %7600 = vmatpush.msra.mxu0 %v6210
    %7601 = vmatpush.msra.mxu0 %v6206
    %7602 = vmatpush.msra.mxu0 %v6202
    %7603 = vmatpush.msra.mxu0 %v6198
    %7604 = vmatpush.msra.mxu0 %v6194
    %7605 = vmatpush.msra.mxu0 %v6190
    %7606 = vmatpush.msra.mxu0 %v6186
    %7607 = vmatpush.msra.mxu0 %v6182
    %7608 = vmatpush.msra.mxu0 %v6178
    %7609 = vmatpush.msra.mxu0 %v6174
    %7610 = vmatpush.msra.mxu0 %v6170
    %7611 = vmatpush.msra.mxu0 %v6166
    %7612 = vmatpush.msra.mxu0 %v6162
    %7613 = vmatpush.msra.mxu0 %v6158
    %7614 = vmatmul.f32.gmra.mxu0 %v7536
    %v7615 = vpop.f32.mrf.mxu0
    %v7616 = vadd.f32 0.0, %v7615
    %7617 = vdwg.mxu0
    %v7618 = vadd.f32 %v7531, %v7556
    %v7619 = vadd.f32 %v7532, %v7576
    %v7620 = vadd.f32 %v7533, %v7596
    %v7621 = vadd.f32 %v7534, %v7616
    %v7622 = vxor.u32 %v7618, 2147483648
    %v7623 = vmul.f32 %v7622, 1.442695
    %v7624 = vpow.pop %v7623
    %v7625 = vadd.f32 %v7624, 1.0
    %v7626 = vrcp.pop %v7625
    %v7627 = vmul.f32 %v7625, %v7626
    %v7628 = vsub.f32 1.0, %v7627
    %v7629 = vmul.f32 %v7626, %v7628
    %v7630 = vadd.f32 %v7626, %v7629
    %vm7631 = vweird.f32 %v7625
    %vm7632 = vweird.f32 %v7626
    %vm7633 = vmor %vm7631, %vm7632
    %v7634 = vsel %vm7633, %v7626, %v7630
    %v7635 = vand.u32 2147483647, %v7625
    %vm7636 = vcmp.eq.f32.partialorder %v7635, 8.507059e+37
    %v7637 = vand.u32 %v7625, 2147483648
    %v7638 = vor.u32 1.1754944e-38, %v7637
    %v7639 = vsel %vm7636, %v7638, %v7634
    %v7640 = vmul.f32 1.0, %v7639
    %v7641 = vxor.u32 %v7619, 2147483648
    %v7642 = vmul.f32 %v7641, 1.442695
    %v7643 = vpow.pop %v7642
    %v7644 = vadd.f32 %v7643, 1.0
    %v7645 = vrcp.pop %v7644
    %v7646 = vmul.f32 %v7644, %v7645
    %v7647 = vsub.f32 1.0, %v7646
    %v7648 = vmul.f32 %v7645, %v7647
    %v7649 = vadd.f32 %v7645, %v7648
    %vm7650 = vweird.f32 %v7644
    %vm7651 = vweird.f32 %v7645
    %vm7652 = vmor %vm7650, %vm7651
    %v7653 = vsel %vm7652, %v7645, %v7649
    %v7654 = vand.u32 2147483647, %v7644
    %vm7655 = vcmp.eq.f32.partialorder %v7654, 8.507059e+37
    %v7656 = vand.u32 %v7644, 2147483648
    %v7657 = vor.u32 1.1754944e-38, %v7656
    %v7658 = vsel %vm7655, %v7657, %v7653
    %v7659 = vmul.f32 1.0, %v7658
    %v7660 = vtanh.pop %v7620
    %v7661 = vxor.u32 %v7621, 2147483648
    %v7662 = vmul.f32 %v7661, 1.442695
    %v7663 = vpow.pop %v7662
    %v7664 = vadd.f32 %v7663, 1.0
    %v7665 = vrcp.pop %v7664
    %v7666 = vmul.f32 %v7664, %v7665
    %v7667 = vsub.f32 1.0, %v7666
    %v7668 = vmul.f32 %v7665, %v7667
    %v7669 = vadd.f32 %v7665, %v7668
    %vm7670 = vweird.f32 %v7664
    %vm7671 = vweird.f32 %v7665
    %vm7672 = vmor %vm7670, %vm7671
    %v7673 = vsel %vm7672, %v7665, %v7669
    %v7674 = vand.u32 2147483647, %v7664
    %vm7675 = vcmp.eq.f32.partialorder %v7674, 8.507059e+37
    %v7676 = vand.u32 %v7664, 2147483648
    %v7677 = vor.u32 1.1754944e-38, %v7676
    %v7678 = vsel %vm7675, %v7677, %v7673
    %v7679 = vmul.f32 1.0, %v7678
    %v7681 = vrot.slane %v7528, 6
    %v7683 = vmul.f32 %v7659, %v7681
    %v7684 = vmul.f32 %v7640, %v7660
    %v7685 = vadd.f32 %v7683, %v7684
    %v7686 = vtanh.pop %v7685
    %v7687 = vmul.f32 %v7679, %v7686
    %v7688 = vld [vmem:[#allocation5 + $0x40] sm:$0xc]
    %v7689 = vld [vmem:[#allocation5 + $0x48] sm:$0xc]
    %v7690 = vld [vmem:[#allocation5 + $0x50] sm:$0xc]
    %v7691 = vld [vmem:[#allocation5 + $0x58] sm:$0xc]
    %7692 = vmatpush.msra.mxu0 %v6215
    %7693 = vmatpush.msra.mxu0 %v6211
    %7694 = vmatpush.msra.mxu0 %v6207
    %7695 = vmatpush.msra.mxu0 %v6203
    %7696 = vmatpush.msra.mxu0 %v6199
    %7697 = vmatpush.msra.mxu0 %v6195
    %7698 = vmatpush.msra.mxu0 %v6191
    %7699 = vmatpush.msra.mxu0 %v6187
    %7700 = vmatpush.msra.mxu0 %v6183
    %7701 = vmatpush.msra.mxu0 %v6179
    %7702 = vmatpush.msra.mxu0 %v6175
    %7703 = vmatpush.msra.mxu0 %v6171
    %7704 = vmatpush.msra.mxu0 %v6167
    %7705 = vmatpush.msra.mxu0 %v6163
    %7706 = vmatpush.msra.mxu0 %v6159
    %7707 = vmatpush.msra.mxu0 %v6155
    %7708 = vmatmul.f32.gmra.mxu0 %v7687
    %v7709 = vpop.f32.mrf.mxu0
    %v7710 = vadd.f32 0.0, %v7709
    %7711 = vdwg.mxu0
    %7712 = vmatpush.msra.mxu0 %v6216
    %7713 = vmatpush.msra.mxu0 %v6212
    %7714 = vmatpush.msra.mxu0 %v6208
    %7715 = vmatpush.msra.mxu0 %v6204
    %7716 = vmatpush.msra.mxu0 %v6200
    %7717 = vmatpush.msra.mxu0 %v6196
    %7718 = vmatpush.msra.mxu0 %v6192
    %7719 = vmatpush.msra.mxu0 %v6188
    %7720 = vmatpush.msra.mxu0 %v6184
    %7721 = vmatpush.msra.mxu0 %v6180
    %7722 = vmatpush.msra.mxu0 %v6176
    %7723 = vmatpush.msra.mxu0 %v6172
    %7724 = vmatpush.msra.mxu0 %v6168
    %7725 = vmatpush.msra.mxu0 %v6164
    %7726 = vmatpush.msra.mxu0 %v6160
    %7727 = vmatpush.msra.mxu0 %v6156
    %7728 = vmatmul.f32.gmra.mxu0 %v7687
    %v7729 = vpop.f32.mrf.mxu0
    %v7730 = vadd.f32 0.0, %v7729
    %7731 = vdwg.mxu0
    %7732 = vmatpush.msra.mxu0 %v6217
    %7733 = vmatpush.msra.mxu0 %v6213
    %7734 = vmatpush.msra.mxu0 %v6209
    %7735 = vmatpush.msra.mxu0 %v6205
    %7736 = vmatpush.msra.mxu0 %v6201
    %7737 = vmatpush.msra.mxu0 %v6197
    %7738 = vmatpush.msra.mxu0 %v6193
    %7739 = vmatpush.msra.mxu0 %v6189
    %7740 = vmatpush.msra.mxu0 %v6185
    %7741 = vmatpush.msra.mxu0 %v6181
    %7742 = vmatpush.msra.mxu0 %v6177
    %7743 = vmatpush.msra.mxu0 %v6173
    %7744 = vmatpush.msra.mxu0 %v6169
    %7745 = vmatpush.msra.mxu0 %v6165
    %7746 = vmatpush.msra.mxu0 %v6161
    %7747 = vmatpush.msra.mxu0 %v6157
    %7748 = vmatmul.f32.gmra.mxu0 %v7687
    %v7749 = vpop.f32.mrf.mxu0
    %v7750 = vadd.f32 0.0, %v7749
    %7751 = vdwg.mxu0
    %7752 = vmatpush.msra.mxu0 %v6218
    %7753 = vmatpush.msra.mxu0 %v6214
    %7754 = vmatpush.msra.mxu0 %v6210
    %7755 = vmatpush.msra.mxu0 %v6206
    %7756 = vmatpush.msra.mxu0 %v6202
    %7757 = vmatpush.msra.mxu0 %v6198
    %7758 = vmatpush.msra.mxu0 %v6194
    %7759 = vmatpush.msra.mxu0 %v6190
    %7760 = vmatpush.msra.mxu0 %v6186
    %7761 = vmatpush.msra.mxu0 %v6182
    %7762 = vmatpush.msra.mxu0 %v6178
    %7763 = vmatpush.msra.mxu0 %v6174
    %7764 = vmatpush.msra.mxu0 %v6170
    %7765 = vmatpush.msra.mxu0 %v6166
    %7766 = vmatpush.msra.mxu0 %v6162
    %7767 = vmatpush.msra.mxu0 %v6158
    %7768 = vmatmul.f32.gmra.mxu0 %v7687
    %v7769 = vpop.f32.mrf.mxu0
    %v7770 = vadd.f32 0.0, %v7769
    %7771 = vdwg.mxu0
    %v7776 = vrot.slane %v7710, 6
    %v7777 = vrot.slane %v7730, 6
    %v7778 = vrot.slane %v7750, 6
    %v7779 = vrot.slane %v7770, 6
    %v7784 = vadd.f32 %v7688, %v7776
    %v7785 = vadd.f32 %v7689, %v7777
    %v7786 = vadd.f32 %v7690, %v7778
    %v7787 = vadd.f32 %v7691, %v7779
    %v7788 = vxor.u32 %v7784, 2147483648
    %v7789 = vmul.f32 %v7788, 1.442695
    %v7790 = vpow.pop %v7789
    %v7791 = vadd.f32 %v7790, 1.0
    %v7792 = vrcp.pop %v7791
    %v7793 = vmul.f32 %v7791, %v7792
    %v7794 = vsub.f32 1.0, %v7793
    %v7795 = vmul.f32 %v7792, %v7794
    %v7796 = vadd.f32 %v7792, %v7795
    %vm7797 = vweird.f32 %v7791
    %vm7798 = vweird.f32 %v7792
    %vm7799 = vmor %vm7797, %vm7798
    %v7800 = vsel %vm7799, %v7792, %v7796
    %v7801 = vand.u32 2147483647, %v7791
    %vm7802 = vcmp.eq.f32.partialorder %v7801, 8.507059e+37
    %v7803 = vand.u32 %v7791, 2147483648
    %v7804 = vor.u32 1.1754944e-38, %v7803
    %v7805 = vsel %vm7802, %v7804, %v7800
    %v7806 = vmul.f32 1.0, %v7805
    %v7807 = vxor.u32 %v7785, 2147483648
    %v7808 = vmul.f32 %v7807, 1.442695
    %v7809 = vpow.pop %v7808
    %v7810 = vadd.f32 %v7809, 1.0
    %v7811 = vrcp.pop %v7810
    %v7812 = vmul.f32 %v7810, %v7811
    %v7813 = vsub.f32 1.0, %v7812
    %v7814 = vmul.f32 %v7811, %v7813
    %v7815 = vadd.f32 %v7811, %v7814
    %vm7816 = vweird.f32 %v7810
    %vm7817 = vweird.f32 %v7811
    %vm7818 = vmor %vm7816, %vm7817
    %v7819 = vsel %vm7818, %v7811, %v7815
    %v7820 = vand.u32 2147483647, %v7810
    %vm7821 = vcmp.eq.f32.partialorder %v7820, 8.507059e+37
    %v7822 = vand.u32 %v7810, 2147483648
    %v7823 = vor.u32 1.1754944e-38, %v7822
    %v7824 = vsel %vm7821, %v7823, %v7819
    %v7825 = vmul.f32 1.0, %v7824
    %v7826 = vtanh.pop %v7786
    %v7827 = vxor.u32 %v7787, 2147483648
    %v7828 = vmul.f32 %v7827, 1.442695
    %v7829 = vpow.pop %v7828
    %v7830 = vadd.f32 %v7829, 1.0
    %v7831 = vrcp.pop %v7830
    %v7832 = vmul.f32 %v7830, %v7831
    %v7833 = vsub.f32 1.0, %v7832
    %v7834 = vmul.f32 %v7831, %v7833
    %v7835 = vadd.f32 %v7831, %v7834
    %vm7836 = vweird.f32 %v7830
    %vm7837 = vweird.f32 %v7831
    %vm7838 = vmor %vm7836, %vm7837
    %v7839 = vsel %vm7838, %v7831, %v7835
    %v7840 = vand.u32 2147483647, %v7830
    %vm7841 = vcmp.eq.f32.partialorder %v7840, 8.507059e+37
    %v7842 = vand.u32 %v7830, 2147483648
    %v7843 = vor.u32 1.1754944e-38, %v7842
    %v7844 = vsel %vm7841, %v7843, %v7839
    %v7845 = vmul.f32 1.0, %v7844
    %v7847 = vrot.slane %v7685, 6
    %v7849 = vmul.f32 %v7825, %v7847
    %v7850 = vmul.f32 %v7806, %v7826
    %v7851 = vadd.f32 %v7849, %v7850
    %v7852 = vtanh.pop %v7851
    %v7853 = vmul.f32 %v7845, %v7852
    %v7854 = vld [vmem:[#allocation5 + $0x40] sm:$0x30]
    %v7855 = vld [vmem:[#allocation5 + $0x48] sm:$0x30]
    %v7856 = vld [vmem:[#allocation5 + $0x50] sm:$0x30]
    %v7857 = vld [vmem:[#allocation5 + $0x58] sm:$0x30]
    %v7859 = vrot.slane %v7853, 2
    %7861 = vmatpush.msra.mxu0 %v6215
    %7862 = vmatpush.msra.mxu0 %v6211
    %7863 = vmatpush.msra.mxu0 %v6207
    %7864 = vmatpush.msra.mxu0 %v6203
    %7865 = vmatpush.msra.mxu0 %v6199
    %7866 = vmatpush.msra.mxu0 %v6195
    %7867 = vmatpush.msra.mxu0 %v6191
    %7868 = vmatpush.msra.mxu0 %v6187
    %7869 = vmatpush.msra.mxu0 %v6183
    %7870 = vmatpush.msra.mxu0 %v6179
    %7871 = vmatpush.msra.mxu0 %v6175
    %7872 = vmatpush.msra.mxu0 %v6171
    %7873 = vmatpush.msra.mxu0 %v6167
    %7874 = vmatpush.msra.mxu0 %v6163
    %7875 = vmatpush.msra.mxu0 %v6159
    %7876 = vmatpush.msra.mxu0 %v6155
    %7877 = vmatmul.f32.gmra.mxu0 %v7859
    %v7878 = vpop.f32.mrf.mxu0
    %v7879 = vadd.f32 0.0, %v7878
    %7880 = vdwg.mxu0
    %7881 = vmatpush.msra.mxu0 %v6216
    %7882 = vmatpush.msra.mxu0 %v6212
    %7883 = vmatpush.msra.mxu0 %v6208
    %7884 = vmatpush.msra.mxu0 %v6204
    %7885 = vmatpush.msra.mxu0 %v6200
    %7886 = vmatpush.msra.mxu0 %v6196
    %7887 = vmatpush.msra.mxu0 %v6192
    %7888 = vmatpush.msra.mxu0 %v6188
    %7889 = vmatpush.msra.mxu0 %v6184
    %7890 = vmatpush.msra.mxu0 %v6180
    %7891 = vmatpush.msra.mxu0 %v6176
    %7892 = vmatpush.msra.mxu0 %v6172
    %7893 = vmatpush.msra.mxu0 %v6168
    %7894 = vmatpush.msra.mxu0 %v6164
    %7895 = vmatpush.msra.mxu0 %v6160
    %7896 = vmatpush.msra.mxu0 %v6156
    %7897 = vmatmul.f32.gmra.mxu0 %v7859
    %v7898 = vpop.f32.mrf.mxu0
    %v7899 = vadd.f32 0.0, %v7898
    %7900 = vdwg.mxu0
    %7901 = vmatpush.msra.mxu0 %v6217
    %7902 = vmatpush.msra.mxu0 %v6213
    %7903 = vmatpush.msra.mxu0 %v6209
    %7904 = vmatpush.msra.mxu0 %v6205
    %7905 = vmatpush.msra.mxu0 %v6201
    %7906 = vmatpush.msra.mxu0 %v6197
    %7907 = vmatpush.msra.mxu0 %v6193
    %7908 = vmatpush.msra.mxu0 %v6189
    %7909 = vmatpush.msra.mxu0 %v6185
    %7910 = vmatpush.msra.mxu0 %v6181
    %7911 = vmatpush.msra.mxu0 %v6177
    %7912 = vmatpush.msra.mxu0 %v6173
    %7913 = vmatpush.msra.mxu0 %v6169
    %7914 = vmatpush.msra.mxu0 %v6165
    %7915 = vmatpush.msra.mxu0 %v6161
    %7916 = vmatpush.msra.mxu0 %v6157
    %7917 = vmatmul.f32.gmra.mxu0 %v7859
    %v7918 = vpop.f32.mrf.mxu0
    %v7919 = vadd.f32 0.0, %v7918
    %7920 = vdwg.mxu0
    %7921 = vmatpush.msra.mxu0 %v6218
    %7922 = vmatpush.msra.mxu0 %v6214
    %7923 = vmatpush.msra.mxu0 %v6210
    %7924 = vmatpush.msra.mxu0 %v6206
    %7925 = vmatpush.msra.mxu0 %v6202
    %7926 = vmatpush.msra.mxu0 %v6198
    %7927 = vmatpush.msra.mxu0 %v6194
    %7928 = vmatpush.msra.mxu0 %v6190
    %7929 = vmatpush.msra.mxu0 %v6186
    %7930 = vmatpush.msra.mxu0 %v6182
    %7931 = vmatpush.msra.mxu0 %v6178
    %7932 = vmatpush.msra.mxu0 %v6174
    %7933 = vmatpush.msra.mxu0 %v6170
    %7934 = vmatpush.msra.mxu0 %v6166
    %7935 = vmatpush.msra.mxu0 %v6162
    %7936 = vmatpush.msra.mxu0 %v6158
    %7937 = vmatmul.f32.gmra.mxu0 %v7859
    %v7938 = vpop.f32.mrf.mxu0
    %v7939 = vadd.f32 0.0, %v7938
    %7940 = vdwg.mxu0
    %v7945 = vrot.slane %v7879, 4
    %v7946 = vrot.slane %v7899, 4
    %v7947 = vrot.slane %v7919, 4
    %v7948 = vrot.slane %v7939, 4
    %v7953 = vadd.f32 %v7854, %v7945
    %v7954 = vadd.f32 %v7855, %v7946
    %v7955 = vadd.f32 %v7856, %v7947
    %v7956 = vadd.f32 %v7857, %v7948
    %v7957 = vxor.u32 %v7953, 2147483648
    %v7958 = vmul.f32 %v7957, 1.442695
    %v7959 = vpow.pop %v7958
    %v7960 = vadd.f32 %v7959, 1.0
    %v7961 = vrcp.pop %v7960
    %v7962 = vmul.f32 %v7960, %v7961
    %v7963 = vsub.f32 1.0, %v7962
    %v7964 = vmul.f32 %v7961, %v7963
    %v7965 = vadd.f32 %v7961, %v7964
    %vm7966 = vweird.f32 %v7960
    %vm7967 = vweird.f32 %v7961
    %vm7968 = vmor %vm7966, %vm7967
    %v7969 = vsel %vm7968, %v7961, %v7965
    %v7970 = vand.u32 2147483647, %v7960
    %vm7971 = vcmp.eq.f32.partialorder %v7970, 8.507059e+37
    %v7972 = vand.u32 %v7960, 2147483648
    %v7973 = vor.u32 1.1754944e-38, %v7972
    %v7974 = vsel %vm7971, %v7973, %v7969
    %v7975 = vmul.f32 1.0, %v7974
    %v7976 = vxor.u32 %v7954, 2147483648
    %v7977 = vmul.f32 %v7976, 1.442695
    %v7978 = vpow.pop %v7977
    %v7979 = vadd.f32 %v7978, 1.0
    %v7980 = vrcp.pop %v7979
    %v7981 = vmul.f32 %v7979, %v7980
    %v7982 = vsub.f32 1.0, %v7981
    %v7983 = vmul.f32 %v7980, %v7982
    %v7984 = vadd.f32 %v7980, %v7983
    %vm7985 = vweird.f32 %v7979
    %vm7986 = vweird.f32 %v7980
    %vm7987 = vmor %vm7985, %vm7986
    %v7988 = vsel %vm7987, %v7980, %v7984
    %v7989 = vand.u32 2147483647, %v7979
    %vm7990 = vcmp.eq.f32.partialorder %v7989, 8.507059e+37
    %v7991 = vand.u32 %v7979, 2147483648
    %v7992 = vor.u32 1.1754944e-38, %v7991
    %v7993 = vsel %vm7990, %v7992, %v7988
    %v7994 = vmul.f32 1.0, %v7993
    %v7995 = vtanh.pop %v7955
    %v7996 = vxor.u32 %v7956, 2147483648
    %v7997 = vmul.f32 %v7996, 1.442695
    %v7998 = vpow.pop %v7997
    %v7999 = vadd.f32 %v7998, 1.0
    %v8000 = vrcp.pop %v7999
    %v8001 = vmul.f32 %v7999, %v8000
    %v8002 = vsub.f32 1.0, %v8001
    %v8003 = vmul.f32 %v8000, %v8002
    %v8004 = vadd.f32 %v8000, %v8003
    %vm8005 = vweird.f32 %v7999
    %vm8006 = vweird.f32 %v8000
    %vm8007 = vmor %vm8005, %vm8006
    %v8008 = vsel %vm8007, %v8000, %v8004
    %v8009 = vand.u32 2147483647, %v7999
    %vm8010 = vcmp.eq.f32.partialorder %v8009, 8.507059e+37
    %v8011 = vand.u32 %v7999, 2147483648
    %v8012 = vor.u32 1.1754944e-38, %v8011
    %v8013 = vsel %vm8010, %v8012, %v8008
    %v8014 = vmul.f32 1.0, %v8013
    %v8016 = vrot.slane %v7851, 6
    %v8018 = vmul.f32 %v7994, %v8016
    %v8019 = vmul.f32 %v7975, %v7995
    %v8020 = vadd.f32 %v8018, %v8019
    %v8021 = vtanh.pop %v8020
    %v8022 = vmul.f32 %v8014, %v8021
    %v8023 = vld [vmem:[#allocation5 + $0x40] sm:$0xc0]
    %v8024 = vld [vmem:[#allocation5 + $0x48] sm:$0xc0]
    %v8025 = vld [vmem:[#allocation5 + $0x50] sm:$0xc0]
    %v8026 = vld [vmem:[#allocation5 + $0x58] sm:$0xc0]
    %v8028 = vrot.slane %v8022, 4
    %8030 = vmatpush.msra.mxu0 %v6215
    %8031 = vmatpush.msra.mxu0 %v6211
    %8032 = vmatpush.msra.mxu0 %v6207
    %8033 = vmatpush.msra.mxu0 %v6203
    %8034 = vmatpush.msra.mxu0 %v6199
    %8035 = vmatpush.msra.mxu0 %v6195
    %8036 = vmatpush.msra.mxu0 %v6191
    %8037 = vmatpush.msra.mxu0 %v6187
    %8038 = vmatpush.msra.mxu0 %v6183
    %8039 = vmatpush.msra.mxu0 %v6179
    %8040 = vmatpush.msra.mxu0 %v6175
    %8041 = vmatpush.msra.mxu0 %v6171
    %8042 = vmatpush.msra.mxu0 %v6167
    %8043 = vmatpush.msra.mxu0 %v6163
    %8044 = vmatpush.msra.mxu0 %v6159
    %8045 = vmatpush.msra.mxu0 %v6155
    %8046 = vmatmul.f32.gmra.mxu0 %v8028
    %v8047 = vpop.f32.mrf.mxu0
    %v8048 = vadd.f32 0.0, %v8047
    %8049 = vdwg.mxu0
    %8050 = vmatpush.msra.mxu0 %v6216
    %8051 = vmatpush.msra.mxu0 %v6212
    %8052 = vmatpush.msra.mxu0 %v6208
    %8053 = vmatpush.msra.mxu0 %v6204
    %8054 = vmatpush.msra.mxu0 %v6200
    %8055 = vmatpush.msra.mxu0 %v6196
    %8056 = vmatpush.msra.mxu0 %v6192
    %8057 = vmatpush.msra.mxu0 %v6188
    %8058 = vmatpush.msra.mxu0 %v6184
    %8059 = vmatpush.msra.mxu0 %v6180
    %8060 = vmatpush.msra.mxu0 %v6176
    %8061 = vmatpush.msra.mxu0 %v6172
    %8062 = vmatpush.msra.mxu0 %v6168
    %8063 = vmatpush.msra.mxu0 %v6164
    %8064 = vmatpush.msra.mxu0 %v6160
    %8065 = vmatpush.msra.mxu0 %v6156
    %8066 = vmatmul.f32.gmra.mxu0 %v8028
    %v8067 = vpop.f32.mrf.mxu0
    %v8068 = vadd.f32 0.0, %v8067
    %8069 = vdwg.mxu0
    %8070 = vmatpush.msra.mxu0 %v6217
    %8071 = vmatpush.msra.mxu0 %v6213
    %8072 = vmatpush.msra.mxu0 %v6209
    %8073 = vmatpush.msra.mxu0 %v6205
    %8074 = vmatpush.msra.mxu0 %v6201
    %8075 = vmatpush.msra.mxu0 %v6197
    %8076 = vmatpush.msra.mxu0 %v6193
    %8077 = vmatpush.msra.mxu0 %v6189
    %8078 = vmatpush.msra.mxu0 %v6185
    %8079 = vmatpush.msra.mxu0 %v6181
    %8080 = vmatpush.msra.mxu0 %v6177
    %8081 = vmatpush.msra.mxu0 %v6173
    %8082 = vmatpush.msra.mxu0 %v6169
    %8083 = vmatpush.msra.mxu0 %v6165
    %8084 = vmatpush.msra.mxu0 %v6161
    %8085 = vmatpush.msra.mxu0 %v6157
    %8086 = vmatmul.f32.gmra.mxu0 %v8028
    %v8087 = vpop.f32.mrf.mxu0
    %v8088 = vadd.f32 0.0, %v8087
    %8089 = vdwg.mxu0
    %8090 = vmatpush.msra.mxu0 %v6218
    %8091 = vmatpush.msra.mxu0 %v6214
    %8092 = vmatpush.msra.mxu0 %v6210
    %8093 = vmatpush.msra.mxu0 %v6206
    %8094 = vmatpush.msra.mxu0 %v6202
    %8095 = vmatpush.msra.mxu0 %v6198
    %8096 = vmatpush.msra.mxu0 %v6194
    %8097 = vmatpush.msra.mxu0 %v6190
    %8098 = vmatpush.msra.mxu0 %v6186
    %8099 = vmatpush.msra.mxu0 %v6182
    %8100 = vmatpush.msra.mxu0 %v6178
    %8101 = vmatpush.msra.mxu0 %v6174
    %8102 = vmatpush.msra.mxu0 %v6170
    %8103 = vmatpush.msra.mxu0 %v6166
    %8104 = vmatpush.msra.mxu0 %v6162
    %8105 = vmatpush.msra.mxu0 %v6158
    %8106 = vmatmul.f32.gmra.mxu0 %v8028
    %v8107 = vpop.f32.mrf.mxu0
    %v8108 = vadd.f32 0.0, %v8107
    %8109 = vdwg.mxu0
    %v8114 = vrot.slane %v8048, 2
    %v8115 = vrot.slane %v8068, 2
    %v8116 = vrot.slane %v8088, 2
    %v8117 = vrot.slane %v8108, 2
    %v8122 = vadd.f32 %v8023, %v8114
    %v8123 = vadd.f32 %v8024, %v8115
    %v8124 = vadd.f32 %v8025, %v8116
    %v8125 = vadd.f32 %v8026, %v8117
    %v8126 = vxor.u32 %v8122, 2147483648
    %v8127 = vmul.f32 %v8126, 1.442695
    %v8128 = vpow.pop %v8127
    %v8129 = vadd.f32 %v8128, 1.0
    %v8130 = vrcp.pop %v8129
    %v8131 = vmul.f32 %v8129, %v8130
    %v8132 = vsub.f32 1.0, %v8131
    %v8133 = vmul.f32 %v8130, %v8132
    %v8134 = vadd.f32 %v8130, %v8133
    %vm8135 = vweird.f32 %v8129
    %vm8136 = vweird.f32 %v8130
    %vm8137 = vmor %vm8135, %vm8136
    %v8138 = vsel %vm8137, %v8130, %v8134
    %v8139 = vand.u32 2147483647, %v8129
    %vm8140 = vcmp.eq.f32.partialorder %v8139, 8.507059e+37
    %v8141 = vand.u32 %v8129, 2147483648
    %v8142 = vor.u32 1.1754944e-38, %v8141
    %v8143 = vsel %vm8140, %v8142, %v8138
    %v8144 = vmul.f32 1.0, %v8143
    %v8145 = vxor.u32 %v8123, 2147483648
    %v8146 = vmul.f32 %v8145, 1.442695
    %v8147 = vpow.pop %v8146
    %v8148 = vadd.f32 %v8147, 1.0
    %v8149 = vrcp.pop %v8148
    %v8150 = vmul.f32 %v8148, %v8149
    %v8151 = vsub.f32 1.0, %v8150
    %v8152 = vmul.f32 %v8149, %v8151
    %v8153 = vadd.f32 %v8149, %v8152
    %vm8154 = vweird.f32 %v8148
    %vm8155 = vweird.f32 %v8149
    %vm8156 = vmor %vm8154, %vm8155
    %v8157 = vsel %vm8156, %v8149, %v8153
    %v8158 = vand.u32 2147483647, %v8148
    %vm8159 = vcmp.eq.f32.partialorder %v8158, 8.507059e+37
    %v8160 = vand.u32 %v8148, 2147483648
    %v8161 = vor.u32 1.1754944e-38, %v8160
    %v8162 = vsel %vm8159, %v8161, %v8157
    %v8163 = vmul.f32 1.0, %v8162
    %v8164 = vtanh.pop %v8124
    %v8165 = vxor.u32 %v8125, 2147483648
    %v8166 = vmul.f32 %v8165, 1.442695
    %v8167 = vpow.pop %v8166
    %v8168 = vadd.f32 %v8167, 1.0
    %v8169 = vrcp.pop %v8168
    %v8170 = vmul.f32 %v8168, %v8169
    %v8171 = vsub.f32 1.0, %v8170
    %v8172 = vmul.f32 %v8169, %v8171
    %v8173 = vadd.f32 %v8169, %v8172
    %vm8174 = vweird.f32 %v8168
    %vm8175 = vweird.f32 %v8169
    %vm8176 = vmor %vm8174, %vm8175
    %v8177 = vsel %vm8176, %v8169, %v8173
    %v8178 = vand.u32 2147483647, %v8168
    %vm8179 = vcmp.eq.f32.partialorder %v8178, 8.507059e+37
    %v8180 = vand.u32 %v8168, 2147483648
    %v8181 = vor.u32 1.1754944e-38, %v8180
    %v8182 = vsel %vm8179, %v8181, %v8177
    %v8183 = vmul.f32 1.0, %v8182
    %v8185 = vrot.slane %v8020, 6
    %v8187 = vmul.f32 %v8163, %v8185
    %v8188 = vmul.f32 %v8144, %v8164
    %v8189 = vadd.f32 %v8187, %v8188
    %v8190 = vtanh.pop %v8189
    %v8191 = vmul.f32 %v8183, %v8190
    %v8192 = vld [vmem:[#allocation5 + $0x60] sm:$0x3]
    %v8193 = vld [vmem:[#allocation5 + $0x68] sm:$0x3]
    %v8194 = vld [vmem:[#allocation5 + $0x70] sm:$0x3]
    %v8195 = vld [vmem:[#allocation5 + $0x78] sm:$0x3]
    %v8197 = vrot.slane %v8191, 6
    %8199 = vmatpush.msra.mxu0 %v6215
    %8200 = vmatpush.msra.mxu0 %v6211
    %8201 = vmatpush.msra.mxu0 %v6207
    %8202 = vmatpush.msra.mxu0 %v6203
    %8203 = vmatpush.msra.mxu0 %v6199
    %8204 = vmatpush.msra.mxu0 %v6195
    %8205 = vmatpush.msra.mxu0 %v6191
    %8206 = vmatpush.msra.mxu0 %v6187
    %8207 = vmatpush.msra.mxu0 %v6183
    %8208 = vmatpush.msra.mxu0 %v6179
    %8209 = vmatpush.msra.mxu0 %v6175
    %8210 = vmatpush.msra.mxu0 %v6171
    %8211 = vmatpush.msra.mxu0 %v6167
    %8212 = vmatpush.msra.mxu0 %v6163
    %8213 = vmatpush.msra.mxu0 %v6159
    %8214 = vmatpush.msra.mxu0 %v6155
    %8215 = vmatmul.f32.gmra.mxu0 %v8197
    %v8216 = vpop.f32.mrf.mxu0
    %v8217 = vadd.f32 0.0, %v8216
    %8218 = vdwg.mxu0
    %8219 = vmatpush.msra.mxu0 %v6216
    %8220 = vmatpush.msra.mxu0 %v6212
    %8221 = vmatpush.msra.mxu0 %v6208
    %8222 = vmatpush.msra.mxu0 %v6204
    %8223 = vmatpush.msra.mxu0 %v6200
    %8224 = vmatpush.msra.mxu0 %v6196
    %8225 = vmatpush.msra.mxu0 %v6192
    %8226 = vmatpush.msra.mxu0 %v6188
    %8227 = vmatpush.msra.mxu0 %v6184
    %8228 = vmatpush.msra.mxu0 %v6180
    %8229 = vmatpush.msra.mxu0 %v6176
    %8230 = vmatpush.msra.mxu0 %v6172
    %8231 = vmatpush.msra.mxu0 %v6168
    %8232 = vmatpush.msra.mxu0 %v6164
    %8233 = vmatpush.msra.mxu0 %v6160
    %8234 = vmatpush.msra.mxu0 %v6156
    %8235 = vmatmul.f32.gmra.mxu0 %v8197
    %v8236 = vpop.f32.mrf.mxu0
    %v8237 = vadd.f32 0.0, %v8236
    %8238 = vdwg.mxu0
    %8239 = vmatpush.msra.mxu0 %v6217
    %8240 = vmatpush.msra.mxu0 %v6213
    %8241 = vmatpush.msra.mxu0 %v6209
    %8242 = vmatpush.msra.mxu0 %v6205
    %8243 = vmatpush.msra.mxu0 %v6201
    %8244 = vmatpush.msra.mxu0 %v6197
    %8245 = vmatpush.msra.mxu0 %v6193
    %8246 = vmatpush.msra.mxu0 %v6189
    %8247 = vmatpush.msra.mxu0 %v6185
    %8248 = vmatpush.msra.mxu0 %v6181
    %8249 = vmatpush.msra.mxu0 %v6177
    %8250 = vmatpush.msra.mxu0 %v6173
    %8251 = vmatpush.msra.mxu0 %v6169
    %8252 = vmatpush.msra.mxu0 %v6165
    %8253 = vmatpush.msra.mxu0 %v6161
    %8254 = vmatpush.msra.mxu0 %v6157
    %8255 = vmatmul.f32.gmra.mxu0 %v8197
    %v8256 = vpop.f32.mrf.mxu0
    %v8257 = vadd.f32 0.0, %v8256
    %8258 = vdwg.mxu0
    %8259 = vmatpush.msra.mxu0 %v6218
    %8260 = vmatpush.msra.mxu0 %v6214
    %8261 = vmatpush.msra.mxu0 %v6210
    %8262 = vmatpush.msra.mxu0 %v6206
    %8263 = vmatpush.msra.mxu0 %v6202
    %8264 = vmatpush.msra.mxu0 %v6198
    %8265 = vmatpush.msra.mxu0 %v6194
    %8266 = vmatpush.msra.mxu0 %v6190
    %8267 = vmatpush.msra.mxu0 %v6186
    %8268 = vmatpush.msra.mxu0 %v6182
    %8269 = vmatpush.msra.mxu0 %v6178
    %8270 = vmatpush.msra.mxu0 %v6174
    %8271 = vmatpush.msra.mxu0 %v6170
    %8272 = vmatpush.msra.mxu0 %v6166
    %8273 = vmatpush.msra.mxu0 %v6162
    %8274 = vmatpush.msra.mxu0 %v6158
    %8275 = vmatmul.f32.gmra.mxu0 %v8197
    %v8276 = vpop.f32.mrf.mxu0
    %v8277 = vadd.f32 0.0, %v8276
    %8278 = vdwg.mxu0
    %v8279 = vadd.f32 %v8192, %v8217
    %v8280 = vadd.f32 %v8193, %v8237
    %v8281 = vadd.f32 %v8194, %v8257
    %v8282 = vadd.f32 %v8195, %v8277
    %v8283 = vxor.u32 %v8279, 2147483648
    %v8284 = vmul.f32 %v8283, 1.442695
    %v8285 = vpow.pop %v8284
    %v8286 = vadd.f32 %v8285, 1.0
    %v8287 = vrcp.pop %v8286
    %v8288 = vmul.f32 %v8286, %v8287
    %v8289 = vsub.f32 1.0, %v8288
    %v8290 = vmul.f32 %v8287, %v8289
    %v8291 = vadd.f32 %v8287, %v8290
    %vm8292 = vweird.f32 %v8286
    %vm8293 = vweird.f32 %v8287
    %vm8294 = vmor %vm8292, %vm8293
    %v8295 = vsel %vm8294, %v8287, %v8291
    %v8296 = vand.u32 2147483647, %v8286
    %vm8297 = vcmp.eq.f32.partialorder %v8296, 8.507059e+37
    %v8298 = vand.u32 %v8286, 2147483648
    %v8299 = vor.u32 1.1754944e-38, %v8298
    %v8300 = vsel %vm8297, %v8299, %v8295
    %v8301 = vmul.f32 1.0, %v8300
    %v8302 = vxor.u32 %v8280, 2147483648
    %v8303 = vmul.f32 %v8302, 1.442695
    %v8304 = vpow.pop %v8303
    %v8305 = vadd.f32 %v8304, 1.0
    %v8306 = vrcp.pop %v8305
    %v8307 = vmul.f32 %v8305, %v8306
    %v8308 = vsub.f32 1.0, %v8307
    %v8309 = vmul.f32 %v8306, %v8308
    %v8310 = vadd.f32 %v8306, %v8309
    %vm8311 = vweird.f32 %v8305
    %vm8312 = vweird.f32 %v8306
    %vm8313 = vmor %vm8311, %vm8312
    %v8314 = vsel %vm8313, %v8306, %v8310
    %v8315 = vand.u32 2147483647, %v8305
    %vm8316 = vcmp.eq.f32.partialorder %v8315, 8.507059e+37
    %v8317 = vand.u32 %v8305, 2147483648
    %v8318 = vor.u32 1.1754944e-38, %v8317
    %v8319 = vsel %vm8316, %v8318, %v8314
    %v8320 = vmul.f32 1.0, %v8319
    %v8321 = vtanh.pop %v8281
    %v8322 = vxor.u32 %v8282, 2147483648
    %v8323 = vmul.f32 %v8322, 1.442695
    %v8324 = vpow.pop %v8323
    %v8325 = vadd.f32 %v8324, 1.0
    %v8326 = vrcp.pop %v8325
    %v8327 = vmul.f32 %v8325, %v8326
    %v8328 = vsub.f32 1.0, %v8327
    %v8329 = vmul.f32 %v8326, %v8328
    %v8330 = vadd.f32 %v8326, %v8329
    %vm8331 = vweird.f32 %v8325
    %vm8332 = vweird.f32 %v8326
    %vm8333 = vmor %vm8331, %vm8332
    %v8334 = vsel %vm8333, %v8326, %v8330
    %v8335 = vand.u32 2147483647, %v8325
    %vm8336 = vcmp.eq.f32.partialorder %v8335, 8.507059e+37
    %v8337 = vand.u32 %v8325, 2147483648
    %v8338 = vor.u32 1.1754944e-38, %v8337
    %v8339 = vsel %vm8336, %v8338, %v8334
    %v8340 = vmul.f32 1.0, %v8339
    %v8342 = vrot.slane %v8189, 6
    %v8344 = vmul.f32 %v8320, %v8342
    %v8345 = vmul.f32 %v8301, %v8321
    %v8346 = vadd.f32 %v8344, %v8345
    %v8347 = vtanh.pop %v8346
    %v8348 = vmul.f32 %v8340, %v8347
    %v8349 = vld [vmem:[#allocation5 + $0x60] sm:$0xc]
    %v8350 = vld [vmem:[#allocation5 + $0x68] sm:$0xc]
    %v8351 = vld [vmem:[#allocation5 + $0x70] sm:$0xc]
    %v8352 = vld [vmem:[#allocation5 + $0x78] sm:$0xc]
    %8353 = vmatpush.msra.mxu0 %v6215
    %8354 = vmatpush.msra.mxu0 %v6211
    %8355 = vmatpush.msra.mxu0 %v6207
    %8356 = vmatpush.msra.mxu0 %v6203
    %8357 = vmatpush.msra.mxu0 %v6199
    %8358 = vmatpush.msra.mxu0 %v6195
    %8359 = vmatpush.msra.mxu0 %v6191
    %8360 = vmatpush.msra.mxu0 %v6187
    %8361 = vmatpush.msra.mxu0 %v6183
    %8362 = vmatpush.msra.mxu0 %v6179
    %8363 = vmatpush.msra.mxu0 %v6175
    %8364 = vmatpush.msra.mxu0 %v6171
    %8365 = vmatpush.msra.mxu0 %v6167
    %8366 = vmatpush.msra.mxu0 %v6163
    %8367 = vmatpush.msra.mxu0 %v6159
    %8368 = vmatpush.msra.mxu0 %v6155
    %8369 = vmatmul.f32.gmra.mxu0 %v8348
    %v8370 = vpop.f32.mrf.mxu0
    %v8371 = vadd.f32 0.0, %v8370
    %8372 = vdwg.mxu0
    %8373 = vmatpush.msra.mxu0 %v6216
    %8374 = vmatpush.msra.mxu0 %v6212
    %8375 = vmatpush.msra.mxu0 %v6208
    %8376 = vmatpush.msra.mxu0 %v6204
    %8377 = vmatpush.msra.mxu0 %v6200
    %8378 = vmatpush.msra.mxu0 %v6196
    %8379 = vmatpush.msra.mxu0 %v6192
    %8380 = vmatpush.msra.mxu0 %v6188
    %8381 = vmatpush.msra.mxu0 %v6184
    %8382 = vmatpush.msra.mxu0 %v6180
    %8383 = vmatpush.msra.mxu0 %v6176
    %8384 = vmatpush.msra.mxu0 %v6172
    %8385 = vmatpush.msra.mxu0 %v6168
    %8386 = vmatpush.msra.mxu0 %v6164
    %8387 = vmatpush.msra.mxu0 %v6160
    %8388 = vmatpush.msra.mxu0 %v6156
    %8389 = vmatmul.f32.gmra.mxu0 %v8348
    %v8390 = vpop.f32.mrf.mxu0
    %v8391 = vadd.f32 0.0, %v8390
    %8392 = vdwg.mxu0
    %8393 = vmatpush.msra.mxu0 %v6217
    %8394 = vmatpush.msra.mxu0 %v6213
    %8395 = vmatpush.msra.mxu0 %v6209
    %8396 = vmatpush.msra.mxu0 %v6205
    %8397 = vmatpush.msra.mxu0 %v6201
    %8398 = vmatpush.msra.mxu0 %v6197
    %8399 = vmatpush.msra.mxu0 %v6193
    %8400 = vmatpush.msra.mxu0 %v6189
    %8401 = vmatpush.msra.mxu0 %v6185
    %8402 = vmatpush.msra.mxu0 %v6181
    %8403 = vmatpush.msra.mxu0 %v6177
    %8404 = vmatpush.msra.mxu0 %v6173
    %8405 = vmatpush.msra.mxu0 %v6169
    %8406 = vmatpush.msra.mxu0 %v6165
    %8407 = vmatpush.msra.mxu0 %v6161
    %8408 = vmatpush.msra.mxu0 %v6157
    %8409 = vmatmul.f32.gmra.mxu0 %v8348
    %v8410 = vpop.f32.mrf.mxu0
    %v8411 = vadd.f32 0.0, %v8410
    %8412 = vdwg.mxu0
    %8413 = vmatpush.msra.mxu0 %v6218
    %8414 = vmatpush.msra.mxu0 %v6214
    %8415 = vmatpush.msra.mxu0 %v6210
    %8416 = vmatpush.msra.mxu0 %v6206
    %8417 = vmatpush.msra.mxu0 %v6202
    %8418 = vmatpush.msra.mxu0 %v6198
    %8419 = vmatpush.msra.mxu0 %v6194
    %8420 = vmatpush.msra.mxu0 %v6190
    %8421 = vmatpush.msra.mxu0 %v6186
    %8422 = vmatpush.msra.mxu0 %v6182
    %8423 = vmatpush.msra.mxu0 %v6178
    %8424 = vmatpush.msra.mxu0 %v6174
    %8425 = vmatpush.msra.mxu0 %v6170
    %8426 = vmatpush.msra.mxu0 %v6166
    %8427 = vmatpush.msra.mxu0 %v6162
    %8428 = vmatpush.msra.mxu0 %v6158
    %8429 = vmatmul.f32.gmra.mxu0 %v8348
    %v8430 = vpop.f32.mrf.mxu0
    %v8431 = vadd.f32 0.0, %v8430
    %8432 = vdwg.mxu0
    %v8437 = vrot.slane %v8371, 6
    %v8438 = vrot.slane %v8391, 6
    %v8439 = vrot.slane %v8411, 6
    %v8440 = vrot.slane %v8431, 6
    %v8445 = vadd.f32 %v8349, %v8437
    %v8446 = vadd.f32 %v8350, %v8438
    %v8447 = vadd.f32 %v8351, %v8439
    %v8448 = vadd.f32 %v8352, %v8440
    %v8449 = vxor.u32 %v8445, 2147483648
    %v8450 = vmul.f32 %v8449, 1.442695
    %v8451 = vpow.pop %v8450
    %v8452 = vadd.f32 %v8451, 1.0
    %v8453 = vrcp.pop %v8452
    %v8454 = vmul.f32 %v8452, %v8453
    %v8455 = vsub.f32 1.0, %v8454
    %v8456 = vmul.f32 %v8453, %v8455
    %v8457 = vadd.f32 %v8453, %v8456
    %vm8458 = vweird.f32 %v8452
    %vm8459 = vweird.f32 %v8453
    %vm8460 = vmor %vm8458, %vm8459
    %v8461 = vsel %vm8460, %v8453, %v8457
    %v8462 = vand.u32 2147483647, %v8452
    %vm8463 = vcmp.eq.f32.partialorder %v8462, 8.507059e+37
    %v8464 = vand.u32 %v8452, 2147483648
    %v8465 = vor.u32 1.1754944e-38, %v8464
    %v8466 = vsel %vm8463, %v8465, %v8461
    %v8467 = vmul.f32 1.0, %v8466
    %v8468 = vxor.u32 %v8446, 2147483648
    %v8469 = vmul.f32 %v8468, 1.442695
    %v8470 = vpow.pop %v8469
    %v8471 = vadd.f32 %v8470, 1.0
    %v8472 = vrcp.pop %v8471
    %v8473 = vmul.f32 %v8471, %v8472
    %v8474 = vsub.f32 1.0, %v8473
    %v8475 = vmul.f32 %v8472, %v8474
    %v8476 = vadd.f32 %v8472, %v8475
    %vm8477 = vweird.f32 %v8471
    %vm8478 = vweird.f32 %v8472
    %vm8479 = vmor %vm8477, %vm8478
    %v8480 = vsel %vm8479, %v8472, %v8476
    %v8481 = vand.u32 2147483647, %v8471
    %vm8482 = vcmp.eq.f32.partialorder %v8481, 8.507059e+37
    %v8483 = vand.u32 %v8471, 2147483648
    %v8484 = vor.u32 1.1754944e-38, %v8483
    %v8485 = vsel %vm8482, %v8484, %v8480
    %v8486 = vmul.f32 1.0, %v8485
    %v8487 = vtanh.pop %v8447
    %v8488 = vxor.u32 %v8448, 2147483648
    %v8489 = vmul.f32 %v8488, 1.442695
    %v8490 = vpow.pop %v8489
    %v8491 = vadd.f32 %v8490, 1.0
    %v8492 = vrcp.pop %v8491
    %v8493 = vmul.f32 %v8491, %v8492
    %v8494 = vsub.f32 1.0, %v8493
    %v8495 = vmul.f32 %v8492, %v8494
    %v8496 = vadd.f32 %v8492, %v8495
    %vm8497 = vweird.f32 %v8491
    %vm8498 = vweird.f32 %v8492
    %vm8499 = vmor %vm8497, %vm8498
    %v8500 = vsel %vm8499, %v8492, %v8496
    %v8501 = vand.u32 2147483647, %v8491
    %vm8502 = vcmp.eq.f32.partialorder %v8501, 8.507059e+37
    %v8503 = vand.u32 %v8491, 2147483648
    %v8504 = vor.u32 1.1754944e-38, %v8503
    %v8505 = vsel %vm8502, %v8504, %v8500
    %v8506 = vmul.f32 1.0, %v8505
    %v8508 = vrot.slane %v8346, 6
    %v8510 = vmul.f32 %v8486, %v8508
    %v8511 = vmul.f32 %v8467, %v8487
    %v8512 = vadd.f32 %v8510, %v8511
    %v8513 = vtanh.pop %v8512
    %v8514 = vmul.f32 %v8506, %v8513
    %v8515 = vld [vmem:[#allocation5 + $0x60] sm:$0x30]
    %v8516 = vld [vmem:[#allocation5 + $0x68] sm:$0x30]
    %v8517 = vld [vmem:[#allocation5 + $0x70] sm:$0x30]
    %v8518 = vld [vmem:[#allocation5 + $0x78] sm:$0x30]
    %v8520 = vrot.slane %v8514, 2
    %8522 = vmatpush.msra.mxu0 %v6215
    %8523 = vmatpush.msra.mxu0 %v6211
    %8524 = vmatpush.msra.mxu0 %v6207
    %8525 = vmatpush.msra.mxu0 %v6203
    %8526 = vmatpush.msra.mxu0 %v6199
    %8527 = vmatpush.msra.mxu0 %v6195
    %8528 = vmatpush.msra.mxu0 %v6191
    %8529 = vmatpush.msra.mxu0 %v6187
    %8530 = vmatpush.msra.mxu0 %v6183
    %8531 = vmatpush.msra.mxu0 %v6179
    %8532 = vmatpush.msra.mxu0 %v6175
    %8533 = vmatpush.msra.mxu0 %v6171
    %8534 = vmatpush.msra.mxu0 %v6167
    %8535 = vmatpush.msra.mxu0 %v6163
    %8536 = vmatpush.msra.mxu0 %v6159
    %8537 = vmatpush.msra.mxu0 %v6155
    %8538 = vmatmul.f32.gmra.mxu0 %v8520
    %v8539 = vpop.f32.mrf.mxu0
    %v8540 = vadd.f32 0.0, %v8539
    %8541 = vdwg.mxu0
    %8542 = vmatpush.msra.mxu0 %v6216
    %8543 = vmatpush.msra.mxu0 %v6212
    %8544 = vmatpush.msra.mxu0 %v6208
    %8545 = vmatpush.msra.mxu0 %v6204
    %8546 = vmatpush.msra.mxu0 %v6200
    %8547 = vmatpush.msra.mxu0 %v6196
    %8548 = vmatpush.msra.mxu0 %v6192
    %8549 = vmatpush.msra.mxu0 %v6188
    %8550 = vmatpush.msra.mxu0 %v6184
    %8551 = vmatpush.msra.mxu0 %v6180
    %8552 = vmatpush.msra.mxu0 %v6176
    %8553 = vmatpush.msra.mxu0 %v6172
    %8554 = vmatpush.msra.mxu0 %v6168
    %8555 = vmatpush.msra.mxu0 %v6164
    %8556 = vmatpush.msra.mxu0 %v6160
    %8557 = vmatpush.msra.mxu0 %v6156
    %8558 = vmatmul.f32.gmra.mxu0 %v8520
    %v8559 = vpop.f32.mrf.mxu0
    %v8560 = vadd.f32 0.0, %v8559
    %8561 = vdwg.mxu0
    %8562 = vmatpush.msra.mxu0 %v6217
    %8563 = vmatpush.msra.mxu0 %v6213
    %8564 = vmatpush.msra.mxu0 %v6209
    %8565 = vmatpush.msra.mxu0 %v6205
    %8566 = vmatpush.msra.mxu0 %v6201
    %8567 = vmatpush.msra.mxu0 %v6197
    %8568 = vmatpush.msra.mxu0 %v6193
    %8569 = vmatpush.msra.mxu0 %v6189
    %8570 = vmatpush.msra.mxu0 %v6185
    %8571 = vmatpush.msra.mxu0 %v6181
    %8572 = vmatpush.msra.mxu0 %v6177
    %8573 = vmatpush.msra.mxu0 %v6173
    %8574 = vmatpush.msra.mxu0 %v6169
    %8575 = vmatpush.msra.mxu0 %v6165
    %8576 = vmatpush.msra.mxu0 %v6161
    %8577 = vmatpush.msra.mxu0 %v6157
    %8578 = vmatmul.f32.gmra.mxu0 %v8520
    %v8579 = vpop.f32.mrf.mxu0
    %v8580 = vadd.f32 0.0, %v8579
    %8581 = vdwg.mxu0
    %8582 = vmatpush.msra.mxu0 %v6218
    %8583 = vmatpush.msra.mxu0 %v6214
    %8584 = vmatpush.msra.mxu0 %v6210
    %8585 = vmatpush.msra.mxu0 %v6206
    %8586 = vmatpush.msra.mxu0 %v6202
    %8587 = vmatpush.msra.mxu0 %v6198
    %8588 = vmatpush.msra.mxu0 %v6194
    %8589 = vmatpush.msra.mxu0 %v6190
    %8590 = vmatpush.msra.mxu0 %v6186
    %8591 = vmatpush.msra.mxu0 %v6182
    %8592 = vmatpush.msra.mxu0 %v6178
    %8593 = vmatpush.msra.mxu0 %v6174
    %8594 = vmatpush.msra.mxu0 %v6170
    %8595 = vmatpush.msra.mxu0 %v6166
    %8596 = vmatpush.msra.mxu0 %v6162
    %8597 = vmatpush.msra.mxu0 %v6158
    %8598 = vmatmul.f32.gmra.mxu0 %v8520
    %v8599 = vpop.f32.mrf.mxu0
    %v8600 = vadd.f32 0.0, %v8599
    %8601 = vdwg.mxu0
    %v8606 = vrot.slane %v8540, 4
    %v8607 = vrot.slane %v8560, 4
    %v8608 = vrot.slane %v8580, 4
    %v8609 = vrot.slane %v8600, 4
    %v8614 = vadd.f32 %v8515, %v8606
    %v8615 = vadd.f32 %v8516, %v8607
    %v8616 = vadd.f32 %v8517, %v8608
    %v8617 = vadd.f32 %v8518, %v8609
    %v8618 = vxor.u32 %v8614, 2147483648
    %v8619 = vmul.f32 %v8618, 1.442695
    %v8620 = vpow.pop %v8619
    %v8621 = vadd.f32 %v8620, 1.0
    %v8622 = vrcp.pop %v8621
    %v8623 = vmul.f32 %v8621, %v8622
    %v8624 = vsub.f32 1.0, %v8623
    %v8625 = vmul.f32 %v8622, %v8624
    %v8626 = vadd.f32 %v8622, %v8625
    %vm8627 = vweird.f32 %v8621
    %vm8628 = vweird.f32 %v8622
    %vm8629 = vmor %vm8627, %vm8628
    %v8630 = vsel %vm8629, %v8622, %v8626
    %v8631 = vand.u32 2147483647, %v8621
    %vm8632 = vcmp.eq.f32.partialorder %v8631, 8.507059e+37
    %v8633 = vand.u32 %v8621, 2147483648
    %v8634 = vor.u32 1.1754944e-38, %v8633
    %v8635 = vsel %vm8632, %v8634, %v8630
    %v8636 = vmul.f32 1.0, %v8635
    %v8637 = vxor.u32 %v8615, 2147483648
    %v8638 = vmul.f32 %v8637, 1.442695
    %v8639 = vpow.pop %v8638
    %v8640 = vadd.f32 %v8639, 1.0
    %v8641 = vrcp.pop %v8640
    %v8642 = vmul.f32 %v8640, %v8641
    %v8643 = vsub.f32 1.0, %v8642
    %v8644 = vmul.f32 %v8641, %v8643
    %v8645 = vadd.f32 %v8641, %v8644
    %vm8646 = vweird.f32 %v8640
    %vm8647 = vweird.f32 %v8641
    %vm8648 = vmor %vm8646, %vm8647
    %v8649 = vsel %vm8648, %v8641, %v8645
    %v8650 = vand.u32 2147483647, %v8640
    %vm8651 = vcmp.eq.f32.partialorder %v8650, 8.507059e+37
    %v8652 = vand.u32 %v8640, 2147483648
    %v8653 = vor.u32 1.1754944e-38, %v8652
    %v8654 = vsel %vm8651, %v8653, %v8649
    %v8655 = vmul.f32 1.0, %v8654
    %v8656 = vtanh.pop %v8616
    %v8657 = vxor.u32 %v8617, 2147483648
    %v8658 = vmul.f32 %v8657, 1.442695
    %v8659 = vpow.pop %v8658
    %v8660 = vadd.f32 %v8659, 1.0
    %v8661 = vrcp.pop %v8660
    %v8662 = vmul.f32 %v8660, %v8661
    %v8663 = vsub.f32 1.0, %v8662
    %v8664 = vmul.f32 %v8661, %v8663
    %v8665 = vadd.f32 %v8661, %v8664
    %vm8666 = vweird.f32 %v8660
    %vm8667 = vweird.f32 %v8661
    %vm8668 = vmor %vm8666, %vm8667
    %v8669 = vsel %vm8668, %v8661, %v8665
    %v8670 = vand.u32 2147483647, %v8660
    %vm8671 = vcmp.eq.f32.partialorder %v8670, 8.507059e+37
    %v8672 = vand.u32 %v8660, 2147483648
    %v8673 = vor.u32 1.1754944e-38, %v8672
    %v8674 = vsel %vm8671, %v8673, %v8669
    %v8675 = vmul.f32 1.0, %v8674
    %v8677 = vrot.slane %v8512, 6
    %v8679 = vmul.f32 %v8655, %v8677
    %v8680 = vmul.f32 %v8636, %v8656
    %v8681 = vadd.f32 %v8679, %v8680
    %v8682 = vtanh.pop %v8681
    %v8683 = vmul.f32 %v8675, %v8682
    %v8684 = vld [vmem:[%s12] sm:$0xff]
    %v8685 = vld [vmem:[%s12 + $0x8] sm:$0xff]
    %v8686 = vld [vmem:[%s12 + $0x10] sm:$0xff]
    %v8687 = vld [vmem:[%s12 + $0x18] sm:$0xff]
    %v8688 = vld [vmem:[%s12 + $0x20] sm:$0xff]
    %v8689 = vld [vmem:[%s12 + $0x28] sm:$0xff]
    %v8690 = vld [vmem:[%s12 + $0x30] sm:$0xff]
    %v8691 = vld [vmem:[%s12 + $0x38] sm:$0xff]
    %v8692 = vld [vmem:[%s12 + $0x40] sm:$0xff]
    %v8693 = vld [vmem:[%s12 + $0x48] sm:$0xff]
    %v8694 = vld [vmem:[%s12 + $0x50] sm:$0xff]
    %v8695 = vld [vmem:[%s12 + $0x58] sm:$0xff]
    %v8696 = vld [vmem:[%s12 + $0x60] sm:$0xff]
    %v8697 = vld [vmem:[%s12 + $0x68] sm:$0xff]
    %v8698 = vld [vmem:[%s12 + $0x70] sm:$0xff]
    %v8699 = vld [vmem:[%s12 + $0x78] sm:$0xff]
    %v8700 = vld [vmem:[%s13] sm:$0x1]
    %v8702 = vperm.slane %v8700, 0
    %v8705 = vrot.slane %v8683, 4
    %8707 = vmatpush.msra.mxu0 %v8699
    %8708 = vmatpush.msra.mxu0 %v8698
    %8709 = vmatpush.msra.mxu0 %v8697
    %8710 = vmatpush.msra.mxu0 %v8696
    %8711 = vmatpush.msra.mxu0 %v8695
    %8712 = vmatpush.msra.mxu0 %v8694
    %8713 = vmatpush.msra.mxu0 %v8693
    %8714 = vmatpush.msra.mxu0 %v8692
    %8715 = vmatpush.msra.mxu0 %v8691
    %8716 = vmatpush.msra.mxu0 %v8690
    %8717 = vmatpush.msra.mxu0 %v8689
    %8718 = vmatpush.msra.mxu0 %v8688
    %8719 = vmatpush.msra.mxu0 %v8687
    %8720 = vmatpush.msra.mxu0 %v8686
    %8721 = vmatpush.msra.mxu0 %v8685
    %8722 = vmatpush.msra.mxu0 %v8684
    %8723 = vmatmul.f32.gmra.mxu0 %v8705
    %v8724 = vpop.f32.mrf.mxu0
    %v8725 = vadd.f32 %v8702, %v8724
    %8726 = vdwg.mxu0
    %vm8727 = vcmask 9216
    %8728 = vst.msk [vmem:[#allocation17] sm:$0x3] %vm8727, %v8725
    // Predicated region
    $region78: #{base_lstm_forward.1} parent=1 // pred_check
      _
    $region79: #{base_lstm_forward.1} parent=1 // pred_check_branch
      %8730 = sbr.rel (0) target = $region81
    $region80: #{base_lstm_forward.1} parent=1 // pred_region
      %8732 = vsyncadd [#allocation10], 0
      %s8734 = sshll.u32 [#allocation17], 4
      %s8735 = int_to_ptr.vmem [resolvable:$true] %s8734
      %s8736 = sshll.u32 %s14, 4
      %s8737 = int_to_ptr.hbm [resolvable:$true] %s8736
      %8739 = dma.vmem_to_hbm [thread:$0]  %s8735, 32, %s8737, [#allocation10]
    $region81: #{base_lstm_forward.1} parent=1 // pred_fallthru
      _
    // Predicated region
    $region82: #{base_lstm_forward.1} parent=1 // pred_check
      _
    $region83: #{base_lstm_forward.1} parent=1 // pred_check_branch
      %8741 = sbr.rel (0) target = $region85
    $region84: #{base_lstm_forward.1} parent=1 // pred_region
      %8743 = dma.done [#allocation10], 32
    $region85: #{base_lstm_forward.1} parent=1 // pred_fallthru
      _
    %8744 = vsyncpa [#allocation9], 1
    %8745 = vsyncpa [#allocation12], 1
    %8746 = vsyncpa [#allocation15], 1
    %8747 = vsyncpa [#allocation10], 1

</llo_original>
